<compile_context>
chip_gen: v7x
topology: tpu7x:2x2x1
jax: 0.10.0
libtpu: 0.0.40
codegen_flags: <defaults>
</compile_context>

<pallas_src>
import math
import functools

import jax
import jax.numpy as jnp
from jax.experimental import pallas as pl
from jax.experimental.pallas import tpu as pltpu

# ----------------------------- configuration --------------------------------
IMAGE = 32          # (real ViT-B/16: 224)
PATCH = 16
IN_CH = 3
HIDDEN = 128        # (real: 768)
HEADS = 4           # (real: 12)
MLP = 256           # (real: 3072)
LAYERS = 2          # (real: 12)
CLASSES = 20        # nn.Linear(768, out_classes=20) replacement head
LN_EPS = 1e-6       # torchvision ViT uses LayerNorm(eps=1e-6)

N_PATCH = (IMAGE // PATCH) ** 2          # 4
SEQ = N_PATCH + 1                        # 5 (cls token + patches)
SEQ_PAD = ((SEQ + 7) // 8) * 8           # 8  -- sublane-aligned token rows
PATCH_DIM = IN_CH * PATCH * PATCH        # 768
HEAD_DIM = HIDDEN // HEADS               # 32
CLASSES_PAD = 128                        # lane-dense classifier output
ATTN_SCALE = 1.0 / math.sqrt(HEAD_DIM)

TB = 8                                   # images per grid step (batch block)
M = TB * SEQ_PAD                         # token rows per grid step (64)
BH = TB * HEADS                          # attention batch (images x heads)
LVEC_W = max(3 * HIDDEN, MLP)            # packed per-layer vector width
FVEC_W = max(HIDDEN, CLASSES_PAD)        # packed final-constant vector width


# ------------------------------ kernel helpers -------------------------------
def _layernorm(x, w, b):
    mu = jnp.mean(x, axis=-1, keepdims=True)
    var = jnp.mean(jnp.square(x - mu), axis=-1, keepdims=True)
    return (x - mu) * jax.lax.rsqrt(var + LN_EPS) * w + b


def _split_heads(t):
    """[M, HIDDEN] -> [TB*HEADS, SEQ_PAD, HEAD_DIM]."""
    # TODO(synk): check lower_as_mlir for relayouts here; at real scale a
    # head-major production of q/k/v (per-head weight column blocks) would
    # avoid the lane-split + transpose.
    return (t.reshape(TB, SEQ_PAD, HEADS, HEAD_DIM)
             .transpose(0, 2, 1, 3)
             .reshape(BH, SEQ_PAD, HEAD_DIM))


def _merge_heads(t):
    """[TB*HEADS, SEQ_PAD, HEAD_DIM] -> [M, HIDDEN]."""
    return (t.reshape(TB, HEADS, SEQ_PAD, HEAD_DIM)
             .transpose(0, 2, 1, 3)
             .reshape(M, HIDDEN))


# ------------------------------ fused ViT kernel ------------------------------
def _vit_fused_kernel(patches_ref, convw_ref, embadd_ref,
                      qkvw_ref, outw_ref, fc1w_ref, fc2w_ref, lvec_ref,
                      headw_ref, fvec_ref,
                      o_ref, tok_ref):
    layer = pl.program_id(1)

    # --- layer 0: fused patch embedding + cls token + positional embedding ---
    # patches were pre-padded per image (row 0 = cls slot, tail rows = padding,
    # both zero) and pre-cast to bf16; conv bias + cls + pos are folded into
    # the embadd table, so this is one matmul + one add (no concat / scatter).
    @pl.when(layer == 0)
    def _():
        emb = jnp.dot(patches_ref[...], convw_ref[...],
                      preferred_element_type=jnp.float32)          # [M, HIDDEN]
        tok_ref[...] = embadd_ref[...] + emb

    x = tok_ref[...]                                               # [M, HIDDEN] f32

    # --- one DMA worth of small per-layer vectors, row-sliced here ---
    vec = lvec_ref[0]                                              # [8, LVEC_W] f32
    ln1_w = vec[0:1, :HIDDEN]
    ln1_b = vec[1:2, :HIDDEN]
    qkv_b = vec[2:3, :3 * HIDDEN]
    out_b = vec[3:4, :HIDDEN]
    ln2_w = vec[4:5, :HIDDEN]
    ln2_b = vec[5:6, :HIDDEN]
    fc1_b = vec[6:7, :MLP]
    fc2_b = vec[7:8, :HIDDEN]

    # --- pre-norm multi-head self-attention over TB images at once ---
    xn = _layernorm(x, ln1_w, ln1_b).astype(jnp.bfloat16)
    qkv = (jnp.dot(xn, qkvw_ref[0], preferred_element_type=jnp.float32)
           + qkv_b)                                                # [M, 3*HIDDEN] f32
    q = _split_heads((qkv[:, :HIDDEN] * ATTN_SCALE).astype(jnp.bfloat16))
    k = _split_heads(qkv[:, HIDDEN:2 * HIDDEN].astype(jnp.bfloat16))
    v = _split_heads(qkv[:, 2 * HIDDEN:].astype(jnp.bfloat16))

    s = jnp.einsum('bqd,bkd->bqk', q, k,
                   preferred_element_type=jnp.float32)             # [BH, SEQ_PAD, SEQ_PAD]
    # mask out padded key positions (rows >= SEQ are padding)
    kmask = jax.lax.broadcasted_iota(jnp.int32, (1, 1, SEQ_PAD), 2) < SEQ
    s = jnp.where(kmask, s, -1e30)
    mmax = jnp.max(s, axis=-1, keepdims=True)
    p = jnp.exp(s - mmax)
    p = p * pl.reciprocal(jnp.sum(p, axis=-1, keepdims=True), approx=True)
    ao = jnp.einsum('bqk,bkd->bqd', p.astype(jnp.bfloat16), v,
                    preferred_element_type=jnp.float32)            # [BH, SEQ_PAD, HEAD_DIM]
    attn = _merge_heads(ao.astype(jnp.bfloat16))                   # [M, HIDDEN] bf16
    attn = (jnp.dot(attn, outw_ref[0], preferred_element_type=jnp.float32)
            + out_b)
    x = x + attn                                                   # residual 1

    # --- pre-norm MLP ---
    yn = _layernorm(x, ln2_w, ln2_b).astype(jnp.bfloat16)
    h1 = (jnp.dot(yn, fc1w_ref[0], preferred_element_type=jnp.float32)
          + fc1_b)
    # TODO(synk): torch nn.GELU() is the exact erf GELU; tanh approximation used
    # here for guaranteed Mosaic lowering (numerical difference ~1e-3).
    h1 = jax.nn.gelu(h1, approximate=True).astype(jnp.bfloat16)
    h2 = (jnp.dot(h1, fc2w_ref[0], preferred_element_type=jnp.float32)
          + fc2_b)
    x = x + h2                                                     # residual 2
    tok_ref[...] = x

    # --- last layer: final LayerNorm + classifier head on cls tokens only ---
    @pl.when(layer == LAYERS - 1)
    def _():
        fvec = fvec_ref[...]                                       # [8, FVEC_W] f32
        lnf_w = fvec[0:1, :HIDDEN]
        lnf_b = fvec[1:2, :HIDDEN]
        head_b = fvec[2:3, :CLASSES_PAD]
        cls = x.reshape(TB, SEQ_PAD, HIDDEN)[:, 0, :]              # [TB, HIDDEN]
        cls = _layernorm(cls, lnf_w, lnf_b).astype(jnp.bfloat16)
        o_ref[...] = (jnp.dot(cls, headw_ref[...],
                              preferred_element_type=jnp.float32)
                      + head_b)                                    # [TB, CLASSES_PAD]


# ------------------------------ pallas_call wrapper ---------------------------
def _const_spec(shape):
    nd = len(shape)
    return pl.BlockSpec(tuple(shape), lambda b, l, _nd=nd: (0,) * _nd)


def _layer_spec(shape):  # shape includes the leading LAYERS axis
    nd = len(shape)
    return pl.BlockSpec((1,) + tuple(shape[1:]),
                        lambda b, l, _nd=nd: (l,) + (0,) * (_nd - 1))


def vit_forward(kp, x):
    """x: NCHW float32 [B, IN_CH, IMAGE, IMAGE] -> logits [B, CLASSES]."""
    B = x.shape[0]
    B_pad = ((B + TB - 1) // TB) * TB
    patches = extract_patches(x)                                   # [B, SEQ_PAD, PATCH_DIM] bf16
    if B_pad != B:
        pad = jnp.zeros((B_pad - B, SEQ_PAD, PATCH_DIM), patches.dtype)
        patches = jnp.concatenate([patches, pad], axis=0)
    patches = patches.reshape(B_pad * SEQ_PAD, PATCH_DIM)

    in_specs = [
        pl.BlockSpec((M, PATCH_DIM), lambda b, l: (b, 0)),         # patches (bf16)
        _const_spec((PATCH_DIM, HIDDEN)),                          # conv_w
        _const_spec((M, HIDDEN)),                                  # embed add (cls+pos+conv_b)
        _layer_spec((LAYERS, HIDDEN, 3 * HIDDEN)),                 # qkv_w
        _layer_spec((LAYERS, HIDDEN, HIDDEN)),                     # out_w
        _layer_spec((LAYERS, HIDDEN, MLP)),                        # fc1_w
        _layer_spec((LAYERS, MLP, HIDDEN)),                        # fc2_w
        _layer_spec((LAYERS, 8, LVEC_W)),                          # packed per-layer vectors
        _const_spec((HIDDEN, CLASSES_PAD)),                        # head_w (padded)
        _const_spec((8, FVEC_W)),                                  # packed final ln/head biases
    ]

    out = pl.pallas_call(
        _vit_fused_kernel,
        out_shape=jax.ShapeDtypeStruct((B_pad, CLASSES_PAD), jnp.float32),
        grid_spec=pltpu.PrefetchScalarGridSpec(
            num_scalar_prefetch=0,
            grid=(B_pad // TB, LAYERS),
            in_specs=in_specs,
            out_specs=pl.BlockSpec((TB, CLASSES_PAD), lambda b, l: (b, 0)),
            scratch_shapes=[pltpu.VMEM((M, HIDDEN), jnp.float32)],
        ),
        compiler_params=pltpu.CompilerParams(
            dimension_semantics=("parallel", "arbitrary"),
            # fits v7x's 64 MiB VMEM with headroom; raise toward ~100 MiB for
            # v5e/v6e at real scale (larger TB / full-layer weight blocks).
            vmem_limit_bytes=56 * 1024 * 1024),
    )(patches,
      kp["conv_w"], kp["embed_add"],
      kp["qkv_w"], kp["out_w"], kp["fc1_w"], kp["fc2_w"], kp["lvec"],
      kp["head_w"], kp["fvec"])

    return out[:B, :CLASSES]


# ------------------------------ glue / parameters -----------------------------
def extract_patches(x):
    """NCHW image -> [B, SEQ_PAD, C*P*P] bf16 with (C, ph, pw) flatten order
    (matching torch's conv_proj weight [D, C, P, P]); row 0 (cls slot) and the
    SEQ..SEQ_PAD-1 padding rows are zero."""
    B, C, H, W = x.shape
    p = PATCH
    xr = x.reshape(B, C, H // p, p, W // p, p)
    xr = xr.transpose(0, 2, 4, 1, 3, 5)                # [B, H/p, W/p, C, p, p]
    xr = xr.reshape(B, N_PATCH, C * p * p)
    out = jnp.zeros((B, SEQ_PAD, PATCH_DIM), jnp.bfloat16)
    return out.at[:, 1:SEQ, :].set(xr.astype(jnp.bfloat16))


def init_params(key):
    """Parameters in torch (nn.Module) layout."""
    keys = jax.random.split(key, 6 + LAYERS)

    def nrm(k, shape, scale=0.02):
        return scale * jax.random.normal(k, shape, jnp.float32)

    params = {
        "conv_w": nrm(keys[0], (HIDDEN, IN_CH, PATCH, PATCH)),   # torch conv layout
        "conv_b": nrm(keys[1], (HIDDEN,)),
        "cls": nrm(keys[2], (1, 1, HIDDEN)),
        "pos": nrm(keys[3], (1, SEQ, HIDDEN)),
        "ln_w": jnp.ones((HIDDEN,), jnp.float32),
        "ln_b": jnp.zeros((HIDDEN,), jnp.float32),
        "head_w": nrm(keys[4], (CLASSES, HIDDEN)),               # torch Linear layout
        "head_b": nrm(keys[5], (CLASSES,)),
        "layers": [],
    }
    for l in range(LAYERS):
        lk = jax.random.split(keys[6 + l], 8)
        params["layers"].append(dict(
            ln1_w=jnp.ones((HIDDEN,), jnp.float32), ln1_b=jnp.zeros((HIDDEN,), jnp.float32),
            qkv_w=nrm(lk[0], (3 * HIDDEN, HIDDEN)), qkv_b=nrm(lk[1], (3 * HIDDEN,)),
            out_w=nrm(lk[2], (HIDDEN, HIDDEN)), out_b=nrm(lk[3], (HIDDEN,)),
            ln2_w=jnp.ones((HIDDEN,), jnp.float32), ln2_b=jnp.zeros((HIDDEN,), jnp.float32),
            fc1_w=nrm(lk[4], (MLP, HIDDEN)), fc1_b=nrm(lk[5], (MLP,)),
            fc2_w=nrm(lk[6], (HIDDEN, MLP)), fc2_b=nrm(lk[7], (HIDDEN,)),
        ))
    return params


def prepare_params(params):
    """One-time packing into kernel-ready layouts: transpose Linear weights to
    [in, out], stack per-layer matmul weights along LAYERS in bf16, pack the
    per-layer small vectors into a single [LAYERS, 8, LVEC_W] tensor, fold
    cls token + positional embedding + conv bias into one TB-tiled additive
    table, and pad the classifier to a lane-dense 128-wide output."""
    L = params["layers"]

    # cls + pos + conv bias, tiled across the TB images of a grid step.
    base = jnp.zeros((SEQ_PAD, HIDDEN), jnp.float32)
    base = base.at[:SEQ].set(params["pos"][0])
    base = base.at[0].add(params["cls"][0, 0])
    base = base.at[1:SEQ].add(params["conv_b"])
    embed_add = jnp.tile(base, (TB, 1))                            # [M, HIDDEN]

    def pack_layer_vec(lp):
        v = jnp.zeros((8, LVEC_W), jnp.float32)
        v = v.at[0, :HIDDEN].set(lp["ln1_w"])
        v = v.at[1, :HIDDEN].set(lp["ln1_b"])
        v = v.at[2, :3 * HIDDEN].set(lp["qkv_b"])
        v = v.at[3, :HIDDEN].set(lp["out_b"])
        v = v.at[4, :HIDDEN].set(lp["ln2_w"])
        v = v.at[5, :HIDDEN].set(lp["ln2_b"])
        v = v.at[6, :MLP].set(lp["fc1_b"])
        v = v.at[7, :HIDDEN].set(lp["fc2_b"])
        return v

    fvec = jnp.zeros((8, FVEC_W), jnp.float32)
    fvec = fvec.at[0, :HIDDEN].set(params["ln_w"])
    fvec = fvec.at[1, :HIDDEN].set(params["ln_b"])
    fvec = fvec.at[2, :CLASSES].set(params["head_b"])

    head_w = jnp.zeros((HIDDEN, CLASSES_PAD), jnp.float32)
    head_w = head_w.at[:, :CLASSES].set(params["head_w"].T)

    return {
        "conv_w": params["conv_w"].reshape(HIDDEN, PATCH_DIM).T.astype(jnp.bfloat16),
        "embed_add": embed_add,
        "qkv_w": jnp.stack([lp["qkv_w"].T for lp in L]).astype(jnp.bfloat16),
        "out_w": jnp.stack([lp["out_w"].T for lp in L]).astype(jnp.bfloat16),
        "fc1_w": jnp.stack([lp["fc1_w"].T for lp in L]).astype(jnp.bfloat16),
        "fc2_w": jnp.stack([lp["fc2_w"].T for lp in L]).astype(jnp.bfloat16),
        "lvec": jnp.stack([pack_layer_vec(lp) for lp in L]),
        "head_w": head_w.astype(jnp.bfloat16),
        "fvec": fvec,
    }


# ----------------------------------- main -------------------------------------
if __name__ == "__main__":
    BATCH = 16                     # 2 batch blocks of TB=8 -> both v7x cores busy
    key = jax.random.PRNGKey(0)
    pkey, xkey = jax.random.split(key)
    params = init_params(pkey)
    kparams = prepare_params(params)          # one-time weight layout prep
    x = jax.random.normal(xkey, (BATCH, IN_CH, IMAGE, IMAGE), jnp.float32)

    fwd = jax.jit(functools.partial(vit_forward, kparams))
    out = jax.block_until_ready(fwd(x))

    assert out.shape == (BATCH, CLASSES), out.shape
    assert jnp.all(jnp.isfinite(out))
    print("KERNEL_OK")
</pallas_src>

<mosaic_0001>
module attributes {stable_mosaic.version = 11 : i64} {
  func.func @_vit_fused_kernel(%arg0: i32, %arg1: i32, %arg2: memref<64x768xbf16, #tpu.memory_space<vmem>>, %arg3: memref<768x128xbf16, #tpu.memory_space<vmem>>, %arg4: memref<64x128xf32, #tpu.memory_space<vmem>>, %arg5: memref<1x128x384xbf16, #tpu.memory_space<vmem>>, %arg6: memref<1x128x128xbf16, #tpu.memory_space<vmem>>, %arg7: memref<1x128x256xbf16, #tpu.memory_space<vmem>>, %arg8: memref<1x256x128xbf16, #tpu.memory_space<vmem>>, %arg9: memref<1x8x384xf32, #tpu.memory_space<vmem>>, %arg10: memref<128x128xbf16, #tpu.memory_space<vmem>>, %arg11: memref<8x128xf32, #tpu.memory_space<vmem>>, %arg12: memref<8x128xf32, #tpu.memory_space<vmem>>, %arg13: memref<64x128xf32, #tpu.memory_space<vmem>>) attributes {dimension_semantics = [#tpu.dimension_semantics<parallel>, #tpu.dimension_semantics<arbitrary>], iteration_bounds = array<i64: 2, 2>, scalar_prefetch = 0 : i64, scratch_operands = 1 : i64, tpu.core_type = #tpu.core_type<tc>, window_params = [{transform_indices = @transform_0, window_bounds = array<i64: 64, 768>}, {pipeline_mode = #tpu.pipeline_mode<synchronous>, transform_indices = @transform_1, window_bounds = array<i64: 768, 128>}, {pipeline_mode = #tpu.pipeline_mode<synchronous>, transform_indices = @transform_2, window_bounds = array<i64: 64, 128>}, {transform_indices = @transform_3, window_bounds = array<i64: 1, 128, 384>}, {transform_indices = @transform_4, window_bounds = array<i64: 1, 128, 128>}, {transform_indices = @transform_5, window_bounds = array<i64: 1, 128, 256>}, {transform_indices = @transform_6, window_bounds = array<i64: 1, 256, 128>}, {transform_indices = @transform_7, window_bounds = array<i64: 1, 8, 384>}, {pipeline_mode = #tpu.pipeline_mode<synchronous>, transform_indices = @transform_8, window_bounds = array<i64: 128, 128>}, {pipeline_mode = #tpu.pipeline_mode<synchronous>, transform_indices = @transform_9, window_bounds = array<i64: 8, 128>}, {transform_indices = @transform_10, window_bounds = array<i64: 8, 128>}]} {
    %c0_i32 = arith.constant 0 : i32
    %0 = arith.cmpi eq, %arg1, %c0_i32 : i32
    %1 = arith.extui %0 : i1 to i32
    %c0_i32_0 = arith.constant 0 : i32
    %2 = arith.cmpi ne, %1, %c0_i32_0 : i32
    scf.if %2 {
      %c0_43 = arith.constant 0 : index
      %c0_44 = arith.constant 0 : index
      %141 = vector.load %arg2[%c0_43, %c0_44] : memref<64x768xbf16, #tpu.memory_space<vmem>>, vector<64x768xbf16>
      %c0_45 = arith.constant 0 : index
      %c0_46 = arith.constant 0 : index
      %142 = vector.load %arg3[%c0_45, %c0_46] : memref<768x128xbf16, #tpu.memory_space<vmem>>, vector<768x128xbf16>
      %cst_47 = arith.constant dense<0.000000e+00> : vector<64x128xf32>
      %143 = tpu.matmul %141, %142, %cst_47 {dimension_numbers = #tpu.dot_dimension_numbers<[1], [0], [0], [1], [0, 0, 1, 1], [], []>} : vector<64x768xbf16>, vector<768x128xbf16>, vector<64x128xf32> -> vector<64x128xf32>
      %c0_48 = arith.constant 0 : index
      %c0_49 = arith.constant 0 : index
      %144 = vector.load %arg4[%c0_48, %c0_49] : memref<64x128xf32, #tpu.memory_space<vmem>>, vector<64x128xf32>
      %145 = arith.addf %144, %143 : vector<64x128xf32>
      %c0_50 = arith.constant 0 : index
      %c0_51 = arith.constant 0 : index
      %146 = vector.load %arg13[%c0_50, %c0_51] : memref<64x128xf32, #tpu.memory_space<vmem>>, vector<64x128xf32>
      tpu.vector_store %arg13[%c0_50, %c0_51], %145 {strides = array<i32>} : memref<64x128xf32, #tpu.memory_space<vmem>>, vector<64x128xf32>,
    } else {
    }
    %c0 = arith.constant 0 : index
    %c0_1 = arith.constant 0 : index
    %3 = vector.load %arg13[%c0, %c0_1] : memref<64x128xf32, #tpu.memory_space<vmem>>, vector<64x128xf32>
    %c0_2 = arith.constant 0 : index
    %c0_3 = arith.constant 0 : index
    %c0_4 = arith.constant 0 : index
    %4 = vector.load %arg9[%c0_2, %c0_3, %c0_4] : memref<1x8x384xf32, #tpu.memory_space<vmem>>, vector<1x8x384xf32>
    %5 = vector.shape_cast %4 : vector<1x8x384xf32> to vector<8x384xf32>
    %6 = vector.extract_strided_slice %5 {offsets = [0, 0], sizes = [1, 128], strides = [1, 1]} : vector<8x384xf32> to vector<1x128xf32>
    %7 = vector.extract_strided_slice %5 {offsets = [1, 0], sizes = [1, 128], strides = [1, 1]} : vector<8x384xf32> to vector<1x128xf32>
    %8 = vector.extract_strided_slice %5 {offsets = [2, 0], sizes = [1, 384], strides = [1, 1]} : vector<8x384xf32> to vector<1x384xf32>
    %9 = vector.extract_strided_slice %5 {offsets = [3, 0], sizes = [1, 128], strides = [1, 1]} : vector<8x384xf32> to vector<1x128xf32>
    %10 = vector.extract_strided_slice %5 {offsets = [4, 0], sizes = [1, 128], strides = [1, 1]} : vector<8x384xf32> to vector<1x128xf32>
    %11 = vector.extract_strided_slice %5 {offsets = [5, 0], sizes = [1, 128], strides = [1, 1]} : vector<8x384xf32> to vector<1x128xf32>
    %12 = vector.extract_strided_slice %5 {offsets = [6, 0], sizes = [1, 256], strides = [1, 1]} : vector<8x384xf32> to vector<1x256xf32>
    %13 = vector.extract_strided_slice %5 {offsets = [7, 0], sizes = [1, 128], strides = [1, 1]} : vector<8x384xf32> to vector<1x128xf32>
    %cst = arith.constant dense<0.000000e+00> : vector<64xf32>
    %14 = vector.multi_reduction <add>, %3, %cst [1] : vector<64x128xf32> to vector<64xf32>
    %15 = vector.shape_cast %14 : vector<64xf32> to vector<64x1xf32>
    %cst_5 = arith.constant 1.280000e+02 : f32
    %16 = vector.broadcast %cst_5 : f32 to vector<64x1xf32>
    %17 = arith.divf %15, %16 : vector<64x1xf32>
    %18 = vector.broadcast %17 : vector<64x1xf32> to vector<64x128xf32>
    %19 = arith.subf %3, %18 : vector<64x128xf32>
    %20 = arith.mulf %19, %19 : vector<64x128xf32>
    %cst_6 = arith.constant dense<0.000000e+00> : vector<64xf32>
    %21 = vector.multi_reduction <add>, %20, %cst_6 [1] : vector<64x128xf32> to vector<64xf32>
    %22 = vector.shape_cast %21 : vector<64xf32> to vector<64x1xf32>
    %cst_7 = arith.constant 1.280000e+02 : f32
    %23 = vector.broadcast %cst_7 : f32 to vector<64x1xf32>
    %24 = arith.divf %22, %23 : vector<64x1xf32>
    %25 = vector.broadcast %17 : vector<64x1xf32> to vector<64x128xf32>
    %26 = arith.subf %3, %25 : vector<64x128xf32>
    %cst_8 = arith.constant 9.99999997E-7 : f32
    %27 = vector.broadcast %cst_8 : f32 to vector<64x1xf32>
    %28 = arith.addf %24, %27 : vector<64x1xf32>
    %29 = math.rsqrt %28 : vector<64x1xf32>
    %30 = vector.broadcast %29 : vector<64x1xf32> to vector<64x128xf32>
    %31 = arith.mulf %26, %30 : vector<64x128xf32>
    %32 = vector.broadcast %6 : vector<1x128xf32> to vector<64x128xf32>
    %33 = arith.mulf %31, %32 : vector<64x128xf32>
    %34 = vector.broadcast %7 : vector<1x128xf32> to vector<64x128xf32>
    %35 = arith.addf %33, %34 : vector<64x128xf32>
    %36 = arith.truncf %35 : vector<64x128xf32> to vector<64x128xbf16>
    %c0_9 = arith.constant 0 : index
    %c0_10 = arith.constant 0 : index
    %c0_11 = arith.constant 0 : index
    %37 = vector.load %arg5[%c0_9, %c0_10, %c0_11] : memref<1x128x384xbf16, #tpu.memory_space<vmem>>, vector<1x128x384xbf16>
    %38 = vector.shape_cast %37 : vector<1x128x384xbf16> to vector<128x384xbf16>
    %cst_12 = arith.constant dense<0.000000e+00> : vector<64x384xf32>
    %39 = tpu.matmul %36, %38, %cst_12 {dimension_numbers = #tpu.dot_dimension_numbers<[1], [0], [0], [1], [0, 0, 1, 1], [], []>} : vector<64x128xbf16>, vector<128x384xbf16>, vector<64x384xf32> -> vector<64x384xf32>
    %40 = vector.broadcast %8 : vector<1x384xf32> to vector<64x384xf32>
    %41 = arith.addf %39, %40 : vector<64x384xf32>
    %42 = vector.extract_strided_slice %41 {offsets = [0, 0], sizes = [64, 128], strides = [1, 1]} : vector<64x384xf32> to vector<64x128xf32>
    %cst_13 = arith.constant 0.176776692 : f32
    %43 = vector.broadcast %cst_13 : f32 to vector<64x128xf32>
    %44 = arith.mulf %42, %43 : vector<64x128xf32>
    %45 = arith.truncf %44 : vector<64x128xf32> to vector<64x128xbf16>
    %46 = vector.shape_cast %45 : vector<64x128xbf16> to vector<8x8x4x32xbf16>
    %47 = tpu.transpose %46, [0, 2, 1, 3] : vector<8x8x4x32xbf16> -> vector<8x4x8x32xbf16>
    %48 = vector.shape_cast %47 : vector<8x4x8x32xbf16> to vector<32x8x32xbf16>
    %49 = vector.extract_strided_slice %41 {offsets = [0, 128], sizes = [64, 128], strides = [1, 1]} : vector<64x384xf32> to vector<64x128xf32>
    %50 = arith.truncf %49 : vector<64x128xf32> to vector<64x128xbf16>
    %51 = vector.shape_cast %50 : vector<64x128xbf16> to vector<8x8x4x32xbf16>
    %52 = tpu.transpose %51, [0, 2, 1, 3] : vector<8x8x4x32xbf16> -> vector<8x4x8x32xbf16>
    %53 = vector.shape_cast %52 : vector<8x4x8x32xbf16> to vector<32x8x32xbf16>
    %54 = vector.extract_strided_slice %41 {offsets = [0, 256], sizes = [64, 128], strides = [1, 1]} : vector<64x384xf32> to vector<64x128xf32>
    %55 = arith.truncf %54 : vector<64x128xf32> to vector<64x128xbf16>
    %56 = vector.shape_cast %55 : vector<64x128xbf16> to vector<8x8x4x32xbf16>
    %57 = tpu.transpose %56, [0, 2, 1, 3] : vector<8x8x4x32xbf16> -> vector<8x4x8x32xbf16>
    %58 = vector.shape_cast %57 : vector<8x4x8x32xbf16> to vector<32x8x32xbf16>
    "tpu.trace_start"() <{level = 10 : i32, message = "bqd,bkd->bqk"}> : () -> ()
    %cst_14 = arith.constant dense<0.000000e+00> : vector<32x8x8xf32>
    %59 = tpu.matmul %48, %53, %cst_14 {dimension_numbers = #tpu.dot_dimension_numbers<[2], [2], [1], [1], [0, 0, 0, 1, 1, 1], [0], [0]>} : vector<32x8x32xbf16>, vector<32x8x32xbf16>, vector<32x8x8xf32> -> vector<32x8x8xf32>
    "tpu.trace_stop"() : () -> ()
    %60 = tpu.iota {dimensions = array<i32: 2>} : vector<1x1x8xi32>
    %c5_i32 = arith.constant 5 : i32
    %61 = vector.broadcast %c5_i32 : i32 to vector<1x1x8xi32>
    %62 = arith.cmpi slt, %60, %61 : vector<1x1x8xi32>
    %cst_15 = arith.constant -1.000000e+30 : f32
    %63 = vector.shape_cast %62 : vector<1x1x8xi1> to vector<1x1x8xi1>
    %64 = vector.broadcast %63 : vector<1x1x8xi1> to vector<32x8x8xi1>
    %65 = vector.broadcast %cst_15 : f32 to vector<32x8x8xf32>
    %66 = arith.select %64, %59, %65 : vector<32x8x8xi1>, vector<32x8x8xf32>
    %cst_16 = arith.constant dense<0xFF800000> : vector<32x8xf32>
    %67 = vector.multi_reduction <maximumf>, %66, %cst_16 [2] : vector<32x8x8xf32> to vector<32x8xf32>
    %68 = vector.shape_cast %67 : vector<32x8xf32> to vector<32x8x1xf32>
    %69 = vector.broadcast %68 : vector<32x8x1xf32> to vector<32x8x8xf32>
    %70 = arith.subf %66, %69 : vector<32x8x8xf32>
    %71 = math.exp %70 : vector<32x8x8xf32>
    %cst_17 = arith.constant dense<0.000000e+00> : vector<32x8xf32>
    %72 = vector.multi_reduction <add>, %71, %cst_17 [2] : vector<32x8x8xf32> to vector<32x8xf32>
    %73 = vector.shape_cast %72 : vector<32x8xf32> to vector<32x8x1xf32>
    %74 = tpu.reciprocal %73 {approx = true} : vector<32x8x1xf32> -> vector<32x8x1xf32>
    %75 = vector.broadcast %74 : vector<32x8x1xf32> to vector<32x8x8xf32>
    %76 = arith.mulf %71, %75 : vector<32x8x8xf32>
    %77 = arith.truncf %76 : vector<32x8x8xf32> to vector<32x8x8xbf16>
    "tpu.trace_start"() <{level = 10 : i32, message = "bqk,bkd->bqd"}> : () -> ()
    %cst_18 = arith.constant dense<0.000000e+00> : vector<32x8x32xf32>
    %78 = tpu.matmul %77, %58, %cst_18 {dimension_numbers = #tpu.dot_dimension_numbers<[2], [1], [1], [2], [0, 0, 0, 1, 1, 2], [0], [0]>} : vector<32x8x8xbf16>, vector<32x8x32xbf16>, vector<32x8x32xf32> -> vector<32x8x32xf32>
    "tpu.trace_stop"() : () -> ()
    %79 = arith.truncf %78 : vector<32x8x32xf32> to vector<32x8x32xbf16>
    %80 = vector.shape_cast %79 : vector<32x8x32xbf16> to vector<8x4x8x32xbf16>
    %81 = tpu.transpose %80, [0, 2, 1, 3] : vector<8x4x8x32xbf16> -> vector<8x8x4x32xbf16>
    %82 = vector.shape_cast %81 : vector<8x8x4x32xbf16> to vector<64x128xbf16>
    %c0_19 = arith.constant 0 : index
    %c0_20 = arith.constant 0 : index
    %c0_21 = arith.constant 0 : index
    %83 = vector.load %arg6[%c0_19, %c0_20, %c0_21] : memref<1x128x128xbf16, #tpu.memory_space<vmem>>, vector<1x128x128xbf16>
    %84 = vector.shape_cast %83 : vector<1x128x128xbf16> to vector<128x128xbf16>
    %cst_22 = arith.constant dense<0.000000e+00> : vector<64x128xf32>
    %85 = tpu.matmul %82, %84, %cst_22 {dimension_numbers = #tpu.dot_dimension_numbers<[1], [0], [0], [1], [0, 0, 1, 1], [], []>} : vector<64x128xbf16>, vector<128x128xbf16>, vector<64x128xf32> -> vector<64x128xf32>
    %86 = vector.broadcast %9 : vector<1x128xf32> to vector<64x128xf32>
    %87 = arith.addf %85, %86 : vector<64x128xf32>
    %88 = arith.addf %3, %87 : vector<64x128xf32>
    %cst_23 = arith.constant dense<0.000000e+00> : vector<64xf32>
    %89 = vector.multi_reduction <add>, %88, %cst_23 [1] : vector<64x128xf32> to vector<64xf32>
    %90 = vector.shape_cast %89 : vector<64xf32> to vector<64x1xf32>
    %cst_24 = arith.constant 1.280000e+02 : f32
    %91 = vector.broadcast %cst_24 : f32 to vector<64x1xf32>
    %92 = arith.divf %90, %91 : vector<64x1xf32>
    %93 = vector.broadcast %92 : vector<64x1xf32> to vector<64x128xf32>
    %94 = arith.subf %88, %93 : vector<64x128xf32>
    %95 = arith.mulf %94, %94 : vector<64x128xf32>
    %cst_25 = arith.constant dense<0.000000e+00> : vector<64xf32>
    %96 = vector.multi_reduction <add>, %95, %cst_25 [1] : vector<64x128xf32> to vector<64xf32>
    %97 = vector.shape_cast %96 : vector<64xf32> to vector<64x1xf32>
    %cst_26 = arith.constant 1.280000e+02 : f32
    %98 = vector.broadcast %cst_26 : f32 to vector<64x1xf32>
    %99 = arith.divf %97, %98 : vector<64x1xf32>
    %100 = vector.broadcast %92 : vector<64x1xf32> to vector<64x128xf32>
    %101 = arith.subf %88, %100 : vector<64x128xf32>
    %cst_27 = arith.constant 9.99999997E-7 : f32
    %102 = vector.broadcast %cst_27 : f32 to vector<64x1xf32>
    %103 = arith.addf %99, %102 : vector<64x1xf32>
    %104 = math.rsqrt %103 : vector<64x1xf32>
    %105 = vector.broadcast %104 : vector<64x1xf32> to vector<64x128xf32>
    %106 = arith.mulf %101, %105 : vector<64x128xf32>
    %107 = vector.broadcast %10 : vector<1x128xf32> to vector<64x128xf32>
    %108 = arith.mulf %106, %107 : vector<64x128xf32>
    %109 = vector.broadcast %11 : vector<1x128xf32> to vector<64x128xf32>
    %110 = arith.addf %108, %109 : vector<64x128xf32>
    %111 = arith.truncf %110 : vector<64x128xf32> to vector<64x128xbf16>
    %c0_28 = arith.constant 0 : index
    %c0_29 = arith.constant 0 : index
    %c0_30 = arith.constant 0 : index
    %112 = vector.load %arg7[%c0_28, %c0_29, %c0_30] : memref<1x128x256xbf16, #tpu.memory_space<vmem>>, vector<1x128x256xbf16>
    %113 = vector.shape_cast %112 : vector<1x128x256xbf16> to vector<128x256xbf16>
    %cst_31 = arith.constant dense<0.000000e+00> : vector<64x256xf32>
    %114 = tpu.matmul %111, %113, %cst_31 {dimension_numbers = #tpu.dot_dimension_numbers<[1], [0], [0], [1], [0, 0, 1, 1], [], []>} : vector<64x128xbf16>, vector<128x256xbf16>, vector<64x256xf32> -> vector<64x256xf32>
    %115 = vector.broadcast %12 : vector<1x256xf32> to vector<64x256xf32>
    %116 = arith.addf %114, %115 : vector<64x256xf32>
    %117 = arith.mulf %116, %116 : vector<64x256xf32>
    %118 = arith.mulf %116, %117 : vector<64x256xf32>
    %cst_32 = arith.constant 4.471500e-02 : f32
    %119 = vector.broadcast %cst_32 : f32 to vector<64x256xf32>
    %120 = arith.mulf %119, %118 : vector<64x256xf32>
    %121 = arith.addf %116, %120 : vector<64x256xf32>
    %cst_33 = arith.constant 0.797884583 : f32
    %122 = vector.broadcast %cst_33 : f32 to vector<64x256xf32>
    %123 = arith.mulf %122, %121 : vector<64x256xf32>
    %124 = math.tanh %123 : vector<64x256xf32>
    %cst_34 = arith.constant 1.000000e+00 : f32
    %125 = vector.broadcast %cst_34 : f32 to vector<64x256xf32>
    %126 = arith.addf %125, %124 : vector<64x256xf32>
    %cst_35 = arith.constant 5.000000e-01 : f32
    %127 = vector.broadcast %cst_35 : f32 to vector<64x256xf32>
    %128 = arith.mulf %127, %126 : vector<64x256xf32>
    %129 = arith.mulf %116, %128 : vector<64x256xf32>
    %130 = arith.truncf %129 : vector<64x256xf32> to vector<64x256xbf16>
    %c0_36 = arith.constant 0 : index
    %c0_37 = arith.constant 0 : index
    %c0_38 = arith.constant 0 : index
    %131 = vector.load %arg8[%c0_36, %c0_37, %c0_38] : memref<1x256x128xbf16, #tpu.memory_space<vmem>>, vector<1x256x128xbf16>
    %132 = vector.shape_cast %131 : vector<1x256x128xbf16> to vector<256x128xbf16>
    %cst_39 = arith.constant dense<0.000000e+00> : vector<64x128xf32>
    %133 = tpu.matmul %130, %132, %cst_39 {dimension_numbers = #tpu.dot_dimension_numbers<[1], [0], [0], [1], [0, 0, 1, 1], [], []>} : vector<64x256xbf16>, vector<256x128xbf16>, vector<64x128xf32> -> vector<64x128xf32>
    %134 = vector.broadcast %13 : vector<1x128xf32> to vector<64x128xf32>
    %135 = arith.addf %133, %134 : vector<64x128xf32>
    %136 = arith.addf %88, %135 : vector<64x128xf32>
    %c0_40 = arith.constant 0 : index
    %c0_41 = arith.constant 0 : index
    %137 = vector.load %arg13[%c0_40, %c0_41] : memref<64x128xf32, #tpu.memory_space<vmem>>, vector<64x128xf32>
    tpu.vector_store %arg13[%c0_40, %c0_41], %136 {strides = array<i32>} : memref<64x128xf32, #tpu.memory_space<vmem>>, vector<64x128xf32>,
    %c1_i32 = arith.constant 1 : i32
    %138 = arith.cmpi eq, %arg1, %c1_i32 : i32
    %139 = arith.extui %138 : i1 to i32
    %c0_i32_42 = arith.constant 0 : i32
    %140 = arith.cmpi ne, %139, %c0_i32_42 : i32
    scf.if %140 {
      %c0_43 = arith.constant 0 : index
      %c0_44 = arith.constant 0 : index
      %141 = vector.load %arg11[%c0_43, %c0_44] : memref<8x128xf32, #tpu.memory_space<vmem>>, vector<8x128xf32>
      %142 = vector.extract_strided_slice %141 {offsets = [0, 0], sizes = [1, 128], strides = [1, 1]} : vector<8x128xf32> to vector<1x128xf32>
      %143 = vector.extract_strided_slice %141 {offsets = [1, 0], sizes = [1, 128], strides = [1, 1]} : vector<8x128xf32> to vector<1x128xf32>
      %144 = vector.extract_strided_slice %141 {offsets = [2, 0], sizes = [1, 128], strides = [1, 1]} : vector<8x128xf32> to vector<1x128xf32>
      %145 = vector.shape_cast %136 : vector<64x128xf32> to vector<8x8x128xf32>
      %146 = vector.extract_strided_slice %145 {offsets = [0, 0, 0], sizes = [8, 1, 128], strides = [1, 1, 1]} : vector<8x8x128xf32> to vector<8x1x128xf32>
      %147 = vector.shape_cast %146 : vector<8x1x128xf32> to vector<8x128xf32>
      %cst_45 = arith.constant dense<0.000000e+00> : vector<8xf32>
      %148 = vector.multi_reduction <add>, %147, %cst_45 [1] : vector<8x128xf32> to vector<8xf32>
      %149 = vector.shape_cast %148 : vector<8xf32> to vector<8x1xf32>
      %cst_46 = arith.constant 1.280000e+02 : f32
      %150 = vector.broadcast %cst_46 : f32 to vector<8x1xf32>
      %151 = arith.divf %149, %150 : vector<8x1xf32>
      %152 = vector.broadcast %151 : vector<8x1xf32> to vector<8x128xf32>
      %153 = arith.subf %147, %152 : vector<8x128xf32>
      %154 = arith.mulf %153, %153 : vector<8x128xf32>
      %cst_47 = arith.constant dense<0.000000e+00> : vector<8xf32>
      %155 = vector.multi_reduction <add>, %154, %cst_47 [1] : vector<8x128xf32> to vector<8xf32>
      %156 = vector.shape_cast %155 : vector<8xf32> to vector<8x1xf32>
      %cst_48 = arith.constant 1.280000e+02 : f32
      %157 = vector.broadcast %cst_48 : f32 to vector<8x1xf32>
      %158 = arith.divf %156, %157 : vector<8x1xf32>
      %159 = vector.broadcast %151 : vector<8x1xf32> to vector<8x128xf32>
      %160 = arith.subf %147, %159 : vector<8x128xf32>
      %cst_49 = arith.constant 9.99999997E-7 : f32
      %161 = vector.broadcast %cst_49 : f32 to vector<8x1xf32>
      %162 = arith.addf %158, %161 : vector<8x1xf32>
      %163 = math.rsqrt %162 : vector<8x1xf32>
      %164 = vector.broadcast %163 : vector<8x1xf32> to vector<8x128xf32>
      %165 = arith.mulf %160, %164 : vector<8x128xf32>
      %166 = vector.broadcast %142 : vector<1x128xf32> to vector<8x128xf32>
      %167 = arith.mulf %165, %166 : vector<8x128xf32>
      %168 = vector.broadcast %143 : vector<1x128xf32> to vector<8x128xf32>
      %169 = arith.addf %167, %168 : vector<8x128xf32>
      %170 = arith.truncf %169 : vector<8x128xf32> to vector<8x128xbf16>
      %c0_50 = arith.constant 0 : index
      %c0_51 = arith.constant 0 : index
      %171 = vector.load %arg10[%c0_50, %c0_51] : memref<128x128xbf16, #tpu.memory_space<vmem>>, vector<128x128xbf16>
      %cst_52 = arith.constant dense<0.000000e+00> : vector<8x128xf32>
      %172 = tpu.matmul %170, %171, %cst_52 {dimension_numbers = #tpu.dot_dimension_numbers<[1], [0], [0], [1], [0, 0, 1, 1], [], []>} : vector<8x128xbf16>, vector<128x128xbf16>, vector<8x128xf32> -> vector<8x128xf32>
      %173 = vector.broadcast %144 : vector<1x128xf32> to vector<8x128xf32>
      %174 = arith.addf %172, %173 : vector<8x128xf32>
      %c0_53 = arith.constant 0 : index
      %c0_54 = arith.constant 0 : index
      %175 = vector.load %arg12[%c0_53, %c0_54] : memref<8x128xf32, #tpu.memory_space<vmem>>, vector<8x128xf32>
      tpu.vector_store %arg12[%c0_53, %c0_54], %174 {strides = array<i32>} : memref<8x128xf32, #tpu.memory_space<vmem>>, vector<8x128xf32>,
    } else {
    }
    return
  }
  func.func @transform_0(%arg0: i32, %arg1: i32) -> (i32, i32) {
    %c0_i32 = arith.constant 0 : i32
    %c0_i32_0 = arith.constant 0 : i32
    return %arg0, %c0_i32 : i32, i32
  }
  func.func @transform_1(%arg0: i32, %arg1: i32) -> (i32, i32) {
    %c0_i32 = arith.constant 0 : i32
    %c0_i32_0 = arith.constant 0 : i32
    %c0_i32_1 = arith.constant 0 : i32
    return %c0_i32, %c0_i32_0 : i32, i32
  }
  func.func @transform_2(%arg0: i32, %arg1: i32) -> (i32, i32) {
    %c0_i32 = arith.constant 0 : i32
    %c0_i32_0 = arith.constant 0 : i32
    %c0_i32_1 = arith.constant 0 : i32
    return %c0_i32, %c0_i32_0 : i32, i32
  }
  func.func @transform_3(%arg0: i32, %arg1: i32) -> (i32, i32, i32) {
    %c0_i32 = arith.constant 0 : i32
    %c0_i32_0 = arith.constant 0 : i32
    %c0_i32_1 = arith.constant 0 : i32
    return %arg1, %c0_i32, %c0_i32_0 : i32, i32, i32
  }
  func.func @transform_4(%arg0: i32, %arg1: i32) -> (i32, i32, i32) {
    %c0_i32 = arith.constant 0 : i32
    %c0_i32_0 = arith.constant 0 : i32
    %c0_i32_1 = arith.constant 0 : i32
    return %arg1, %c0_i32, %c0_i32_0 : i32, i32, i32
  }
  func.func @transform_5(%arg0: i32, %arg1: i32) -> (i32, i32, i32) {
    %c0_i32 = arith.constant 0 : i32
    %c0_i32_0 = arith.constant 0 : i32
    %c0_i32_1 = arith.constant 0 : i32
    return %arg1, %c0_i32, %c0_i32_0 : i32, i32, i32
  }
  func.func @transform_6(%arg0: i32, %arg1: i32) -> (i32, i32, i32) {
    %c0_i32 = arith.constant 0 : i32
    %c0_i32_0 = arith.constant 0 : i32
    %c0_i32_1 = arith.constant 0 : i32
    return %arg1, %c0_i32, %c0_i32_0 : i32, i32, i32
  }
  func.func @transform_7(%arg0: i32, %arg1: i32) -> (i32, i32, i32) {
    %c0_i32 = arith.constant 0 : i32
    %c0_i32_0 = arith.constant 0 : i32
    %c0_i32_1 = arith.constant 0 : i32
    return %arg1, %c0_i32, %c0_i32_0 : i32, i32, i32
  }
  func.func @transform_8(%arg0: i32, %arg1: i32) -> (i32, i32) {
    %c0_i32 = arith.constant 0 : i32
    %c0_i32_0 = arith.constant 0 : i32
    %c0_i32_1 = arith.constant 0 : i32
    return %c0_i32, %c0_i32_0 : i32, i32
  }
  func.func @transform_9(%arg0: i32, %arg1: i32) -> (i32, i32) {
    %c0_i32 = arith.constant 0 : i32
    %c0_i32_0 = arith.constant 0 : i32
    %c0_i32_1 = arith.constant 0 : i32
    return %c0_i32, %c0_i32_0 : i32, i32
  }
  func.func @transform_10(%arg0: i32, %arg1: i32) -> (i32, i32) {
    %c0_i32 = arith.constant 0 : i32
    %c0_i32_0 = arith.constant 0 : i32
    return %arg0, %c0_i32 : i32, i32
  }
}

</mosaic_0001>

<llo_original>
// kernel: vit_forward.1
$region0: #{vit_forward.1}
  #allocation0 [shape = 'u32[]', space=smem, size = 0x4, offset = 0x4, fixed_abs, tag = 'smem constant byte address 0x4 - core index']
  #allocation1 [shape = 'u32[144,128]{1,0:T(1,128)}', space=vmem, size = 0x12000, scoped, tag = 'internal scratch']
  #allocation2 [shape = 'f32[64,128]{1,0:T(8,128)}', space=vmem, size = 0x8000, scoped, tag = 'scratch operand']
  %s0 = inlined_call_operand.vmem [shape: bf16[128,768], index: 0, kind: input, shape index: {}]
  %s1 = inlined_call_operand.vmem [shape: bf16[768,128], index: 1, kind: input, shape index: {}]
  %s2 = inlined_call_operand.vmem [shape: f32[64,128], index: 2, kind: input, shape index: {}]
  %s3 = inlined_call_operand.vmem [shape: bf16[2,128,384], index: 3, kind: input, shape index: {}]
  %s4 = inlined_call_operand.vmem [shape: bf16[2,128,128], index: 4, kind: input, shape index: {}]
  %s5 = inlined_call_operand.vmem [shape: bf16[2,128,256], index: 5, kind: input, shape index: {}]
  %s6 = inlined_call_operand.vmem [shape: bf16[2,256,128], index: 6, kind: input, shape index: {}]
  %s7 = inlined_call_operand.vmem [shape: f32[2,8,384], index: 7, kind: input, shape index: {}]
  %s8 = inlined_call_operand.vmem [shape: bf16[128,128], index: 8, kind: input, shape index: {}]
  %s9 = inlined_call_operand.vmem [shape: f32[8,128], index: 9, kind: input, shape index: {}]
  %s10 = inlined_call_operand.hbm [shape: f32[16,128], index: 10, kind: output, shape index: {}]
  %s11 = sld [smem:[#allocation0]]
  $region81: #{vit_forward.1} parent=0
    _
  %s13 = ssub.s32 1, %s11
  %s14 = scalar_select 0, %s13, %s11
  $region1: #{vit_forward.1} parent=0
    #allocation3 [shape = 'u8[8192]{0}', space=vmem, size = 0x2000, scoped, tag = 'output window, operand 0']
    #allocation4 [shape = 's32[2]{0}', space=sflag, size = 0x8, scoped, tag = 'scoped memory for vit_forward.1']
    %15 = vsyncpa [#allocation4], 0
    %s16 = scalar_lea.sflag [#allocation4], 1
    %17 = vsyncpa %s16, 0
    loop: start=0, step=1, limit=6
    $region2: #{vit_forward.1} parent=1 // loop_pre_header
      _
    $region3: #{vit_forward.1} parent=1 // loop_header
      %s19 = sphi 0, %s23
      %p20 = scmp.ge.s32.totalorder %s19, 6
      %s26 = sphi 0, %s38
      %s27 = sphi 0, %s34
      %s28 = sphi 0, %s26
      %s29 = sphi 0, %s27
      %s30 = sphi 0, %s28
      %s31 = sphi 0, %s29
      %s41 = sphi 0, %s43
      %s44 = sphi 0, %s41
      %s45 = sphi 0, %s44
      %s61 = sphi 0, %s45
      %s65 = sphi 0, %s65
      %s67 = sphi 0, %s65
      %s68 = sphi 0, %s67
      %s82 = sphi 0, %s68
      %s86 = sphi 0, %s86
      %s88 = sphi 0, %s86
      %s89 = sphi 0, %s88
      %s103 = sphi 0, %s89
      %s109 = sphi 0, %s111
      %s112 = sphi 0, %s109
      %s113 = sphi 0, %s112
      %s129 = sphi 0, %s113
      %s135 = sphi 0, %s137
      %s138 = sphi 0, %s135
      %s139 = sphi 0, %s138
      %s155 = sphi 0, %s139
      %s161 = sphi 0, %s163
      %s164 = sphi 0, %s161
      %s165 = sphi 0, %s164
      %s181 = sphi 0, %s165
      %s187 = sphi 0, %s189
      %s190 = sphi 0, %s187
      %s191 = sphi 0, %s190
      %s207 = sphi 0, %s191
      %s213 = sphi 0, %s215
      %s216 = sphi 0, %s213
      %s217 = sphi 0, %s216
      %s233 = sphi 0, %s217
      %s237 = sphi 0, %s237
      %s239 = sphi 0, %s237
      %s240 = sphi 0, %s239
      %s254 = sphi 0, %s240
      %s258 = sphi 0, %s258
      %s260 = sphi 0, %s258
      %s261 = sphi 0, %s260
      %s275 = sphi 0, %s261
      %s281 = sphi 0, %s283
      %s284 = sphi 0, %s281
      %s285 = sphi 0, %s284
      %s301 = sphi 0, %s285
    $region4: #{vit_forward.1} parent=1 // loop_header_branch
      %22 = sbr.rel (%p20) target = $region8
    $region5: #{vit_forward.1} parent=1 // loop_body
      %s24 = ssub.s32 %s19, 1
      %s25 = ssub.s32 %s19, 2
      %s32 = sadd.s32 1, %s27
      %p33 = scmp.ge.s32.totalorder %s32, 2
      %s34 = scalar_select %p33, 0, %s32
      %s35 = sadd.s32 1, %s26
      %s36 = scalar_select %p33, %s35, %s26
      %p37 = scmp.ge.s32.totalorder %s36, 2
      %s38 = scalar_select %p37, 0, %s36
      %s39 = ssub.s32 %s26, %s38
      %p40 = scmp.eq.s32.totalorder %s39, 0
      %s42 = sadd.s32 %s41, 1
      %s43 = scalar_select %p40, %s41, %s42
      %p46 = pneg %p40
      %p47 = scmp.eq.s32.totalorder %s19, 3
      %p48 = por %p46, %p47
      %p49 = scmp.ne.s32.totalorder %s41, %s44
      %p50 = scmp.eq.s32.totalorder %s19, 0
      %p51 = por %p49, %p50
      %p52 = scmp.ne.s32.totalorder %s41, %s44
      %p53 = scmp.eq.s32.totalorder %s24, 3
      %p54 = por %p52, %p53
      %p55 = scmp.ne.s32.totalorder %s44, %s45
      %p56 = scmp.eq.s32.totalorder %s24, 0
      %p57 = por %p55, %p56
      %p58 = scmp.ne.s32.totalorder %s44, %s45
      %p59 = scmp.eq.s32.totalorder %s25, 3
      %p60 = por %p58, %p59
      %p62 = scmp.ne.s32.totalorder %s45, %s61
      %p63 = scmp.eq.s32.totalorder %s25, 0
      %p64 = por %p62, %p63
      %s66 = sadd.s32 %s65, 1
      %p69 = scmp.eq.s32.totalorder %s19, 3
      %p70 = scmp.ne.s32.totalorder %s65, %s67
      %p71 = scmp.eq.s32.totalorder %s19, 0
      %p72 = por %p70, %p71
      %p73 = scmp.ne.s32.totalorder %s65, %s67
      %p74 = scmp.eq.s32.totalorder %s24, 3
      %p75 = por %p73, %p74
      %p76 = scmp.ne.s32.totalorder %s67, %s68
      %p77 = scmp.eq.s32.totalorder %s24, 0
      %p78 = por %p76, %p77
      %p79 = scmp.ne.s32.totalorder %s67, %s68
      %p80 = scmp.eq.s32.totalorder %s25, 3
      %p81 = por %p79, %p80
      %p83 = scmp.ne.s32.totalorder %s68, %s82
      %p84 = scmp.eq.s32.totalorder %s25, 0
      %p85 = por %p83, %p84
      %s87 = sadd.s32 %s86, 1
      %p90 = scmp.eq.s32.totalorder %s19, 3
      %p91 = scmp.ne.s32.totalorder %s86, %s88
      %p92 = scmp.eq.s32.totalorder %s19, 0
      %p93 = por %p91, %p92
      %p94 = scmp.ne.s32.totalorder %s86, %s88
      %p95 = scmp.eq.s32.totalorder %s24, 3
      %p96 = por %p94, %p95
      %p97 = scmp.ne.s32.totalorder %s88, %s89
      %p98 = scmp.eq.s32.totalorder %s24, 0
      %p99 = por %p97, %p98
      %p100 = scmp.ne.s32.totalorder %s88, %s89
      %p101 = scmp.eq.s32.totalorder %s25, 3
      %p102 = por %p100, %p101
      %p104 = scmp.ne.s32.totalorder %s89, %s103
      %p105 = scmp.eq.s32.totalorder %s25, 0
      %p106 = por %p104, %p105
      %s107 = ssub.s32 %s27, %s34
      %p108 = scmp.eq.s32.totalorder %s107, 0
      %s110 = sadd.s32 %s109, 1
      %s111 = scalar_select %p108, %s109, %s110
      %p114 = pneg %p108
      %p115 = scmp.eq.s32.totalorder %s19, 3
      %p116 = por %p114, %p115
      %p117 = scmp.ne.s32.totalorder %s109, %s112
      %p118 = scmp.eq.s32.totalorder %s19, 0
      %p119 = por %p117, %p118
      %p120 = scmp.ne.s32.totalorder %s109, %s112
      %p121 = scmp.eq.s32.totalorder %s24, 3
      %p122 = por %p120, %p121
      %p123 = scmp.ne.s32.totalorder %s112, %s113
      %p124 = scmp.eq.s32.totalorder %s24, 0
      %p125 = por %p123, %p124
      %p126 = scmp.ne.s32.totalorder %s112, %s113
      %p127 = scmp.eq.s32.totalorder %s25, 3
      %p128 = por %p126, %p127
      %p130 = scmp.ne.s32.totalorder %s113, %s129
      %p131 = scmp.eq.s32.totalorder %s25, 0
      %p132 = por %p130, %p131
      %s133 = ssub.s32 %s27, %s34
      %p134 = scmp.eq.s32.totalorder %s133, 0
      %s136 = sadd.s32 %s135, 1
      %s137 = scalar_select %p134, %s135, %s136
      %p140 = pneg %p134
      %p141 = scmp.eq.s32.totalorder %s19, 3
      %p142 = por %p140, %p141
      %p143 = scmp.ne.s32.totalorder %s135, %s138
      %p144 = scmp.eq.s32.totalorder %s19, 0
      %p145 = por %p143, %p144
      %p146 = scmp.ne.s32.totalorder %s135, %s138
      %p147 = scmp.eq.s32.totalorder %s24, 3
      %p148 = por %p146, %p147
      %p149 = scmp.ne.s32.totalorder %s138, %s139
      %p150 = scmp.eq.s32.totalorder %s24, 0
      %p151 = por %p149, %p150
      %p152 = scmp.ne.s32.totalorder %s138, %s139
      %p153 = scmp.eq.s32.totalorder %s25, 3
      %p154 = por %p152, %p153
      %p156 = scmp.ne.s32.totalorder %s139, %s155
      %p157 = scmp.eq.s32.totalorder %s25, 0
      %p158 = por %p156, %p157
      %s159 = ssub.s32 %s27, %s34
      %p160 = scmp.eq.s32.totalorder %s159, 0
      %s162 = sadd.s32 %s161, 1
      %s163 = scalar_select %p160, %s161, %s162
      %p166 = pneg %p160
      %p167 = scmp.eq.s32.totalorder %s19, 3
      %p168 = por %p166, %p167
      %p169 = scmp.ne.s32.totalorder %s161, %s164
      %p170 = scmp.eq.s32.totalorder %s19, 0
      %p171 = por %p169, %p170
      %p172 = scmp.ne.s32.totalorder %s161, %s164
      %p173 = scmp.eq.s32.totalorder %s24, 3
      %p174 = por %p172, %p173
      %p175 = scmp.ne.s32.totalorder %s164, %s165
      %p176 = scmp.eq.s32.totalorder %s24, 0
      %p177 = por %p175, %p176
      %p178 = scmp.ne.s32.totalorder %s164, %s165
      %p179 = scmp.eq.s32.totalorder %s25, 3
      %p180 = por %p178, %p179
      %p182 = scmp.ne.s32.totalorder %s165, %s181
      %p183 = scmp.eq.s32.totalorder %s25, 0
      %p184 = por %p182, %p183
      %s185 = ssub.s32 %s27, %s34
      %p186 = scmp.eq.s32.totalorder %s185, 0
      %s188 = sadd.s32 %s187, 1
      %s189 = scalar_select %p186, %s187, %s188
      %p192 = pneg %p186
      %p193 = scmp.eq.s32.totalorder %s19, 3
      %p194 = por %p192, %p193
      %p195 = scmp.ne.s32.totalorder %s187, %s190
      %p196 = scmp.eq.s32.totalorder %s19, 0
      %p197 = por %p195, %p196
      %p198 = scmp.ne.s32.totalorder %s187, %s190
      %p199 = scmp.eq.s32.totalorder %s24, 3
      %p200 = por %p198, %p199
      %p201 = scmp.ne.s32.totalorder %s190, %s191
      %p202 = scmp.eq.s32.totalorder %s24, 0
      %p203 = por %p201, %p202
      %p204 = scmp.ne.s32.totalorder %s190, %s191
      %p205 = scmp.eq.s32.totalorder %s25, 3
      %p206 = por %p204, %p205
      %p208 = scmp.ne.s32.totalorder %s191, %s207
      %p209 = scmp.eq.s32.totalorder %s25, 0
      %p210 = por %p208, %p209
      %s211 = ssub.s32 %s27, %s34
      %p212 = scmp.eq.s32.totalorder %s211, 0
      %s214 = sadd.s32 %s213, 1
      %s215 = scalar_select %p212, %s213, %s214
      %p218 = pneg %p212
      %p219 = scmp.eq.s32.totalorder %s19, 3
      %p220 = por %p218, %p219
      %p221 = scmp.ne.s32.totalorder %s213, %s216
      %p222 = scmp.eq.s32.totalorder %s19, 0
      %p223 = por %p221, %p222
      %p224 = scmp.ne.s32.totalorder %s213, %s216
      %p225 = scmp.eq.s32.totalorder %s24, 3
      %p226 = por %p224, %p225
      %p227 = scmp.ne.s32.totalorder %s216, %s217
      %p228 = scmp.eq.s32.totalorder %s24, 0
      %p229 = por %p227, %p228
      %p230 = scmp.ne.s32.totalorder %s216, %s217
      %p231 = scmp.eq.s32.totalorder %s25, 3
      %p232 = por %p230, %p231
      %p234 = scmp.ne.s32.totalorder %s217, %s233
      %p235 = scmp.eq.s32.totalorder %s25, 0
      %p236 = por %p234, %p235
      %s238 = sadd.s32 %s237, 1
      %p241 = scmp.eq.s32.totalorder %s19, 3
      %p242 = scmp.ne.s32.totalorder %s237, %s239
      %p243 = scmp.eq.s32.totalorder %s19, 0
      %p244 = por %p242, %p243
      %p245 = scmp.ne.s32.totalorder %s237, %s239
      %p246 = scmp.eq.s32.totalorder %s24, 3
      %p247 = por %p245, %p246
      %p248 = scmp.ne.s32.totalorder %s239, %s240
      %p249 = scmp.eq.s32.totalorder %s24, 0
      %p250 = por %p248, %p249
      %p251 = scmp.ne.s32.totalorder %s239, %s240
      %p252 = scmp.eq.s32.totalorder %s25, 3
      %p253 = por %p251, %p252
      %p255 = scmp.ne.s32.totalorder %s240, %s254
      %p256 = scmp.eq.s32.totalorder %s25, 0
      %p257 = por %p255, %p256
      %s259 = sadd.s32 %s258, 1
      %p262 = scmp.eq.s32.totalorder %s19, 3
      %p263 = scmp.ne.s32.totalorder %s258, %s260
      %p264 = scmp.eq.s32.totalorder %s19, 0
      %p265 = por %p263, %p264
      %p266 = scmp.ne.s32.totalorder %s258, %s260
      %p267 = scmp.eq.s32.totalorder %s24, 3
      %p268 = por %p266, %p267
      %p269 = scmp.ne.s32.totalorder %s260, %s261
      %p270 = scmp.eq.s32.totalorder %s24, 0
      %p271 = por %p269, %p270
      %p272 = scmp.ne.s32.totalorder %s260, %s261
      %p273 = scmp.eq.s32.totalorder %s25, 3
      %p274 = por %p272, %p273
      %p276 = scmp.ne.s32.totalorder %s261, %s275
      %p277 = scmp.eq.s32.totalorder %s25, 0
      %p278 = por %p276, %p277
      %s279 = ssub.s32 %s26, %s38
      %p280 = scmp.eq.s32.totalorder %s279, 0
      %s282 = sadd.s32 %s281, 1
      %s283 = scalar_select %p280, %s281, %s282
      %p286 = pneg %p280
      %p287 = scmp.eq.s32.totalorder %s19, 3
      %p288 = por %p286, %p287
      %p289 = scmp.ne.s32.totalorder %s281, %s284
      %p290 = scmp.eq.s32.totalorder %s19, 0
      %p291 = por %p289, %p290
      %p292 = scmp.ne.s32.totalorder %s281, %s284
      %p293 = scmp.eq.s32.totalorder %s24, 3
      %p294 = por %p292, %p293
      %p295 = scmp.ne.s32.totalorder %s284, %s285
      %p296 = scmp.eq.s32.totalorder %s24, 0
      %p297 = por %p295, %p296
      %p298 = scmp.ne.s32.totalorder %s284, %s285
      %p299 = scmp.eq.s32.totalorder %s25, 3
      %p300 = por %p298, %p299
      %p302 = scmp.ne.s32.totalorder %s285, %s301
      %p303 = scmp.eq.s32.totalorder %s25, 0
      %p304 = por %p302, %p303
      %p305 = scmp.le.s32.totalorder 1, %s19
      %p306 = scmp.lt.s32.totalorder %s19, 5
      %p307 = pnand %p305, %p306
      %p308 = pneg %p307
      // Predicated region
      $region9: #{vit_forward.1} parent=5 // pred_check
        _
      $region10: #{vit_forward.1} parent=5 // pred_check_branch
        %310 = sbr.rel (%p307) target = $region12
      $region11: #{vit_forward.1} parent=5 // pred_region
        %s311 = ssub.s32 %s19, 1
        // Predicated region
        $region13: #{vit_forward.1} parent=11 // pred_check
          %p312 = pneg %p78
        $region14: #{vit_forward.1} parent=11 // pred_check_branch
          %314 = sbr.rel (%p312) target = $region16
        $region15: #{vit_forward.1} parent=11 // pred_region
          _
        $region16: #{vit_forward.1} parent=11 // pred_fallthru
          _
        // Predicated region
        $region17: #{vit_forward.1} parent=11 // pred_check
          %p315 = pneg %p99
        $region18: #{vit_forward.1} parent=11 // pred_check_branch
          %317 = sbr.rel (%p315) target = $region20
        $region19: #{vit_forward.1} parent=11 // pred_region
          _
        $region20: #{vit_forward.1} parent=11 // pred_fallthru
          _
        // Predicated region
        $region21: #{vit_forward.1} parent=11 // pred_check
          %p318 = pneg %p250
        $region22: #{vit_forward.1} parent=11 // pred_check_branch
          %320 = sbr.rel (%p318) target = $region24
        $region23: #{vit_forward.1} parent=11 // pred_region
          _
        $region24: #{vit_forward.1} parent=11 // pred_fallthru
          _
        // Predicated region
        $region25: #{vit_forward.1} parent=11 // pred_check
          %p321 = pneg %p271
        $region26: #{vit_forward.1} parent=11 // pred_check_branch
          %323 = sbr.rel (%p321) target = $region28
        $region27: #{vit_forward.1} parent=11 // pred_region
          _
        $region28: #{vit_forward.1} parent=11 // pred_fallthru
          _
      $region12: #{vit_forward.1} parent=5 // pred_fallthru
        _
      %p324 = scmp.lt.s32.totalorder %s19, 4
      // Predicated region
      $region29: #{vit_forward.1} parent=5 // pred_check
        %p325 = pneg %p324
      $region30: #{vit_forward.1} parent=5 // pred_check_branch
        %327 = sbr.rel (%p325) target = $region32
      $region31: #{vit_forward.1} parent=5 // pred_region
        // Predicated region
        $region33: #{vit_forward.1} parent=31 // pred_check
          %p328 = pneg %p51
        $region34: #{vit_forward.1} parent=31 // pred_check_branch
          %330 = sbr.rel (%p328) target = $region36
        $region35: #{vit_forward.1} parent=31 // pred_region
          %s331 = smul.u32 8, %s26
          %p332 = scmp.lt.s32.totalorder %s331, 15
          %s333 = scalar_select %p332, %s331, 15
          %s334 = smul.addr %s333, 6
          %s335 = smul.addr %s334, 4
          %s336 = scalar_lea.vmem %s0, %s335
          %s337 = smul.u32 8, %s26
        $region36: #{vit_forward.1} parent=31 // pred_fallthru
          _
        // Predicated region
        $region37: #{vit_forward.1} parent=31 // pred_check
          %p338 = pneg %p119
        $region38: #{vit_forward.1} parent=31 // pred_check_branch
          %340 = sbr.rel (%p338) target = $region40
        $region39: #{vit_forward.1} parent=31 // pred_region
          %p341 = scmp.lt.s32.totalorder %s27, 1
          %s342 = scalar_select %p341, %s27, 1
          %s343 = smul.addr %s342, 48
          %s344 = smul.addr %s343, 4
          %s345 = scalar_lea.vmem %s3, %s344
        $region40: #{vit_forward.1} parent=31 // pred_fallthru
          _
        // Predicated region
        $region41: #{vit_forward.1} parent=31 // pred_check
          %p346 = pneg %p145
        $region42: #{vit_forward.1} parent=31 // pred_check_branch
          %348 = sbr.rel (%p346) target = $region44
        $region43: #{vit_forward.1} parent=31 // pred_region
          %p349 = scmp.lt.s32.totalorder %s27, 1
          %s350 = scalar_select %p349, %s27, 1
          %s351 = smul.addr %s350, 16
          %s352 = smul.addr %s351, 4
          %s353 = scalar_lea.vmem %s4, %s352
        $region44: #{vit_forward.1} parent=31 // pred_fallthru
          _
        // Predicated region
        $region45: #{vit_forward.1} parent=31 // pred_check
          %p354 = pneg %p171
        $region46: #{vit_forward.1} parent=31 // pred_check_branch
          %356 = sbr.rel (%p354) target = $region48
        $region47: #{vit_forward.1} parent=31 // pred_region
          %p357 = scmp.lt.s32.totalorder %s27, 1
          %s358 = scalar_select %p357, %s27, 1
          %s359 = smul.addr %s358, 32
          %s360 = smul.addr %s359, 4
          %s361 = scalar_lea.vmem %s5, %s360
        $region48: #{vit_forward.1} parent=31 // pred_fallthru
          _
        // Predicated region
        $region49: #{vit_forward.1} parent=31 // pred_check
          %p362 = pneg %p197
        $region50: #{vit_forward.1} parent=31 // pred_check_branch
          %364 = sbr.rel (%p362) target = $region52
        $region51: #{vit_forward.1} parent=31 // pred_region
          %p365 = scmp.lt.s32.totalorder %s27, 1
          %s366 = scalar_select %p365, %s27, 1
          %s367 = smul.addr %s366, 32
          %s368 = smul.addr %s367, 4
          %s369 = scalar_lea.vmem %s6, %s368
        $region52: #{vit_forward.1} parent=31 // pred_fallthru
          _
        // Predicated region
        $region53: #{vit_forward.1} parent=31 // pred_check
          %p370 = pneg %p223
        $region54: #{vit_forward.1} parent=31 // pred_check_branch
          %372 = sbr.rel (%p370) target = $region56
        $region55: #{vit_forward.1} parent=31 // pred_region
          %p373 = scmp.lt.s32.totalorder %s27, 1
          %s374 = scalar_select %p373, %s27, 1
          %s375 = smul.addr %s374, 3
          %s376 = smul.addr %s375, 8
          %s377 = scalar_lea.vmem %s7, %s376
        $region56: #{vit_forward.1} parent=31 // pred_fallthru
          _
      $region32: #{vit_forward.1} parent=5 // pred_fallthru
        _
      %p378 = scmp.le.s32.totalorder 1, %s19
      %p379 = scmp.lt.s32.totalorder %s19, 5
      %p380 = pnand %p378, %p379
      %p381 = pneg %p380
      // Predicated region
      $region57: #{vit_forward.1} parent=5 // pred_check
        _
      $region58: #{vit_forward.1} parent=5 // pred_check_branch
        %383 = sbr.rel (%p380) target = $region60
      $region59: #{vit_forward.1} parent=5 // pred_region
        %s384 = ssub.s32 %s19, 1
        %s385 = smul.u32 8, %s28
        %p386 = scmp.lt.s32.totalorder %s385, 15
        %s387 = scalar_select %p386, %s385, 15
        %s388 = smul.addr %s387, 6
        %s389 = smul.addr %s388, 4
        %s390 = scalar_lea.vmem %s0, %s389
        %p391 = pneg %p57
        %p392 = pneg %p54
        %p393 = pneg %p78
        %p394 = pneg %p75
        %p395 = pneg %p99
        %p396 = pneg %p96
        %p397 = scmp.lt.s32.totalorder %s29, 1
        %s398 = scalar_select %p397, %s29, 1
        %s399 = smul.addr %s398, 48
        %s400 = smul.addr %s399, 4
        %s401 = scalar_lea.vmem %s3, %s400
        %p402 = pneg %p125
        %p403 = pneg %p122
        %p404 = scmp.lt.s32.totalorder %s29, 1
        %s405 = scalar_select %p404, %s29, 1
        %s406 = smul.addr %s405, 16
        %s407 = smul.addr %s406, 4
        %s408 = scalar_lea.vmem %s4, %s407
        %p409 = pneg %p151
        %p410 = pneg %p148
        %p411 = scmp.lt.s32.totalorder %s29, 1
        %s412 = scalar_select %p411, %s29, 1
        %s413 = smul.addr %s412, 32
        %s414 = smul.addr %s413, 4
        %s415 = scalar_lea.vmem %s5, %s414
        %p416 = pneg %p177
        %p417 = pneg %p174
        %p418 = scmp.lt.s32.totalorder %s29, 1
        %s419 = scalar_select %p418, %s29, 1
        %s420 = smul.addr %s419, 32
        %s421 = smul.addr %s420, 4
        %s422 = scalar_lea.vmem %s6, %s421
        %p423 = pneg %p203
        %p424 = pneg %p200
        %p425 = scmp.lt.s32.totalorder %s29, 1
        %s426 = scalar_select %p425, %s29, 1
        %s427 = smul.addr %s426, 3
        %s428 = smul.addr %s427, 8
        %s429 = scalar_lea.vmem %s7, %s428
        %p430 = pneg %p229
        %p431 = pneg %p226
        %p432 = pneg %p250
        %p433 = pneg %p247
        %p434 = pneg %p271
        %p435 = pneg %p268
        %p436 = pneg %p297
        %p437 = pneg %p294
        %s438 = sand.u32 %s284, 1
        %s439 = scalar_lea.sflag [#allocation4], %s438
        %s440 = sand.u32 %s284, 1
        %s441 = smul.addr %s440, 8
        %s442 = scalar_lea.vmem [#allocation3], %s441
        %s443 = smul.u32 8, %s28
        %p444 = scmp.lt.s32.totalorder %s443, 15
        %s445 = scalar_select %p444, %s443, 15
        %s446 = smul.addr %s445, 6
        %s447 = smul.addr %s446, 4
        %s448 = scalar_lea.vmem %s0, %s447
        %s449 = smul.u32 8, %s28
        %p450 = scmp.lt.s32.totalorder %s29, 1
        %s451 = scalar_select %p450, %s29, 1
        %s452 = smul.addr %s451, 48
        %s453 = smul.addr %s452, 4
        %s454 = scalar_lea.vmem %s3, %s453
        %p455 = scmp.lt.s32.totalorder %s29, 1
        %s456 = scalar_select %p455, %s29, 1
        %s457 = smul.addr %s456, 16
        %s458 = smul.addr %s457, 4
        %s459 = scalar_lea.vmem %s4, %s458
        %p460 = scmp.lt.s32.totalorder %s29, 1
        %s461 = scalar_select %p460, %s29, 1
        %s462 = smul.addr %s461, 32
        %s463 = smul.addr %s462, 4
        %s464 = scalar_lea.vmem %s5, %s463
        %p465 = scmp.lt.s32.totalorder %s29, 1
        %s466 = scalar_select %p465, %s29, 1
        %s467 = smul.addr %s466, 32
        %s468 = smul.addr %s467, 4
        %s469 = scalar_lea.vmem %s6, %s468
        %p470 = scmp.lt.s32.totalorder %s29, 1
        %s471 = scalar_select %p470, %s29, 1
        %s472 = smul.addr %s471, 3
        %s473 = smul.addr %s472, 8
        %s474 = scalar_lea.vmem %s7, %s473
        %p476 = scmp.eq.s32.totalorder %s29, 0
        // Predicated region
        $region61: #{vit_forward.1} parent=59 // pred_check
          %p477 = pneg %p476
        $region62: #{vit_forward.1} parent=59 // pred_check_branch
          %479 = sbr.rel (%p477) target = $region64
        $region63: #{vit_forward.1} parent=59 // pred_region
          %v480 = vld [vmem:[%s448] sm:$0xff]
          %v481 = vld [vmem:[%s448 + $0x8] sm:$0xff]
          %v482 = vld [vmem:[%s448 + $0x10] sm:$0xff]
          %v483 = vld [vmem:[%s448 + $0x18] sm:$0xff]
          %v484 = vld [vmem:[%s448 + $0x20] sm:$0xff]
          %v485 = vld [vmem:[%s448 + $0x28] sm:$0xff]
          %v486 = vld [vmem:[%s448 + $0x30] sm:$0xff]
          %v487 = vld [vmem:[%s448 + $0x38] sm:$0xff]
          %v488 = vld [vmem:[%s448 + $0x40] sm:$0xff]
          %v489 = vld [vmem:[%s448 + $0x48] sm:$0xff]
          %v490 = vld [vmem:[%s448 + $0x50] sm:$0xff]
          %v491 = vld [vmem:[%s448 + $0x58] sm:$0xff]
          %v492 = vld [vmem:[%s448 + $0x60] sm:$0xff]
          %v493 = vld [vmem:[%s448 + $0x68] sm:$0xff]
          %v494 = vld [vmem:[%s448 + $0x70] sm:$0xff]
          %v495 = vld [vmem:[%s448 + $0x78] sm:$0xff]
          %v496 = vld [vmem:[%s448 + $0x80] sm:$0xff]
          %v497 = vld [vmem:[%s448 + $0x88] sm:$0xff]
          %v498 = vld [vmem:[%s448 + $0x90] sm:$0xff]
          %v499 = vld [vmem:[%s448 + $0x98] sm:$0xff]
          %v500 = vld [vmem:[%s448 + $0xa0] sm:$0xff]
          %v501 = vld [vmem:[%s448 + $0xa8] sm:$0xff]
          %v502 = vld [vmem:[%s448 + $0xb0] sm:$0xff]
          %v503 = vld [vmem:[%s448 + $0xb8] sm:$0xff]
          %v504 = vld [vmem:[%s1] sm:$0xf]
          %v505 = vld [vmem:[%s1 + $0x4] sm:$0xf]
          %v506 = vld [vmem:[%s1 + $0x8] sm:$0xf]
          %v507 = vld [vmem:[%s1 + $0xc] sm:$0xf]
          %v508 = vld [vmem:[%s1 + $0x10] sm:$0xf]
          %v509 = vld [vmem:[%s1 + $0x14] sm:$0xf]
          %v510 = vld [vmem:[%s1 + $0x18] sm:$0xf]
          %v511 = vld [vmem:[%s1 + $0x1c] sm:$0xf]
          %v512 = vld [vmem:[%s1 + $0x20] sm:$0xf]
          %v513 = vld [vmem:[%s1 + $0x24] sm:$0xf]
          %v514 = vld [vmem:[%s1 + $0x28] sm:$0xf]
          %v515 = vld [vmem:[%s1 + $0x2c] sm:$0xf]
          %v516 = vld [vmem:[%s1 + $0x30] sm:$0xf]
          %v517 = vld [vmem:[%s1 + $0x34] sm:$0xf]
          %v518 = vld [vmem:[%s1 + $0x38] sm:$0xf]
          %v519 = vld [vmem:[%s1 + $0x3c] sm:$0xf]
          %v520 = vld [vmem:[%s1 + $0x40] sm:$0xf]
          %v521 = vld [vmem:[%s1 + $0x44] sm:$0xf]
          %v522 = vld [vmem:[%s1 + $0x48] sm:$0xf]
          %v523 = vld [vmem:[%s1 + $0x4c] sm:$0xf]
          %v524 = vld [vmem:[%s1 + $0x50] sm:$0xf]
          %v525 = vld [vmem:[%s1 + $0x54] sm:$0xf]
          %v526 = vld [vmem:[%s1 + $0x58] sm:$0xf]
          %v527 = vld [vmem:[%s1 + $0x5c] sm:$0xf]
          %v528 = vld [vmem:[%s1 + $0x60] sm:$0xf]
          %v529 = vld [vmem:[%s1 + $0x64] sm:$0xf]
          %v530 = vld [vmem:[%s1 + $0x68] sm:$0xf]
          %v531 = vld [vmem:[%s1 + $0x6c] sm:$0xf]
          %v532 = vld [vmem:[%s1 + $0x70] sm:$0xf]
          %v533 = vld [vmem:[%s1 + $0x74] sm:$0xf]
          %v534 = vld [vmem:[%s1 + $0x78] sm:$0xf]
          %v535 = vld [vmem:[%s1 + $0x7c] sm:$0xf]
          %v536 = vld [vmem:[%s1 + $0x80] sm:$0xf]
          %v537 = vld [vmem:[%s1 + $0x84] sm:$0xf]
          %v538 = vld [vmem:[%s1 + $0x88] sm:$0xf]
          %v539 = vld [vmem:[%s1 + $0x8c] sm:$0xf]
          %v540 = vld [vmem:[%s1 + $0x90] sm:$0xf]
          %v541 = vld [vmem:[%s1 + $0x94] sm:$0xf]
          %v542 = vld [vmem:[%s1 + $0x98] sm:$0xf]
          %v543 = vld [vmem:[%s1 + $0x9c] sm:$0xf]
          %v544 = vld [vmem:[%s1 + $0xa0] sm:$0xf]
          %v545 = vld [vmem:[%s1 + $0xa4] sm:$0xf]
          %v546 = vld [vmem:[%s1 + $0xa8] sm:$0xf]
          %v547 = vld [vmem:[%s1 + $0xac] sm:$0xf]
          %v548 = vld [vmem:[%s1 + $0xb0] sm:$0xf]
          %v549 = vld [vmem:[%s1 + $0xb4] sm:$0xf]
          %v550 = vld [vmem:[%s1 + $0xb8] sm:$0xf]
          %v551 = vld [vmem:[%s1 + $0xbc] sm:$0xf]
          %v552 = vld [vmem:[%s1 + $0xc0] sm:$0xf]
          %v553 = vld [vmem:[%s1 + $0xc4] sm:$0xf]
          %v554 = vld [vmem:[%s1 + $0xc8] sm:$0xf]
          %v555 = vld [vmem:[%s1 + $0xcc] sm:$0xf]
          %v556 = vld [vmem:[%s1 + $0xd0] sm:$0xf]
          %v557 = vld [vmem:[%s1 + $0xd4] sm:$0xf]
          %v558 = vld [vmem:[%s1 + $0xd8] sm:$0xf]
          %v559 = vld [vmem:[%s1 + $0xdc] sm:$0xf]
          %v560 = vld [vmem:[%s1 + $0xe0] sm:$0xf]
          %v561 = vld [vmem:[%s1 + $0xe4] sm:$0xf]
          %v562 = vld [vmem:[%s1 + $0xe8] sm:$0xf]
          %v563 = vld [vmem:[%s1 + $0xec] sm:$0xf]
          %v564 = vld [vmem:[%s1 + $0xf0] sm:$0xf]
          %v565 = vld [vmem:[%s1 + $0xf4] sm:$0xf]
          %v566 = vld [vmem:[%s1 + $0xf8] sm:$0xf]
          %v567 = vld [vmem:[%s1 + $0xfc] sm:$0xf]
          %v568 = vld [vmem:[%s1 + $0x100] sm:$0xf]
          %v569 = vld [vmem:[%s1 + $0x104] sm:$0xf]
          %v570 = vld [vmem:[%s1 + $0x108] sm:$0xf]
          %v571 = vld [vmem:[%s1 + $0x10c] sm:$0xf]
          %v572 = vld [vmem:[%s1 + $0x110] sm:$0xf]
          %v573 = vld [vmem:[%s1 + $0x114] sm:$0xf]
          %v574 = vld [vmem:[%s1 + $0x118] sm:$0xf]
          %v575 = vld [vmem:[%s1 + $0x11c] sm:$0xf]
          %v576 = vld [vmem:[%s1 + $0x120] sm:$0xf]
          %v577 = vld [vmem:[%s1 + $0x124] sm:$0xf]
          %v578 = vld [vmem:[%s1 + $0x128] sm:$0xf]
          %v579 = vld [vmem:[%s1 + $0x12c] sm:$0xf]
          %v580 = vld [vmem:[%s1 + $0x130] sm:$0xf]
          %v581 = vld [vmem:[%s1 + $0x134] sm:$0xf]
          %v582 = vld [vmem:[%s1 + $0x138] sm:$0xf]
          %v583 = vld [vmem:[%s1 + $0x13c] sm:$0xf]
          %v584 = vld [vmem:[%s1 + $0x140] sm:$0xf]
          %v585 = vld [vmem:[%s1 + $0x144] sm:$0xf]
          %v586 = vld [vmem:[%s1 + $0x148] sm:$0xf]
          %v587 = vld [vmem:[%s1 + $0x14c] sm:$0xf]
          %v588 = vld [vmem:[%s1 + $0x150] sm:$0xf]
          %v589 = vld [vmem:[%s1 + $0x154] sm:$0xf]
          %v590 = vld [vmem:[%s1 + $0x158] sm:$0xf]
          %v591 = vld [vmem:[%s1 + $0x15c] sm:$0xf]
          %v592 = vld [vmem:[%s1 + $0x160] sm:$0xf]
          %v593 = vld [vmem:[%s1 + $0x164] sm:$0xf]
          %v594 = vld [vmem:[%s1 + $0x168] sm:$0xf]
          %v595 = vld [vmem:[%s1 + $0x16c] sm:$0xf]
          %v596 = vld [vmem:[%s1 + $0x170] sm:$0xf]
          %v597 = vld [vmem:[%s1 + $0x174] sm:$0xf]
          %v598 = vld [vmem:[%s1 + $0x178] sm:$0xf]
          %v599 = vld [vmem:[%s1 + $0x17c] sm:$0xf]
          %v624 = vunpack.c.l.b16 %v480
          %v625 = vunpack.c.h.b16 %v480
          %v626 = vunpack.c.l.b16 %v481
          %v627 = vunpack.c.h.b16 %v481
          %v628 = vunpack.c.l.b16 %v482
          %v629 = vunpack.c.h.b16 %v482
          %v630 = vunpack.c.l.b16 %v483
          %v631 = vunpack.c.h.b16 %v483
          %v632 = vunpack.c.l.b16 %v484
          %v633 = vunpack.c.h.b16 %v484
          %v634 = vunpack.c.l.b16 %v485
          %v635 = vunpack.c.h.b16 %v485
          %v636 = vunpack.c.l.b16 %v486
          %v637 = vunpack.c.h.b16 %v486
          %v638 = vunpack.c.l.b16 %v487
          %v639 = vunpack.c.h.b16 %v487
          %v640 = vunpack.c.l.b16 %v488
          %v641 = vunpack.c.h.b16 %v488
          %v642 = vunpack.c.l.b16 %v489
          %v643 = vunpack.c.h.b16 %v489
          %v644 = vunpack.c.l.b16 %v490
          %v645 = vunpack.c.h.b16 %v490
          %v646 = vunpack.c.l.b16 %v491
          %v647 = vunpack.c.h.b16 %v491
          %v648 = vunpack.c.l.b16 %v492
          %v649 = vunpack.c.h.b16 %v492
          %v650 = vunpack.c.l.b16 %v493
          %v651 = vunpack.c.h.b16 %v493
          %v652 = vunpack.c.l.b16 %v494
          %v653 = vunpack.c.h.b16 %v494
          %v654 = vunpack.c.l.b16 %v495
          %v655 = vunpack.c.h.b16 %v495
          %v656 = vunpack.c.l.b16 %v496
          %v657 = vunpack.c.h.b16 %v496
          %v658 = vunpack.c.l.b16 %v497
          %v659 = vunpack.c.h.b16 %v497
          %v660 = vunpack.c.l.b16 %v498
          %v661 = vunpack.c.h.b16 %v498
          %v662 = vunpack.c.l.b16 %v499
          %v663 = vunpack.c.h.b16 %v499
          %v664 = vunpack.c.l.b16 %v500
          %v665 = vunpack.c.h.b16 %v500
          %v666 = vunpack.c.l.b16 %v501
          %v667 = vunpack.c.h.b16 %v501
          %v668 = vunpack.c.l.b16 %v502
          %v669 = vunpack.c.h.b16 %v502
          %v670 = vunpack.c.l.b16 %v503
          %v671 = vunpack.c.h.b16 %v503
          %v672 = vpack.c.b16 %v630, %v624
          %v673 = vpack.c.b16 %v631, %v625
          %v674 = vpack.c.b16 %v632, %v626
          %v675 = vpack.c.b16 %v633, %v627
          %v676 = vpack.c.b16 %v634, %v628
          %v677 = vpack.c.b16 %v635, %v629
          %v678 = vpack.c.b16 %v642, %v636
          %v679 = vpack.c.b16 %v643, %v637
          %v680 = vpack.c.b16 %v644, %v638
          %v681 = vpack.c.b16 %v645, %v639
          %v682 = vpack.c.b16 %v646, %v640
          %v683 = vpack.c.b16 %v647, %v641
          %v684 = vpack.c.b16 %v654, %v648
          %v685 = vpack.c.b16 %v655, %v649
          %v686 = vpack.c.b16 %v656, %v650
          %v687 = vpack.c.b16 %v657, %v651
          %v688 = vpack.c.b16 %v658, %v652
          %v689 = vpack.c.b16 %v659, %v653
          %v690 = vpack.c.b16 %v666, %v660
          %v691 = vpack.c.b16 %v667, %v661
          %v692 = vpack.c.b16 %v668, %v662
          %v693 = vpack.c.b16 %v669, %v663
          %v694 = vpack.c.b16 %v670, %v664
          %v695 = vpack.c.b16 %v671, %v665
          %v816 = vunpack.c.l.b16 %v504
          %v817 = vunpack.c.l.b16 %v505
          %v818 = vunpack.c.l.b16 %v506
          %v819 = vunpack.c.l.b16 %v507
          %v820 = vunpack.c.l.b16 %v508
          %v821 = vunpack.c.l.b16 %v509
          %v822 = vunpack.c.l.b16 %v510
          %v823 = vunpack.c.l.b16 %v511
          %v824 = vunpack.c.l.b16 %v512
          %v825 = vunpack.c.l.b16 %v513
          %v826 = vunpack.c.l.b16 %v514
          %v827 = vunpack.c.l.b16 %v515
          %v828 = vunpack.c.l.b16 %v516
          %v829 = vunpack.c.l.b16 %v517
          %v830 = vunpack.c.l.b16 %v518
          %v831 = vunpack.c.l.b16 %v519
          %v832 = vunpack.c.l.b16 %v520
          %v833 = vunpack.c.l.b16 %v521
          %v834 = vunpack.c.l.b16 %v522
          %v835 = vunpack.c.l.b16 %v523
          %v836 = vunpack.c.l.b16 %v524
          %v837 = vunpack.c.l.b16 %v525
          %v838 = vunpack.c.l.b16 %v526
          %v839 = vunpack.c.l.b16 %v527
          %v840 = vunpack.c.l.b16 %v528
          %v841 = vunpack.c.l.b16 %v529
          %v842 = vunpack.c.l.b16 %v530
          %v843 = vunpack.c.l.b16 %v531
          %v844 = vunpack.c.l.b16 %v532
          %v845 = vunpack.c.l.b16 %v533
          %v846 = vunpack.c.l.b16 %v534
          %v847 = vunpack.c.l.b16 %v535
          %v848 = vunpack.c.l.b16 %v536
          %v849 = vunpack.c.l.b16 %v537
          %v850 = vunpack.c.l.b16 %v538
          %v851 = vunpack.c.l.b16 %v539
          %v852 = vunpack.c.l.b16 %v540
          %v853 = vunpack.c.l.b16 %v541
          %v854 = vunpack.c.l.b16 %v542
          %v855 = vunpack.c.l.b16 %v543
          %v856 = vunpack.c.l.b16 %v544
          %v857 = vunpack.c.l.b16 %v545
          %v858 = vunpack.c.l.b16 %v546
          %v859 = vunpack.c.l.b16 %v547
          %v860 = vunpack.c.l.b16 %v548
          %v861 = vunpack.c.l.b16 %v549
          %v862 = vunpack.c.l.b16 %v550
          %v863 = vunpack.c.l.b16 %v551
          %v864 = vunpack.c.l.b16 %v552
          %v865 = vunpack.c.l.b16 %v553
          %v866 = vunpack.c.l.b16 %v554
          %v867 = vunpack.c.l.b16 %v555
          %v868 = vunpack.c.l.b16 %v556
          %v869 = vunpack.c.l.b16 %v557
          %v870 = vunpack.c.l.b16 %v558
          %v871 = vunpack.c.l.b16 %v559
          %v872 = vunpack.c.l.b16 %v560
          %v873 = vunpack.c.l.b16 %v561
          %v874 = vunpack.c.l.b16 %v562
          %v875 = vunpack.c.l.b16 %v563
          %v876 = vunpack.c.l.b16 %v564
          %v877 = vunpack.c.l.b16 %v565
          %v878 = vunpack.c.l.b16 %v566
          %v879 = vunpack.c.l.b16 %v567
          %v880 = vunpack.c.l.b16 %v568
          %v881 = vunpack.c.l.b16 %v569
          %v882 = vunpack.c.l.b16 %v570
          %v883 = vunpack.c.l.b16 %v571
          %v884 = vunpack.c.l.b16 %v572
          %v885 = vunpack.c.l.b16 %v573
          %v886 = vunpack.c.l.b16 %v574
          %v887 = vunpack.c.l.b16 %v575
          %v888 = vunpack.c.l.b16 %v576
          %v889 = vunpack.c.l.b16 %v577
          %v890 = vunpack.c.l.b16 %v578
          %v891 = vunpack.c.l.b16 %v579
          %v892 = vunpack.c.l.b16 %v580
          %v893 = vunpack.c.l.b16 %v581
          %v894 = vunpack.c.l.b16 %v582
          %v895 = vunpack.c.l.b16 %v583
          %v896 = vunpack.c.l.b16 %v584
          %v897 = vunpack.c.l.b16 %v585
          %v898 = vunpack.c.l.b16 %v586
          %v899 = vunpack.c.l.b16 %v587
          %v900 = vunpack.c.l.b16 %v588
          %v901 = vunpack.c.l.b16 %v589
          %v902 = vunpack.c.l.b16 %v590
          %v903 = vunpack.c.l.b16 %v591
          %v904 = vunpack.c.l.b16 %v592
          %v905 = vunpack.c.l.b16 %v593
          %v906 = vunpack.c.l.b16 %v594
          %v907 = vunpack.c.l.b16 %v595
          %v908 = vunpack.c.l.b16 %v596
          %v909 = vunpack.c.l.b16 %v597
          %v910 = vunpack.c.l.b16 %v598
          %v911 = vunpack.c.l.b16 %v599
          %v912 = vpack.c.b16 %v817, %v816
          %v913 = vpack.c.b16 %v819, %v818
          %v914 = vpack.c.b16 %v821, %v820
          %v915 = vpack.c.b16 %v823, %v822
          %v916 = vpack.c.b16 %v825, %v824
          %v917 = vpack.c.b16 %v827, %v826
          %v918 = vpack.c.b16 %v829, %v828
          %v919 = vpack.c.b16 %v831, %v830
          %v920 = vpack.c.b16 %v833, %v832
          %v921 = vpack.c.b16 %v835, %v834
          %v922 = vpack.c.b16 %v837, %v836
          %v923 = vpack.c.b16 %v839, %v838
          %v924 = vpack.c.b16 %v841, %v840
          %v925 = vpack.c.b16 %v843, %v842
          %v926 = vpack.c.b16 %v845, %v844
          %v927 = vpack.c.b16 %v847, %v846
          %v928 = vpack.c.b16 %v849, %v848
          %v929 = vpack.c.b16 %v851, %v850
          %v930 = vpack.c.b16 %v853, %v852
          %v931 = vpack.c.b16 %v855, %v854
          %v932 = vpack.c.b16 %v857, %v856
          %v933 = vpack.c.b16 %v859, %v858
          %v934 = vpack.c.b16 %v861, %v860
          %v935 = vpack.c.b16 %v863, %v862
          %v936 = vpack.c.b16 %v865, %v864
          %v937 = vpack.c.b16 %v867, %v866
          %v938 = vpack.c.b16 %v869, %v868
          %v939 = vpack.c.b16 %v871, %v870
          %v940 = vpack.c.b16 %v873, %v872
          %v941 = vpack.c.b16 %v875, %v874
          %v942 = vpack.c.b16 %v877, %v876
          %v943 = vpack.c.b16 %v879, %v878
          %v944 = vpack.c.b16 %v881, %v880
          %v945 = vpack.c.b16 %v883, %v882
          %v946 = vpack.c.b16 %v885, %v884
          %v947 = vpack.c.b16 %v887, %v886
          %v948 = vpack.c.b16 %v889, %v888
          %v949 = vpack.c.b16 %v891, %v890
          %v950 = vpack.c.b16 %v893, %v892
          %v951 = vpack.c.b16 %v895, %v894
          %v952 = vpack.c.b16 %v897, %v896
          %v953 = vpack.c.b16 %v899, %v898
          %v954 = vpack.c.b16 %v901, %v900
          %v955 = vpack.c.b16 %v903, %v902
          %v956 = vpack.c.b16 %v905, %v904
          %v957 = vpack.c.b16 %v907, %v906
          %v958 = vpack.c.b16 %v909, %v908
          %v959 = vpack.c.b16 %v911, %v910
          %1008 = vmatprep.subr.bf16.mxu0 0
          %1009 = vmatpush1.bf16.msra.mxu0 %v912
          %1010 = vmatprep.subr.bf16.mxu0 0
          %1011 = vmatpush1.bf16.msra.mxu0 %v913
          %1012 = vmatprep.subr.bf16.mxu0 0
          %1013 = vmatpush1.bf16.msra.mxu0 %v914
          %1014 = vmatprep.subr.bf16.mxu0 0
          %1015 = vmatpush1.bf16.msra.mxu0 %v915
          %1016 = vmatprep.subr.bf16.mxu0 0
          %1017 = vmatpush1.bf16.msra.mxu0 %v916
          %1018 = vmatprep.subr.bf16.mxu0 0
          %1019 = vmatpush1.bf16.msra.mxu0 %v917
          %1020 = vmatprep.subr.bf16.mxu0 0
          %1021 = vmatpush1.bf16.msra.mxu0 %v918
          %1022 = vmatprep.subr.bf16.mxu0 0
          %1023 = vmatpush1.bf16.msra.mxu0 %v919
          %1024 = vmatprep.subr.bf16.mxu0 0
          %1025 = vmatpush1.bf16.msra.mxu0 %v920
          %1026 = vmatprep.subr.bf16.mxu0 0
          %1027 = vmatpush1.bf16.msra.mxu0 %v921
          %1028 = vmatprep.subr.bf16.mxu0 0
          %1029 = vmatpush1.bf16.msra.mxu0 %v922
          %1030 = vmatprep.subr.bf16.mxu0 0
          %1031 = vmatpush1.bf16.msra.mxu0 %v923
          %1032 = vmatprep.subr.bf16.mxu0 0
          %1033 = vmatpush1.bf16.msra.mxu0 %v924
          %1034 = vmatprep.subr.bf16.mxu0 0
          %1035 = vmatpush1.bf16.msra.mxu0 %v925
          %1036 = vmatprep.subr.bf16.mxu0 0
          %1037 = vmatpush1.bf16.msra.mxu0 %v926
          %1038 = vmatprep.subr.bf16.mxu0 0
          %1039 = vmatpush1.bf16.msra.mxu0 %v927
          %1040 = vmatprep.mubr.bf16.mxu0 %v673
          %1041 = vmatmul.mubr.bf16.gmra.mrb[0].mxu0 %v672
          %v1042 = vpop.f32.mrb[0].mxu0
          %v1043 = vadd.f32 0.0, %v1042
          %v1044 = vpop.f32.mrb[0].mxu0
          %v1045 = vpop.f32.mrb[0].mxu0
          %v1046 = vadd.f32 0.0, %v1045
          %v1047 = vpop.f32.mrb[0].mxu0
          %1048 = vmatprep.mubr.bf16.mxu0 %v679
          %1049 = vmatmul.mubr.bf16.gmra.mrb[0].mxu0 %v678
          %v1050 = vpop.f32.mrb[0].mxu0
          %v1051 = vadd.f32 0.0, %v1050
          %v1052 = vpop.f32.mrb[0].mxu0
          %v1053 = vpop.f32.mrb[0].mxu0
          %v1054 = vadd.f32 0.0, %v1053
          %v1055 = vpop.f32.mrb[0].mxu0
          %1056 = vmatprep.mubr.bf16.mxu0 %v685
          %1057 = vmatmul.mubr.bf16.gmra.mrb[0].mxu0 %v684
          %v1058 = vpop.f32.mrb[0].mxu0
          %v1059 = vadd.f32 0.0, %v1058
          %v1060 = vpop.f32.mrb[0].mxu0
          %v1061 = vpop.f32.mrb[0].mxu0
          %v1062 = vadd.f32 0.0, %v1061
          %v1063 = vpop.f32.mrb[0].mxu0
          %1064 = vmatprep.mubr.bf16.mxu0 %v691
          %1065 = vmatmul.mubr.bf16.gmra.mrb[0].mxu0 %v690
          %v1066 = vpop.f32.mrb[0].mxu0
          %v1067 = vadd.f32 0.0, %v1066
          %v1068 = vpop.f32.mrb[0].mxu0
          %v1069 = vpop.f32.mrb[0].mxu0
          %v1070 = vadd.f32 0.0, %v1069
          %v1071 = vpop.f32.mrb[0].mxu0
          %1072 = vdwg.mxu0
          %1073 = vmatprep.subr.bf16.mxu0 0
          %1074 = vmatpush1.bf16.msra.mxu0 %v928
          %1075 = vmatprep.subr.bf16.mxu0 0
          %1076 = vmatpush1.bf16.msra.mxu0 %v929
          %1077 = vmatprep.subr.bf16.mxu0 0
          %1078 = vmatpush1.bf16.msra.mxu0 %v930
          %1079 = vmatprep.subr.bf16.mxu0 0
          %1080 = vmatpush1.bf16.msra.mxu0 %v931
          %1081 = vmatprep.subr.bf16.mxu0 0
          %1082 = vmatpush1.bf16.msra.mxu0 %v932
          %1083 = vmatprep.subr.bf16.mxu0 0
          %1084 = vmatpush1.bf16.msra.mxu0 %v933
          %1085 = vmatprep.subr.bf16.mxu0 0
          %1086 = vmatpush1.bf16.msra.mxu0 %v934
          %1087 = vmatprep.subr.bf16.mxu0 0
          %1088 = vmatpush1.bf16.msra.mxu0 %v935
          %1089 = vmatprep.subr.bf16.mxu0 0
          %1090 = vmatpush1.bf16.msra.mxu0 %v936
          %1091 = vmatprep.subr.bf16.mxu0 0
          %1092 = vmatpush1.bf16.msra.mxu0 %v937
          %1093 = vmatprep.subr.bf16.mxu0 0
          %1094 = vmatpush1.bf16.msra.mxu0 %v938
          %1095 = vmatprep.subr.bf16.mxu0 0
          %1096 = vmatpush1.bf16.msra.mxu0 %v939
          %1097 = vmatprep.subr.bf16.mxu0 0
          %1098 = vmatpush1.bf16.msra.mxu0 %v940
          %1099 = vmatprep.subr.bf16.mxu0 0
          %1100 = vmatpush1.bf16.msra.mxu0 %v941
          %1101 = vmatprep.subr.bf16.mxu0 0
          %1102 = vmatpush1.bf16.msra.mxu0 %v942
          %1103 = vmatprep.subr.bf16.mxu0 0
          %1104 = vmatpush1.bf16.msra.mxu0 %v943
          %1105 = vmatprep.mubr.bf16.mxu0 %v675
          %1106 = vmatmul.mubr.bf16.gmra.mrb[0].mxu0 %v674
          %v1107 = vpop.f32.mrb[0].mxu0
          %v1108 = vadd.f32 %v1043, %v1107
          %v1109 = vpop.f32.mrb[0].mxu0
          %v1110 = vpop.f32.mrb[0].mxu0
          %v1111 = vadd.f32 %v1046, %v1110
          %v1112 = vpop.f32.mrb[0].mxu0
          %1113 = vmatprep.mubr.bf16.mxu0 %v681
          %1114 = vmatmul.mubr.bf16.gmra.mrb[0].mxu0 %v680
          %v1115 = vpop.f32.mrb[0].mxu0
          %v1116 = vadd.f32 %v1051, %v1115
          %v1117 = vpop.f32.mrb[0].mxu0
          %v1118 = vpop.f32.mrb[0].mxu0
          %v1119 = vadd.f32 %v1054, %v1118
          %v1120 = vpop.f32.mrb[0].mxu0
          %1121 = vmatprep.mubr.bf16.mxu0 %v687
          %1122 = vmatmul.mubr.bf16.gmra.mrb[0].mxu0 %v686
          %v1123 = vpop.f32.mrb[0].mxu0
          %v1124 = vadd.f32 %v1059, %v1123
          %v1125 = vpop.f32.mrb[0].mxu0
          %v1126 = vpop.f32.mrb[0].mxu0
          %v1127 = vadd.f32 %v1062, %v1126
          %v1128 = vpop.f32.mrb[0].mxu0
          %1129 = vmatprep.mubr.bf16.mxu0 %v693
          %1130 = vmatmul.mubr.bf16.gmra.mrb[0].mxu0 %v692
          %v1131 = vpop.f32.mrb[0].mxu0
          %v1132 = vadd.f32 %v1067, %v1131
          %v1133 = vpop.f32.mrb[0].mxu0
          %v1134 = vpop.f32.mrb[0].mxu0
          %v1135 = vadd.f32 %v1070, %v1134
          %v1136 = vpop.f32.mrb[0].mxu0
          %1137 = vdwg.mxu0
          %1138 = vmatprep.subr.bf16.mxu0 0
          %1139 = vmatpush1.bf16.msra.mxu0 %v944
          %1140 = vmatprep.subr.bf16.mxu0 0
          %1141 = vmatpush1.bf16.msra.mxu0 %v945
          %1142 = vmatprep.subr.bf16.mxu0 0
          %1143 = vmatpush1.bf16.msra.mxu0 %v946
          %1144 = vmatprep.subr.bf16.mxu0 0
          %1145 = vmatpush1.bf16.msra.mxu0 %v947
          %1146 = vmatprep.subr.bf16.mxu0 0
          %1147 = vmatpush1.bf16.msra.mxu0 %v948
          %1148 = vmatprep.subr.bf16.mxu0 0
          %1149 = vmatpush1.bf16.msra.mxu0 %v949
          %1150 = vmatprep.subr.bf16.mxu0 0
          %1151 = vmatpush1.bf16.msra.mxu0 %v950
          %1152 = vmatprep.subr.bf16.mxu0 0
          %1153 = vmatpush1.bf16.msra.mxu0 %v951
          %1154 = vmatprep.subr.bf16.mxu0 0
          %1155 = vmatpush1.bf16.msra.mxu0 %v952
          %1156 = vmatprep.subr.bf16.mxu0 0
          %1157 = vmatpush1.bf16.msra.mxu0 %v953
          %1158 = vmatprep.subr.bf16.mxu0 0
          %1159 = vmatpush1.bf16.msra.mxu0 %v954
          %1160 = vmatprep.subr.bf16.mxu0 0
          %1161 = vmatpush1.bf16.msra.mxu0 %v955
          %1162 = vmatprep.subr.bf16.mxu0 0
          %1163 = vmatpush1.bf16.msra.mxu0 %v956
          %1164 = vmatprep.subr.bf16.mxu0 0
          %1165 = vmatpush1.bf16.msra.mxu0 %v957
          %1166 = vmatprep.subr.bf16.mxu0 0
          %1167 = vmatpush1.bf16.msra.mxu0 %v958
          %1168 = vmatprep.subr.bf16.mxu0 0
          %1169 = vmatpush1.bf16.msra.mxu0 %v959
          %1170 = vmatprep.mubr.bf16.mxu0 %v677
          %1171 = vmatmul.mubr.bf16.gmra.mrb[0].mxu0 %v676
          %v1172 = vpop.f32.mrb[0].mxu0
          %v1173 = vadd.f32 %v1108, %v1172
          %v1174 = vpop.f32.mrb[0].mxu0
          %v1175 = vpop.f32.mrb[0].mxu0
          %v1176 = vadd.f32 %v1111, %v1175
          %v1177 = vpop.f32.mrb[0].mxu0
          %1178 = vmatprep.mubr.bf16.mxu0 %v683
          %1179 = vmatmul.mubr.bf16.gmra.mrb[0].mxu0 %v682
          %v1180 = vpop.f32.mrb[0].mxu0
          %v1181 = vadd.f32 %v1116, %v1180
          %v1182 = vpop.f32.mrb[0].mxu0
          %v1183 = vpop.f32.mrb[0].mxu0
          %v1184 = vadd.f32 %v1119, %v1183
          %v1185 = vpop.f32.mrb[0].mxu0
          %1186 = vmatprep.mubr.bf16.mxu0 %v689
          %1187 = vmatmul.mubr.bf16.gmra.mrb[0].mxu0 %v688
          %v1188 = vpop.f32.mrb[0].mxu0
          %v1189 = vadd.f32 %v1124, %v1188
          %v1190 = vpop.f32.mrb[0].mxu0
          %v1191 = vpop.f32.mrb[0].mxu0
          %v1192 = vadd.f32 %v1127, %v1191
          %v1193 = vpop.f32.mrb[0].mxu0
          %1194 = vmatprep.mubr.bf16.mxu0 %v695
          %1195 = vmatmul.mubr.bf16.gmra.mrb[0].mxu0 %v694
          %v1196 = vpop.f32.mrb[0].mxu0
          %v1197 = vadd.f32 %v1132, %v1196
          %v1198 = vpop.f32.mrb[0].mxu0
          %v1199 = vpop.f32.mrb[0].mxu0
          %v1200 = vadd.f32 %v1135, %v1199
          %v1201 = vpop.f32.mrb[0].mxu0
          %1202 = vdwg.mxu0
          %v1203 = vld [vmem:[%s2] sm:$0xff]
          %v1204 = vld [vmem:[%s2 + $0x8] sm:$0xff]
          %v1205 = vld [vmem:[%s2 + $0x10] sm:$0xff]
          %v1206 = vld [vmem:[%s2 + $0x18] sm:$0xff]
          %v1207 = vld [vmem:[%s2 + $0x20] sm:$0xff]
          %v1208 = vld [vmem:[%s2 + $0x28] sm:$0xff]
          %v1209 = vld [vmem:[%s2 + $0x30] sm:$0xff]
          %v1210 = vld [vmem:[%s2 + $0x38] sm:$0xff]
          %v1211 = vadd.f32 %v1203, %v1173
          %v1212 = vadd.f32 %v1204, %v1176
          %v1213 = vadd.f32 %v1205, %v1181
          %v1214 = vadd.f32 %v1206, %v1184
          %v1215 = vadd.f32 %v1207, %v1189
          %v1216 = vadd.f32 %v1208, %v1192
          %v1217 = vadd.f32 %v1209, %v1197
          %v1218 = vadd.f32 %v1210, %v1200
          %1219 = vst [vmem:[#allocation2] sm:$0xff] %v1211
          %1220 = vst [vmem:[#allocation2 + $0x8] sm:$0xff] %v1212
          %1221 = vst [vmem:[#allocation2 + $0x10] sm:$0xff] %v1213
          %1222 = vst [vmem:[#allocation2 + $0x18] sm:$0xff] %v1214
          %1223 = vst [vmem:[#allocation2 + $0x20] sm:$0xff] %v1215
          %1224 = vst [vmem:[#allocation2 + $0x28] sm:$0xff] %v1216
          %1225 = vst [vmem:[#allocation2 + $0x30] sm:$0xff] %v1217
          %1226 = vst [vmem:[#allocation2 + $0x38] sm:$0xff] %v1218
        $region64: #{vit_forward.1} parent=59 // pred_fallthru
          _
        %v1227 = vld [vmem:[#allocation2] sm:$0xff]
        %v1228 = vld [vmem:[#allocation2 + $0x8] sm:$0xff]
        %v1229 = vld [vmem:[#allocation2 + $0x10] sm:$0xff]
        %v1230 = vld [vmem:[#allocation2 + $0x18] sm:$0xff]
        %v1231 = vld [vmem:[#allocation2 + $0x20] sm:$0xff]
        %v1232 = vld [vmem:[#allocation2 + $0x28] sm:$0xff]
        %v1233 = vld [vmem:[#allocation2 + $0x30] sm:$0xff]
        %v1234 = vld [vmem:[#allocation2 + $0x38] sm:$0xff]
        %v1235 = vld [vmem:[%s474] sm:$0xff]
        %v1236 = vld [vmem:[%s474 + $0x8] sm:$0xff]
        %v1237 = vld [vmem:[%s474 + $0x10] sm:$0xff]
        %1238 = vadd.xlane.f32.xlu0 %v1227
        %v1239 = vpop.xlane.xlu0 %1238
        %1240 = vadd.xlane.f32.xlu0 %v1228
        %v1241 = vpop.xlane.xlu0 %1240
        %1242 = vadd.xlane.f32.xlu0 %v1229
        %v1243 = vpop.xlane.xlu0 %1242
        %1244 = vadd.xlane.f32.xlu0 %v1230
        %v1245 = vpop.xlane.xlu0 %1244
        %1246 = vadd.xlane.f32.xlu0 %v1231
        %v1247 = vpop.xlane.xlu0 %1246
        %1248 = vadd.xlane.f32.xlu0 %v1232
        %v1249 = vpop.xlane.xlu0 %1248
        %1250 = vadd.xlane.f32.xlu0 %v1233
        %v1251 = vpop.xlane.xlu0 %1250
        %1252 = vadd.xlane.f32.xlu0 %v1234
        %v1253 = vpop.xlane.xlu0 %1252
        %v1254 = vrcp.pop 128.0
        %v1255 = vmul.f32 %v1239, %v1254
        %v1256 = vmul.f32 %v1241, %v1254
        %v1257 = vmul.f32 %v1243, %v1254
        %v1258 = vmul.f32 %v1245, %v1254
        %v1259 = vmul.f32 %v1247, %v1254
        %v1260 = vmul.f32 %v1249, %v1254
        %v1261 = vmul.f32 %v1251, %v1254
        %v1262 = vmul.f32 %v1253, %v1254
        %v1263 = vsub.f32 %v1227, %v1255
        %v1264 = vsub.f32 %v1228, %v1256
        %v1265 = vsub.f32 %v1229, %v1257
        %v1266 = vsub.f32 %v1230, %v1258
        %v1267 = vsub.f32 %v1231, %v1259
        %v1268 = vsub.f32 %v1232, %v1260
        %v1269 = vsub.f32 %v1233, %v1261
        %v1270 = vsub.f32 %v1234, %v1262
        %v1271 = vmul.f32 %v1263, %v1263
        %v1272 = vmul.f32 %v1264, %v1264
        %v1273 = vmul.f32 %v1265, %v1265
        %v1274 = vmul.f32 %v1266, %v1266
        %v1275 = vmul.f32 %v1267, %v1267
        %v1276 = vmul.f32 %v1268, %v1268
        %v1277 = vmul.f32 %v1269, %v1269
        %v1278 = vmul.f32 %v1270, %v1270
        %1279 = vadd.xlane.f32.xlu0 %v1271
        %v1280 = vpop.xlane.xlu0 %1279
        %1281 = vadd.xlane.f32.xlu0 %v1272
        %v1282 = vpop.xlane.xlu0 %1281
        %1283 = vadd.xlane.f32.xlu0 %v1273
        %v1284 = vpop.xlane.xlu0 %1283
        %1285 = vadd.xlane.f32.xlu0 %v1274
        %v1286 = vpop.xlane.xlu0 %1285
        %1287 = vadd.xlane.f32.xlu0 %v1275
        %v1288 = vpop.xlane.xlu0 %1287
        %1289 = vadd.xlane.f32.xlu0 %v1276
        %v1290 = vpop.xlane.xlu0 %1289
        %1291 = vadd.xlane.f32.xlu0 %v1277
        %v1292 = vpop.xlane.xlu0 %1291
        %1293 = vadd.xlane.f32.xlu0 %v1278
        %v1294 = vpop.xlane.xlu0 %1293
        %v1295 = vmul.f32 %v1280, %v1254
        %v1296 = vmul.f32 %v1282, %v1254
        %v1297 = vmul.f32 %v1284, %v1254
        %v1298 = vmul.f32 %v1286, %v1254
        %v1299 = vmul.f32 %v1288, %v1254
        %v1300 = vmul.f32 %v1290, %v1254
        %v1301 = vmul.f32 %v1292, %v1254
        %v1302 = vmul.f32 %v1294, %v1254
        %v1303 = vadd.f32 %v1295, 1e-06
        %v1304 = vadd.f32 %v1296, 1e-06
        %v1305 = vadd.f32 %v1297, 1e-06
        %v1306 = vadd.f32 %v1298, 1e-06
        %v1307 = vadd.f32 %v1299, 1e-06
        %v1308 = vadd.f32 %v1300, 1e-06
        %v1309 = vadd.f32 %v1301, 1e-06
        %v1310 = vadd.f32 %v1302, 1e-06
        %v1311 = vrsqrt.pop %v1303
        %v1312 = vrsqrt.pop %v1304
        %v1313 = vrsqrt.pop %v1305
        %v1314 = vrsqrt.pop %v1306
        %v1315 = vrsqrt.pop %v1307
        %v1316 = vrsqrt.pop %v1308
        %v1317 = vrsqrt.pop %v1309
        %v1318 = vrsqrt.pop %v1310
        %v1319 = vmul.f32 %v1263, %v1311
        %v1320 = vmul.f32 %v1264, %v1312
        %v1321 = vmul.f32 %v1265, %v1313
        %v1322 = vmul.f32 %v1266, %v1314
        %v1323 = vmul.f32 %v1267, %v1315
        %v1324 = vmul.f32 %v1268, %v1316
        %v1325 = vmul.f32 %v1269, %v1317
        %v1326 = vmul.f32 %v1270, %v1318
        %v1327 = vlaneseq
        %v1328 = vshrl.u32 %v1327, 7
        %v1329 = vsub.s32 0, %v1328
        %v1330 = vrot.slane %v1235, %v1329
        %v1331 = vmul.f32 %v1319, %v1330
        %v1332 = vmul.f32 %v1320, %v1330
        %v1333 = vmul.f32 %v1321, %v1330
        %v1334 = vmul.f32 %v1322, %v1330
        %v1335 = vmul.f32 %v1323, %v1330
        %v1336 = vmul.f32 %v1324, %v1330
        %v1337 = vmul.f32 %v1325, %v1330
        %v1338 = vmul.f32 %v1326, %v1330
        %v1339 = vlaneseq
        %v1340 = vshrl.u32 %v1339, 7
        %v1341 = vsub.s32 1, %v1340
        %v1342 = vrot.slane %v1235, %v1341
        %v1343 = vadd.f32 %v1331, %v1342
        %v1344 = vadd.f32 %v1332, %v1342
        %v1345 = vadd.f32 %v1333, %v1342
        %v1346 = vadd.f32 %v1334, %v1342
        %v1347 = vadd.f32 %v1335, %v1342
        %v1348 = vadd.f32 %v1336, %v1342
        %v1349 = vadd.f32 %v1337, %v1342
        %v1350 = vadd.f32 %v1338, %v1342
        %v1351 = vpack.c.bf16 %v1344, %v1343
        %v1352 = vpack.c.bf16 %v1346, %v1345
        %v1353 = vpack.c.bf16 %v1348, %v1347
        %v1354 = vpack.c.bf16 %v1350, %v1349
        %v1355 = vld [vmem:[%s454] sm:$0xff]
        %v1356 = vld [vmem:[%s454 + $0x8] sm:$0xf]
        %v1357 = vld [vmem:[%s454 + $0xc] sm:$0xff]
        %v1358 = vld [vmem:[%s454 + $0x14] sm:$0xf]
        %v1359 = vld [vmem:[%s454 + $0x18] sm:$0xff]
        %v1360 = vld [vmem:[%s454 + $0x20] sm:$0xf]
        %v1361 = vld [vmem:[%s454 + $0x24] sm:$0xff]
        %v1362 = vld [vmem:[%s454 + $0x2c] sm:$0xf]
        %v1363 = vld [vmem:[%s454 + $0x30] sm:$0xff]
        %v1364 = vld [vmem:[%s454 + $0x38] sm:$0xf]
        %v1365 = vld [vmem:[%s454 + $0x3c] sm:$0xff]
        %v1366 = vld [vmem:[%s454 + $0x44] sm:$0xf]
        %v1367 = vld [vmem:[%s454 + $0x48] sm:$0xff]
        %v1368 = vld [vmem:[%s454 + $0x50] sm:$0xf]
        %v1369 = vld [vmem:[%s454 + $0x54] sm:$0xff]
        %v1370 = vld [vmem:[%s454 + $0x5c] sm:$0xf]
        %v1371 = vld [vmem:[%s454 + $0x60] sm:$0xff]
        %v1372 = vld [vmem:[%s454 + $0x68] sm:$0xf]
        %v1373 = vld [vmem:[%s454 + $0x6c] sm:$0xff]
        %v1374 = vld [vmem:[%s454 + $0x74] sm:$0xf]
        %v1375 = vld [vmem:[%s454 + $0x78] sm:$0xff]
        %v1376 = vld [vmem:[%s454 + $0x80] sm:$0xf]
        %v1377 = vld [vmem:[%s454 + $0x84] sm:$0xff]
        %v1378 = vld [vmem:[%s454 + $0x8c] sm:$0xf]
        %v1379 = vld [vmem:[%s454 + $0x90] sm:$0xff]
        %v1380 = vld [vmem:[%s454 + $0x98] sm:$0xf]
        %v1381 = vld [vmem:[%s454 + $0x9c] sm:$0xff]
        %v1382 = vld [vmem:[%s454 + $0xa4] sm:$0xf]
        %v1383 = vld [vmem:[%s454 + $0xa8] sm:$0xff]
        %v1384 = vld [vmem:[%s454 + $0xb0] sm:$0xf]
        %v1385 = vld [vmem:[%s454 + $0xb4] sm:$0xff]
        %v1386 = vld [vmem:[%s454 + $0xbc] sm:$0xf]
        %v1387 = vlaneseq
        %v1388 = vshrl.u32 %v1387, 7
        %v1389 = vsub.s32 2, %v1388
        %v1390 = vrot.slane %v1235, %v1389
        %v1391 = vlaneseq
        %v1392 = vshrl.u32 %v1391, 7
        %v1393 = vsub.s32 2, %v1392
        %v1394 = vrot.slane %v1236, %v1393
        %v1395 = vlaneseq
        %v1396 = vshrl.u32 %v1395, 7
        %v1397 = vsub.s32 2, %v1396
        %v1398 = vrot.slane %v1237, %v1397
        %v1431 = vunpack.c.l.b16 %v1355
        %v1432 = vunpack.c.h.b16 %v1355
        %v1433 = vunpack.c.l.b16 %v1356
        %v1434 = vunpack.c.l.b16 %v1357
        %v1435 = vunpack.c.h.b16 %v1357
        %v1436 = vunpack.c.l.b16 %v1358
        %v1437 = vunpack.c.l.b16 %v1359
        %v1438 = vunpack.c.h.b16 %v1359
        %v1439 = vunpack.c.l.b16 %v1360
        %v1440 = vunpack.c.l.b16 %v1361
        %v1441 = vunpack.c.h.b16 %v1361
        %v1442 = vunpack.c.l.b16 %v1362
        %v1443 = vunpack.c.l.b16 %v1363
        %v1444 = vunpack.c.h.b16 %v1363
        %v1445 = vunpack.c.l.b16 %v1364
        %v1446 = vunpack.c.l.b16 %v1365
        %v1447 = vunpack.c.h.b16 %v1365
        %v1448 = vunpack.c.l.b16 %v1366
        %v1449 = vunpack.c.l.b16 %v1367
        %v1450 = vunpack.c.h.b16 %v1367
        %v1451 = vunpack.c.l.b16 %v1368
        %v1452 = vunpack.c.l.b16 %v1369
        %v1453 = vunpack.c.h.b16 %v1369
        %v1454 = vunpack.c.l.b16 %v1370
        %v1455 = vunpack.c.l.b16 %v1371
        %v1456 = vunpack.c.h.b16 %v1371
        %v1457 = vunpack.c.l.b16 %v1372
        %v1458 = vunpack.c.l.b16 %v1373
        %v1459 = vunpack.c.h.b16 %v1373
        %v1460 = vunpack.c.l.b16 %v1374
        %v1461 = vunpack.c.l.b16 %v1375
        %v1462 = vunpack.c.h.b16 %v1375
        %v1463 = vunpack.c.l.b16 %v1376
        %v1464 = vunpack.c.l.b16 %v1377
        %v1465 = vunpack.c.h.b16 %v1377
        %v1466 = vunpack.c.l.b16 %v1378
        %v1467 = vunpack.c.l.b16 %v1379
        %v1468 = vunpack.c.h.b16 %v1379
        %v1469 = vunpack.c.l.b16 %v1380
        %v1470 = vunpack.c.l.b16 %v1381
        %v1471 = vunpack.c.h.b16 %v1381
        %v1472 = vunpack.c.l.b16 %v1382
        %v1473 = vunpack.c.l.b16 %v1383
        %v1474 = vunpack.c.h.b16 %v1383
        %v1475 = vunpack.c.l.b16 %v1384
        %v1476 = vunpack.c.l.b16 %v1385
        %v1477 = vunpack.c.h.b16 %v1385
        %v1478 = vunpack.c.l.b16 %v1386
        %v1479 = vpack.c.b16 %v1434, %v1431
        %v1480 = vpack.c.b16 %v1435, %v1432
        %v1481 = vpack.c.b16 %v1436, %v1433
        %v1482 = vpack.c.b16 %v1440, %v1437
        %v1483 = vpack.c.b16 %v1441, %v1438
        %v1484 = vpack.c.b16 %v1442, %v1439
        %v1485 = vpack.c.b16 %v1446, %v1443
        %v1486 = vpack.c.b16 %v1447, %v1444
        %v1487 = vpack.c.b16 %v1448, %v1445
        %v1488 = vpack.c.b16 %v1452, %v1449
        %v1489 = vpack.c.b16 %v1453, %v1450
        %v1490 = vpack.c.b16 %v1454, %v1451
        %v1491 = vpack.c.b16 %v1458, %v1455
        %v1492 = vpack.c.b16 %v1459, %v1456
        %v1493 = vpack.c.b16 %v1460, %v1457
        %v1494 = vpack.c.b16 %v1464, %v1461
        %v1495 = vpack.c.b16 %v1465, %v1462
        %v1496 = vpack.c.b16 %v1466, %v1463
        %v1497 = vpack.c.b16 %v1470, %v1467
        %v1498 = vpack.c.b16 %v1471, %v1468
        %v1499 = vpack.c.b16 %v1472, %v1469
        %v1500 = vpack.c.b16 %v1476, %v1473
        %v1501 = vpack.c.b16 %v1477, %v1474
        %v1502 = vpack.c.b16 %v1478, %v1475
        %1527 = vmatprep.subr.bf16.mxu0 %v1480
        %1528 = vmatpush1.bf16.msra.mxu0 %v1479
        %1529 = vmatprep.subr.bf16.mxu0 %v1483
        %1530 = vmatpush1.bf16.msra.mxu0 %v1482
        %1531 = vmatprep.subr.bf16.mxu0 %v1486
        %1532 = vmatpush1.bf16.msra.mxu0 %v1485
        %1533 = vmatprep.subr.bf16.mxu0 %v1489
        %1534 = vmatpush1.bf16.msra.mxu0 %v1488
        %1535 = vmatprep.subr.bf16.mxu0 %v1492
        %1536 = vmatpush1.bf16.msra.mxu0 %v1491
        %1537 = vmatprep.subr.bf16.mxu0 %v1495
        %1538 = vmatpush1.bf16.msra.mxu0 %v1494
        %1539 = vmatprep.subr.bf16.mxu0 %v1498
        %1540 = vmatpush1.bf16.msra.mxu0 %v1497
        %1541 = vmatprep.subr.bf16.mxu0 %v1501
        %1542 = vmatpush1.bf16.msra.mxu0 %v1500
        %1543 = vmatprep.subr.bf16.mxu0 0
        %1544 = vmatpush1.bf16.msra.mxu0 0
        %1545 = vmatprep.subr.bf16.mxu0 0
        %1546 = vmatpush1.bf16.msra.mxu0 0
        %1547 = vmatprep.subr.bf16.mxu0 0
        %1548 = vmatpush1.bf16.msra.mxu0 0
        %1549 = vmatprep.subr.bf16.mxu0 0
        %1550 = vmatpush1.bf16.msra.mxu0 0
        %1551 = vmatprep.subr.bf16.mxu0 0
        %1552 = vmatpush1.bf16.msra.mxu0 0
        %1553 = vmatprep.subr.bf16.mxu0 0
        %1554 = vmatpush1.bf16.msra.mxu0 0
        %1555 = vmatprep.subr.bf16.mxu0 0
        %1556 = vmatpush1.bf16.msra.mxu0 0
        %1557 = vmatprep.subr.bf16.mxu0 0
        %1558 = vmatpush1.bf16.msra.mxu0 0
        %1559 = vmatprep.mubr.bf16.mxu0 0
        %1560 = vmatmul.mubr.bf16.gmra.mrb[0].mxu0 %v1351
        %v1561 = vpop.f32.mrb[0].mxu0
        %v1562 = vadd.f32 %v1390, %v1561
        %v1563 = vpop.f32.mrb[0].mxu0
        %v1564 = vadd.f32 %v1394, %v1563
        %v1565 = vpop.f32.mrb[0].mxu0
        %v1566 = vadd.f32 %v1390, %v1565
        %v1567 = vpop.f32.mrb[0].mxu0
        %v1568 = vadd.f32 %v1394, %v1567
        %1569 = vmatprep.mubr.bf16.mxu0 0
        %1570 = vmatmul.mubr.bf16.gmra.mrb[0].mxu0 %v1352
        %v1571 = vpop.f32.mrb[0].mxu0
        %v1572 = vadd.f32 %v1390, %v1571
        %v1573 = vpop.f32.mrb[0].mxu0
        %v1574 = vadd.f32 %v1394, %v1573
        %v1575 = vpop.f32.mrb[0].mxu0
        %v1576 = vadd.f32 %v1390, %v1575
        %v1577 = vpop.f32.mrb[0].mxu0
        %v1578 = vadd.f32 %v1394, %v1577
        %1579 = vmatprep.mubr.bf16.mxu0 0
        %1580 = vmatmul.mubr.bf16.gmra.mrb[0].mxu0 %v1353
        %v1581 = vpop.f32.mrb[0].mxu0
        %v1582 = vadd.f32 %v1390, %v1581
        %v1583 = vpop.f32.mrb[0].mxu0
        %v1584 = vadd.f32 %v1394, %v1583
        %v1585 = vpop.f32.mrb[0].mxu0
        %v1586 = vadd.f32 %v1390, %v1585
        %v1587 = vpop.f32.mrb[0].mxu0
        %v1588 = vadd.f32 %v1394, %v1587
        %1589 = vmatprep.mubr.bf16.mxu0 0
        %1590 = vmatmul.mubr.bf16.gmra.mrb[0].mxu0 %v1354
        %v1591 = vpop.f32.mrb[0].mxu0
        %v1592 = vadd.f32 %v1390, %v1591
        %v1593 = vpop.f32.mrb[0].mxu0
        %v1594 = vadd.f32 %v1394, %v1593
        %v1595 = vpop.f32.mrb[0].mxu0
        %v1596 = vadd.f32 %v1390, %v1595
        %v1597 = vpop.f32.mrb[0].mxu0
        %v1598 = vadd.f32 %v1394, %v1597
        %1599 = vdwg.mxu0
        %1600 = vmatprep.subr.bf16.mxu0 0
        %1601 = vmatpush1.bf16.msra.mxu0 %v1481
        %1602 = vmatprep.subr.bf16.mxu0 0
        %1603 = vmatpush1.bf16.msra.mxu0 %v1484
        %1604 = vmatprep.subr.bf16.mxu0 0
        %1605 = vmatpush1.bf16.msra.mxu0 %v1487
        %1606 = vmatprep.subr.bf16.mxu0 0
        %1607 = vmatpush1.bf16.msra.mxu0 %v1490
        %1608 = vmatprep.subr.bf16.mxu0 0
        %1609 = vmatpush1.bf16.msra.mxu0 %v1493
        %1610 = vmatprep.subr.bf16.mxu0 0
        %1611 = vmatpush1.bf16.msra.mxu0 %v1496
        %1612 = vmatprep.subr.bf16.mxu0 0
        %1613 = vmatpush1.bf16.msra.mxu0 %v1499
        %1614 = vmatprep.subr.bf16.mxu0 0
        %1615 = vmatpush1.bf16.msra.mxu0 %v1502
        %1616 = vmatprep.subr.bf16.mxu0 0
        %1617 = vmatpush1.bf16.msra.mxu0 0
        %1618 = vmatprep.subr.bf16.mxu0 0
        %1619 = vmatpush1.bf16.msra.mxu0 0
        %1620 = vmatprep.subr.bf16.mxu0 0
        %1621 = vmatpush1.bf16.msra.mxu0 0
        %1622 = vmatprep.subr.bf16.mxu0 0
        %1623 = vmatpush1.bf16.msra.mxu0 0
        %1624 = vmatprep.subr.bf16.mxu0 0
        %1625 = vmatpush1.bf16.msra.mxu0 0
        %1626 = vmatprep.subr.bf16.mxu0 0
        %1627 = vmatpush1.bf16.msra.mxu0 0
        %1628 = vmatprep.subr.bf16.mxu0 0
        %1629 = vmatpush1.bf16.msra.mxu0 0
        %1630 = vmatprep.subr.bf16.mxu0 0
        %1631 = vmatpush1.bf16.msra.mxu0 0
        %1632 = vmatprep.mubr.bf16.mxu0 0
        %1633 = vmatmul.mubr.bf16.gmra.mrb[0].mxu0 %v1351
        %v1634 = vpop.f32.mrb[0].mxu0
        %v1635 = vadd.f32 %v1398, %v1634
        %v1636 = vpop.f32.mrb[0].mxu0
        %v1637 = vpop.f32.mrb[0].mxu0
        %v1638 = vadd.f32 %v1398, %v1637
        %v1639 = vpop.f32.mrb[0].mxu0
        %1640 = vmatprep.mubr.bf16.mxu0 0
        %1641 = vmatmul.mubr.bf16.gmra.mrb[0].mxu0 %v1352
        %v1642 = vpop.f32.mrb[0].mxu0
        %v1643 = vadd.f32 %v1398, %v1642
        %v1644 = vpop.f32.mrb[0].mxu0
        %v1645 = vpop.f32.mrb[0].mxu0
        %v1646 = vadd.f32 %v1398, %v1645
        %v1647 = vpop.f32.mrb[0].mxu0
        %1648 = vmatprep.mubr.bf16.mxu0 0
        %1649 = vmatmul.mubr.bf16.gmra.mrb[0].mxu0 %v1353
        %v1650 = vpop.f32.mrb[0].mxu0
        %v1651 = vadd.f32 %v1398, %v1650
        %v1652 = vpop.f32.mrb[0].mxu0
        %v1653 = vpop.f32.mrb[0].mxu0
        %v1654 = vadd.f32 %v1398, %v1653
        %v1655 = vpop.f32.mrb[0].mxu0
        %1656 = vmatprep.mubr.bf16.mxu0 0
        %1657 = vmatmul.mubr.bf16.gmra.mrb[0].mxu0 %v1354
        %v1658 = vpop.f32.mrb[0].mxu0
        %v1659 = vadd.f32 %v1398, %v1658
        %v1660 = vpop.f32.mrb[0].mxu0
        %v1661 = vpop.f32.mrb[0].mxu0
        %v1662 = vadd.f32 %v1398, %v1661
        %v1663 = vpop.f32.mrb[0].mxu0
        %1664 = vdwg.mxu0
        %v1665 = vmul.f32 %v1562, 0.17677669
        %v1666 = vmul.f32 %v1566, 0.17677669
        %v1667 = vmul.f32 %v1572, 0.17677669
        %v1668 = vmul.f32 %v1576, 0.17677669
        %v1669 = vmul.f32 %v1582, 0.17677669
        %v1670 = vmul.f32 %v1586, 0.17677669
        %v1671 = vmul.f32 %v1592, 0.17677669
        %v1672 = vmul.f32 %v1596, 0.17677669
        %v1673 = vpack.c.bf16 %v1666, %v1665
        %v1674 = vpack.c.bf16 %v1668, %v1667
        %v1675 = vpack.c.bf16 %v1670, %v1669
        %v1676 = vpack.c.bf16 %v1672, %v1671
        %1681 = vrot.lane.b32.xlu0 %v1673, 96
        %v1682 = vpop.permute.xlu0 %1681
        %1683 = vrot.lane.b32.xlu0 %v1674, 96
        %v1684 = vpop.permute.xlu0 %1683
        %1685 = vrot.lane.b32.xlu0 %v1675, 96
        %v1686 = vpop.permute.xlu0 %1685
        %1687 = vrot.lane.b32.xlu0 %v1676, 96
        %v1688 = vpop.permute.xlu0 %1687
        %1689 = vrot.lane.b32.xlu0 %v1673, 64
        %v1690 = vpop.permute.xlu0 %1689
        %1691 = vrot.lane.b32.xlu0 %v1674, 64
        %v1692 = vpop.permute.xlu0 %1691
        %1693 = vrot.lane.b32.xlu0 %v1675, 64
        %v1694 = vpop.permute.xlu0 %1693
        %1695 = vrot.lane.b32.xlu0 %v1676, 64
        %v1696 = vpop.permute.xlu0 %1695
        %1697 = vrot.lane.b32.xlu0 %v1673, 32
        %v1698 = vpop.permute.xlu0 %1697
        %1699 = vrot.lane.b32.xlu0 %v1674, 32
        %v1700 = vpop.permute.xlu0 %1699
        %1701 = vrot.lane.b32.xlu0 %v1675, 32
        %v1702 = vpop.permute.xlu0 %1701
        %1703 = vrot.lane.b32.xlu0 %v1676, 32
        %v1704 = vpop.permute.xlu0 %1703
        %v1707 = vpack.i.b16 %v1682, %v1673
        %v1709 = vshrl.u32 %v1673, 16
        %v1710 = vshrl.u32 %v1682, 16
        %v1711 = vpack.i.b16 %v1710, %v1709
        %v1715 = vpack.i.b16 %v1698, %v1690
        %v1717 = vshrl.u32 %v1690, 16
        %v1718 = vshrl.u32 %v1698, 16
        %v1719 = vpack.i.b16 %v1718, %v1717
        %v1722 = vpack.i.b16 0, 0
        %v1724 = vshrl.u32 0, 16
        %v1725 = vpack.i.b16 %v1724, %v1724
        %v1729 = vpack.i.b16 %v1684, %v1674
        %v1731 = vshrl.u32 %v1674, 16
        %v1732 = vshrl.u32 %v1684, 16
        %v1733 = vpack.i.b16 %v1732, %v1731
        %v1737 = vpack.i.b16 %v1700, %v1692
        %v1739 = vshrl.u32 %v1692, 16
        %v1740 = vshrl.u32 %v1700, 16
        %v1741 = vpack.i.b16 %v1740, %v1739
        %v1745 = vpack.i.b16 %v1686, %v1675
        %v1747 = vshrl.u32 %v1675, 16
        %v1748 = vshrl.u32 %v1686, 16
        %v1749 = vpack.i.b16 %v1748, %v1747
        %v1753 = vpack.i.b16 %v1702, %v1694
        %v1755 = vshrl.u32 %v1694, 16
        %v1756 = vshrl.u32 %v1702, 16
        %v1757 = vpack.i.b16 %v1756, %v1755
        %v1761 = vpack.i.b16 %v1688, %v1676
        %v1763 = vshrl.u32 %v1676, 16
        %v1764 = vshrl.u32 %v1688, 16
        %v1765 = vpack.i.b16 %v1764, %v1763
        %v1769 = vpack.i.b16 %v1704, %v1696
        %v1771 = vshrl.u32 %v1696, 16
        %v1772 = vshrl.u32 %v1704, 16
        %v1773 = vpack.i.b16 %v1772, %v1771
        %v1775 = vcombine.high %v1707, %v1722
        %v1777 = vunpack.c.l.s4 1983009808
        %v1778 = vunpack.c.0.s8 %v1777
        %v1779 = vlaneseq
        %v1780 = vshrl.u32 %v1779, 7
        %v1781 = vsub.s32 %v1778, %v1780
        %v1782 = vrot.slane %v1707, %v1781
        %v1784 = vunpack.c.l.s4 1983009808
        %v1785 = vunpack.c.0.s8 %v1784
        %v1786 = vlaneseq
        %v1787 = vshrl.u32 %v1786, 7
        %v1788 = vsub.s32 %v1785, %v1787
        %v1789 = vrot.slane %v1775, %v1788
        %v1790 = vcombine.high %v1715, %v1722
        %v1792 = vunpack.c.l.s4 1983009808
        %v1793 = vunpack.c.0.s8 %v1792
        %v1794 = vlaneseq
        %v1795 = vshrl.u32 %v1794, 7
        %v1796 = vsub.s32 %v1793, %v1795
        %v1797 = vrot.slane %v1715, %v1796
        %v1799 = vunpack.c.l.s4 1983009808
        %v1800 = vunpack.c.0.s8 %v1799
        %v1801 = vlaneseq
        %v1802 = vshrl.u32 %v1801, 7
        %v1803 = vsub.s32 %v1800, %v1802
        %v1804 = vrot.slane %v1790, %v1803
        %v1805 = vcombine.low %v1782, %v1797
        %v1806 = vcombine.high %v1782, %v1797
        %v1808 = vunpack.c.l.s4 1934713408
        %v1809 = vunpack.c.0.s8 %v1808
        %v1810 = vlaneseq
        %v1811 = vshrl.u32 %v1810, 7
        %v1812 = vsub.s32 %v1809, %v1811
        %v1813 = vrot.slane %v1805, %v1812
        %v1815 = vunpack.c.l.s4 1934713408
        %v1816 = vunpack.c.0.s8 %v1815
        %v1817 = vlaneseq
        %v1818 = vshrl.u32 %v1817, 7
        %v1819 = vsub.s32 %v1816, %v1818
        %v1820 = vrot.slane %v1806, %v1819
        %v1821 = vcombine.low %v1789, %v1804
        %v1822 = vcombine.high %v1789, %v1804
        %v1824 = vunpack.c.l.s4 1934713408
        %v1825 = vunpack.c.0.s8 %v1824
        %v1826 = vlaneseq
        %v1827 = vshrl.u32 %v1826, 7
        %v1828 = vsub.s32 %v1825, %v1827
        %v1829 = vrot.slane %v1821, %v1828
        %v1831 = vunpack.c.l.s4 1934713408
        %v1832 = vunpack.c.0.s8 %v1831
        %v1833 = vlaneseq
        %v1834 = vshrl.u32 %v1833, 7
        %v1835 = vsub.s32 %v1832, %v1834
        %v1836 = vrot.slane %v1822, %v1835
        %v1837 = vcombine.high %v1813, 0
        %v1838 = vcombine.high %v1820, 0
        %v1839 = vcombine.high %v1829, 0
        %v1840 = vcombine.high %v1836, 0
        %v1841 = vcombine.high %v1711, %v1725
        %v1843 = vunpack.c.l.s4 1983009808
        %v1844 = vunpack.c.0.s8 %v1843
        %v1845 = vlaneseq
        %v1846 = vshrl.u32 %v1845, 7
        %v1847 = vsub.s32 %v1844, %v1846
        %v1848 = vrot.slane %v1711, %v1847
        %v1850 = vunpack.c.l.s4 1983009808
        %v1851 = vunpack.c.0.s8 %v1850
        %v1852 = vlaneseq
        %v1853 = vshrl.u32 %v1852, 7
        %v1854 = vsub.s32 %v1851, %v1853
        %v1855 = vrot.slane %v1841, %v1854
        %v1856 = vcombine.high %v1719, %v1725
        %v1858 = vunpack.c.l.s4 1983009808
        %v1859 = vunpack.c.0.s8 %v1858
        %v1860 = vlaneseq
        %v1861 = vshrl.u32 %v1860, 7
        %v1862 = vsub.s32 %v1859, %v1861
        %v1863 = vrot.slane %v1719, %v1862
        %v1865 = vunpack.c.l.s4 1983009808
        %v1866 = vunpack.c.0.s8 %v1865
        %v1867 = vlaneseq
        %v1868 = vshrl.u32 %v1867, 7
        %v1869 = vsub.s32 %v1866, %v1868
        %v1870 = vrot.slane %v1856, %v1869
        %v1871 = vcombine.low %v1848, %v1863
        %v1872 = vcombine.high %v1848, %v1863
        %v1874 = vunpack.c.l.s4 1934713408
        %v1875 = vunpack.c.0.s8 %v1874
        %v1876 = vlaneseq
        %v1877 = vshrl.u32 %v1876, 7
        %v1878 = vsub.s32 %v1875, %v1877
        %v1879 = vrot.slane %v1871, %v1878
        %v1881 = vunpack.c.l.s4 1934713408
        %v1882 = vunpack.c.0.s8 %v1881
        %v1883 = vlaneseq
        %v1884 = vshrl.u32 %v1883, 7
        %v1885 = vsub.s32 %v1882, %v1884
        %v1886 = vrot.slane %v1872, %v1885
        %v1887 = vcombine.low %v1855, %v1870
        %v1888 = vcombine.high %v1855, %v1870
        %v1890 = vunpack.c.l.s4 1934713408
        %v1891 = vunpack.c.0.s8 %v1890
        %v1892 = vlaneseq
        %v1893 = vshrl.u32 %v1892, 7
        %v1894 = vsub.s32 %v1891, %v1893
        %v1895 = vrot.slane %v1887, %v1894
        %v1897 = vunpack.c.l.s4 1934713408
        %v1898 = vunpack.c.0.s8 %v1897
        %v1899 = vlaneseq
        %v1900 = vshrl.u32 %v1899, 7
        %v1901 = vsub.s32 %v1898, %v1900
        %v1902 = vrot.slane %v1888, %v1901
        %v1903 = vcombine.high %v1879, 0
        %v1904 = vcombine.high %v1886, 0
        %v1905 = vcombine.high %v1895, 0
        %v1906 = vcombine.high %v1902, 0
        %v1907 = vcombine.high %v1729, %v1722
        %v1909 = vunpack.c.l.s4 1983009808
        %v1910 = vunpack.c.0.s8 %v1909
        %v1911 = vlaneseq
        %v1912 = vshrl.u32 %v1911, 7
        %v1913 = vsub.s32 %v1910, %v1912
        %v1914 = vrot.slane %v1729, %v1913
        %v1916 = vunpack.c.l.s4 1983009808
        %v1917 = vunpack.c.0.s8 %v1916
        %v1918 = vlaneseq
        %v1919 = vshrl.u32 %v1918, 7
        %v1920 = vsub.s32 %v1917, %v1919
        %v1921 = vrot.slane %v1907, %v1920
        %v1922 = vcombine.high %v1737, %v1722
        %v1924 = vunpack.c.l.s4 1983009808
        %v1925 = vunpack.c.0.s8 %v1924
        %v1926 = vlaneseq
        %v1927 = vshrl.u32 %v1926, 7
        %v1928 = vsub.s32 %v1925, %v1927
        %v1929 = vrot.slane %v1737, %v1928
        %v1931 = vunpack.c.l.s4 1983009808
        %v1932 = vunpack.c.0.s8 %v1931
        %v1933 = vlaneseq
        %v1934 = vshrl.u32 %v1933, 7
        %v1935 = vsub.s32 %v1932, %v1934
        %v1936 = vrot.slane %v1922, %v1935
        %v1937 = vcombine.low %v1914, %v1929
        %v1938 = vcombine.high %v1914, %v1929
        %v1940 = vunpack.c.l.s4 1934713408
        %v1941 = vunpack.c.0.s8 %v1940
        %v1942 = vlaneseq
        %v1943 = vshrl.u32 %v1942, 7
        %v1944 = vsub.s32 %v1941, %v1943
        %v1945 = vrot.slane %v1937, %v1944
        %v1947 = vunpack.c.l.s4 1934713408
        %v1948 = vunpack.c.0.s8 %v1947
        %v1949 = vlaneseq
        %v1950 = vshrl.u32 %v1949, 7
        %v1951 = vsub.s32 %v1948, %v1950
        %v1952 = vrot.slane %v1938, %v1951
        %v1953 = vcombine.low %v1921, %v1936
        %v1954 = vcombine.high %v1921, %v1936
        %v1956 = vunpack.c.l.s4 1934713408
        %v1957 = vunpack.c.0.s8 %v1956
        %v1958 = vlaneseq
        %v1959 = vshrl.u32 %v1958, 7
        %v1960 = vsub.s32 %v1957, %v1959
        %v1961 = vrot.slane %v1953, %v1960
        %v1963 = vunpack.c.l.s4 1934713408
        %v1964 = vunpack.c.0.s8 %v1963
        %v1965 = vlaneseq
        %v1966 = vshrl.u32 %v1965, 7
        %v1967 = vsub.s32 %v1964, %v1966
        %v1968 = vrot.slane %v1954, %v1967
        %v1969 = vcombine.high %v1945, 0
        %v1970 = vcombine.high %v1952, 0
        %v1971 = vcombine.high %v1961, 0
        %v1972 = vcombine.high %v1968, 0
        %v1973 = vcombine.high %v1733, %v1725
        %v1975 = vunpack.c.l.s4 1983009808
        %v1976 = vunpack.c.0.s8 %v1975
        %v1977 = vlaneseq
        %v1978 = vshrl.u32 %v1977, 7
        %v1979 = vsub.s32 %v1976, %v1978
        %v1980 = vrot.slane %v1733, %v1979
        %v1982 = vunpack.c.l.s4 1983009808
        %v1983 = vunpack.c.0.s8 %v1982
        %v1984 = vlaneseq
        %v1985 = vshrl.u32 %v1984, 7
        %v1986 = vsub.s32 %v1983, %v1985
        %v1987 = vrot.slane %v1973, %v1986
        %v1988 = vcombine.high %v1741, %v1725
        %v1990 = vunpack.c.l.s4 1983009808
        %v1991 = vunpack.c.0.s8 %v1990
        %v1992 = vlaneseq
        %v1993 = vshrl.u32 %v1992, 7
        %v1994 = vsub.s32 %v1991, %v1993
        %v1995 = vrot.slane %v1741, %v1994
        %v1997 = vunpack.c.l.s4 1983009808
        %v1998 = vunpack.c.0.s8 %v1997
        %v1999 = vlaneseq
        %v2000 = vshrl.u32 %v1999, 7
        %v2001 = vsub.s32 %v1998, %v2000
        %v2002 = vrot.slane %v1988, %v2001
        %v2003 = vcombine.low %v1980, %v1995
        %v2004 = vcombine.high %v1980, %v1995
        %v2006 = vunpack.c.l.s4 1934713408
        %v2007 = vunpack.c.0.s8 %v2006
        %v2008 = vlaneseq
        %v2009 = vshrl.u32 %v2008, 7
        %v2010 = vsub.s32 %v2007, %v2009
        %v2011 = vrot.slane %v2003, %v2010
        %v2013 = vunpack.c.l.s4 1934713408
        %v2014 = vunpack.c.0.s8 %v2013
        %v2015 = vlaneseq
        %v2016 = vshrl.u32 %v2015, 7
        %v2017 = vsub.s32 %v2014, %v2016
        %v2018 = vrot.slane %v2004, %v2017
        %v2019 = vcombine.low %v1987, %v2002
        %v2020 = vcombine.high %v1987, %v2002
        %v2022 = vunpack.c.l.s4 1934713408
        %v2023 = vunpack.c.0.s8 %v2022
        %v2024 = vlaneseq
        %v2025 = vshrl.u32 %v2024, 7
        %v2026 = vsub.s32 %v2023, %v2025
        %v2027 = vrot.slane %v2019, %v2026
        %v2029 = vunpack.c.l.s4 1934713408
        %v2030 = vunpack.c.0.s8 %v2029
        %v2031 = vlaneseq
        %v2032 = vshrl.u32 %v2031, 7
        %v2033 = vsub.s32 %v2030, %v2032
        %v2034 = vrot.slane %v2020, %v2033
        %v2035 = vcombine.high %v2011, 0
        %v2036 = vcombine.high %v2018, 0
        %v2037 = vcombine.high %v2027, 0
        %v2038 = vcombine.high %v2034, 0
        %v2039 = vcombine.high %v1745, %v1722
        %v2041 = vunpack.c.l.s4 1983009808
        %v2042 = vunpack.c.0.s8 %v2041
        %v2043 = vlaneseq
        %v2044 = vshrl.u32 %v2043, 7
        %v2045 = vsub.s32 %v2042, %v2044
        %v2046 = vrot.slane %v1745, %v2045
        %v2048 = vunpack.c.l.s4 1983009808
        %v2049 = vunpack.c.0.s8 %v2048
        %v2050 = vlaneseq
        %v2051 = vshrl.u32 %v2050, 7
        %v2052 = vsub.s32 %v2049, %v2051
        %v2053 = vrot.slane %v2039, %v2052
        %v2054 = vcombine.high %v1753, %v1722
        %v2056 = vunpack.c.l.s4 1983009808
        %v2057 = vunpack.c.0.s8 %v2056
        %v2058 = vlaneseq
        %v2059 = vshrl.u32 %v2058, 7
        %v2060 = vsub.s32 %v2057, %v2059
        %v2061 = vrot.slane %v1753, %v2060
        %v2063 = vunpack.c.l.s4 1983009808
        %v2064 = vunpack.c.0.s8 %v2063
        %v2065 = vlaneseq
        %v2066 = vshrl.u32 %v2065, 7
        %v2067 = vsub.s32 %v2064, %v2066
        %v2068 = vrot.slane %v2054, %v2067
        %v2069 = vcombine.low %v2046, %v2061
        %v2070 = vcombine.high %v2046, %v2061
        %v2072 = vunpack.c.l.s4 1934713408
        %v2073 = vunpack.c.0.s8 %v2072
        %v2074 = vlaneseq
        %v2075 = vshrl.u32 %v2074, 7
        %v2076 = vsub.s32 %v2073, %v2075
        %v2077 = vrot.slane %v2069, %v2076
        %v2079 = vunpack.c.l.s4 1934713408
        %v2080 = vunpack.c.0.s8 %v2079
        %v2081 = vlaneseq
        %v2082 = vshrl.u32 %v2081, 7
        %v2083 = vsub.s32 %v2080, %v2082
        %v2084 = vrot.slane %v2070, %v2083
        %v2085 = vcombine.low %v2053, %v2068
        %v2086 = vcombine.high %v2053, %v2068
        %v2088 = vunpack.c.l.s4 1934713408
        %v2089 = vunpack.c.0.s8 %v2088
        %v2090 = vlaneseq
        %v2091 = vshrl.u32 %v2090, 7
        %v2092 = vsub.s32 %v2089, %v2091
        %v2093 = vrot.slane %v2085, %v2092
        %v2095 = vunpack.c.l.s4 1934713408
        %v2096 = vunpack.c.0.s8 %v2095
        %v2097 = vlaneseq
        %v2098 = vshrl.u32 %v2097, 7
        %v2099 = vsub.s32 %v2096, %v2098
        %v2100 = vrot.slane %v2086, %v2099
        %v2101 = vcombine.high %v2077, 0
        %v2102 = vcombine.high %v2084, 0
        %v2103 = vcombine.high %v2093, 0
        %v2104 = vcombine.high %v2100, 0
        %v2105 = vcombine.high %v1749, %v1725
        %v2107 = vunpack.c.l.s4 1983009808
        %v2108 = vunpack.c.0.s8 %v2107
        %v2109 = vlaneseq
        %v2110 = vshrl.u32 %v2109, 7
        %v2111 = vsub.s32 %v2108, %v2110
        %v2112 = vrot.slane %v1749, %v2111
        %v2114 = vunpack.c.l.s4 1983009808
        %v2115 = vunpack.c.0.s8 %v2114
        %v2116 = vlaneseq
        %v2117 = vshrl.u32 %v2116, 7
        %v2118 = vsub.s32 %v2115, %v2117
        %v2119 = vrot.slane %v2105, %v2118
        %v2120 = vcombine.high %v1757, %v1725
        %v2122 = vunpack.c.l.s4 1983009808
        %v2123 = vunpack.c.0.s8 %v2122
        %v2124 = vlaneseq
        %v2125 = vshrl.u32 %v2124, 7
        %v2126 = vsub.s32 %v2123, %v2125
        %v2127 = vrot.slane %v1757, %v2126
        %v2129 = vunpack.c.l.s4 1983009808
        %v2130 = vunpack.c.0.s8 %v2129
        %v2131 = vlaneseq
        %v2132 = vshrl.u32 %v2131, 7
        %v2133 = vsub.s32 %v2130, %v2132
        %v2134 = vrot.slane %v2120, %v2133
        %v2135 = vcombine.low %v2112, %v2127
        %v2136 = vcombine.high %v2112, %v2127
        %v2138 = vunpack.c.l.s4 1934713408
        %v2139 = vunpack.c.0.s8 %v2138
        %v2140 = vlaneseq
        %v2141 = vshrl.u32 %v2140, 7
        %v2142 = vsub.s32 %v2139, %v2141
        %v2143 = vrot.slane %v2135, %v2142
        %v2145 = vunpack.c.l.s4 1934713408
        %v2146 = vunpack.c.0.s8 %v2145
        %v2147 = vlaneseq
        %v2148 = vshrl.u32 %v2147, 7
        %v2149 = vsub.s32 %v2146, %v2148
        %v2150 = vrot.slane %v2136, %v2149
        %v2151 = vcombine.low %v2119, %v2134
        %v2152 = vcombine.high %v2119, %v2134
        %v2154 = vunpack.c.l.s4 1934713408
        %v2155 = vunpack.c.0.s8 %v2154
        %v2156 = vlaneseq
        %v2157 = vshrl.u32 %v2156, 7
        %v2158 = vsub.s32 %v2155, %v2157
        %v2159 = vrot.slane %v2151, %v2158
        %v2161 = vunpack.c.l.s4 1934713408
        %v2162 = vunpack.c.0.s8 %v2161
        %v2163 = vlaneseq
        %v2164 = vshrl.u32 %v2163, 7
        %v2165 = vsub.s32 %v2162, %v2164
        %v2166 = vrot.slane %v2152, %v2165
        %v2167 = vcombine.high %v2143, 0
        %v2168 = vcombine.high %v2150, 0
        %v2169 = vcombine.high %v2159, 0
        %v2170 = vcombine.high %v2166, 0
        %v2171 = vcombine.high %v1761, %v1722
        %v2173 = vunpack.c.l.s4 1983009808
        %v2174 = vunpack.c.0.s8 %v2173
        %v2175 = vlaneseq
        %v2176 = vshrl.u32 %v2175, 7
        %v2177 = vsub.s32 %v2174, %v2176
        %v2178 = vrot.slane %v1761, %v2177
        %v2180 = vunpack.c.l.s4 1983009808
        %v2181 = vunpack.c.0.s8 %v2180
        %v2182 = vlaneseq
        %v2183 = vshrl.u32 %v2182, 7
        %v2184 = vsub.s32 %v2181, %v2183
        %v2185 = vrot.slane %v2171, %v2184
        %v2186 = vcombine.high %v1769, %v1722
        %v2188 = vunpack.c.l.s4 1983009808
        %v2189 = vunpack.c.0.s8 %v2188
        %v2190 = vlaneseq
        %v2191 = vshrl.u32 %v2190, 7
        %v2192 = vsub.s32 %v2189, %v2191
        %v2193 = vrot.slane %v1769, %v2192
        %v2195 = vunpack.c.l.s4 1983009808
        %v2196 = vunpack.c.0.s8 %v2195
        %v2197 = vlaneseq
        %v2198 = vshrl.u32 %v2197, 7
        %v2199 = vsub.s32 %v2196, %v2198
        %v2200 = vrot.slane %v2186, %v2199
        %v2201 = vcombine.low %v2178, %v2193
        %v2202 = vcombine.high %v2178, %v2193
        %v2204 = vunpack.c.l.s4 1934713408
        %v2205 = vunpack.c.0.s8 %v2204
        %v2206 = vlaneseq
        %v2207 = vshrl.u32 %v2206, 7
        %v2208 = vsub.s32 %v2205, %v2207
        %v2209 = vrot.slane %v2201, %v2208
        %v2211 = vunpack.c.l.s4 1934713408
        %v2212 = vunpack.c.0.s8 %v2211
        %v2213 = vlaneseq
        %v2214 = vshrl.u32 %v2213, 7
        %v2215 = vsub.s32 %v2212, %v2214
        %v2216 = vrot.slane %v2202, %v2215
        %v2217 = vcombine.low %v2185, %v2200
        %v2218 = vcombine.high %v2185, %v2200
        %v2220 = vunpack.c.l.s4 1934713408
        %v2221 = vunpack.c.0.s8 %v2220
        %v2222 = vlaneseq
        %v2223 = vshrl.u32 %v2222, 7
        %v2224 = vsub.s32 %v2221, %v2223
        %v2225 = vrot.slane %v2217, %v2224
        %v2227 = vunpack.c.l.s4 1934713408
        %v2228 = vunpack.c.0.s8 %v2227
        %v2229 = vlaneseq
        %v2230 = vshrl.u32 %v2229, 7
        %v2231 = vsub.s32 %v2228, %v2230
        %v2232 = vrot.slane %v2218, %v2231
        %v2233 = vcombine.high %v2209, 0
        %v2234 = vcombine.high %v2216, 0
        %v2235 = vcombine.high %v2225, 0
        %v2236 = vcombine.high %v2232, 0
        %v2237 = vcombine.high %v1765, %v1725
        %v2239 = vunpack.c.l.s4 1983009808
        %v2240 = vunpack.c.0.s8 %v2239
        %v2241 = vlaneseq
        %v2242 = vshrl.u32 %v2241, 7
        %v2243 = vsub.s32 %v2240, %v2242
        %v2244 = vrot.slane %v1765, %v2243
        %v2246 = vunpack.c.l.s4 1983009808
        %v2247 = vunpack.c.0.s8 %v2246
        %v2248 = vlaneseq
        %v2249 = vshrl.u32 %v2248, 7
        %v2250 = vsub.s32 %v2247, %v2249
        %v2251 = vrot.slane %v2237, %v2250
        %v2252 = vcombine.high %v1773, %v1725
        %v2254 = vunpack.c.l.s4 1983009808
        %v2255 = vunpack.c.0.s8 %v2254
        %v2256 = vlaneseq
        %v2257 = vshrl.u32 %v2256, 7
        %v2258 = vsub.s32 %v2255, %v2257
        %v2259 = vrot.slane %v1773, %v2258
        %v2261 = vunpack.c.l.s4 1983009808
        %v2262 = vunpack.c.0.s8 %v2261
        %v2263 = vlaneseq
        %v2264 = vshrl.u32 %v2263, 7
        %v2265 = vsub.s32 %v2262, %v2264
        %v2266 = vrot.slane %v2252, %v2265
        %v2267 = vcombine.low %v2244, %v2259
        %v2268 = vcombine.high %v2244, %v2259
        %v2270 = vunpack.c.l.s4 1934713408
        %v2271 = vunpack.c.0.s8 %v2270
        %v2272 = vlaneseq
        %v2273 = vshrl.u32 %v2272, 7
        %v2274 = vsub.s32 %v2271, %v2273
        %v2275 = vrot.slane %v2267, %v2274
        %v2277 = vunpack.c.l.s4 1934713408
        %v2278 = vunpack.c.0.s8 %v2277
        %v2279 = vlaneseq
        %v2280 = vshrl.u32 %v2279, 7
        %v2281 = vsub.s32 %v2278, %v2280
        %v2282 = vrot.slane %v2268, %v2281
        %v2283 = vcombine.low %v2251, %v2266
        %v2284 = vcombine.high %v2251, %v2266
        %v2286 = vunpack.c.l.s4 1934713408
        %v2287 = vunpack.c.0.s8 %v2286
        %v2288 = vlaneseq
        %v2289 = vshrl.u32 %v2288, 7
        %v2290 = vsub.s32 %v2287, %v2289
        %v2291 = vrot.slane %v2283, %v2290
        %v2293 = vunpack.c.l.s4 1934713408
        %v2294 = vunpack.c.0.s8 %v2293
        %v2295 = vlaneseq
        %v2296 = vshrl.u32 %v2295, 7
        %v2297 = vsub.s32 %v2294, %v2296
        %v2298 = vrot.slane %v2284, %v2297
        %v2299 = vcombine.high %v2275, 0
        %v2300 = vcombine.high %v2282, 0
        %v2301 = vcombine.high %v2291, 0
        %v2302 = vcombine.high %v2298, 0
        %v2303 = vcombine.low %v1813, %v1820
        %v2305 = vunpack.c.l.s4 1983009808
        %v2306 = vunpack.c.0.s8 %v2305
        %v2307 = vlaneseq
        %v2308 = vshrl.u32 %v2307, 7
        %v2309 = vsub.s32 %v2306, %v2308
        %v2310 = vrot.slane %v2303, %v2309
        %v2311 = vcombine.low %v1837, %v1838
        %v2313 = vunpack.c.l.s4 1983009808
        %v2314 = vunpack.c.0.s8 %v2313
        %v2315 = vlaneseq
        %v2316 = vshrl.u32 %v2315, 7
        %v2317 = vsub.s32 %v2314, %v2316
        %v2318 = vrot.slane %v2311, %v2317
        %v2319 = vcombine.low %v2310, %v2318
        %v2321 = vunpack.c.l.s4 1934713408
        %v2322 = vunpack.c.0.s8 %v2321
        %v2323 = vlaneseq
        %v2324 = vshrl.u32 %v2323, 7
        %v2325 = vsub.s32 %v2322, %v2324
        %v2326 = vrot.slane %v2319, %v2325
        %v2327 = vcombine.high %v2326, 0
        %v2328 = vcombine.low %v1879, %v1886
        %v2330 = vunpack.c.l.s4 1983009808
        %v2331 = vunpack.c.0.s8 %v2330
        %v2332 = vlaneseq
        %v2333 = vshrl.u32 %v2332, 7
        %v2334 = vsub.s32 %v2331, %v2333
        %v2335 = vrot.slane %v2328, %v2334
        %v2336 = vcombine.low %v1903, %v1904
        %v2338 = vunpack.c.l.s4 1983009808
        %v2339 = vunpack.c.0.s8 %v2338
        %v2340 = vlaneseq
        %v2341 = vshrl.u32 %v2340, 7
        %v2342 = vsub.s32 %v2339, %v2341
        %v2343 = vrot.slane %v2336, %v2342
        %v2344 = vcombine.low %v2335, %v2343
        %v2346 = vunpack.c.l.s4 1934713408
        %v2347 = vunpack.c.0.s8 %v2346
        %v2348 = vlaneseq
        %v2349 = vshrl.u32 %v2348, 7
        %v2350 = vsub.s32 %v2347, %v2349
        %v2351 = vrot.slane %v2344, %v2350
        %v2352 = vcombine.high %v2351, 0
        %v2353 = vcombine.low %v1829, %v1836
        %v2355 = vunpack.c.l.s4 1983009808
        %v2356 = vunpack.c.0.s8 %v2355
        %v2357 = vlaneseq
        %v2358 = vshrl.u32 %v2357, 7
        %v2359 = vsub.s32 %v2356, %v2358
        %v2360 = vrot.slane %v2353, %v2359
        %v2361 = vcombine.low %v1839, %v1840
        %v2363 = vunpack.c.l.s4 1983009808
        %v2364 = vunpack.c.0.s8 %v2363
        %v2365 = vlaneseq
        %v2366 = vshrl.u32 %v2365, 7
        %v2367 = vsub.s32 %v2364, %v2366
        %v2368 = vrot.slane %v2361, %v2367
        %v2369 = vcombine.low %v2360, %v2368
        %v2371 = vunpack.c.l.s4 1934713408
        %v2372 = vunpack.c.0.s8 %v2371
        %v2373 = vlaneseq
        %v2374 = vshrl.u32 %v2373, 7
        %v2375 = vsub.s32 %v2372, %v2374
        %v2376 = vrot.slane %v2369, %v2375
        %v2377 = vcombine.high %v2376, 0
        %v2378 = vcombine.low %v1895, %v1902
        %v2380 = vunpack.c.l.s4 1983009808
        %v2381 = vunpack.c.0.s8 %v2380
        %v2382 = vlaneseq
        %v2383 = vshrl.u32 %v2382, 7
        %v2384 = vsub.s32 %v2381, %v2383
        %v2385 = vrot.slane %v2378, %v2384
        %v2386 = vcombine.low %v1905, %v1906
        %v2388 = vunpack.c.l.s4 1983009808
        %v2389 = vunpack.c.0.s8 %v2388
        %v2390 = vlaneseq
        %v2391 = vshrl.u32 %v2390, 7
        %v2392 = vsub.s32 %v2389, %v2391
        %v2393 = vrot.slane %v2386, %v2392
        %v2394 = vcombine.low %v2385, %v2393
        %v2396 = vunpack.c.l.s4 1934713408
        %v2397 = vunpack.c.0.s8 %v2396
        %v2398 = vlaneseq
        %v2399 = vshrl.u32 %v2398, 7
        %v2400 = vsub.s32 %v2397, %v2399
        %v2401 = vrot.slane %v2394, %v2400
        %v2402 = vcombine.high %v2401, 0
        %v2403 = vcombine.low %v1945, %v1952
        %v2405 = vunpack.c.l.s4 1983009808
        %v2406 = vunpack.c.0.s8 %v2405
        %v2407 = vlaneseq
        %v2408 = vshrl.u32 %v2407, 7
        %v2409 = vsub.s32 %v2406, %v2408
        %v2410 = vrot.slane %v2403, %v2409
        %v2411 = vcombine.low %v1969, %v1970
        %v2413 = vunpack.c.l.s4 1983009808
        %v2414 = vunpack.c.0.s8 %v2413
        %v2415 = vlaneseq
        %v2416 = vshrl.u32 %v2415, 7
        %v2417 = vsub.s32 %v2414, %v2416
        %v2418 = vrot.slane %v2411, %v2417
        %v2419 = vcombine.low %v2410, %v2418
        %v2421 = vunpack.c.l.s4 1934713408
        %v2422 = vunpack.c.0.s8 %v2421
        %v2423 = vlaneseq
        %v2424 = vshrl.u32 %v2423, 7
        %v2425 = vsub.s32 %v2422, %v2424
        %v2426 = vrot.slane %v2419, %v2425
        %v2427 = vcombine.high %v2426, 0
        %v2428 = vcombine.low %v2011, %v2018
        %v2430 = vunpack.c.l.s4 1983009808
        %v2431 = vunpack.c.0.s8 %v2430
        %v2432 = vlaneseq
        %v2433 = vshrl.u32 %v2432, 7
        %v2434 = vsub.s32 %v2431, %v2433
        %v2435 = vrot.slane %v2428, %v2434
        %v2436 = vcombine.low %v2035, %v2036
        %v2438 = vunpack.c.l.s4 1983009808
        %v2439 = vunpack.c.0.s8 %v2438
        %v2440 = vlaneseq
        %v2441 = vshrl.u32 %v2440, 7
        %v2442 = vsub.s32 %v2439, %v2441
        %v2443 = vrot.slane %v2436, %v2442
        %v2444 = vcombine.low %v2435, %v2443
        %v2446 = vunpack.c.l.s4 1934713408
        %v2447 = vunpack.c.0.s8 %v2446
        %v2448 = vlaneseq
        %v2449 = vshrl.u32 %v2448, 7
        %v2450 = vsub.s32 %v2447, %v2449
        %v2451 = vrot.slane %v2444, %v2450
        %v2452 = vcombine.high %v2451, 0
        %v2453 = vcombine.low %v1961, %v1968
        %v2455 = vunpack.c.l.s4 1983009808
        %v2456 = vunpack.c.0.s8 %v2455
        %v2457 = vlaneseq
        %v2458 = vshrl.u32 %v2457, 7
        %v2459 = vsub.s32 %v2456, %v2458
        %v2460 = vrot.slane %v2453, %v2459
        %v2461 = vcombine.low %v1971, %v1972
        %v2463 = vunpack.c.l.s4 1983009808
        %v2464 = vunpack.c.0.s8 %v2463
        %v2465 = vlaneseq
        %v2466 = vshrl.u32 %v2465, 7
        %v2467 = vsub.s32 %v2464, %v2466
        %v2468 = vrot.slane %v2461, %v2467
        %v2469 = vcombine.low %v2460, %v2468
        %v2471 = vunpack.c.l.s4 1934713408
        %v2472 = vunpack.c.0.s8 %v2471
        %v2473 = vlaneseq
        %v2474 = vshrl.u32 %v2473, 7
        %v2475 = vsub.s32 %v2472, %v2474
        %v2476 = vrot.slane %v2469, %v2475
        %v2477 = vcombine.high %v2476, 0
        %v2478 = vcombine.low %v2027, %v2034
        %v2480 = vunpack.c.l.s4 1983009808
        %v2481 = vunpack.c.0.s8 %v2480
        %v2482 = vlaneseq
        %v2483 = vshrl.u32 %v2482, 7
        %v2484 = vsub.s32 %v2481, %v2483
        %v2485 = vrot.slane %v2478, %v2484
        %v2486 = vcombine.low %v2037, %v2038
        %v2488 = vunpack.c.l.s4 1983009808
        %v2489 = vunpack.c.0.s8 %v2488
        %v2490 = vlaneseq
        %v2491 = vshrl.u32 %v2490, 7
        %v2492 = vsub.s32 %v2489, %v2491
        %v2493 = vrot.slane %v2486, %v2492
        %v2494 = vcombine.low %v2485, %v2493
        %v2496 = vunpack.c.l.s4 1934713408
        %v2497 = vunpack.c.0.s8 %v2496
        %v2498 = vlaneseq
        %v2499 = vshrl.u32 %v2498, 7
        %v2500 = vsub.s32 %v2497, %v2499
        %v2501 = vrot.slane %v2494, %v2500
        %v2502 = vcombine.high %v2501, 0
        %v2503 = vcombine.low %v2077, %v2084
        %v2505 = vunpack.c.l.s4 1983009808
        %v2506 = vunpack.c.0.s8 %v2505
        %v2507 = vlaneseq
        %v2508 = vshrl.u32 %v2507, 7
        %v2509 = vsub.s32 %v2506, %v2508
        %v2510 = vrot.slane %v2503, %v2509
        %v2511 = vcombine.low %v2101, %v2102
        %v2513 = vunpack.c.l.s4 1983009808
        %v2514 = vunpack.c.0.s8 %v2513
        %v2515 = vlaneseq
        %v2516 = vshrl.u32 %v2515, 7
        %v2517 = vsub.s32 %v2514, %v2516
        %v2518 = vrot.slane %v2511, %v2517
        %v2519 = vcombine.low %v2510, %v2518
        %v2521 = vunpack.c.l.s4 1934713408
        %v2522 = vunpack.c.0.s8 %v2521
        %v2523 = vlaneseq
        %v2524 = vshrl.u32 %v2523, 7
        %v2525 = vsub.s32 %v2522, %v2524
        %v2526 = vrot.slane %v2519, %v2525
        %v2527 = vcombine.high %v2526, 0
        %v2528 = vcombine.low %v2143, %v2150
        %v2530 = vunpack.c.l.s4 1983009808
        %v2531 = vunpack.c.0.s8 %v2530
        %v2532 = vlaneseq
        %v2533 = vshrl.u32 %v2532, 7
        %v2534 = vsub.s32 %v2531, %v2533
        %v2535 = vrot.slane %v2528, %v2534
        %v2536 = vcombine.low %v2167, %v2168
        %v2538 = vunpack.c.l.s4 1983009808
        %v2539 = vunpack.c.0.s8 %v2538
        %v2540 = vlaneseq
        %v2541 = vshrl.u32 %v2540, 7
        %v2542 = vsub.s32 %v2539, %v2541
        %v2543 = vrot.slane %v2536, %v2542
        %v2544 = vcombine.low %v2535, %v2543
        %v2546 = vunpack.c.l.s4 1934713408
        %v2547 = vunpack.c.0.s8 %v2546
        %v2548 = vlaneseq
        %v2549 = vshrl.u32 %v2548, 7
        %v2550 = vsub.s32 %v2547, %v2549
        %v2551 = vrot.slane %v2544, %v2550
        %v2552 = vcombine.high %v2551, 0
        %v2553 = vcombine.low %v2093, %v2100
        %v2555 = vunpack.c.l.s4 1983009808
        %v2556 = vunpack.c.0.s8 %v2555
        %v2557 = vlaneseq
        %v2558 = vshrl.u32 %v2557, 7
        %v2559 = vsub.s32 %v2556, %v2558
        %v2560 = vrot.slane %v2553, %v2559
        %v2561 = vcombine.low %v2103, %v2104
        %v2563 = vunpack.c.l.s4 1983009808
        %v2564 = vunpack.c.0.s8 %v2563
        %v2565 = vlaneseq
        %v2566 = vshrl.u32 %v2565, 7
        %v2567 = vsub.s32 %v2564, %v2566
        %v2568 = vrot.slane %v2561, %v2567
        %v2569 = vcombine.low %v2560, %v2568
        %v2571 = vunpack.c.l.s4 1934713408
        %v2572 = vunpack.c.0.s8 %v2571
        %v2573 = vlaneseq
        %v2574 = vshrl.u32 %v2573, 7
        %v2575 = vsub.s32 %v2572, %v2574
        %v2576 = vrot.slane %v2569, %v2575
        %v2577 = vcombine.high %v2576, 0
        %v2578 = vcombine.low %v2159, %v2166
        %v2580 = vunpack.c.l.s4 1983009808
        %v2581 = vunpack.c.0.s8 %v2580
        %v2582 = vlaneseq
        %v2583 = vshrl.u32 %v2582, 7
        %v2584 = vsub.s32 %v2581, %v2583
        %v2585 = vrot.slane %v2578, %v2584
        %v2586 = vcombine.low %v2169, %v2170
        %v2588 = vunpack.c.l.s4 1983009808
        %v2589 = vunpack.c.0.s8 %v2588
        %v2590 = vlaneseq
        %v2591 = vshrl.u32 %v2590, 7
        %v2592 = vsub.s32 %v2589, %v2591
        %v2593 = vrot.slane %v2586, %v2592
        %v2594 = vcombine.low %v2585, %v2593
        %v2596 = vunpack.c.l.s4 1934713408
        %v2597 = vunpack.c.0.s8 %v2596
        %v2598 = vlaneseq
        %v2599 = vshrl.u32 %v2598, 7
        %v2600 = vsub.s32 %v2597, %v2599
        %v2601 = vrot.slane %v2594, %v2600
        %v2602 = vcombine.high %v2601, 0
        %v2603 = vcombine.low %v2209, %v2216
        %v2605 = vunpack.c.l.s4 1983009808
        %v2606 = vunpack.c.0.s8 %v2605
        %v2607 = vlaneseq
        %v2608 = vshrl.u32 %v2607, 7
        %v2609 = vsub.s32 %v2606, %v2608
        %v2610 = vrot.slane %v2603, %v2609
        %v2611 = vcombine.low %v2233, %v2234
        %v2613 = vunpack.c.l.s4 1983009808
        %v2614 = vunpack.c.0.s8 %v2613
        %v2615 = vlaneseq
        %v2616 = vshrl.u32 %v2615, 7
        %v2617 = vsub.s32 %v2614, %v2616
        %v2618 = vrot.slane %v2611, %v2617
        %v2619 = vcombine.low %v2610, %v2618
        %v2621 = vunpack.c.l.s4 1934713408
        %v2622 = vunpack.c.0.s8 %v2621
        %v2623 = vlaneseq
        %v2624 = vshrl.u32 %v2623, 7
        %v2625 = vsub.s32 %v2622, %v2624
        %v2626 = vrot.slane %v2619, %v2625
        %v2627 = vcombine.high %v2626, 0
        %v2628 = vcombine.low %v2275, %v2282
        %v2630 = vunpack.c.l.s4 1983009808
        %v2631 = vunpack.c.0.s8 %v2630
        %v2632 = vlaneseq
        %v2633 = vshrl.u32 %v2632, 7
        %v2634 = vsub.s32 %v2631, %v2633
        %v2635 = vrot.slane %v2628, %v2634
        %v2636 = vcombine.low %v2299, %v2300
        %v2638 = vunpack.c.l.s4 1983009808
        %v2639 = vunpack.c.0.s8 %v2638
        %v2640 = vlaneseq
        %v2641 = vshrl.u32 %v2640, 7
        %v2642 = vsub.s32 %v2639, %v2641
        %v2643 = vrot.slane %v2636, %v2642
        %v2644 = vcombine.low %v2635, %v2643
        %v2646 = vunpack.c.l.s4 1934713408
        %v2647 = vunpack.c.0.s8 %v2646
        %v2648 = vlaneseq
        %v2649 = vshrl.u32 %v2648, 7
        %v2650 = vsub.s32 %v2647, %v2649
        %v2651 = vrot.slane %v2644, %v2650
        %v2652 = vcombine.high %v2651, 0
        %v2653 = vcombine.low %v2225, %v2232
        %v2655 = vunpack.c.l.s4 1983009808
        %v2656 = vunpack.c.0.s8 %v2655
        %v2657 = vlaneseq
        %v2658 = vshrl.u32 %v2657, 7
        %v2659 = vsub.s32 %v2656, %v2658
        %v2660 = vrot.slane %v2653, %v2659
        %v2661 = vcombine.low %v2235, %v2236
        %v2663 = vunpack.c.l.s4 1983009808
        %v2664 = vunpack.c.0.s8 %v2663
        %v2665 = vlaneseq
        %v2666 = vshrl.u32 %v2665, 7
        %v2667 = vsub.s32 %v2664, %v2666
        %v2668 = vrot.slane %v2661, %v2667
        %v2669 = vcombine.low %v2660, %v2668
        %v2671 = vunpack.c.l.s4 1934713408
        %v2672 = vunpack.c.0.s8 %v2671
        %v2673 = vlaneseq
        %v2674 = vshrl.u32 %v2673, 7
        %v2675 = vsub.s32 %v2672, %v2674
        %v2676 = vrot.slane %v2669, %v2675
        %v2677 = vcombine.high %v2676, 0
        %v2678 = vcombine.low %v2291, %v2298
        %v2680 = vunpack.c.l.s4 1983009808
        %v2681 = vunpack.c.0.s8 %v2680
        %v2682 = vlaneseq
        %v2683 = vshrl.u32 %v2682, 7
        %v2684 = vsub.s32 %v2681, %v2683
        %v2685 = vrot.slane %v2678, %v2684
        %v2686 = vcombine.low %v2301, %v2302
        %v2688 = vunpack.c.l.s4 1983009808
        %v2689 = vunpack.c.0.s8 %v2688
        %v2690 = vlaneseq
        %v2691 = vshrl.u32 %v2690, 7
        %v2692 = vsub.s32 %v2689, %v2691
        %v2693 = vrot.slane %v2686, %v2692
        %v2694 = vcombine.low %v2685, %v2693
        %v2696 = vunpack.c.l.s4 1934713408
        %v2697 = vunpack.c.0.s8 %v2696
        %v2698 = vlaneseq
        %v2699 = vshrl.u32 %v2698, 7
        %v2700 = vsub.s32 %v2697, %v2699
        %v2701 = vrot.slane %v2694, %v2700
        %v2702 = vcombine.high %v2701, 0
        %v2705 = vpack.i.b16 %v2351, %v2326
        %v2706 = vshrl.u32 %v2326, 16
        %v2707 = vshrl.u32 %v2351, 16
        %v2708 = vpack.i.b16 %v2707, %v2706
        %v2711 = vpack.i.b16 %v2352, %v2327
        %v2712 = vshrl.u32 %v2327, 16
        %v2713 = vshrl.u32 %v2352, 16
        %v2714 = vpack.i.b16 %v2713, %v2712
        %v2717 = vpack.i.b16 %v2401, %v2376
        %v2718 = vshrl.u32 %v2376, 16
        %v2719 = vshrl.u32 %v2401, 16
        %v2720 = vpack.i.b16 %v2719, %v2718
        %v2723 = vpack.i.b16 %v2402, %v2377
        %v2724 = vshrl.u32 %v2377, 16
        %v2725 = vshrl.u32 %v2402, 16
        %v2726 = vpack.i.b16 %v2725, %v2724
        %v2729 = vpack.i.b16 %v2451, %v2426
        %v2730 = vshrl.u32 %v2426, 16
        %v2731 = vshrl.u32 %v2451, 16
        %v2732 = vpack.i.b16 %v2731, %v2730
        %v2735 = vpack.i.b16 %v2452, %v2427
        %v2736 = vshrl.u32 %v2427, 16
        %v2737 = vshrl.u32 %v2452, 16
        %v2738 = vpack.i.b16 %v2737, %v2736
        %v2741 = vpack.i.b16 %v2501, %v2476
        %v2742 = vshrl.u32 %v2476, 16
        %v2743 = vshrl.u32 %v2501, 16
        %v2744 = vpack.i.b16 %v2743, %v2742
        %v2747 = vpack.i.b16 %v2502, %v2477
        %v2748 = vshrl.u32 %v2477, 16
        %v2749 = vshrl.u32 %v2502, 16
        %v2750 = vpack.i.b16 %v2749, %v2748
        %v2753 = vpack.i.b16 %v2551, %v2526
        %v2754 = vshrl.u32 %v2526, 16
        %v2755 = vshrl.u32 %v2551, 16
        %v2756 = vpack.i.b16 %v2755, %v2754
        %v2759 = vpack.i.b16 %v2552, %v2527
        %v2760 = vshrl.u32 %v2527, 16
        %v2761 = vshrl.u32 %v2552, 16
        %v2762 = vpack.i.b16 %v2761, %v2760
        %v2765 = vpack.i.b16 %v2601, %v2576
        %v2766 = vshrl.u32 %v2576, 16
        %v2767 = vshrl.u32 %v2601, 16
        %v2768 = vpack.i.b16 %v2767, %v2766
        %v2771 = vpack.i.b16 %v2602, %v2577
        %v2772 = vshrl.u32 %v2577, 16
        %v2773 = vshrl.u32 %v2602, 16
        %v2774 = vpack.i.b16 %v2773, %v2772
        %v2777 = vpack.i.b16 %v2651, %v2626
        %v2778 = vshrl.u32 %v2626, 16
        %v2779 = vshrl.u32 %v2651, 16
        %v2780 = vpack.i.b16 %v2779, %v2778
        %v2783 = vpack.i.b16 %v2652, %v2627
        %v2784 = vshrl.u32 %v2627, 16
        %v2785 = vshrl.u32 %v2652, 16
        %v2786 = vpack.i.b16 %v2785, %v2784
        %v2789 = vpack.i.b16 %v2701, %v2676
        %v2790 = vshrl.u32 %v2676, 16
        %v2791 = vshrl.u32 %v2701, 16
        %v2792 = vpack.i.b16 %v2791, %v2790
        %v2795 = vpack.i.b16 %v2702, %v2677
        %v2796 = vshrl.u32 %v2677, 16
        %v2797 = vshrl.u32 %v2702, 16
        %v2798 = vpack.i.b16 %v2797, %v2796
        %v2799 = vpack.c.bf16 %v1568, %v1564
        %v2800 = vpack.c.bf16 %v1578, %v1574
        %v2801 = vpack.c.bf16 %v1588, %v1584
        %v2802 = vpack.c.bf16 %v1598, %v1594
        %2807 = vrot.lane.b32.xlu0 %v2799, 96
        %v2808 = vpop.permute.xlu0 %2807
        %2809 = vrot.lane.b32.xlu0 %v2800, 96
        %v2810 = vpop.permute.xlu0 %2809
        %2811 = vrot.lane.b32.xlu0 %v2801, 96
        %v2812 = vpop.permute.xlu0 %2811
        %2813 = vrot.lane.b32.xlu0 %v2802, 96
        %v2814 = vpop.permute.xlu0 %2813
        %2815 = vrot.lane.b32.xlu0 %v2799, 64
        %v2816 = vpop.permute.xlu0 %2815
        %2817 = vrot.lane.b32.xlu0 %v2800, 64
        %v2818 = vpop.permute.xlu0 %2817
        %2819 = vrot.lane.b32.xlu0 %v2801, 64
        %v2820 = vpop.permute.xlu0 %2819
        %2821 = vrot.lane.b32.xlu0 %v2802, 64
        %v2822 = vpop.permute.xlu0 %2821
        %2823 = vrot.lane.b32.xlu0 %v2799, 32
        %v2824 = vpop.permute.xlu0 %2823
        %2825 = vrot.lane.b32.xlu0 %v2800, 32
        %v2826 = vpop.permute.xlu0 %2825
        %2827 = vrot.lane.b32.xlu0 %v2801, 32
        %v2828 = vpop.permute.xlu0 %2827
        %2829 = vrot.lane.b32.xlu0 %v2802, 32
        %v2830 = vpop.permute.xlu0 %2829
        %v2833 = vpack.i.b16 %v2808, %v2799
        %v2835 = vshrl.u32 %v2799, 16
        %v2836 = vshrl.u32 %v2808, 16
        %v2837 = vpack.i.b16 %v2836, %v2835
        %v2841 = vpack.i.b16 %v2824, %v2816
        %v2843 = vshrl.u32 %v2816, 16
        %v2844 = vshrl.u32 %v2824, 16
        %v2845 = vpack.i.b16 %v2844, %v2843
        %v2849 = vpack.i.b16 %v2810, %v2800
        %v2851 = vshrl.u32 %v2800, 16
        %v2852 = vshrl.u32 %v2810, 16
        %v2853 = vpack.i.b16 %v2852, %v2851
        %v2857 = vpack.i.b16 %v2826, %v2818
        %v2859 = vshrl.u32 %v2818, 16
        %v2860 = vshrl.u32 %v2826, 16
        %v2861 = vpack.i.b16 %v2860, %v2859
        %v2865 = vpack.i.b16 %v2812, %v2801
        %v2867 = vshrl.u32 %v2801, 16
        %v2868 = vshrl.u32 %v2812, 16
        %v2869 = vpack.i.b16 %v2868, %v2867
        %v2873 = vpack.i.b16 %v2828, %v2820
        %v2875 = vshrl.u32 %v2820, 16
        %v2876 = vshrl.u32 %v2828, 16
        %v2877 = vpack.i.b16 %v2876, %v2875
        %v2881 = vpack.i.b16 %v2814, %v2802
        %v2883 = vshrl.u32 %v2802, 16
        %v2884 = vshrl.u32 %v2814, 16
        %v2885 = vpack.i.b16 %v2884, %v2883
        %v2889 = vpack.i.b16 %v2830, %v2822
        %v2891 = vshrl.u32 %v2822, 16
        %v2892 = vshrl.u32 %v2830, 16
        %v2893 = vpack.i.b16 %v2892, %v2891
        %v2895 = vcombine.high %v2833, %v1722
        %v2897 = vunpack.c.l.s4 1983009808
        %v2898 = vunpack.c.0.s8 %v2897
        %v2899 = vlaneseq
        %v2900 = vshrl.u32 %v2899, 7
        %v2901 = vsub.s32 %v2898, %v2900
        %v2902 = vrot.slane %v2833, %v2901
        %v2904 = vunpack.c.l.s4 1983009808
        %v2905 = vunpack.c.0.s8 %v2904
        %v2906 = vlaneseq
        %v2907 = vshrl.u32 %v2906, 7
        %v2908 = vsub.s32 %v2905, %v2907
        %v2909 = vrot.slane %v2895, %v2908
        %v2910 = vcombine.high %v2841, %v1722
        %v2912 = vunpack.c.l.s4 1983009808
        %v2913 = vunpack.c.0.s8 %v2912
        %v2914 = vlaneseq
        %v2915 = vshrl.u32 %v2914, 7
        %v2916 = vsub.s32 %v2913, %v2915
        %v2917 = vrot.slane %v2841, %v2916
        %v2919 = vunpack.c.l.s4 1983009808
        %v2920 = vunpack.c.0.s8 %v2919
        %v2921 = vlaneseq
        %v2922 = vshrl.u32 %v2921, 7
        %v2923 = vsub.s32 %v2920, %v2922
        %v2924 = vrot.slane %v2910, %v2923
        %v2925 = vcombine.low %v2902, %v2917
        %v2926 = vcombine.high %v2902, %v2917
        %v2928 = vunpack.c.l.s4 1934713408
        %v2929 = vunpack.c.0.s8 %v2928
        %v2930 = vlaneseq
        %v2931 = vshrl.u32 %v2930, 7
        %v2932 = vsub.s32 %v2929, %v2931
        %v2933 = vrot.slane %v2925, %v2932
        %v2935 = vunpack.c.l.s4 1934713408
        %v2936 = vunpack.c.0.s8 %v2935
        %v2937 = vlaneseq
        %v2938 = vshrl.u32 %v2937, 7
        %v2939 = vsub.s32 %v2936, %v2938
        %v2940 = vrot.slane %v2926, %v2939
        %v2941 = vcombine.low %v2909, %v2924
        %v2942 = vcombine.high %v2909, %v2924
        %v2944 = vunpack.c.l.s4 1934713408
        %v2945 = vunpack.c.0.s8 %v2944
        %v2946 = vlaneseq
        %v2947 = vshrl.u32 %v2946, 7
        %v2948 = vsub.s32 %v2945, %v2947
        %v2949 = vrot.slane %v2941, %v2948
        %v2951 = vunpack.c.l.s4 1934713408
        %v2952 = vunpack.c.0.s8 %v2951
        %v2953 = vlaneseq
        %v2954 = vshrl.u32 %v2953, 7
        %v2955 = vsub.s32 %v2952, %v2954
        %v2956 = vrot.slane %v2942, %v2955
        %v2957 = vcombine.high %v2933, 0
        %v2958 = vcombine.high %v2940, 0
        %v2959 = vcombine.high %v2949, 0
        %v2960 = vcombine.high %v2956, 0
        %v2961 = vcombine.high %v2837, %v1725
        %v2963 = vunpack.c.l.s4 1983009808
        %v2964 = vunpack.c.0.s8 %v2963
        %v2965 = vlaneseq
        %v2966 = vshrl.u32 %v2965, 7
        %v2967 = vsub.s32 %v2964, %v2966
        %v2968 = vrot.slane %v2837, %v2967
        %v2970 = vunpack.c.l.s4 1983009808
        %v2971 = vunpack.c.0.s8 %v2970
        %v2972 = vlaneseq
        %v2973 = vshrl.u32 %v2972, 7
        %v2974 = vsub.s32 %v2971, %v2973
        %v2975 = vrot.slane %v2961, %v2974
        %v2976 = vcombine.high %v2845, %v1725
        %v2978 = vunpack.c.l.s4 1983009808
        %v2979 = vunpack.c.0.s8 %v2978
        %v2980 = vlaneseq
        %v2981 = vshrl.u32 %v2980, 7
        %v2982 = vsub.s32 %v2979, %v2981
        %v2983 = vrot.slane %v2845, %v2982
        %v2985 = vunpack.c.l.s4 1983009808
        %v2986 = vunpack.c.0.s8 %v2985
        %v2987 = vlaneseq
        %v2988 = vshrl.u32 %v2987, 7
        %v2989 = vsub.s32 %v2986, %v2988
        %v2990 = vrot.slane %v2976, %v2989
        %v2991 = vcombine.low %v2968, %v2983
        %v2992 = vcombine.high %v2968, %v2983
        %v2994 = vunpack.c.l.s4 1934713408
        %v2995 = vunpack.c.0.s8 %v2994
        %v2996 = vlaneseq
        %v2997 = vshrl.u32 %v2996, 7
        %v2998 = vsub.s32 %v2995, %v2997
        %v2999 = vrot.slane %v2991, %v2998
        %v3001 = vunpack.c.l.s4 1934713408
        %v3002 = vunpack.c.0.s8 %v3001
        %v3003 = vlaneseq
        %v3004 = vshrl.u32 %v3003, 7
        %v3005 = vsub.s32 %v3002, %v3004
        %v3006 = vrot.slane %v2992, %v3005
        %v3007 = vcombine.low %v2975, %v2990
        %v3008 = vcombine.high %v2975, %v2990
        %v3010 = vunpack.c.l.s4 1934713408
        %v3011 = vunpack.c.0.s8 %v3010
        %v3012 = vlaneseq
        %v3013 = vshrl.u32 %v3012, 7
        %v3014 = vsub.s32 %v3011, %v3013
        %v3015 = vrot.slane %v3007, %v3014
        %v3017 = vunpack.c.l.s4 1934713408
        %v3018 = vunpack.c.0.s8 %v3017
        %v3019 = vlaneseq
        %v3020 = vshrl.u32 %v3019, 7
        %v3021 = vsub.s32 %v3018, %v3020
        %v3022 = vrot.slane %v3008, %v3021
        %v3023 = vcombine.high %v2999, 0
        %v3024 = vcombine.high %v3006, 0
        %v3025 = vcombine.high %v3015, 0
        %v3026 = vcombine.high %v3022, 0
        %v3027 = vcombine.high %v2849, %v1722
        %v3029 = vunpack.c.l.s4 1983009808
        %v3030 = vunpack.c.0.s8 %v3029
        %v3031 = vlaneseq
        %v3032 = vshrl.u32 %v3031, 7
        %v3033 = vsub.s32 %v3030, %v3032
        %v3034 = vrot.slane %v2849, %v3033
        %v3036 = vunpack.c.l.s4 1983009808
        %v3037 = vunpack.c.0.s8 %v3036
        %v3038 = vlaneseq
        %v3039 = vshrl.u32 %v3038, 7
        %v3040 = vsub.s32 %v3037, %v3039
        %v3041 = vrot.slane %v3027, %v3040
        %v3042 = vcombine.high %v2857, %v1722
        %v3044 = vunpack.c.l.s4 1983009808
        %v3045 = vunpack.c.0.s8 %v3044
        %v3046 = vlaneseq
        %v3047 = vshrl.u32 %v3046, 7
        %v3048 = vsub.s32 %v3045, %v3047
        %v3049 = vrot.slane %v2857, %v3048
        %v3051 = vunpack.c.l.s4 1983009808
        %v3052 = vunpack.c.0.s8 %v3051
        %v3053 = vlaneseq
        %v3054 = vshrl.u32 %v3053, 7
        %v3055 = vsub.s32 %v3052, %v3054
        %v3056 = vrot.slane %v3042, %v3055
        %v3057 = vcombine.low %v3034, %v3049
        %v3058 = vcombine.high %v3034, %v3049
        %v3060 = vunpack.c.l.s4 1934713408
        %v3061 = vunpack.c.0.s8 %v3060
        %v3062 = vlaneseq
        %v3063 = vshrl.u32 %v3062, 7
        %v3064 = vsub.s32 %v3061, %v3063
        %v3065 = vrot.slane %v3057, %v3064
        %v3067 = vunpack.c.l.s4 1934713408
        %v3068 = vunpack.c.0.s8 %v3067
        %v3069 = vlaneseq
        %v3070 = vshrl.u32 %v3069, 7
        %v3071 = vsub.s32 %v3068, %v3070
        %v3072 = vrot.slane %v3058, %v3071
        %v3073 = vcombine.low %v3041, %v3056
        %v3074 = vcombine.high %v3041, %v3056
        %v3076 = vunpack.c.l.s4 1934713408
        %v3077 = vunpack.c.0.s8 %v3076
        %v3078 = vlaneseq
        %v3079 = vshrl.u32 %v3078, 7
        %v3080 = vsub.s32 %v3077, %v3079
        %v3081 = vrot.slane %v3073, %v3080
        %v3083 = vunpack.c.l.s4 1934713408
        %v3084 = vunpack.c.0.s8 %v3083
        %v3085 = vlaneseq
        %v3086 = vshrl.u32 %v3085, 7
        %v3087 = vsub.s32 %v3084, %v3086
        %v3088 = vrot.slane %v3074, %v3087
        %v3089 = vcombine.high %v3065, 0
        %v3090 = vcombine.high %v3072, 0
        %v3091 = vcombine.high %v3081, 0
        %v3092 = vcombine.high %v3088, 0
        %v3093 = vcombine.high %v2853, %v1725
        %v3095 = vunpack.c.l.s4 1983009808
        %v3096 = vunpack.c.0.s8 %v3095
        %v3097 = vlaneseq
        %v3098 = vshrl.u32 %v3097, 7
        %v3099 = vsub.s32 %v3096, %v3098
        %v3100 = vrot.slane %v2853, %v3099
        %v3102 = vunpack.c.l.s4 1983009808
        %v3103 = vunpack.c.0.s8 %v3102
        %v3104 = vlaneseq
        %v3105 = vshrl.u32 %v3104, 7
        %v3106 = vsub.s32 %v3103, %v3105
        %v3107 = vrot.slane %v3093, %v3106
        %v3108 = vcombine.high %v2861, %v1725
        %v3110 = vunpack.c.l.s4 1983009808
        %v3111 = vunpack.c.0.s8 %v3110
        %v3112 = vlaneseq
        %v3113 = vshrl.u32 %v3112, 7
        %v3114 = vsub.s32 %v3111, %v3113
        %v3115 = vrot.slane %v2861, %v3114
        %v3117 = vunpack.c.l.s4 1983009808
        %v3118 = vunpack.c.0.s8 %v3117
        %v3119 = vlaneseq
        %v3120 = vshrl.u32 %v3119, 7
        %v3121 = vsub.s32 %v3118, %v3120
        %v3122 = vrot.slane %v3108, %v3121
        %v3123 = vcombine.low %v3100, %v3115
        %v3124 = vcombine.high %v3100, %v3115
        %v3126 = vunpack.c.l.s4 1934713408
        %v3127 = vunpack.c.0.s8 %v3126
        %v3128 = vlaneseq
        %v3129 = vshrl.u32 %v3128, 7
        %v3130 = vsub.s32 %v3127, %v3129
        %v3131 = vrot.slane %v3123, %v3130
        %v3133 = vunpack.c.l.s4 1934713408
        %v3134 = vunpack.c.0.s8 %v3133
        %v3135 = vlaneseq
        %v3136 = vshrl.u32 %v3135, 7
        %v3137 = vsub.s32 %v3134, %v3136
        %v3138 = vrot.slane %v3124, %v3137
        %v3139 = vcombine.low %v3107, %v3122
        %v3140 = vcombine.high %v3107, %v3122
        %v3142 = vunpack.c.l.s4 1934713408
        %v3143 = vunpack.c.0.s8 %v3142
        %v3144 = vlaneseq
        %v3145 = vshrl.u32 %v3144, 7
        %v3146 = vsub.s32 %v3143, %v3145
        %v3147 = vrot.slane %v3139, %v3146
        %v3149 = vunpack.c.l.s4 1934713408
        %v3150 = vunpack.c.0.s8 %v3149
        %v3151 = vlaneseq
        %v3152 = vshrl.u32 %v3151, 7
        %v3153 = vsub.s32 %v3150, %v3152
        %v3154 = vrot.slane %v3140, %v3153
        %v3155 = vcombine.high %v3131, 0
        %v3156 = vcombine.high %v3138, 0
        %v3157 = vcombine.high %v3147, 0
        %v3158 = vcombine.high %v3154, 0
        %v3159 = vcombine.high %v2865, %v1722
        %v3161 = vunpack.c.l.s4 1983009808
        %v3162 = vunpack.c.0.s8 %v3161
        %v3163 = vlaneseq
        %v3164 = vshrl.u32 %v3163, 7
        %v3165 = vsub.s32 %v3162, %v3164
        %v3166 = vrot.slane %v2865, %v3165
        %v3168 = vunpack.c.l.s4 1983009808
        %v3169 = vunpack.c.0.s8 %v3168
        %v3170 = vlaneseq
        %v3171 = vshrl.u32 %v3170, 7
        %v3172 = vsub.s32 %v3169, %v3171
        %v3173 = vrot.slane %v3159, %v3172
        %v3174 = vcombine.high %v2873, %v1722
        %v3176 = vunpack.c.l.s4 1983009808
        %v3177 = vunpack.c.0.s8 %v3176
        %v3178 = vlaneseq
        %v3179 = vshrl.u32 %v3178, 7
        %v3180 = vsub.s32 %v3177, %v3179
        %v3181 = vrot.slane %v2873, %v3180
        %v3183 = vunpack.c.l.s4 1983009808
        %v3184 = vunpack.c.0.s8 %v3183
        %v3185 = vlaneseq
        %v3186 = vshrl.u32 %v3185, 7
        %v3187 = vsub.s32 %v3184, %v3186
        %v3188 = vrot.slane %v3174, %v3187
        %v3189 = vcombine.low %v3166, %v3181
        %v3190 = vcombine.high %v3166, %v3181
        %v3192 = vunpack.c.l.s4 1934713408
        %v3193 = vunpack.c.0.s8 %v3192
        %v3194 = vlaneseq
        %v3195 = vshrl.u32 %v3194, 7
        %v3196 = vsub.s32 %v3193, %v3195
        %v3197 = vrot.slane %v3189, %v3196
        %v3199 = vunpack.c.l.s4 1934713408
        %v3200 = vunpack.c.0.s8 %v3199
        %v3201 = vlaneseq
        %v3202 = vshrl.u32 %v3201, 7
        %v3203 = vsub.s32 %v3200, %v3202
        %v3204 = vrot.slane %v3190, %v3203
        %v3205 = vcombine.low %v3173, %v3188
        %v3206 = vcombine.high %v3173, %v3188
        %v3208 = vunpack.c.l.s4 1934713408
        %v3209 = vunpack.c.0.s8 %v3208
        %v3210 = vlaneseq
        %v3211 = vshrl.u32 %v3210, 7
        %v3212 = vsub.s32 %v3209, %v3211
        %v3213 = vrot.slane %v3205, %v3212
        %v3215 = vunpack.c.l.s4 1934713408
        %v3216 = vunpack.c.0.s8 %v3215
        %v3217 = vlaneseq
        %v3218 = vshrl.u32 %v3217, 7
        %v3219 = vsub.s32 %v3216, %v3218
        %v3220 = vrot.slane %v3206, %v3219
        %v3221 = vcombine.high %v3197, 0
        %v3222 = vcombine.high %v3204, 0
        %v3223 = vcombine.high %v3213, 0
        %v3224 = vcombine.high %v3220, 0
        %v3225 = vcombine.high %v2869, %v1725
        %v3227 = vunpack.c.l.s4 1983009808
        %v3228 = vunpack.c.0.s8 %v3227
        %v3229 = vlaneseq
        %v3230 = vshrl.u32 %v3229, 7
        %v3231 = vsub.s32 %v3228, %v3230
        %v3232 = vrot.slane %v2869, %v3231
        %v3234 = vunpack.c.l.s4 1983009808
        %v3235 = vunpack.c.0.s8 %v3234
        %v3236 = vlaneseq
        %v3237 = vshrl.u32 %v3236, 7
        %v3238 = vsub.s32 %v3235, %v3237
        %v3239 = vrot.slane %v3225, %v3238
        %v3240 = vcombine.high %v2877, %v1725
        %v3242 = vunpack.c.l.s4 1983009808
        %v3243 = vunpack.c.0.s8 %v3242
        %v3244 = vlaneseq
        %v3245 = vshrl.u32 %v3244, 7
        %v3246 = vsub.s32 %v3243, %v3245
        %v3247 = vrot.slane %v2877, %v3246
        %v3249 = vunpack.c.l.s4 1983009808
        %v3250 = vunpack.c.0.s8 %v3249
        %v3251 = vlaneseq
        %v3252 = vshrl.u32 %v3251, 7
        %v3253 = vsub.s32 %v3250, %v3252
        %v3254 = vrot.slane %v3240, %v3253
        %v3255 = vcombine.low %v3232, %v3247
        %v3256 = vcombine.high %v3232, %v3247
        %v3258 = vunpack.c.l.s4 1934713408
        %v3259 = vunpack.c.0.s8 %v3258
        %v3260 = vlaneseq
        %v3261 = vshrl.u32 %v3260, 7
        %v3262 = vsub.s32 %v3259, %v3261
        %v3263 = vrot.slane %v3255, %v3262
        %v3265 = vunpack.c.l.s4 1934713408
        %v3266 = vunpack.c.0.s8 %v3265
        %v3267 = vlaneseq
        %v3268 = vshrl.u32 %v3267, 7
        %v3269 = vsub.s32 %v3266, %v3268
        %v3270 = vrot.slane %v3256, %v3269
        %v3271 = vcombine.low %v3239, %v3254
        %v3272 = vcombine.high %v3239, %v3254
        %v3274 = vunpack.c.l.s4 1934713408
        %v3275 = vunpack.c.0.s8 %v3274
        %v3276 = vlaneseq
        %v3277 = vshrl.u32 %v3276, 7
        %v3278 = vsub.s32 %v3275, %v3277
        %v3279 = vrot.slane %v3271, %v3278
        %v3281 = vunpack.c.l.s4 1934713408
        %v3282 = vunpack.c.0.s8 %v3281
        %v3283 = vlaneseq
        %v3284 = vshrl.u32 %v3283, 7
        %v3285 = vsub.s32 %v3282, %v3284
        %v3286 = vrot.slane %v3272, %v3285
        %v3287 = vcombine.high %v3263, 0
        %v3288 = vcombine.high %v3270, 0
        %v3289 = vcombine.high %v3279, 0
        %v3290 = vcombine.high %v3286, 0
        %v3291 = vcombine.high %v2881, %v1722
        %v3293 = vunpack.c.l.s4 1983009808
        %v3294 = vunpack.c.0.s8 %v3293
        %v3295 = vlaneseq
        %v3296 = vshrl.u32 %v3295, 7
        %v3297 = vsub.s32 %v3294, %v3296
        %v3298 = vrot.slane %v2881, %v3297
        %v3300 = vunpack.c.l.s4 1983009808
        %v3301 = vunpack.c.0.s8 %v3300
        %v3302 = vlaneseq
        %v3303 = vshrl.u32 %v3302, 7
        %v3304 = vsub.s32 %v3301, %v3303
        %v3305 = vrot.slane %v3291, %v3304
        %v3306 = vcombine.high %v2889, %v1722
        %v3308 = vunpack.c.l.s4 1983009808
        %v3309 = vunpack.c.0.s8 %v3308
        %v3310 = vlaneseq
        %v3311 = vshrl.u32 %v3310, 7
        %v3312 = vsub.s32 %v3309, %v3311
        %v3313 = vrot.slane %v2889, %v3312
        %v3315 = vunpack.c.l.s4 1983009808
        %v3316 = vunpack.c.0.s8 %v3315
        %v3317 = vlaneseq
        %v3318 = vshrl.u32 %v3317, 7
        %v3319 = vsub.s32 %v3316, %v3318
        %v3320 = vrot.slane %v3306, %v3319
        %v3321 = vcombine.low %v3298, %v3313
        %v3322 = vcombine.high %v3298, %v3313
        %v3324 = vunpack.c.l.s4 1934713408
        %v3325 = vunpack.c.0.s8 %v3324
        %v3326 = vlaneseq
        %v3327 = vshrl.u32 %v3326, 7
        %v3328 = vsub.s32 %v3325, %v3327
        %v3329 = vrot.slane %v3321, %v3328
        %v3331 = vunpack.c.l.s4 1934713408
        %v3332 = vunpack.c.0.s8 %v3331
        %v3333 = vlaneseq
        %v3334 = vshrl.u32 %v3333, 7
        %v3335 = vsub.s32 %v3332, %v3334
        %v3336 = vrot.slane %v3322, %v3335
        %v3337 = vcombine.low %v3305, %v3320
        %v3338 = vcombine.high %v3305, %v3320
        %v3340 = vunpack.c.l.s4 1934713408
        %v3341 = vunpack.c.0.s8 %v3340
        %v3342 = vlaneseq
        %v3343 = vshrl.u32 %v3342, 7
        %v3344 = vsub.s32 %v3341, %v3343
        %v3345 = vrot.slane %v3337, %v3344
        %v3347 = vunpack.c.l.s4 1934713408
        %v3348 = vunpack.c.0.s8 %v3347
        %v3349 = vlaneseq
        %v3350 = vshrl.u32 %v3349, 7
        %v3351 = vsub.s32 %v3348, %v3350
        %v3352 = vrot.slane %v3338, %v3351
        %v3353 = vcombine.high %v3329, 0
        %v3354 = vcombine.high %v3336, 0
        %v3355 = vcombine.high %v3345, 0
        %v3356 = vcombine.high %v3352, 0
        %v3357 = vcombine.high %v2885, %v1725
        %v3359 = vunpack.c.l.s4 1983009808
        %v3360 = vunpack.c.0.s8 %v3359
        %v3361 = vlaneseq
        %v3362 = vshrl.u32 %v3361, 7
        %v3363 = vsub.s32 %v3360, %v3362
        %v3364 = vrot.slane %v2885, %v3363
        %v3366 = vunpack.c.l.s4 1983009808
        %v3367 = vunpack.c.0.s8 %v3366
        %v3368 = vlaneseq
        %v3369 = vshrl.u32 %v3368, 7
        %v3370 = vsub.s32 %v3367, %v3369
        %v3371 = vrot.slane %v3357, %v3370
        %v3372 = vcombine.high %v2893, %v1725
        %v3374 = vunpack.c.l.s4 1983009808
        %v3375 = vunpack.c.0.s8 %v3374
        %v3376 = vlaneseq
        %v3377 = vshrl.u32 %v3376, 7
        %v3378 = vsub.s32 %v3375, %v3377
        %v3379 = vrot.slane %v2893, %v3378
        %v3381 = vunpack.c.l.s4 1983009808
        %v3382 = vunpack.c.0.s8 %v3381
        %v3383 = vlaneseq
        %v3384 = vshrl.u32 %v3383, 7
        %v3385 = vsub.s32 %v3382, %v3384
        %v3386 = vrot.slane %v3372, %v3385
        %v3387 = vcombine.low %v3364, %v3379
        %v3388 = vcombine.high %v3364, %v3379
        %v3390 = vunpack.c.l.s4 1934713408
        %v3391 = vunpack.c.0.s8 %v3390
        %v3392 = vlaneseq
        %v3393 = vshrl.u32 %v3392, 7
        %v3394 = vsub.s32 %v3391, %v3393
        %v3395 = vrot.slane %v3387, %v3394
        %v3397 = vunpack.c.l.s4 1934713408
        %v3398 = vunpack.c.0.s8 %v3397
        %v3399 = vlaneseq
        %v3400 = vshrl.u32 %v3399, 7
        %v3401 = vsub.s32 %v3398, %v3400
        %v3402 = vrot.slane %v3388, %v3401
        %v3403 = vcombine.low %v3371, %v3386
        %v3404 = vcombine.high %v3371, %v3386
        %v3406 = vunpack.c.l.s4 1934713408
        %v3407 = vunpack.c.0.s8 %v3406
        %v3408 = vlaneseq
        %v3409 = vshrl.u32 %v3408, 7
        %v3410 = vsub.s32 %v3407, %v3409
        %v3411 = vrot.slane %v3403, %v3410
        %v3413 = vunpack.c.l.s4 1934713408
        %v3414 = vunpack.c.0.s8 %v3413
        %v3415 = vlaneseq
        %v3416 = vshrl.u32 %v3415, 7
        %v3417 = vsub.s32 %v3414, %v3416
        %v3418 = vrot.slane %v3404, %v3417
        %v3419 = vcombine.high %v3395, 0
        %v3420 = vcombine.high %v3402, 0
        %v3421 = vcombine.high %v3411, 0
        %v3422 = vcombine.high %v3418, 0
        %v3423 = vcombine.low %v2933, %v2940
        %v3425 = vunpack.c.l.s4 1983009808
        %v3426 = vunpack.c.0.s8 %v3425
        %v3427 = vlaneseq
        %v3428 = vshrl.u32 %v3427, 7
        %v3429 = vsub.s32 %v3426, %v3428
        %v3430 = vrot.slane %v3423, %v3429
        %v3431 = vcombine.low %v2957, %v2958
        %v3433 = vunpack.c.l.s4 1983009808
        %v3434 = vunpack.c.0.s8 %v3433
        %v3435 = vlaneseq
        %v3436 = vshrl.u32 %v3435, 7
        %v3437 = vsub.s32 %v3434, %v3436
        %v3438 = vrot.slane %v3431, %v3437
        %v3439 = vcombine.low %v3430, %v3438
        %v3441 = vunpack.c.l.s4 1934713408
        %v3442 = vunpack.c.0.s8 %v3441
        %v3443 = vlaneseq
        %v3444 = vshrl.u32 %v3443, 7
        %v3445 = vsub.s32 %v3442, %v3444
        %v3446 = vrot.slane %v3439, %v3445
        %v3447 = vcombine.high %v3446, 0
        %v3448 = vcombine.low %v2999, %v3006
        %v3450 = vunpack.c.l.s4 1983009808
        %v3451 = vunpack.c.0.s8 %v3450
        %v3452 = vlaneseq
        %v3453 = vshrl.u32 %v3452, 7
        %v3454 = vsub.s32 %v3451, %v3453
        %v3455 = vrot.slane %v3448, %v3454
        %v3456 = vcombine.low %v3023, %v3024
        %v3458 = vunpack.c.l.s4 1983009808
        %v3459 = vunpack.c.0.s8 %v3458
        %v3460 = vlaneseq
        %v3461 = vshrl.u32 %v3460, 7
        %v3462 = vsub.s32 %v3459, %v3461
        %v3463 = vrot.slane %v3456, %v3462
        %v3464 = vcombine.low %v3455, %v3463
        %v3466 = vunpack.c.l.s4 1934713408
        %v3467 = vunpack.c.0.s8 %v3466
        %v3468 = vlaneseq
        %v3469 = vshrl.u32 %v3468, 7
        %v3470 = vsub.s32 %v3467, %v3469
        %v3471 = vrot.slane %v3464, %v3470
        %v3472 = vcombine.high %v3471, 0
        %v3473 = vcombine.low %v2949, %v2956
        %v3475 = vunpack.c.l.s4 1983009808
        %v3476 = vunpack.c.0.s8 %v3475
        %v3477 = vlaneseq
        %v3478 = vshrl.u32 %v3477, 7
        %v3479 = vsub.s32 %v3476, %v3478
        %v3480 = vrot.slane %v3473, %v3479
        %v3481 = vcombine.low %v2959, %v2960
        %v3483 = vunpack.c.l.s4 1983009808
        %v3484 = vunpack.c.0.s8 %v3483
        %v3485 = vlaneseq
        %v3486 = vshrl.u32 %v3485, 7
        %v3487 = vsub.s32 %v3484, %v3486
        %v3488 = vrot.slane %v3481, %v3487
        %v3489 = vcombine.low %v3480, %v3488
        %v3491 = vunpack.c.l.s4 1934713408
        %v3492 = vunpack.c.0.s8 %v3491
        %v3493 = vlaneseq
        %v3494 = vshrl.u32 %v3493, 7
        %v3495 = vsub.s32 %v3492, %v3494
        %v3496 = vrot.slane %v3489, %v3495
        %v3497 = vcombine.high %v3496, 0
        %v3498 = vcombine.low %v3015, %v3022
        %v3500 = vunpack.c.l.s4 1983009808
        %v3501 = vunpack.c.0.s8 %v3500
        %v3502 = vlaneseq
        %v3503 = vshrl.u32 %v3502, 7
        %v3504 = vsub.s32 %v3501, %v3503
        %v3505 = vrot.slane %v3498, %v3504
        %v3506 = vcombine.low %v3025, %v3026
        %v3508 = vunpack.c.l.s4 1983009808
        %v3509 = vunpack.c.0.s8 %v3508
        %v3510 = vlaneseq
        %v3511 = vshrl.u32 %v3510, 7
        %v3512 = vsub.s32 %v3509, %v3511
        %v3513 = vrot.slane %v3506, %v3512
        %v3514 = vcombine.low %v3505, %v3513
        %v3516 = vunpack.c.l.s4 1934713408
        %v3517 = vunpack.c.0.s8 %v3516
        %v3518 = vlaneseq
        %v3519 = vshrl.u32 %v3518, 7
        %v3520 = vsub.s32 %v3517, %v3519
        %v3521 = vrot.slane %v3514, %v3520
        %v3522 = vcombine.high %v3521, 0
        %v3523 = vcombine.low %v3065, %v3072
        %v3525 = vunpack.c.l.s4 1983009808
        %v3526 = vunpack.c.0.s8 %v3525
        %v3527 = vlaneseq
        %v3528 = vshrl.u32 %v3527, 7
        %v3529 = vsub.s32 %v3526, %v3528
        %v3530 = vrot.slane %v3523, %v3529
        %v3531 = vcombine.low %v3089, %v3090
        %v3533 = vunpack.c.l.s4 1983009808
        %v3534 = vunpack.c.0.s8 %v3533
        %v3535 = vlaneseq
        %v3536 = vshrl.u32 %v3535, 7
        %v3537 = vsub.s32 %v3534, %v3536
        %v3538 = vrot.slane %v3531, %v3537
        %v3539 = vcombine.low %v3530, %v3538
        %v3541 = vunpack.c.l.s4 1934713408
        %v3542 = vunpack.c.0.s8 %v3541
        %v3543 = vlaneseq
        %v3544 = vshrl.u32 %v3543, 7
        %v3545 = vsub.s32 %v3542, %v3544
        %v3546 = vrot.slane %v3539, %v3545
        %v3547 = vcombine.high %v3546, 0
        %v3548 = vcombine.low %v3131, %v3138
        %v3550 = vunpack.c.l.s4 1983009808
        %v3551 = vunpack.c.0.s8 %v3550
        %v3552 = vlaneseq
        %v3553 = vshrl.u32 %v3552, 7
        %v3554 = vsub.s32 %v3551, %v3553
        %v3555 = vrot.slane %v3548, %v3554
        %v3556 = vcombine.low %v3155, %v3156
        %v3558 = vunpack.c.l.s4 1983009808
        %v3559 = vunpack.c.0.s8 %v3558
        %v3560 = vlaneseq
        %v3561 = vshrl.u32 %v3560, 7
        %v3562 = vsub.s32 %v3559, %v3561
        %v3563 = vrot.slane %v3556, %v3562
        %v3564 = vcombine.low %v3555, %v3563
        %v3566 = vunpack.c.l.s4 1934713408
        %v3567 = vunpack.c.0.s8 %v3566
        %v3568 = vlaneseq
        %v3569 = vshrl.u32 %v3568, 7
        %v3570 = vsub.s32 %v3567, %v3569
        %v3571 = vrot.slane %v3564, %v3570
        %v3572 = vcombine.high %v3571, 0
        %v3573 = vcombine.low %v3081, %v3088
        %v3575 = vunpack.c.l.s4 1983009808
        %v3576 = vunpack.c.0.s8 %v3575
        %v3577 = vlaneseq
        %v3578 = vshrl.u32 %v3577, 7
        %v3579 = vsub.s32 %v3576, %v3578
        %v3580 = vrot.slane %v3573, %v3579
        %v3581 = vcombine.low %v3091, %v3092
        %v3583 = vunpack.c.l.s4 1983009808
        %v3584 = vunpack.c.0.s8 %v3583
        %v3585 = vlaneseq
        %v3586 = vshrl.u32 %v3585, 7
        %v3587 = vsub.s32 %v3584, %v3586
        %v3588 = vrot.slane %v3581, %v3587
        %v3589 = vcombine.low %v3580, %v3588
        %v3591 = vunpack.c.l.s4 1934713408
        %v3592 = vunpack.c.0.s8 %v3591
        %v3593 = vlaneseq
        %v3594 = vshrl.u32 %v3593, 7
        %v3595 = vsub.s32 %v3592, %v3594
        %v3596 = vrot.slane %v3589, %v3595
        %v3597 = vcombine.high %v3596, 0
        %v3598 = vcombine.low %v3147, %v3154
        %v3600 = vunpack.c.l.s4 1983009808
        %v3601 = vunpack.c.0.s8 %v3600
        %v3602 = vlaneseq
        %v3603 = vshrl.u32 %v3602, 7
        %v3604 = vsub.s32 %v3601, %v3603
        %v3605 = vrot.slane %v3598, %v3604
        %v3606 = vcombine.low %v3157, %v3158
        %v3608 = vunpack.c.l.s4 1983009808
        %v3609 = vunpack.c.0.s8 %v3608
        %v3610 = vlaneseq
        %v3611 = vshrl.u32 %v3610, 7
        %v3612 = vsub.s32 %v3609, %v3611
        %v3613 = vrot.slane %v3606, %v3612
        %v3614 = vcombine.low %v3605, %v3613
        %v3616 = vunpack.c.l.s4 1934713408
        %v3617 = vunpack.c.0.s8 %v3616
        %v3618 = vlaneseq
        %v3619 = vshrl.u32 %v3618, 7
        %v3620 = vsub.s32 %v3617, %v3619
        %v3621 = vrot.slane %v3614, %v3620
        %v3622 = vcombine.high %v3621, 0
        %v3623 = vcombine.low %v3197, %v3204
        %v3625 = vunpack.c.l.s4 1983009808
        %v3626 = vunpack.c.0.s8 %v3625
        %v3627 = vlaneseq
        %v3628 = vshrl.u32 %v3627, 7
        %v3629 = vsub.s32 %v3626, %v3628
        %v3630 = vrot.slane %v3623, %v3629
        %v3631 = vcombine.low %v3221, %v3222
        %v3633 = vunpack.c.l.s4 1983009808
        %v3634 = vunpack.c.0.s8 %v3633
        %v3635 = vlaneseq
        %v3636 = vshrl.u32 %v3635, 7
        %v3637 = vsub.s32 %v3634, %v3636
        %v3638 = vrot.slane %v3631, %v3637
        %v3639 = vcombine.low %v3630, %v3638
        %v3641 = vunpack.c.l.s4 1934713408
        %v3642 = vunpack.c.0.s8 %v3641
        %v3643 = vlaneseq
        %v3644 = vshrl.u32 %v3643, 7
        %v3645 = vsub.s32 %v3642, %v3644
        %v3646 = vrot.slane %v3639, %v3645
        %v3647 = vcombine.high %v3646, 0
        %v3648 = vcombine.low %v3263, %v3270
        %v3650 = vunpack.c.l.s4 1983009808
        %v3651 = vunpack.c.0.s8 %v3650
        %v3652 = vlaneseq
        %v3653 = vshrl.u32 %v3652, 7
        %v3654 = vsub.s32 %v3651, %v3653
        %v3655 = vrot.slane %v3648, %v3654
        %v3656 = vcombine.low %v3287, %v3288
        %v3658 = vunpack.c.l.s4 1983009808
        %v3659 = vunpack.c.0.s8 %v3658
        %v3660 = vlaneseq
        %v3661 = vshrl.u32 %v3660, 7
        %v3662 = vsub.s32 %v3659, %v3661
        %v3663 = vrot.slane %v3656, %v3662
        %v3664 = vcombine.low %v3655, %v3663
        %v3666 = vunpack.c.l.s4 1934713408
        %v3667 = vunpack.c.0.s8 %v3666
        %v3668 = vlaneseq
        %v3669 = vshrl.u32 %v3668, 7
        %v3670 = vsub.s32 %v3667, %v3669
        %v3671 = vrot.slane %v3664, %v3670
        %v3672 = vcombine.high %v3671, 0
        %v3673 = vcombine.low %v3213, %v3220
        %v3675 = vunpack.c.l.s4 1983009808
        %v3676 = vunpack.c.0.s8 %v3675
        %v3677 = vlaneseq
        %v3678 = vshrl.u32 %v3677, 7
        %v3679 = vsub.s32 %v3676, %v3678
        %v3680 = vrot.slane %v3673, %v3679
        %v3681 = vcombine.low %v3223, %v3224
        %v3683 = vunpack.c.l.s4 1983009808
        %v3684 = vunpack.c.0.s8 %v3683
        %v3685 = vlaneseq
        %v3686 = vshrl.u32 %v3685, 7
        %v3687 = vsub.s32 %v3684, %v3686
        %v3688 = vrot.slane %v3681, %v3687
        %v3689 = vcombine.low %v3680, %v3688
        %v3691 = vunpack.c.l.s4 1934713408
        %v3692 = vunpack.c.0.s8 %v3691
        %v3693 = vlaneseq
        %v3694 = vshrl.u32 %v3693, 7
        %v3695 = vsub.s32 %v3692, %v3694
        %v3696 = vrot.slane %v3689, %v3695
        %v3697 = vcombine.high %v3696, 0
        %v3698 = vcombine.low %v3279, %v3286
        %v3700 = vunpack.c.l.s4 1983009808
        %v3701 = vunpack.c.0.s8 %v3700
        %v3702 = vlaneseq
        %v3703 = vshrl.u32 %v3702, 7
        %v3704 = vsub.s32 %v3701, %v3703
        %v3705 = vrot.slane %v3698, %v3704
        %v3706 = vcombine.low %v3289, %v3290
        %v3708 = vunpack.c.l.s4 1983009808
        %v3709 = vunpack.c.0.s8 %v3708
        %v3710 = vlaneseq
        %v3711 = vshrl.u32 %v3710, 7
        %v3712 = vsub.s32 %v3709, %v3711
        %v3713 = vrot.slane %v3706, %v3712
        %v3714 = vcombine.low %v3705, %v3713
        %v3716 = vunpack.c.l.s4 1934713408
        %v3717 = vunpack.c.0.s8 %v3716
        %v3718 = vlaneseq
        %v3719 = vshrl.u32 %v3718, 7
        %v3720 = vsub.s32 %v3717, %v3719
        %v3721 = vrot.slane %v3714, %v3720
        %v3722 = vcombine.high %v3721, 0
        %v3723 = vcombine.low %v3329, %v3336
        %v3725 = vunpack.c.l.s4 1983009808
        %v3726 = vunpack.c.0.s8 %v3725
        %v3727 = vlaneseq
        %v3728 = vshrl.u32 %v3727, 7
        %v3729 = vsub.s32 %v3726, %v3728
        %v3730 = vrot.slane %v3723, %v3729
        %v3731 = vcombine.low %v3353, %v3354
        %v3733 = vunpack.c.l.s4 1983009808
        %v3734 = vunpack.c.0.s8 %v3733
        %v3735 = vlaneseq
        %v3736 = vshrl.u32 %v3735, 7
        %v3737 = vsub.s32 %v3734, %v3736
        %v3738 = vrot.slane %v3731, %v3737
        %v3739 = vcombine.low %v3730, %v3738
        %v3741 = vunpack.c.l.s4 1934713408
        %v3742 = vunpack.c.0.s8 %v3741
        %v3743 = vlaneseq
        %v3744 = vshrl.u32 %v3743, 7
        %v3745 = vsub.s32 %v3742, %v3744
        %v3746 = vrot.slane %v3739, %v3745
        %v3747 = vcombine.high %v3746, 0
        %v3748 = vcombine.low %v3395, %v3402
        %v3750 = vunpack.c.l.s4 1983009808
        %v3751 = vunpack.c.0.s8 %v3750
        %v3752 = vlaneseq
        %v3753 = vshrl.u32 %v3752, 7
        %v3754 = vsub.s32 %v3751, %v3753
        %v3755 = vrot.slane %v3748, %v3754
        %v3756 = vcombine.low %v3419, %v3420
        %v3758 = vunpack.c.l.s4 1983009808
        %v3759 = vunpack.c.0.s8 %v3758
        %v3760 = vlaneseq
        %v3761 = vshrl.u32 %v3760, 7
        %v3762 = vsub.s32 %v3759, %v3761
        %v3763 = vrot.slane %v3756, %v3762
        %v3764 = vcombine.low %v3755, %v3763
        %v3766 = vunpack.c.l.s4 1934713408
        %v3767 = vunpack.c.0.s8 %v3766
        %v3768 = vlaneseq
        %v3769 = vshrl.u32 %v3768, 7
        %v3770 = vsub.s32 %v3767, %v3769
        %v3771 = vrot.slane %v3764, %v3770
        %v3772 = vcombine.high %v3771, 0
        %v3773 = vcombine.low %v3345, %v3352
        %v3775 = vunpack.c.l.s4 1983009808
        %v3776 = vunpack.c.0.s8 %v3775
        %v3777 = vlaneseq
        %v3778 = vshrl.u32 %v3777, 7
        %v3779 = vsub.s32 %v3776, %v3778
        %v3780 = vrot.slane %v3773, %v3779
        %v3781 = vcombine.low %v3355, %v3356
        %v3783 = vunpack.c.l.s4 1983009808
        %v3784 = vunpack.c.0.s8 %v3783
        %v3785 = vlaneseq
        %v3786 = vshrl.u32 %v3785, 7
        %v3787 = vsub.s32 %v3784, %v3786
        %v3788 = vrot.slane %v3781, %v3787
        %v3789 = vcombine.low %v3780, %v3788
        %v3791 = vunpack.c.l.s4 1934713408
        %v3792 = vunpack.c.0.s8 %v3791
        %v3793 = vlaneseq
        %v3794 = vshrl.u32 %v3793, 7
        %v3795 = vsub.s32 %v3792, %v3794
        %v3796 = vrot.slane %v3789, %v3795
        %v3797 = vcombine.high %v3796, 0
        %v3798 = vcombine.low %v3411, %v3418
        %v3800 = vunpack.c.l.s4 1983009808
        %v3801 = vunpack.c.0.s8 %v3800
        %v3802 = vlaneseq
        %v3803 = vshrl.u32 %v3802, 7
        %v3804 = vsub.s32 %v3801, %v3803
        %v3805 = vrot.slane %v3798, %v3804
        %v3806 = vcombine.low %v3421, %v3422
        %v3808 = vunpack.c.l.s4 1983009808
        %v3809 = vunpack.c.0.s8 %v3808
        %v3810 = vlaneseq
        %v3811 = vshrl.u32 %v3810, 7
        %v3812 = vsub.s32 %v3809, %v3811
        %v3813 = vrot.slane %v3806, %v3812
        %v3814 = vcombine.low %v3805, %v3813
        %v3816 = vunpack.c.l.s4 1934713408
        %v3817 = vunpack.c.0.s8 %v3816
        %v3818 = vlaneseq
        %v3819 = vshrl.u32 %v3818, 7
        %v3820 = vsub.s32 %v3817, %v3819
        %v3821 = vrot.slane %v3814, %v3820
        %v3822 = vcombine.high %v3821, 0
        %v3825 = vpack.i.b16 %v3471, %v3446
        %v3826 = vshrl.u32 %v3446, 16
        %v3827 = vshrl.u32 %v3471, 16
        %v3828 = vpack.i.b16 %v3827, %v3826
        %v3831 = vpack.i.b16 %v3472, %v3447
        %v3832 = vshrl.u32 %v3447, 16
        %v3833 = vshrl.u32 %v3472, 16
        %v3834 = vpack.i.b16 %v3833, %v3832
        %v3837 = vpack.i.b16 %v3521, %v3496
        %v3838 = vshrl.u32 %v3496, 16
        %v3839 = vshrl.u32 %v3521, 16
        %v3840 = vpack.i.b16 %v3839, %v3838
        %v3843 = vpack.i.b16 %v3522, %v3497
        %v3844 = vshrl.u32 %v3497, 16
        %v3845 = vshrl.u32 %v3522, 16
        %v3846 = vpack.i.b16 %v3845, %v3844
        %v3849 = vpack.i.b16 %v3571, %v3546
        %v3850 = vshrl.u32 %v3546, 16
        %v3851 = vshrl.u32 %v3571, 16
        %v3852 = vpack.i.b16 %v3851, %v3850
        %v3855 = vpack.i.b16 %v3572, %v3547
        %v3856 = vshrl.u32 %v3547, 16
        %v3857 = vshrl.u32 %v3572, 16
        %v3858 = vpack.i.b16 %v3857, %v3856
        %v3861 = vpack.i.b16 %v3621, %v3596
        %v3862 = vshrl.u32 %v3596, 16
        %v3863 = vshrl.u32 %v3621, 16
        %v3864 = vpack.i.b16 %v3863, %v3862
        %v3867 = vpack.i.b16 %v3622, %v3597
        %v3868 = vshrl.u32 %v3597, 16
        %v3869 = vshrl.u32 %v3622, 16
        %v3870 = vpack.i.b16 %v3869, %v3868
        %v3873 = vpack.i.b16 %v3671, %v3646
        %v3874 = vshrl.u32 %v3646, 16
        %v3875 = vshrl.u32 %v3671, 16
        %v3876 = vpack.i.b16 %v3875, %v3874
        %v3879 = vpack.i.b16 %v3672, %v3647
        %v3880 = vshrl.u32 %v3647, 16
        %v3881 = vshrl.u32 %v3672, 16
        %v3882 = vpack.i.b16 %v3881, %v3880
        %v3885 = vpack.i.b16 %v3721, %v3696
        %v3886 = vshrl.u32 %v3696, 16
        %v3887 = vshrl.u32 %v3721, 16
        %v3888 = vpack.i.b16 %v3887, %v3886
        %v3891 = vpack.i.b16 %v3722, %v3697
        %v3892 = vshrl.u32 %v3697, 16
        %v3893 = vshrl.u32 %v3722, 16
        %v3894 = vpack.i.b16 %v3893, %v3892
        %v3897 = vpack.i.b16 %v3771, %v3746
        %v3898 = vshrl.u32 %v3746, 16
        %v3899 = vshrl.u32 %v3771, 16
        %v3900 = vpack.i.b16 %v3899, %v3898
        %v3903 = vpack.i.b16 %v3772, %v3747
        %v3904 = vshrl.u32 %v3747, 16
        %v3905 = vshrl.u32 %v3772, 16
        %v3906 = vpack.i.b16 %v3905, %v3904
        %v3909 = vpack.i.b16 %v3821, %v3796
        %v3910 = vshrl.u32 %v3796, 16
        %v3911 = vshrl.u32 %v3821, 16
        %v3912 = vpack.i.b16 %v3911, %v3910
        %v3915 = vpack.i.b16 %v3822, %v3797
        %v3916 = vshrl.u32 %v3797, 16
        %v3917 = vshrl.u32 %v3822, 16
        %v3918 = vpack.i.b16 %v3917, %v3916
        %v3919 = vpack.c.bf16 %v1638, %v1635
        %v3920 = vpack.c.bf16 %v1646, %v1643
        %v3921 = vpack.c.bf16 %v1654, %v1651
        %v3922 = vpack.c.bf16 %v1662, %v1659
        %3927 = vrot.lane.b32.xlu0 %v3919, 96
        %v3928 = vpop.permute.xlu0 %3927
        %3929 = vrot.lane.b32.xlu0 %v3920, 96
        %v3930 = vpop.permute.xlu0 %3929
        %3931 = vrot.lane.b32.xlu0 %v3921, 96
        %v3932 = vpop.permute.xlu0 %3931
        %3933 = vrot.lane.b32.xlu0 %v3922, 96
        %v3934 = vpop.permute.xlu0 %3933
        %3935 = vrot.lane.b32.xlu0 %v3919, 64
        %v3936 = vpop.permute.xlu0 %3935
        %3937 = vrot.lane.b32.xlu0 %v3920, 64
        %v3938 = vpop.permute.xlu0 %3937
        %3939 = vrot.lane.b32.xlu0 %v3921, 64
        %v3940 = vpop.permute.xlu0 %3939
        %3941 = vrot.lane.b32.xlu0 %v3922, 64
        %v3942 = vpop.permute.xlu0 %3941
        %3943 = vrot.lane.b32.xlu0 %v3919, 32
        %v3944 = vpop.permute.xlu0 %3943
        %3945 = vrot.lane.b32.xlu0 %v3920, 32
        %v3946 = vpop.permute.xlu0 %3945
        %3947 = vrot.lane.b32.xlu0 %v3921, 32
        %v3948 = vpop.permute.xlu0 %3947
        %3949 = vrot.lane.b32.xlu0 %v3922, 32
        %v3950 = vpop.permute.xlu0 %3949
        %v3953 = vpack.i.b16 %v3928, %v3919
        %v3955 = vshrl.u32 %v3919, 16
        %v3956 = vshrl.u32 %v3928, 16
        %v3957 = vpack.i.b16 %v3956, %v3955
        %v3961 = vpack.i.b16 %v3944, %v3936
        %v3963 = vshrl.u32 %v3936, 16
        %v3964 = vshrl.u32 %v3944, 16
        %v3965 = vpack.i.b16 %v3964, %v3963
        %v3969 = vpack.i.b16 %v3930, %v3920
        %v3971 = vshrl.u32 %v3920, 16
        %v3972 = vshrl.u32 %v3930, 16
        %v3973 = vpack.i.b16 %v3972, %v3971
        %v3977 = vpack.i.b16 %v3946, %v3938
        %v3979 = vshrl.u32 %v3938, 16
        %v3980 = vshrl.u32 %v3946, 16
        %v3981 = vpack.i.b16 %v3980, %v3979
        %v3985 = vpack.i.b16 %v3932, %v3921
        %v3987 = vshrl.u32 %v3921, 16
        %v3988 = vshrl.u32 %v3932, 16
        %v3989 = vpack.i.b16 %v3988, %v3987
        %v3993 = vpack.i.b16 %v3948, %v3940
        %v3995 = vshrl.u32 %v3940, 16
        %v3996 = vshrl.u32 %v3948, 16
        %v3997 = vpack.i.b16 %v3996, %v3995
        %v4001 = vpack.i.b16 %v3934, %v3922
        %v4003 = vshrl.u32 %v3922, 16
        %v4004 = vshrl.u32 %v3934, 16
        %v4005 = vpack.i.b16 %v4004, %v4003
        %v4009 = vpack.i.b16 %v3950, %v3942
        %v4011 = vshrl.u32 %v3942, 16
        %v4012 = vshrl.u32 %v3950, 16
        %v4013 = vpack.i.b16 %v4012, %v4011
        %v4015 = vcombine.high %v3953, %v1722
        %v4017 = vunpack.c.l.s4 1983009808
        %v4018 = vunpack.c.0.s8 %v4017
        %v4019 = vlaneseq
        %v4020 = vshrl.u32 %v4019, 7
        %v4021 = vsub.s32 %v4018, %v4020
        %v4022 = vrot.slane %v3953, %v4021
        %v4024 = vunpack.c.l.s4 1983009808
        %v4025 = vunpack.c.0.s8 %v4024
        %v4026 = vlaneseq
        %v4027 = vshrl.u32 %v4026, 7
        %v4028 = vsub.s32 %v4025, %v4027
        %v4029 = vrot.slane %v4015, %v4028
        %v4030 = vcombine.high %v3961, %v1722
        %v4032 = vunpack.c.l.s4 1983009808
        %v4033 = vunpack.c.0.s8 %v4032
        %v4034 = vlaneseq
        %v4035 = vshrl.u32 %v4034, 7
        %v4036 = vsub.s32 %v4033, %v4035
        %v4037 = vrot.slane %v3961, %v4036
        %v4039 = vunpack.c.l.s4 1983009808
        %v4040 = vunpack.c.0.s8 %v4039
        %v4041 = vlaneseq
        %v4042 = vshrl.u32 %v4041, 7
        %v4043 = vsub.s32 %v4040, %v4042
        %v4044 = vrot.slane %v4030, %v4043
        %v4045 = vcombine.low %v4022, %v4037
        %v4046 = vcombine.high %v4022, %v4037
        %v4048 = vunpack.c.l.s4 1934713408
        %v4049 = vunpack.c.0.s8 %v4048
        %v4050 = vlaneseq
        %v4051 = vshrl.u32 %v4050, 7
        %v4052 = vsub.s32 %v4049, %v4051
        %v4053 = vrot.slane %v4045, %v4052
        %v4055 = vunpack.c.l.s4 1934713408
        %v4056 = vunpack.c.0.s8 %v4055
        %v4057 = vlaneseq
        %v4058 = vshrl.u32 %v4057, 7
        %v4059 = vsub.s32 %v4056, %v4058
        %v4060 = vrot.slane %v4046, %v4059
        %v4061 = vcombine.low %v4029, %v4044
        %v4062 = vcombine.high %v4029, %v4044
        %v4064 = vunpack.c.l.s4 1934713408
        %v4065 = vunpack.c.0.s8 %v4064
        %v4066 = vlaneseq
        %v4067 = vshrl.u32 %v4066, 7
        %v4068 = vsub.s32 %v4065, %v4067
        %v4069 = vrot.slane %v4061, %v4068
        %v4071 = vunpack.c.l.s4 1934713408
        %v4072 = vunpack.c.0.s8 %v4071
        %v4073 = vlaneseq
        %v4074 = vshrl.u32 %v4073, 7
        %v4075 = vsub.s32 %v4072, %v4074
        %v4076 = vrot.slane %v4062, %v4075
        %v4077 = vcombine.high %v4053, 0
        %v4078 = vcombine.high %v4060, 0
        %v4079 = vcombine.high %v4069, 0
        %v4080 = vcombine.high %v4076, 0
        %v4081 = vcombine.high %v3957, %v1725
        %v4083 = vunpack.c.l.s4 1983009808
        %v4084 = vunpack.c.0.s8 %v4083
        %v4085 = vlaneseq
        %v4086 = vshrl.u32 %v4085, 7
        %v4087 = vsub.s32 %v4084, %v4086
        %v4088 = vrot.slane %v3957, %v4087
        %v4090 = vunpack.c.l.s4 1983009808
        %v4091 = vunpack.c.0.s8 %v4090
        %v4092 = vlaneseq
        %v4093 = vshrl.u32 %v4092, 7
        %v4094 = vsub.s32 %v4091, %v4093
        %v4095 = vrot.slane %v4081, %v4094
        %v4096 = vcombine.high %v3965, %v1725
        %v4098 = vunpack.c.l.s4 1983009808
        %v4099 = vunpack.c.0.s8 %v4098
        %v4100 = vlaneseq
        %v4101 = vshrl.u32 %v4100, 7
        %v4102 = vsub.s32 %v4099, %v4101
        %v4103 = vrot.slane %v3965, %v4102
        %v4105 = vunpack.c.l.s4 1983009808
        %v4106 = vunpack.c.0.s8 %v4105
        %v4107 = vlaneseq
        %v4108 = vshrl.u32 %v4107, 7
        %v4109 = vsub.s32 %v4106, %v4108
        %v4110 = vrot.slane %v4096, %v4109
        %v4111 = vcombine.low %v4088, %v4103
        %v4112 = vcombine.high %v4088, %v4103
        %v4114 = vunpack.c.l.s4 1934713408
        %v4115 = vunpack.c.0.s8 %v4114
        %v4116 = vlaneseq
        %v4117 = vshrl.u32 %v4116, 7
        %v4118 = vsub.s32 %v4115, %v4117
        %v4119 = vrot.slane %v4111, %v4118
        %v4121 = vunpack.c.l.s4 1934713408
        %v4122 = vunpack.c.0.s8 %v4121
        %v4123 = vlaneseq
        %v4124 = vshrl.u32 %v4123, 7
        %v4125 = vsub.s32 %v4122, %v4124
        %v4126 = vrot.slane %v4112, %v4125
        %v4127 = vcombine.low %v4095, %v4110
        %v4128 = vcombine.high %v4095, %v4110
        %v4130 = vunpack.c.l.s4 1934713408
        %v4131 = vunpack.c.0.s8 %v4130
        %v4132 = vlaneseq
        %v4133 = vshrl.u32 %v4132, 7
        %v4134 = vsub.s32 %v4131, %v4133
        %v4135 = vrot.slane %v4127, %v4134
        %v4137 = vunpack.c.l.s4 1934713408
        %v4138 = vunpack.c.0.s8 %v4137
        %v4139 = vlaneseq
        %v4140 = vshrl.u32 %v4139, 7
        %v4141 = vsub.s32 %v4138, %v4140
        %v4142 = vrot.slane %v4128, %v4141
        %v4143 = vcombine.high %v4119, 0
        %v4144 = vcombine.high %v4126, 0
        %v4145 = vcombine.high %v4135, 0
        %v4146 = vcombine.high %v4142, 0
        %v4147 = vcombine.high %v3969, %v1722
        %v4149 = vunpack.c.l.s4 1983009808
        %v4150 = vunpack.c.0.s8 %v4149
        %v4151 = vlaneseq
        %v4152 = vshrl.u32 %v4151, 7
        %v4153 = vsub.s32 %v4150, %v4152
        %v4154 = vrot.slane %v3969, %v4153
        %v4156 = vunpack.c.l.s4 1983009808
        %v4157 = vunpack.c.0.s8 %v4156
        %v4158 = vlaneseq
        %v4159 = vshrl.u32 %v4158, 7
        %v4160 = vsub.s32 %v4157, %v4159
        %v4161 = vrot.slane %v4147, %v4160
        %v4162 = vcombine.high %v3977, %v1722
        %v4164 = vunpack.c.l.s4 1983009808
        %v4165 = vunpack.c.0.s8 %v4164
        %v4166 = vlaneseq
        %v4167 = vshrl.u32 %v4166, 7
        %v4168 = vsub.s32 %v4165, %v4167
        %v4169 = vrot.slane %v3977, %v4168
        %v4171 = vunpack.c.l.s4 1983009808
        %v4172 = vunpack.c.0.s8 %v4171
        %v4173 = vlaneseq
        %v4174 = vshrl.u32 %v4173, 7
        %v4175 = vsub.s32 %v4172, %v4174
        %v4176 = vrot.slane %v4162, %v4175
        %v4177 = vcombine.low %v4154, %v4169
        %v4178 = vcombine.high %v4154, %v4169
        %v4180 = vunpack.c.l.s4 1934713408
        %v4181 = vunpack.c.0.s8 %v4180
        %v4182 = vlaneseq
        %v4183 = vshrl.u32 %v4182, 7
        %v4184 = vsub.s32 %v4181, %v4183
        %v4185 = vrot.slane %v4177, %v4184
        %v4187 = vunpack.c.l.s4 1934713408
        %v4188 = vunpack.c.0.s8 %v4187
        %v4189 = vlaneseq
        %v4190 = vshrl.u32 %v4189, 7
        %v4191 = vsub.s32 %v4188, %v4190
        %v4192 = vrot.slane %v4178, %v4191
        %v4193 = vcombine.low %v4161, %v4176
        %v4194 = vcombine.high %v4161, %v4176
        %v4196 = vunpack.c.l.s4 1934713408
        %v4197 = vunpack.c.0.s8 %v4196
        %v4198 = vlaneseq
        %v4199 = vshrl.u32 %v4198, 7
        %v4200 = vsub.s32 %v4197, %v4199
        %v4201 = vrot.slane %v4193, %v4200
        %v4203 = vunpack.c.l.s4 1934713408
        %v4204 = vunpack.c.0.s8 %v4203
        %v4205 = vlaneseq
        %v4206 = vshrl.u32 %v4205, 7
        %v4207 = vsub.s32 %v4204, %v4206
        %v4208 = vrot.slane %v4194, %v4207
        %v4209 = vcombine.high %v4185, 0
        %v4210 = vcombine.high %v4192, 0
        %v4211 = vcombine.high %v4201, 0
        %v4212 = vcombine.high %v4208, 0
        %v4213 = vcombine.high %v3973, %v1725
        %v4215 = vunpack.c.l.s4 1983009808
        %v4216 = vunpack.c.0.s8 %v4215
        %v4217 = vlaneseq
        %v4218 = vshrl.u32 %v4217, 7
        %v4219 = vsub.s32 %v4216, %v4218
        %v4220 = vrot.slane %v3973, %v4219
        %v4222 = vunpack.c.l.s4 1983009808
        %v4223 = vunpack.c.0.s8 %v4222
        %v4224 = vlaneseq
        %v4225 = vshrl.u32 %v4224, 7
        %v4226 = vsub.s32 %v4223, %v4225
        %v4227 = vrot.slane %v4213, %v4226
        %v4228 = vcombine.high %v3981, %v1725
        %v4230 = vunpack.c.l.s4 1983009808
        %v4231 = vunpack.c.0.s8 %v4230
        %v4232 = vlaneseq
        %v4233 = vshrl.u32 %v4232, 7
        %v4234 = vsub.s32 %v4231, %v4233
        %v4235 = vrot.slane %v3981, %v4234
        %v4237 = vunpack.c.l.s4 1983009808
        %v4238 = vunpack.c.0.s8 %v4237
        %v4239 = vlaneseq
        %v4240 = vshrl.u32 %v4239, 7
        %v4241 = vsub.s32 %v4238, %v4240
        %v4242 = vrot.slane %v4228, %v4241
        %v4243 = vcombine.low %v4220, %v4235
        %v4244 = vcombine.high %v4220, %v4235
        %v4246 = vunpack.c.l.s4 1934713408
        %v4247 = vunpack.c.0.s8 %v4246
        %v4248 = vlaneseq
        %v4249 = vshrl.u32 %v4248, 7
        %v4250 = vsub.s32 %v4247, %v4249
        %v4251 = vrot.slane %v4243, %v4250
        %v4253 = vunpack.c.l.s4 1934713408
        %v4254 = vunpack.c.0.s8 %v4253
        %v4255 = vlaneseq
        %v4256 = vshrl.u32 %v4255, 7
        %v4257 = vsub.s32 %v4254, %v4256
        %v4258 = vrot.slane %v4244, %v4257
        %v4259 = vcombine.low %v4227, %v4242
        %v4260 = vcombine.high %v4227, %v4242
        %v4262 = vunpack.c.l.s4 1934713408
        %v4263 = vunpack.c.0.s8 %v4262
        %v4264 = vlaneseq
        %v4265 = vshrl.u32 %v4264, 7
        %v4266 = vsub.s32 %v4263, %v4265
        %v4267 = vrot.slane %v4259, %v4266
        %v4269 = vunpack.c.l.s4 1934713408
        %v4270 = vunpack.c.0.s8 %v4269
        %v4271 = vlaneseq
        %v4272 = vshrl.u32 %v4271, 7
        %v4273 = vsub.s32 %v4270, %v4272
        %v4274 = vrot.slane %v4260, %v4273
        %v4275 = vcombine.high %v4251, 0
        %v4276 = vcombine.high %v4258, 0
        %v4277 = vcombine.high %v4267, 0
        %v4278 = vcombine.high %v4274, 0
        %v4279 = vcombine.high %v3985, %v1722
        %v4281 = vunpack.c.l.s4 1983009808
        %v4282 = vunpack.c.0.s8 %v4281
        %v4283 = vlaneseq
        %v4284 = vshrl.u32 %v4283, 7
        %v4285 = vsub.s32 %v4282, %v4284
        %v4286 = vrot.slane %v3985, %v4285
        %v4288 = vunpack.c.l.s4 1983009808
        %v4289 = vunpack.c.0.s8 %v4288
        %v4290 = vlaneseq
        %v4291 = vshrl.u32 %v4290, 7
        %v4292 = vsub.s32 %v4289, %v4291
        %v4293 = vrot.slane %v4279, %v4292
        %v4294 = vcombine.high %v3993, %v1722
        %v4296 = vunpack.c.l.s4 1983009808
        %v4297 = vunpack.c.0.s8 %v4296
        %v4298 = vlaneseq
        %v4299 = vshrl.u32 %v4298, 7
        %v4300 = vsub.s32 %v4297, %v4299
        %v4301 = vrot.slane %v3993, %v4300
        %v4303 = vunpack.c.l.s4 1983009808
        %v4304 = vunpack.c.0.s8 %v4303
        %v4305 = vlaneseq
        %v4306 = vshrl.u32 %v4305, 7
        %v4307 = vsub.s32 %v4304, %v4306
        %v4308 = vrot.slane %v4294, %v4307
        %v4309 = vcombine.low %v4286, %v4301
        %v4310 = vcombine.high %v4286, %v4301
        %v4312 = vunpack.c.l.s4 1934713408
        %v4313 = vunpack.c.0.s8 %v4312
        %v4314 = vlaneseq
        %v4315 = vshrl.u32 %v4314, 7
        %v4316 = vsub.s32 %v4313, %v4315
        %v4317 = vrot.slane %v4309, %v4316
        %v4319 = vunpack.c.l.s4 1934713408
        %v4320 = vunpack.c.0.s8 %v4319
        %v4321 = vlaneseq
        %v4322 = vshrl.u32 %v4321, 7
        %v4323 = vsub.s32 %v4320, %v4322
        %v4324 = vrot.slane %v4310, %v4323
        %v4325 = vcombine.low %v4293, %v4308
        %v4326 = vcombine.high %v4293, %v4308
        %v4328 = vunpack.c.l.s4 1934713408
        %v4329 = vunpack.c.0.s8 %v4328
        %v4330 = vlaneseq
        %v4331 = vshrl.u32 %v4330, 7
        %v4332 = vsub.s32 %v4329, %v4331
        %v4333 = vrot.slane %v4325, %v4332
        %v4335 = vunpack.c.l.s4 1934713408
        %v4336 = vunpack.c.0.s8 %v4335
        %v4337 = vlaneseq
        %v4338 = vshrl.u32 %v4337, 7
        %v4339 = vsub.s32 %v4336, %v4338
        %v4340 = vrot.slane %v4326, %v4339
        %v4341 = vcombine.high %v4317, 0
        %v4342 = vcombine.high %v4324, 0
        %v4343 = vcombine.high %v4333, 0
        %v4344 = vcombine.high %v4340, 0
        %v4345 = vcombine.high %v3989, %v1725
        %v4347 = vunpack.c.l.s4 1983009808
        %v4348 = vunpack.c.0.s8 %v4347
        %v4349 = vlaneseq
        %v4350 = vshrl.u32 %v4349, 7
        %v4351 = vsub.s32 %v4348, %v4350
        %v4352 = vrot.slane %v3989, %v4351
        %v4354 = vunpack.c.l.s4 1983009808
        %v4355 = vunpack.c.0.s8 %v4354
        %v4356 = vlaneseq
        %v4357 = vshrl.u32 %v4356, 7
        %v4358 = vsub.s32 %v4355, %v4357
        %v4359 = vrot.slane %v4345, %v4358
        %v4360 = vcombine.high %v3997, %v1725
        %v4362 = vunpack.c.l.s4 1983009808
        %v4363 = vunpack.c.0.s8 %v4362
        %v4364 = vlaneseq
        %v4365 = vshrl.u32 %v4364, 7
        %v4366 = vsub.s32 %v4363, %v4365
        %v4367 = vrot.slane %v3997, %v4366
        %v4369 = vunpack.c.l.s4 1983009808
        %v4370 = vunpack.c.0.s8 %v4369
        %v4371 = vlaneseq
        %v4372 = vshrl.u32 %v4371, 7
        %v4373 = vsub.s32 %v4370, %v4372
        %v4374 = vrot.slane %v4360, %v4373
        %v4375 = vcombine.low %v4352, %v4367
        %v4376 = vcombine.high %v4352, %v4367
        %v4378 = vunpack.c.l.s4 1934713408
        %v4379 = vunpack.c.0.s8 %v4378
        %v4380 = vlaneseq
        %v4381 = vshrl.u32 %v4380, 7
        %v4382 = vsub.s32 %v4379, %v4381
        %v4383 = vrot.slane %v4375, %v4382
        %v4385 = vunpack.c.l.s4 1934713408
        %v4386 = vunpack.c.0.s8 %v4385
        %v4387 = vlaneseq
        %v4388 = vshrl.u32 %v4387, 7
        %v4389 = vsub.s32 %v4386, %v4388
        %v4390 = vrot.slane %v4376, %v4389
        %v4391 = vcombine.low %v4359, %v4374
        %v4392 = vcombine.high %v4359, %v4374
        %v4394 = vunpack.c.l.s4 1934713408
        %v4395 = vunpack.c.0.s8 %v4394
        %v4396 = vlaneseq
        %v4397 = vshrl.u32 %v4396, 7
        %v4398 = vsub.s32 %v4395, %v4397
        %v4399 = vrot.slane %v4391, %v4398
        %v4401 = vunpack.c.l.s4 1934713408
        %v4402 = vunpack.c.0.s8 %v4401
        %v4403 = vlaneseq
        %v4404 = vshrl.u32 %v4403, 7
        %v4405 = vsub.s32 %v4402, %v4404
        %v4406 = vrot.slane %v4392, %v4405
        %v4407 = vcombine.high %v4383, 0
        %v4408 = vcombine.high %v4390, 0
        %v4409 = vcombine.high %v4399, 0
        %v4410 = vcombine.high %v4406, 0
        %v4411 = vcombine.high %v4001, %v1722
        %v4413 = vunpack.c.l.s4 1983009808
        %v4414 = vunpack.c.0.s8 %v4413
        %v4415 = vlaneseq
        %v4416 = vshrl.u32 %v4415, 7
        %v4417 = vsub.s32 %v4414, %v4416
        %v4418 = vrot.slane %v4001, %v4417
        %v4420 = vunpack.c.l.s4 1983009808
        %v4421 = vunpack.c.0.s8 %v4420
        %v4422 = vlaneseq
        %v4423 = vshrl.u32 %v4422, 7
        %v4424 = vsub.s32 %v4421, %v4423
        %v4425 = vrot.slane %v4411, %v4424
        %v4426 = vcombine.high %v4009, %v1722
        %v4428 = vunpack.c.l.s4 1983009808
        %v4429 = vunpack.c.0.s8 %v4428
        %v4430 = vlaneseq
        %v4431 = vshrl.u32 %v4430, 7
        %v4432 = vsub.s32 %v4429, %v4431
        %v4433 = vrot.slane %v4009, %v4432
        %v4435 = vunpack.c.l.s4 1983009808
        %v4436 = vunpack.c.0.s8 %v4435
        %v4437 = vlaneseq
        %v4438 = vshrl.u32 %v4437, 7
        %v4439 = vsub.s32 %v4436, %v4438
        %v4440 = vrot.slane %v4426, %v4439
        %v4441 = vcombine.low %v4418, %v4433
        %v4442 = vcombine.high %v4418, %v4433
        %v4444 = vunpack.c.l.s4 1934713408
        %v4445 = vunpack.c.0.s8 %v4444
        %v4446 = vlaneseq
        %v4447 = vshrl.u32 %v4446, 7
        %v4448 = vsub.s32 %v4445, %v4447
        %v4449 = vrot.slane %v4441, %v4448
        %v4451 = vunpack.c.l.s4 1934713408
        %v4452 = vunpack.c.0.s8 %v4451
        %v4453 = vlaneseq
        %v4454 = vshrl.u32 %v4453, 7
        %v4455 = vsub.s32 %v4452, %v4454
        %v4456 = vrot.slane %v4442, %v4455
        %v4457 = vcombine.low %v4425, %v4440
        %v4458 = vcombine.high %v4425, %v4440
        %v4460 = vunpack.c.l.s4 1934713408
        %v4461 = vunpack.c.0.s8 %v4460
        %v4462 = vlaneseq
        %v4463 = vshrl.u32 %v4462, 7
        %v4464 = vsub.s32 %v4461, %v4463
        %v4465 = vrot.slane %v4457, %v4464
        %v4467 = vunpack.c.l.s4 1934713408
        %v4468 = vunpack.c.0.s8 %v4467
        %v4469 = vlaneseq
        %v4470 = vshrl.u32 %v4469, 7
        %v4471 = vsub.s32 %v4468, %v4470
        %v4472 = vrot.slane %v4458, %v4471
        %v4473 = vcombine.high %v4449, 0
        %v4474 = vcombine.high %v4456, 0
        %v4475 = vcombine.high %v4465, 0
        %v4476 = vcombine.high %v4472, 0
        %v4477 = vcombine.high %v4005, %v1725
        %v4479 = vunpack.c.l.s4 1983009808
        %v4480 = vunpack.c.0.s8 %v4479
        %v4481 = vlaneseq
        %v4482 = vshrl.u32 %v4481, 7
        %v4483 = vsub.s32 %v4480, %v4482
        %v4484 = vrot.slane %v4005, %v4483
        %v4486 = vunpack.c.l.s4 1983009808
        %v4487 = vunpack.c.0.s8 %v4486
        %v4488 = vlaneseq
        %v4489 = vshrl.u32 %v4488, 7
        %v4490 = vsub.s32 %v4487, %v4489
        %v4491 = vrot.slane %v4477, %v4490
        %v4492 = vcombine.high %v4013, %v1725
        %v4494 = vunpack.c.l.s4 1983009808
        %v4495 = vunpack.c.0.s8 %v4494
        %v4496 = vlaneseq
        %v4497 = vshrl.u32 %v4496, 7
        %v4498 = vsub.s32 %v4495, %v4497
        %v4499 = vrot.slane %v4013, %v4498
        %v4501 = vunpack.c.l.s4 1983009808
        %v4502 = vunpack.c.0.s8 %v4501
        %v4503 = vlaneseq
        %v4504 = vshrl.u32 %v4503, 7
        %v4505 = vsub.s32 %v4502, %v4504
        %v4506 = vrot.slane %v4492, %v4505
        %v4507 = vcombine.low %v4484, %v4499
        %v4508 = vcombine.high %v4484, %v4499
        %v4510 = vunpack.c.l.s4 1934713408
        %v4511 = vunpack.c.0.s8 %v4510
        %v4512 = vlaneseq
        %v4513 = vshrl.u32 %v4512, 7
        %v4514 = vsub.s32 %v4511, %v4513
        %v4515 = vrot.slane %v4507, %v4514
        %v4517 = vunpack.c.l.s4 1934713408
        %v4518 = vunpack.c.0.s8 %v4517
        %v4519 = vlaneseq
        %v4520 = vshrl.u32 %v4519, 7
        %v4521 = vsub.s32 %v4518, %v4520
        %v4522 = vrot.slane %v4508, %v4521
        %v4523 = vcombine.low %v4491, %v4506
        %v4524 = vcombine.high %v4491, %v4506
        %v4526 = vunpack.c.l.s4 1934713408
        %v4527 = vunpack.c.0.s8 %v4526
        %v4528 = vlaneseq
        %v4529 = vshrl.u32 %v4528, 7
        %v4530 = vsub.s32 %v4527, %v4529
        %v4531 = vrot.slane %v4523, %v4530
        %v4533 = vunpack.c.l.s4 1934713408
        %v4534 = vunpack.c.0.s8 %v4533
        %v4535 = vlaneseq
        %v4536 = vshrl.u32 %v4535, 7
        %v4537 = vsub.s32 %v4534, %v4536
        %v4538 = vrot.slane %v4524, %v4537
        %v4539 = vcombine.high %v4515, 0
        %v4540 = vcombine.high %v4522, 0
        %v4541 = vcombine.high %v4531, 0
        %v4542 = vcombine.high %v4538, 0
        %v4543 = vcombine.low %v4053, %v4060
        %v4545 = vunpack.c.l.s4 1983009808
        %v4546 = vunpack.c.0.s8 %v4545
        %v4547 = vlaneseq
        %v4548 = vshrl.u32 %v4547, 7
        %v4549 = vsub.s32 %v4546, %v4548
        %v4550 = vrot.slane %v4543, %v4549
        %v4551 = vcombine.low %v4077, %v4078
        %v4553 = vunpack.c.l.s4 1983009808
        %v4554 = vunpack.c.0.s8 %v4553
        %v4555 = vlaneseq
        %v4556 = vshrl.u32 %v4555, 7
        %v4557 = vsub.s32 %v4554, %v4556
        %v4558 = vrot.slane %v4551, %v4557
        %v4559 = vcombine.low %v4550, %v4558
        %v4561 = vunpack.c.l.s4 1934713408
        %v4562 = vunpack.c.0.s8 %v4561
        %v4563 = vlaneseq
        %v4564 = vshrl.u32 %v4563, 7
        %v4565 = vsub.s32 %v4562, %v4564
        %v4566 = vrot.slane %v4559, %v4565
        %v4567 = vcombine.high %v4566, 0
        %v4568 = vcombine.low %v4119, %v4126
        %v4570 = vunpack.c.l.s4 1983009808
        %v4571 = vunpack.c.0.s8 %v4570
        %v4572 = vlaneseq
        %v4573 = vshrl.u32 %v4572, 7
        %v4574 = vsub.s32 %v4571, %v4573
        %v4575 = vrot.slane %v4568, %v4574
        %v4576 = vcombine.low %v4143, %v4144
        %v4578 = vunpack.c.l.s4 1983009808
        %v4579 = vunpack.c.0.s8 %v4578
        %v4580 = vlaneseq
        %v4581 = vshrl.u32 %v4580, 7
        %v4582 = vsub.s32 %v4579, %v4581
        %v4583 = vrot.slane %v4576, %v4582
        %v4584 = vcombine.low %v4575, %v4583
        %v4586 = vunpack.c.l.s4 1934713408
        %v4587 = vunpack.c.0.s8 %v4586
        %v4588 = vlaneseq
        %v4589 = vshrl.u32 %v4588, 7
        %v4590 = vsub.s32 %v4587, %v4589
        %v4591 = vrot.slane %v4584, %v4590
        %v4592 = vcombine.high %v4591, 0
        %v4593 = vcombine.low %v4069, %v4076
        %v4595 = vunpack.c.l.s4 1983009808
        %v4596 = vunpack.c.0.s8 %v4595
        %v4597 = vlaneseq
        %v4598 = vshrl.u32 %v4597, 7
        %v4599 = vsub.s32 %v4596, %v4598
        %v4600 = vrot.slane %v4593, %v4599
        %v4601 = vcombine.low %v4079, %v4080
        %v4603 = vunpack.c.l.s4 1983009808
        %v4604 = vunpack.c.0.s8 %v4603
        %v4605 = vlaneseq
        %v4606 = vshrl.u32 %v4605, 7
        %v4607 = vsub.s32 %v4604, %v4606
        %v4608 = vrot.slane %v4601, %v4607
        %v4609 = vcombine.low %v4600, %v4608
        %v4611 = vunpack.c.l.s4 1934713408
        %v4612 = vunpack.c.0.s8 %v4611
        %v4613 = vlaneseq
        %v4614 = vshrl.u32 %v4613, 7
        %v4615 = vsub.s32 %v4612, %v4614
        %v4616 = vrot.slane %v4609, %v4615
        %v4617 = vcombine.high %v4616, 0
        %v4618 = vcombine.low %v4135, %v4142
        %v4620 = vunpack.c.l.s4 1983009808
        %v4621 = vunpack.c.0.s8 %v4620
        %v4622 = vlaneseq
        %v4623 = vshrl.u32 %v4622, 7
        %v4624 = vsub.s32 %v4621, %v4623
        %v4625 = vrot.slane %v4618, %v4624
        %v4626 = vcombine.low %v4145, %v4146
        %v4628 = vunpack.c.l.s4 1983009808
        %v4629 = vunpack.c.0.s8 %v4628
        %v4630 = vlaneseq
        %v4631 = vshrl.u32 %v4630, 7
        %v4632 = vsub.s32 %v4629, %v4631
        %v4633 = vrot.slane %v4626, %v4632
        %v4634 = vcombine.low %v4625, %v4633
        %v4636 = vunpack.c.l.s4 1934713408
        %v4637 = vunpack.c.0.s8 %v4636
        %v4638 = vlaneseq
        %v4639 = vshrl.u32 %v4638, 7
        %v4640 = vsub.s32 %v4637, %v4639
        %v4641 = vrot.slane %v4634, %v4640
        %v4642 = vcombine.high %v4641, 0
        %v4643 = vcombine.low %v4185, %v4192
        %v4645 = vunpack.c.l.s4 1983009808
        %v4646 = vunpack.c.0.s8 %v4645
        %v4647 = vlaneseq
        %v4648 = vshrl.u32 %v4647, 7
        %v4649 = vsub.s32 %v4646, %v4648
        %v4650 = vrot.slane %v4643, %v4649
        %v4651 = vcombine.low %v4209, %v4210
        %v4653 = vunpack.c.l.s4 1983009808
        %v4654 = vunpack.c.0.s8 %v4653
        %v4655 = vlaneseq
        %v4656 = vshrl.u32 %v4655, 7
        %v4657 = vsub.s32 %v4654, %v4656
        %v4658 = vrot.slane %v4651, %v4657
        %v4659 = vcombine.low %v4650, %v4658
        %v4661 = vunpack.c.l.s4 1934713408
        %v4662 = vunpack.c.0.s8 %v4661
        %v4663 = vlaneseq
        %v4664 = vshrl.u32 %v4663, 7
        %v4665 = vsub.s32 %v4662, %v4664
        %v4666 = vrot.slane %v4659, %v4665
        %v4667 = vcombine.high %v4666, 0
        %v4668 = vcombine.low %v4251, %v4258
        %v4670 = vunpack.c.l.s4 1983009808
        %v4671 = vunpack.c.0.s8 %v4670
        %v4672 = vlaneseq
        %v4673 = vshrl.u32 %v4672, 7
        %v4674 = vsub.s32 %v4671, %v4673
        %v4675 = vrot.slane %v4668, %v4674
        %v4676 = vcombine.low %v4275, %v4276
        %v4678 = vunpack.c.l.s4 1983009808
        %v4679 = vunpack.c.0.s8 %v4678
        %v4680 = vlaneseq
        %v4681 = vshrl.u32 %v4680, 7
        %v4682 = vsub.s32 %v4679, %v4681
        %v4683 = vrot.slane %v4676, %v4682
        %v4684 = vcombine.low %v4675, %v4683
        %v4686 = vunpack.c.l.s4 1934713408
        %v4687 = vunpack.c.0.s8 %v4686
        %v4688 = vlaneseq
        %v4689 = vshrl.u32 %v4688, 7
        %v4690 = vsub.s32 %v4687, %v4689
        %v4691 = vrot.slane %v4684, %v4690
        %v4692 = vcombine.high %v4691, 0
        %v4693 = vcombine.low %v4201, %v4208
        %v4695 = vunpack.c.l.s4 1983009808
        %v4696 = vunpack.c.0.s8 %v4695
        %v4697 = vlaneseq
        %v4698 = vshrl.u32 %v4697, 7
        %v4699 = vsub.s32 %v4696, %v4698
        %v4700 = vrot.slane %v4693, %v4699
        %v4701 = vcombine.low %v4211, %v4212
        %v4703 = vunpack.c.l.s4 1983009808
        %v4704 = vunpack.c.0.s8 %v4703
        %v4705 = vlaneseq
        %v4706 = vshrl.u32 %v4705, 7
        %v4707 = vsub.s32 %v4704, %v4706
        %v4708 = vrot.slane %v4701, %v4707
        %v4709 = vcombine.low %v4700, %v4708
        %v4711 = vunpack.c.l.s4 1934713408
        %v4712 = vunpack.c.0.s8 %v4711
        %v4713 = vlaneseq
        %v4714 = vshrl.u32 %v4713, 7
        %v4715 = vsub.s32 %v4712, %v4714
        %v4716 = vrot.slane %v4709, %v4715
        %v4717 = vcombine.high %v4716, 0
        %v4718 = vcombine.low %v4267, %v4274
        %v4720 = vunpack.c.l.s4 1983009808
        %v4721 = vunpack.c.0.s8 %v4720
        %v4722 = vlaneseq
        %v4723 = vshrl.u32 %v4722, 7
        %v4724 = vsub.s32 %v4721, %v4723
        %v4725 = vrot.slane %v4718, %v4724
        %v4726 = vcombine.low %v4277, %v4278
        %v4728 = vunpack.c.l.s4 1983009808
        %v4729 = vunpack.c.0.s8 %v4728
        %v4730 = vlaneseq
        %v4731 = vshrl.u32 %v4730, 7
        %v4732 = vsub.s32 %v4729, %v4731
        %v4733 = vrot.slane %v4726, %v4732
        %v4734 = vcombine.low %v4725, %v4733
        %v4736 = vunpack.c.l.s4 1934713408
        %v4737 = vunpack.c.0.s8 %v4736
        %v4738 = vlaneseq
        %v4739 = vshrl.u32 %v4738, 7
        %v4740 = vsub.s32 %v4737, %v4739
        %v4741 = vrot.slane %v4734, %v4740
        %v4742 = vcombine.high %v4741, 0
        %v4743 = vcombine.low %v4317, %v4324
        %v4745 = vunpack.c.l.s4 1983009808
        %v4746 = vunpack.c.0.s8 %v4745
        %v4747 = vlaneseq
        %v4748 = vshrl.u32 %v4747, 7
        %v4749 = vsub.s32 %v4746, %v4748
        %v4750 = vrot.slane %v4743, %v4749
        %v4751 = vcombine.low %v4341, %v4342
        %v4753 = vunpack.c.l.s4 1983009808
        %v4754 = vunpack.c.0.s8 %v4753
        %v4755 = vlaneseq
        %v4756 = vshrl.u32 %v4755, 7
        %v4757 = vsub.s32 %v4754, %v4756
        %v4758 = vrot.slane %v4751, %v4757
        %v4759 = vcombine.low %v4750, %v4758
        %v4761 = vunpack.c.l.s4 1934713408
        %v4762 = vunpack.c.0.s8 %v4761
        %v4763 = vlaneseq
        %v4764 = vshrl.u32 %v4763, 7
        %v4765 = vsub.s32 %v4762, %v4764
        %v4766 = vrot.slane %v4759, %v4765
        %v4767 = vcombine.high %v4766, 0
        %v4768 = vcombine.low %v4383, %v4390
        %v4770 = vunpack.c.l.s4 1983009808
        %v4771 = vunpack.c.0.s8 %v4770
        %v4772 = vlaneseq
        %v4773 = vshrl.u32 %v4772, 7
        %v4774 = vsub.s32 %v4771, %v4773
        %v4775 = vrot.slane %v4768, %v4774
        %v4776 = vcombine.low %v4407, %v4408
        %v4778 = vunpack.c.l.s4 1983009808
        %v4779 = vunpack.c.0.s8 %v4778
        %v4780 = vlaneseq
        %v4781 = vshrl.u32 %v4780, 7
        %v4782 = vsub.s32 %v4779, %v4781
        %v4783 = vrot.slane %v4776, %v4782
        %v4784 = vcombine.low %v4775, %v4783
        %v4786 = vunpack.c.l.s4 1934713408
        %v4787 = vunpack.c.0.s8 %v4786
        %v4788 = vlaneseq
        %v4789 = vshrl.u32 %v4788, 7
        %v4790 = vsub.s32 %v4787, %v4789
        %v4791 = vrot.slane %v4784, %v4790
        %v4792 = vcombine.high %v4791, 0
        %v4793 = vcombine.low %v4333, %v4340
        %v4795 = vunpack.c.l.s4 1983009808
        %v4796 = vunpack.c.0.s8 %v4795
        %v4797 = vlaneseq
        %v4798 = vshrl.u32 %v4797, 7
        %v4799 = vsub.s32 %v4796, %v4798
        %v4800 = vrot.slane %v4793, %v4799
        %v4801 = vcombine.low %v4343, %v4344
        %v4803 = vunpack.c.l.s4 1983009808
        %v4804 = vunpack.c.0.s8 %v4803
        %v4805 = vlaneseq
        %v4806 = vshrl.u32 %v4805, 7
        %v4807 = vsub.s32 %v4804, %v4806
        %v4808 = vrot.slane %v4801, %v4807
        %v4809 = vcombine.low %v4800, %v4808
        %v4811 = vunpack.c.l.s4 1934713408
        %v4812 = vunpack.c.0.s8 %v4811
        %v4813 = vlaneseq
        %v4814 = vshrl.u32 %v4813, 7
        %v4815 = vsub.s32 %v4812, %v4814
        %v4816 = vrot.slane %v4809, %v4815
        %v4817 = vcombine.high %v4816, 0
        %v4818 = vcombine.low %v4399, %v4406
        %v4820 = vunpack.c.l.s4 1983009808
        %v4821 = vunpack.c.0.s8 %v4820
        %v4822 = vlaneseq
        %v4823 = vshrl.u32 %v4822, 7
        %v4824 = vsub.s32 %v4821, %v4823
        %v4825 = vrot.slane %v4818, %v4824
        %v4826 = vcombine.low %v4409, %v4410
        %v4828 = vunpack.c.l.s4 1983009808
        %v4829 = vunpack.c.0.s8 %v4828
        %v4830 = vlaneseq
        %v4831 = vshrl.u32 %v4830, 7
        %v4832 = vsub.s32 %v4829, %v4831
        %v4833 = vrot.slane %v4826, %v4832
        %v4834 = vcombine.low %v4825, %v4833
        %v4836 = vunpack.c.l.s4 1934713408
        %v4837 = vunpack.c.0.s8 %v4836
        %v4838 = vlaneseq
        %v4839 = vshrl.u32 %v4838, 7
        %v4840 = vsub.s32 %v4837, %v4839
        %v4841 = vrot.slane %v4834, %v4840
        %v4842 = vcombine.high %v4841, 0
        %v4843 = vcombine.low %v4449, %v4456
        %v4845 = vunpack.c.l.s4 1983009808
        %v4846 = vunpack.c.0.s8 %v4845
        %v4847 = vlaneseq
        %v4848 = vshrl.u32 %v4847, 7
        %v4849 = vsub.s32 %v4846, %v4848
        %v4850 = vrot.slane %v4843, %v4849
        %v4851 = vcombine.low %v4473, %v4474
        %v4853 = vunpack.c.l.s4 1983009808
        %v4854 = vunpack.c.0.s8 %v4853
        %v4855 = vlaneseq
        %v4856 = vshrl.u32 %v4855, 7
        %v4857 = vsub.s32 %v4854, %v4856
        %v4858 = vrot.slane %v4851, %v4857
        %v4859 = vcombine.low %v4850, %v4858
        %v4861 = vunpack.c.l.s4 1934713408
        %v4862 = vunpack.c.0.s8 %v4861
        %v4863 = vlaneseq
        %v4864 = vshrl.u32 %v4863, 7
        %v4865 = vsub.s32 %v4862, %v4864
        %v4866 = vrot.slane %v4859, %v4865
        %v4867 = vcombine.high %v4866, 0
        %v4868 = vcombine.low %v4515, %v4522
        %v4870 = vunpack.c.l.s4 1983009808
        %v4871 = vunpack.c.0.s8 %v4870
        %v4872 = vlaneseq
        %v4873 = vshrl.u32 %v4872, 7
        %v4874 = vsub.s32 %v4871, %v4873
        %v4875 = vrot.slane %v4868, %v4874
        %v4876 = vcombine.low %v4539, %v4540
        %v4878 = vunpack.c.l.s4 1983009808
        %v4879 = vunpack.c.0.s8 %v4878
        %v4880 = vlaneseq
        %v4881 = vshrl.u32 %v4880, 7
        %v4882 = vsub.s32 %v4879, %v4881
        %v4883 = vrot.slane %v4876, %v4882
        %v4884 = vcombine.low %v4875, %v4883
        %v4886 = vunpack.c.l.s4 1934713408
        %v4887 = vunpack.c.0.s8 %v4886
        %v4888 = vlaneseq
        %v4889 = vshrl.u32 %v4888, 7
        %v4890 = vsub.s32 %v4887, %v4889
        %v4891 = vrot.slane %v4884, %v4890
        %v4892 = vcombine.high %v4891, 0
        %v4893 = vcombine.low %v4465, %v4472
        %v4895 = vunpack.c.l.s4 1983009808
        %v4896 = vunpack.c.0.s8 %v4895
        %v4897 = vlaneseq
        %v4898 = vshrl.u32 %v4897, 7
        %v4899 = vsub.s32 %v4896, %v4898
        %v4900 = vrot.slane %v4893, %v4899
        %v4901 = vcombine.low %v4475, %v4476
        %v4903 = vunpack.c.l.s4 1983009808
        %v4904 = vunpack.c.0.s8 %v4903
        %v4905 = vlaneseq
        %v4906 = vshrl.u32 %v4905, 7
        %v4907 = vsub.s32 %v4904, %v4906
        %v4908 = vrot.slane %v4901, %v4907
        %v4909 = vcombine.low %v4900, %v4908
        %v4911 = vunpack.c.l.s4 1934713408
        %v4912 = vunpack.c.0.s8 %v4911
        %v4913 = vlaneseq
        %v4914 = vshrl.u32 %v4913, 7
        %v4915 = vsub.s32 %v4912, %v4914
        %v4916 = vrot.slane %v4909, %v4915
        %v4917 = vcombine.high %v4916, 0
        %v4918 = vcombine.low %v4531, %v4538
        %v4920 = vunpack.c.l.s4 1983009808
        %v4921 = vunpack.c.0.s8 %v4920
        %v4922 = vlaneseq
        %v4923 = vshrl.u32 %v4922, 7
        %v4924 = vsub.s32 %v4921, %v4923
        %v4925 = vrot.slane %v4918, %v4924
        %v4926 = vcombine.low %v4541, %v4542
        %v4928 = vunpack.c.l.s4 1983009808
        %v4929 = vunpack.c.0.s8 %v4928
        %v4930 = vlaneseq
        %v4931 = vshrl.u32 %v4930, 7
        %v4932 = vsub.s32 %v4929, %v4931
        %v4933 = vrot.slane %v4926, %v4932
        %v4934 = vcombine.low %v4925, %v4933
        %v4936 = vunpack.c.l.s4 1934713408
        %v4937 = vunpack.c.0.s8 %v4936
        %v4938 = vlaneseq
        %v4939 = vshrl.u32 %v4938, 7
        %v4940 = vsub.s32 %v4937, %v4939
        %v4941 = vrot.slane %v4934, %v4940
        %v4942 = vcombine.high %v4941, 0
        %v4945 = vpack.i.b16 %v4591, %v4566
        %v4946 = vshrl.u32 %v4566, 16
        %v4947 = vshrl.u32 %v4591, 16
        %v4948 = vpack.i.b16 %v4947, %v4946
        %v4951 = vpack.i.b16 %v4592, %v4567
        %v4952 = vshrl.u32 %v4567, 16
        %v4953 = vshrl.u32 %v4592, 16
        %v4954 = vpack.i.b16 %v4953, %v4952
        %v4957 = vpack.i.b16 %v4641, %v4616
        %v4958 = vshrl.u32 %v4616, 16
        %v4959 = vshrl.u32 %v4641, 16
        %v4960 = vpack.i.b16 %v4959, %v4958
        %v4963 = vpack.i.b16 %v4642, %v4617
        %v4964 = vshrl.u32 %v4617, 16
        %v4965 = vshrl.u32 %v4642, 16
        %v4966 = vpack.i.b16 %v4965, %v4964
        %v4969 = vpack.i.b16 %v4691, %v4666
        %v4970 = vshrl.u32 %v4666, 16
        %v4971 = vshrl.u32 %v4691, 16
        %v4972 = vpack.i.b16 %v4971, %v4970
        %v4975 = vpack.i.b16 %v4692, %v4667
        %v4976 = vshrl.u32 %v4667, 16
        %v4977 = vshrl.u32 %v4692, 16
        %v4978 = vpack.i.b16 %v4977, %v4976
        %v4981 = vpack.i.b16 %v4741, %v4716
        %v4982 = vshrl.u32 %v4716, 16
        %v4983 = vshrl.u32 %v4741, 16
        %v4984 = vpack.i.b16 %v4983, %v4982
        %v4987 = vpack.i.b16 %v4742, %v4717
        %v4988 = vshrl.u32 %v4717, 16
        %v4989 = vshrl.u32 %v4742, 16
        %v4990 = vpack.i.b16 %v4989, %v4988
        %v4993 = vpack.i.b16 %v4791, %v4766
        %v4994 = vshrl.u32 %v4766, 16
        %v4995 = vshrl.u32 %v4791, 16
        %v4996 = vpack.i.b16 %v4995, %v4994
        %v4999 = vpack.i.b16 %v4792, %v4767
        %v5000 = vshrl.u32 %v4767, 16
        %v5001 = vshrl.u32 %v4792, 16
        %v5002 = vpack.i.b16 %v5001, %v5000
        %v5005 = vpack.i.b16 %v4841, %v4816
        %v5006 = vshrl.u32 %v4816, 16
        %v5007 = vshrl.u32 %v4841, 16
        %v5008 = vpack.i.b16 %v5007, %v5006
        %v5011 = vpack.i.b16 %v4842, %v4817
        %v5012 = vshrl.u32 %v4817, 16
        %v5013 = vshrl.u32 %v4842, 16
        %v5014 = vpack.i.b16 %v5013, %v5012
        %v5017 = vpack.i.b16 %v4891, %v4866
        %v5018 = vshrl.u32 %v4866, 16
        %v5019 = vshrl.u32 %v4891, 16
        %v5020 = vpack.i.b16 %v5019, %v5018
        %v5023 = vpack.i.b16 %v4892, %v4867
        %v5024 = vshrl.u32 %v4867, 16
        %v5025 = vshrl.u32 %v4892, 16
        %v5026 = vpack.i.b16 %v5025, %v5024
        %v5029 = vpack.i.b16 %v4941, %v4916
        %v5030 = vshrl.u32 %v4916, 16
        %v5031 = vshrl.u32 %v4941, 16
        %v5032 = vpack.i.b16 %v5031, %v5030
        %v5035 = vpack.i.b16 %v4942, %v4917
        %v5036 = vshrl.u32 %v4917, 16
        %v5037 = vshrl.u32 %v4942, 16
        %v5038 = vpack.i.b16 %v5037, %v5036
        %vm5039 = vcmask 261120
        %v5041 = vsel %vm5039, %v2705, 0
        %v5044 = vsel %vm5039, %v3825, 0
        %5046 = vmatprep.subr.bf16.mxu0 0
        %5047 = vmatpush1.bf16.xpose.msra.mxu0 %v5044
        %5048 = vmatprep.subr.bf16.mxu0 0
        %5049 = vmatpush1.bf16.xpose.msra.mxu0 0
        %5050 = vmatprep.subr.bf16.mxu0 0
        %5051 = vmatpush1.bf16.xpose.msra.mxu0 0
        %5052 = vmatprep.subr.bf16.mxu0 0
        %5053 = vmatpush1.bf16.xpose.msra.mxu0 0
        %5054 = vmatprep.subr.bf16.mxu0 0
        %5055 = vmatpush1.bf16.xpose.msra.mxu0 0
        %5056 = vmatprep.subr.bf16.mxu0 0
        %5057 = vmatpush1.bf16.xpose.msra.mxu0 0
        %5058 = vmatprep.subr.bf16.mxu0 0
        %5059 = vmatpush1.bf16.xpose.msra.mxu0 0
        %5060 = vmatprep.subr.bf16.mxu0 0
        %5061 = vmatpush1.bf16.xpose.msra.mxu0 0
        %5062 = vmatprep.subr.bf16.mxu0 0
        %5063 = vmatpush1.bf16.xpose.msra.mxu0 0
        %5064 = vmatprep.subr.bf16.mxu0 0
        %5065 = vmatpush1.bf16.xpose.msra.mxu0 0
        %5066 = vmatprep.subr.bf16.mxu0 0
        %5067 = vmatpush1.bf16.xpose.msra.mxu0 0
        %5068 = vmatprep.subr.bf16.mxu0 0
        %5069 = vmatpush1.bf16.xpose.msra.mxu0 0
        %5070 = vmatprep.subr.bf16.mxu0 0
        %5071 = vmatpush1.bf16.xpose.msra.mxu0 0
        %5072 = vmatprep.subr.bf16.mxu0 0
        %5073 = vmatpush1.bf16.xpose.msra.mxu0 0
        %5074 = vmatprep.subr.bf16.mxu0 0
        %5075 = vmatpush1.bf16.xpose.msra.mxu0 0
        %5076 = vmatprep.subr.bf16.mxu0 0
        %5077 = vmatpush1.bf16.xpose.msra.mxu0 0
        %5078 = vmatprep.mubr.bf16.mxu0 0
        %5079 = vmatmul.mubr.bf16.gmra.mrb[0].mxu0 %v5041
        %v5080 = vpop.f32.mrb[0].mxu0
        %v5081 = vadd.f32 0.0, %v5080
        %v5082 = vpop.f32.mrb[0].mxu0
        %v5083 = vpop.f32.mrb[0].mxu0
        %v5084 = vpop.f32.mrb[0].mxu0
        %5085 = vdwg.mxu0
        %v5087 = vsel %vm5039, %v2708, 0
        %v5090 = vsel %vm5039, %v3828, 0
        %5092 = vmatprep.subr.bf16.mxu0 0
        %5093 = vmatpush1.bf16.xpose.msra.mxu0 %v5090
        %5094 = vmatprep.subr.bf16.mxu0 0
        %5095 = vmatpush1.bf16.xpose.msra.mxu0 0
        %5096 = vmatprep.subr.bf16.mxu0 0
        %5097 = vmatpush1.bf16.xpose.msra.mxu0 0
        %5098 = vmatprep.subr.bf16.mxu0 0
        %5099 = vmatpush1.bf16.xpose.msra.mxu0 0
        %5100 = vmatprep.subr.bf16.mxu0 0
        %5101 = vmatpush1.bf16.xpose.msra.mxu0 0
        %5102 = vmatprep.subr.bf16.mxu0 0
        %5103 = vmatpush1.bf16.xpose.msra.mxu0 0
        %5104 = vmatprep.subr.bf16.mxu0 0
        %5105 = vmatpush1.bf16.xpose.msra.mxu0 0
        %5106 = vmatprep.subr.bf16.mxu0 0
        %5107 = vmatpush1.bf16.xpose.msra.mxu0 0
        %5108 = vmatprep.subr.bf16.mxu0 0
        %5109 = vmatpush1.bf16.xpose.msra.mxu0 0
        %5110 = vmatprep.subr.bf16.mxu0 0
        %5111 = vmatpush1.bf16.xpose.msra.mxu0 0
        %5112 = vmatprep.subr.bf16.mxu0 0
        %5113 = vmatpush1.bf16.xpose.msra.mxu0 0
        %5114 = vmatprep.subr.bf16.mxu0 0
        %5115 = vmatpush1.bf16.xpose.msra.mxu0 0
        %5116 = vmatprep.subr.bf16.mxu0 0
        %5117 = vmatpush1.bf16.xpose.msra.mxu0 0
        %5118 = vmatprep.subr.bf16.mxu0 0
        %5119 = vmatpush1.bf16.xpose.msra.mxu0 0
        %5120 = vmatprep.subr.bf16.mxu0 0
        %5121 = vmatpush1.bf16.xpose.msra.mxu0 0
        %5122 = vmatprep.subr.bf16.mxu0 0
        %5123 = vmatpush1.bf16.xpose.msra.mxu0 0
        %5124 = vmatprep.mubr.bf16.mxu0 0
        %5125 = vmatmul.mubr.bf16.gmra.mrb[0].mxu0 %v5087
        %v5126 = vpop.f32.mrb[0].mxu0
        %v5127 = vadd.f32 0.0, %v5126
        %v5128 = vpop.f32.mrb[0].mxu0
        %v5129 = vpop.f32.mrb[0].mxu0
        %v5130 = vpop.f32.mrb[0].mxu0
        %5131 = vdwg.mxu0
        %v5133 = vsel %vm5039, %v2711, 0
        %v5136 = vsel %vm5039, %v3831, 0
        %5138 = vmatprep.subr.bf16.mxu0 0
        %5139 = vmatpush1.bf16.xpose.msra.mxu0 %v5136
        %5140 = vmatprep.subr.bf16.mxu0 0
        %5141 = vmatpush1.bf16.xpose.msra.mxu0 0
        %5142 = vmatprep.subr.bf16.mxu0 0
        %5143 = vmatpush1.bf16.xpose.msra.mxu0 0
        %5144 = vmatprep.subr.bf16.mxu0 0
        %5145 = vmatpush1.bf16.xpose.msra.mxu0 0
        %5146 = vmatprep.subr.bf16.mxu0 0
        %5147 = vmatpush1.bf16.xpose.msra.mxu0 0
        %5148 = vmatprep.subr.bf16.mxu0 0
        %5149 = vmatpush1.bf16.xpose.msra.mxu0 0
        %5150 = vmatprep.subr.bf16.mxu0 0
        %5151 = vmatpush1.bf16.xpose.msra.mxu0 0
        %5152 = vmatprep.subr.bf16.mxu0 0
        %5153 = vmatpush1.bf16.xpose.msra.mxu0 0
        %5154 = vmatprep.subr.bf16.mxu0 0
        %5155 = vmatpush1.bf16.xpose.msra.mxu0 0
        %5156 = vmatprep.subr.bf16.mxu0 0
        %5157 = vmatpush1.bf16.xpose.msra.mxu0 0
        %5158 = vmatprep.subr.bf16.mxu0 0
        %5159 = vmatpush1.bf16.xpose.msra.mxu0 0
        %5160 = vmatprep.subr.bf16.mxu0 0
        %5161 = vmatpush1.bf16.xpose.msra.mxu0 0
        %5162 = vmatprep.subr.bf16.mxu0 0
        %5163 = vmatpush1.bf16.xpose.msra.mxu0 0
        %5164 = vmatprep.subr.bf16.mxu0 0
        %5165 = vmatpush1.bf16.xpose.msra.mxu0 0
        %5166 = vmatprep.subr.bf16.mxu0 0
        %5167 = vmatpush1.bf16.xpose.msra.mxu0 0
        %5168 = vmatprep.subr.bf16.mxu0 0
        %5169 = vmatpush1.bf16.xpose.msra.mxu0 0
        %5170 = vmatprep.mubr.bf16.mxu0 0
        %5171 = vmatmul.mubr.bf16.gmra.mrb[0].mxu0 %v5133
        %v5172 = vpop.f32.mrb[0].mxu0
        %v5173 = vadd.f32 0.0, %v5172
        %v5174 = vpop.f32.mrb[0].mxu0
        %v5175 = vpop.f32.mrb[0].mxu0
        %v5176 = vpop.f32.mrb[0].mxu0
        %5177 = vdwg.mxu0
        %v5179 = vsel %vm5039, %v2714, 0
        %v5182 = vsel %vm5039, %v3834, 0
        %5184 = vmatprep.subr.bf16.mxu0 0
        %5185 = vmatpush1.bf16.xpose.msra.mxu0 %v5182
        %5186 = vmatprep.subr.bf16.mxu0 0
        %5187 = vmatpush1.bf16.xpose.msra.mxu0 0
        %5188 = vmatprep.subr.bf16.mxu0 0
        %5189 = vmatpush1.bf16.xpose.msra.mxu0 0
        %5190 = vmatprep.subr.bf16.mxu0 0
        %5191 = vmatpush1.bf16.xpose.msra.mxu0 0
        %5192 = vmatprep.subr.bf16.mxu0 0
        %5193 = vmatpush1.bf16.xpose.msra.mxu0 0
        %5194 = vmatprep.subr.bf16.mxu0 0
        %5195 = vmatpush1.bf16.xpose.msra.mxu0 0
        %5196 = vmatprep.subr.bf16.mxu0 0
        %5197 = vmatpush1.bf16.xpose.msra.mxu0 0
        %5198 = vmatprep.subr.bf16.mxu0 0
        %5199 = vmatpush1.bf16.xpose.msra.mxu0 0
        %5200 = vmatprep.subr.bf16.mxu0 0
        %5201 = vmatpush1.bf16.xpose.msra.mxu0 0
        %5202 = vmatprep.subr.bf16.mxu0 0
        %5203 = vmatpush1.bf16.xpose.msra.mxu0 0
        %5204 = vmatprep.subr.bf16.mxu0 0
        %5205 = vmatpush1.bf16.xpose.msra.mxu0 0
        %5206 = vmatprep.subr.bf16.mxu0 0
        %5207 = vmatpush1.bf16.xpose.msra.mxu0 0
        %5208 = vmatprep.subr.bf16.mxu0 0
        %5209 = vmatpush1.bf16.xpose.msra.mxu0 0
        %5210 = vmatprep.subr.bf16.mxu0 0
        %5211 = vmatpush1.bf16.xpose.msra.mxu0 0
        %5212 = vmatprep.subr.bf16.mxu0 0
        %5213 = vmatpush1.bf16.xpose.msra.mxu0 0
        %5214 = vmatprep.subr.bf16.mxu0 0
        %5215 = vmatpush1.bf16.xpose.msra.mxu0 0
        %5216 = vmatprep.mubr.bf16.mxu0 0
        %5217 = vmatmul.mubr.bf16.gmra.mrb[0].mxu0 %v5179
        %v5218 = vpop.f32.mrb[0].mxu0
        %v5219 = vadd.f32 0.0, %v5218
        %v5220 = vpop.f32.mrb[0].mxu0
        %v5221 = vpop.f32.mrb[0].mxu0
        %v5222 = vpop.f32.mrb[0].mxu0
        %5223 = vdwg.mxu0
        %v5225 = vsel %vm5039, %v2717, 0
        %v5228 = vsel %vm5039, %v3837, 0
        %5230 = vmatprep.subr.bf16.mxu0 0
        %5231 = vmatpush1.bf16.xpose.msra.mxu0 %v5228
        %5232 = vmatprep.subr.bf16.mxu0 0
        %5233 = vmatpush1.bf16.xpose.msra.mxu0 0
        %5234 = vmatprep.subr.bf16.mxu0 0
        %5235 = vmatpush1.bf16.xpose.msra.mxu0 0
        %5236 = vmatprep.subr.bf16.mxu0 0
        %5237 = vmatpush1.bf16.xpose.msra.mxu0 0
        %5238 = vmatprep.subr.bf16.mxu0 0
        %5239 = vmatpush1.bf16.xpose.msra.mxu0 0
        %5240 = vmatprep.subr.bf16.mxu0 0
        %5241 = vmatpush1.bf16.xpose.msra.mxu0 0
        %5242 = vmatprep.subr.bf16.mxu0 0
        %5243 = vmatpush1.bf16.xpose.msra.mxu0 0
        %5244 = vmatprep.subr.bf16.mxu0 0
        %5245 = vmatpush1.bf16.xpose.msra.mxu0 0
        %5246 = vmatprep.subr.bf16.mxu0 0
        %5247 = vmatpush1.bf16.xpose.msra.mxu0 0
        %5248 = vmatprep.subr.bf16.mxu0 0
        %5249 = vmatpush1.bf16.xpose.msra.mxu0 0
        %5250 = vmatprep.subr.bf16.mxu0 0
        %5251 = vmatpush1.bf16.xpose.msra.mxu0 0
        %5252 = vmatprep.subr.bf16.mxu0 0
        %5253 = vmatpush1.bf16.xpose.msra.mxu0 0
        %5254 = vmatprep.subr.bf16.mxu0 0
        %5255 = vmatpush1.bf16.xpose.msra.mxu0 0
        %5256 = vmatprep.subr.bf16.mxu0 0
        %5257 = vmatpush1.bf16.xpose.msra.mxu0 0
        %5258 = vmatprep.subr.bf16.mxu0 0
        %5259 = vmatpush1.bf16.xpose.msra.mxu0 0
        %5260 = vmatprep.subr.bf16.mxu0 0
        %5261 = vmatpush1.bf16.xpose.msra.mxu0 0
        %5262 = vmatprep.mubr.bf16.mxu0 0
        %5263 = vmatmul.mubr.bf16.gmra.mrb[0].mxu0 %v5225
        %v5264 = vpop.f32.mrb[0].mxu0
        %v5265 = vadd.f32 0.0, %v5264
        %v5266 = vpop.f32.mrb[0].mxu0
        %v5267 = vpop.f32.mrb[0].mxu0
        %v5268 = vpop.f32.mrb[0].mxu0
        %5269 = vdwg.mxu0
        %v5271 = vsel %vm5039, %v2720, 0
        %v5274 = vsel %vm5039, %v3840, 0
        %5276 = vmatprep.subr.bf16.mxu0 0
        %5277 = vmatpush1.bf16.xpose.msra.mxu0 %v5274
        %5278 = vmatprep.subr.bf16.mxu0 0
        %5279 = vmatpush1.bf16.xpose.msra.mxu0 0
        %5280 = vmatprep.subr.bf16.mxu0 0
        %5281 = vmatpush1.bf16.xpose.msra.mxu0 0
        %5282 = vmatprep.subr.bf16.mxu0 0
        %5283 = vmatpush1.bf16.xpose.msra.mxu0 0
        %5284 = vmatprep.subr.bf16.mxu0 0
        %5285 = vmatpush1.bf16.xpose.msra.mxu0 0
        %5286 = vmatprep.subr.bf16.mxu0 0
        %5287 = vmatpush1.bf16.xpose.msra.mxu0 0
        %5288 = vmatprep.subr.bf16.mxu0 0
        %5289 = vmatpush1.bf16.xpose.msra.mxu0 0
        %5290 = vmatprep.subr.bf16.mxu0 0
        %5291 = vmatpush1.bf16.xpose.msra.mxu0 0
        %5292 = vmatprep.subr.bf16.mxu0 0
        %5293 = vmatpush1.bf16.xpose.msra.mxu0 0
        %5294 = vmatprep.subr.bf16.mxu0 0
        %5295 = vmatpush1.bf16.xpose.msra.mxu0 0
        %5296 = vmatprep.subr.bf16.mxu0 0
        %5297 = vmatpush1.bf16.xpose.msra.mxu0 0
        %5298 = vmatprep.subr.bf16.mxu0 0
        %5299 = vmatpush1.bf16.xpose.msra.mxu0 0
        %5300 = vmatprep.subr.bf16.mxu0 0
        %5301 = vmatpush1.bf16.xpose.msra.mxu0 0
        %5302 = vmatprep.subr.bf16.mxu0 0
        %5303 = vmatpush1.bf16.xpose.msra.mxu0 0
        %5304 = vmatprep.subr.bf16.mxu0 0
        %5305 = vmatpush1.bf16.xpose.msra.mxu0 0
        %5306 = vmatprep.subr.bf16.mxu0 0
        %5307 = vmatpush1.bf16.xpose.msra.mxu0 0
        %5308 = vmatprep.mubr.bf16.mxu0 0
        %5309 = vmatmul.mubr.bf16.gmra.mrb[0].mxu0 %v5271
        %v5310 = vpop.f32.mrb[0].mxu0
        %v5311 = vadd.f32 0.0, %v5310
        %v5312 = vpop.f32.mrb[0].mxu0
        %v5313 = vpop.f32.mrb[0].mxu0
        %v5314 = vpop.f32.mrb[0].mxu0
        %5315 = vdwg.mxu0
        %v5317 = vsel %vm5039, %v2723, 0
        %v5320 = vsel %vm5039, %v3843, 0
        %5322 = vmatprep.subr.bf16.mxu0 0
        %5323 = vmatpush1.bf16.xpose.msra.mxu0 %v5320
        %5324 = vmatprep.subr.bf16.mxu0 0
        %5325 = vmatpush1.bf16.xpose.msra.mxu0 0
        %5326 = vmatprep.subr.bf16.mxu0 0
        %5327 = vmatpush1.bf16.xpose.msra.mxu0 0
        %5328 = vmatprep.subr.bf16.mxu0 0
        %5329 = vmatpush1.bf16.xpose.msra.mxu0 0
        %5330 = vmatprep.subr.bf16.mxu0 0
        %5331 = vmatpush1.bf16.xpose.msra.mxu0 0
        %5332 = vmatprep.subr.bf16.mxu0 0
        %5333 = vmatpush1.bf16.xpose.msra.mxu0 0
        %5334 = vmatprep.subr.bf16.mxu0 0
        %5335 = vmatpush1.bf16.xpose.msra.mxu0 0
        %5336 = vmatprep.subr.bf16.mxu0 0
        %5337 = vmatpush1.bf16.xpose.msra.mxu0 0
        %5338 = vmatprep.subr.bf16.mxu0 0
        %5339 = vmatpush1.bf16.xpose.msra.mxu0 0
        %5340 = vmatprep.subr.bf16.mxu0 0
        %5341 = vmatpush1.bf16.xpose.msra.mxu0 0
        %5342 = vmatprep.subr.bf16.mxu0 0
        %5343 = vmatpush1.bf16.xpose.msra.mxu0 0
        %5344 = vmatprep.subr.bf16.mxu0 0
        %5345 = vmatpush1.bf16.xpose.msra.mxu0 0
        %5346 = vmatprep.subr.bf16.mxu0 0
        %5347 = vmatpush1.bf16.xpose.msra.mxu0 0
        %5348 = vmatprep.subr.bf16.mxu0 0
        %5349 = vmatpush1.bf16.xpose.msra.mxu0 0
        %5350 = vmatprep.subr.bf16.mxu0 0
        %5351 = vmatpush1.bf16.xpose.msra.mxu0 0
        %5352 = vmatprep.subr.bf16.mxu0 0
        %5353 = vmatpush1.bf16.xpose.msra.mxu0 0
        %5354 = vmatprep.mubr.bf16.mxu0 0
        %5355 = vmatmul.mubr.bf16.gmra.mrb[0].mxu0 %v5317
        %v5356 = vpop.f32.mrb[0].mxu0
        %v5357 = vadd.f32 0.0, %v5356
        %v5358 = vpop.f32.mrb[0].mxu0
        %v5359 = vpop.f32.mrb[0].mxu0
        %v5360 = vpop.f32.mrb[0].mxu0
        %5361 = vdwg.mxu0
        %v5363 = vsel %vm5039, %v2726, 0
        %v5366 = vsel %vm5039, %v3846, 0
        %5368 = vmatprep.subr.bf16.mxu0 0
        %5369 = vmatpush1.bf16.xpose.msra.mxu0 %v5366
        %5370 = vmatprep.subr.bf16.mxu0 0
        %5371 = vmatpush1.bf16.xpose.msra.mxu0 0
        %5372 = vmatprep.subr.bf16.mxu0 0
        %5373 = vmatpush1.bf16.xpose.msra.mxu0 0
        %5374 = vmatprep.subr.bf16.mxu0 0
        %5375 = vmatpush1.bf16.xpose.msra.mxu0 0
        %5376 = vmatprep.subr.bf16.mxu0 0
        %5377 = vmatpush1.bf16.xpose.msra.mxu0 0
        %5378 = vmatprep.subr.bf16.mxu0 0
        %5379 = vmatpush1.bf16.xpose.msra.mxu0 0
        %5380 = vmatprep.subr.bf16.mxu0 0
        %5381 = vmatpush1.bf16.xpose.msra.mxu0 0
        %5382 = vmatprep.subr.bf16.mxu0 0
        %5383 = vmatpush1.bf16.xpose.msra.mxu0 0
        %5384 = vmatprep.subr.bf16.mxu0 0
        %5385 = vmatpush1.bf16.xpose.msra.mxu0 0
        %5386 = vmatprep.subr.bf16.mxu0 0
        %5387 = vmatpush1.bf16.xpose.msra.mxu0 0
        %5388 = vmatprep.subr.bf16.mxu0 0
        %5389 = vmatpush1.bf16.xpose.msra.mxu0 0
        %5390 = vmatprep.subr.bf16.mxu0 0
        %5391 = vmatpush1.bf16.xpose.msra.mxu0 0
        %5392 = vmatprep.subr.bf16.mxu0 0
        %5393 = vmatpush1.bf16.xpose.msra.mxu0 0
        %5394 = vmatprep.subr.bf16.mxu0 0
        %5395 = vmatpush1.bf16.xpose.msra.mxu0 0
        %5396 = vmatprep.subr.bf16.mxu0 0
        %5397 = vmatpush1.bf16.xpose.msra.mxu0 0
        %5398 = vmatprep.subr.bf16.mxu0 0
        %5399 = vmatpush1.bf16.xpose.msra.mxu0 0
        %5400 = vmatprep.mubr.bf16.mxu0 0
        %5401 = vmatmul.mubr.bf16.gmra.mrb[0].mxu0 %v5363
        %v5402 = vpop.f32.mrb[0].mxu0
        %v5403 = vadd.f32 0.0, %v5402
        %v5404 = vpop.f32.mrb[0].mxu0
        %v5405 = vpop.f32.mrb[0].mxu0
        %v5406 = vpop.f32.mrb[0].mxu0
        %5407 = vdwg.mxu0
        %v5409 = vsel %vm5039, %v2729, 0
        %v5412 = vsel %vm5039, %v3849, 0
        %5414 = vmatprep.subr.bf16.mxu0 0
        %5415 = vmatpush1.bf16.xpose.msra.mxu0 %v5412
        %5416 = vmatprep.subr.bf16.mxu0 0
        %5417 = vmatpush1.bf16.xpose.msra.mxu0 0
        %5418 = vmatprep.subr.bf16.mxu0 0
        %5419 = vmatpush1.bf16.xpose.msra.mxu0 0
        %5420 = vmatprep.subr.bf16.mxu0 0
        %5421 = vmatpush1.bf16.xpose.msra.mxu0 0
        %5422 = vmatprep.subr.bf16.mxu0 0
        %5423 = vmatpush1.bf16.xpose.msra.mxu0 0
        %5424 = vmatprep.subr.bf16.mxu0 0
        %5425 = vmatpush1.bf16.xpose.msra.mxu0 0
        %5426 = vmatprep.subr.bf16.mxu0 0
        %5427 = vmatpush1.bf16.xpose.msra.mxu0 0
        %5428 = vmatprep.subr.bf16.mxu0 0
        %5429 = vmatpush1.bf16.xpose.msra.mxu0 0
        %5430 = vmatprep.subr.bf16.mxu0 0
        %5431 = vmatpush1.bf16.xpose.msra.mxu0 0
        %5432 = vmatprep.subr.bf16.mxu0 0
        %5433 = vmatpush1.bf16.xpose.msra.mxu0 0
        %5434 = vmatprep.subr.bf16.mxu0 0
        %5435 = vmatpush1.bf16.xpose.msra.mxu0 0
        %5436 = vmatprep.subr.bf16.mxu0 0
        %5437 = vmatpush1.bf16.xpose.msra.mxu0 0
        %5438 = vmatprep.subr.bf16.mxu0 0
        %5439 = vmatpush1.bf16.xpose.msra.mxu0 0
        %5440 = vmatprep.subr.bf16.mxu0 0
        %5441 = vmatpush1.bf16.xpose.msra.mxu0 0
        %5442 = vmatprep.subr.bf16.mxu0 0
        %5443 = vmatpush1.bf16.xpose.msra.mxu0 0
        %5444 = vmatprep.subr.bf16.mxu0 0
        %5445 = vmatpush1.bf16.xpose.msra.mxu0 0
        %5446 = vmatprep.mubr.bf16.mxu0 0
        %5447 = vmatmul.mubr.bf16.gmra.mrb[0].mxu0 %v5409
        %v5448 = vpop.f32.mrb[0].mxu0
        %v5449 = vadd.f32 0.0, %v5448
        %v5450 = vpop.f32.mrb[0].mxu0
        %v5451 = vpop.f32.mrb[0].mxu0
        %v5452 = vpop.f32.mrb[0].mxu0
        %5453 = vdwg.mxu0
        %v5455 = vsel %vm5039, %v2732, 0
        %v5458 = vsel %vm5039, %v3852, 0
        %5460 = vmatprep.subr.bf16.mxu0 0
        %5461 = vmatpush1.bf16.xpose.msra.mxu0 %v5458
        %5462 = vmatprep.subr.bf16.mxu0 0
        %5463 = vmatpush1.bf16.xpose.msra.mxu0 0
        %5464 = vmatprep.subr.bf16.mxu0 0
        %5465 = vmatpush1.bf16.xpose.msra.mxu0 0
        %5466 = vmatprep.subr.bf16.mxu0 0
        %5467 = vmatpush1.bf16.xpose.msra.mxu0 0
        %5468 = vmatprep.subr.bf16.mxu0 0
        %5469 = vmatpush1.bf16.xpose.msra.mxu0 0
        %5470 = vmatprep.subr.bf16.mxu0 0
        %5471 = vmatpush1.bf16.xpose.msra.mxu0 0
        %5472 = vmatprep.subr.bf16.mxu0 0
        %5473 = vmatpush1.bf16.xpose.msra.mxu0 0
        %5474 = vmatprep.subr.bf16.mxu0 0
        %5475 = vmatpush1.bf16.xpose.msra.mxu0 0
        %5476 = vmatprep.subr.bf16.mxu0 0
        %5477 = vmatpush1.bf16.xpose.msra.mxu0 0
        %5478 = vmatprep.subr.bf16.mxu0 0
        %5479 = vmatpush1.bf16.xpose.msra.mxu0 0
        %5480 = vmatprep.subr.bf16.mxu0 0
        %5481 = vmatpush1.bf16.xpose.msra.mxu0 0
        %5482 = vmatprep.subr.bf16.mxu0 0
        %5483 = vmatpush1.bf16.xpose.msra.mxu0 0
        %5484 = vmatprep.subr.bf16.mxu0 0
        %5485 = vmatpush1.bf16.xpose.msra.mxu0 0
        %5486 = vmatprep.subr.bf16.mxu0 0
        %5487 = vmatpush1.bf16.xpose.msra.mxu0 0
        %5488 = vmatprep.subr.bf16.mxu0 0
        %5489 = vmatpush1.bf16.xpose.msra.mxu0 0
        %5490 = vmatprep.subr.bf16.mxu0 0
        %5491 = vmatpush1.bf16.xpose.msra.mxu0 0
        %5492 = vmatprep.mubr.bf16.mxu0 0
        %5493 = vmatmul.mubr.bf16.gmra.mrb[0].mxu0 %v5455
        %v5494 = vpop.f32.mrb[0].mxu0
        %v5495 = vadd.f32 0.0, %v5494
        %v5496 = vpop.f32.mrb[0].mxu0
        %v5497 = vpop.f32.mrb[0].mxu0
        %v5498 = vpop.f32.mrb[0].mxu0
        %5499 = vdwg.mxu0
        %v5501 = vsel %vm5039, %v2735, 0
        %v5504 = vsel %vm5039, %v3855, 0
        %5506 = vmatprep.subr.bf16.mxu0 0
        %5507 = vmatpush1.bf16.xpose.msra.mxu0 %v5504
        %5508 = vmatprep.subr.bf16.mxu0 0
        %5509 = vmatpush1.bf16.xpose.msra.mxu0 0
        %5510 = vmatprep.subr.bf16.mxu0 0
        %5511 = vmatpush1.bf16.xpose.msra.mxu0 0
        %5512 = vmatprep.subr.bf16.mxu0 0
        %5513 = vmatpush1.bf16.xpose.msra.mxu0 0
        %5514 = vmatprep.subr.bf16.mxu0 0
        %5515 = vmatpush1.bf16.xpose.msra.mxu0 0
        %5516 = vmatprep.subr.bf16.mxu0 0
        %5517 = vmatpush1.bf16.xpose.msra.mxu0 0
        %5518 = vmatprep.subr.bf16.mxu0 0
        %5519 = vmatpush1.bf16.xpose.msra.mxu0 0
        %5520 = vmatprep.subr.bf16.mxu0 0
        %5521 = vmatpush1.bf16.xpose.msra.mxu0 0
        %5522 = vmatprep.subr.bf16.mxu0 0
        %5523 = vmatpush1.bf16.xpose.msra.mxu0 0
        %5524 = vmatprep.subr.bf16.mxu0 0
        %5525 = vmatpush1.bf16.xpose.msra.mxu0 0
        %5526 = vmatprep.subr.bf16.mxu0 0
        %5527 = vmatpush1.bf16.xpose.msra.mxu0 0
        %5528 = vmatprep.subr.bf16.mxu0 0
        %5529 = vmatpush1.bf16.xpose.msra.mxu0 0
        %5530 = vmatprep.subr.bf16.mxu0 0
        %5531 = vmatpush1.bf16.xpose.msra.mxu0 0
        %5532 = vmatprep.subr.bf16.mxu0 0
        %5533 = vmatpush1.bf16.xpose.msra.mxu0 0
        %5534 = vmatprep.subr.bf16.mxu0 0
        %5535 = vmatpush1.bf16.xpose.msra.mxu0 0
        %5536 = vmatprep.subr.bf16.mxu0 0
        %5537 = vmatpush1.bf16.xpose.msra.mxu0 0
        %5538 = vmatprep.mubr.bf16.mxu0 0
        %5539 = vmatmul.mubr.bf16.gmra.mrb[0].mxu0 %v5501
        %v5540 = vpop.f32.mrb[0].mxu0
        %v5541 = vadd.f32 0.0, %v5540
        %v5542 = vpop.f32.mrb[0].mxu0
        %v5543 = vpop.f32.mrb[0].mxu0
        %v5544 = vpop.f32.mrb[0].mxu0
        %5545 = vdwg.mxu0
        %v5547 = vsel %vm5039, %v2738, 0
        %v5550 = vsel %vm5039, %v3858, 0
        %5552 = vmatprep.subr.bf16.mxu0 0
        %5553 = vmatpush1.bf16.xpose.msra.mxu0 %v5550
        %5554 = vmatprep.subr.bf16.mxu0 0
        %5555 = vmatpush1.bf16.xpose.msra.mxu0 0
        %5556 = vmatprep.subr.bf16.mxu0 0
        %5557 = vmatpush1.bf16.xpose.msra.mxu0 0
        %5558 = vmatprep.subr.bf16.mxu0 0
        %5559 = vmatpush1.bf16.xpose.msra.mxu0 0
        %5560 = vmatprep.subr.bf16.mxu0 0
        %5561 = vmatpush1.bf16.xpose.msra.mxu0 0
        %5562 = vmatprep.subr.bf16.mxu0 0
        %5563 = vmatpush1.bf16.xpose.msra.mxu0 0
        %5564 = vmatprep.subr.bf16.mxu0 0
        %5565 = vmatpush1.bf16.xpose.msra.mxu0 0
        %5566 = vmatprep.subr.bf16.mxu0 0
        %5567 = vmatpush1.bf16.xpose.msra.mxu0 0
        %5568 = vmatprep.subr.bf16.mxu0 0
        %5569 = vmatpush1.bf16.xpose.msra.mxu0 0
        %5570 = vmatprep.subr.bf16.mxu0 0
        %5571 = vmatpush1.bf16.xpose.msra.mxu0 0
        %5572 = vmatprep.subr.bf16.mxu0 0
        %5573 = vmatpush1.bf16.xpose.msra.mxu0 0
        %5574 = vmatprep.subr.bf16.mxu0 0
        %5575 = vmatpush1.bf16.xpose.msra.mxu0 0
        %5576 = vmatprep.subr.bf16.mxu0 0
        %5577 = vmatpush1.bf16.xpose.msra.mxu0 0
        %5578 = vmatprep.subr.bf16.mxu0 0
        %5579 = vmatpush1.bf16.xpose.msra.mxu0 0
        %5580 = vmatprep.subr.bf16.mxu0 0
        %5581 = vmatpush1.bf16.xpose.msra.mxu0 0
        %5582 = vmatprep.subr.bf16.mxu0 0
        %5583 = vmatpush1.bf16.xpose.msra.mxu0 0
        %5584 = vmatprep.mubr.bf16.mxu0 0
        %5585 = vmatmul.mubr.bf16.gmra.mrb[0].mxu0 %v5547
        %v5586 = vpop.f32.mrb[0].mxu0
        %v5587 = vadd.f32 0.0, %v5586
        %v5588 = vpop.f32.mrb[0].mxu0
        %v5589 = vpop.f32.mrb[0].mxu0
        %v5590 = vpop.f32.mrb[0].mxu0
        %5591 = vdwg.mxu0
        %v5593 = vsel %vm5039, %v2741, 0
        %v5596 = vsel %vm5039, %v3861, 0
        %5598 = vmatprep.subr.bf16.mxu0 0
        %5599 = vmatpush1.bf16.xpose.msra.mxu0 %v5596
        %5600 = vmatprep.subr.bf16.mxu0 0
        %5601 = vmatpush1.bf16.xpose.msra.mxu0 0
        %5602 = vmatprep.subr.bf16.mxu0 0
        %5603 = vmatpush1.bf16.xpose.msra.mxu0 0
        %5604 = vmatprep.subr.bf16.mxu0 0
        %5605 = vmatpush1.bf16.xpose.msra.mxu0 0
        %5606 = vmatprep.subr.bf16.mxu0 0
        %5607 = vmatpush1.bf16.xpose.msra.mxu0 0
        %5608 = vmatprep.subr.bf16.mxu0 0
        %5609 = vmatpush1.bf16.xpose.msra.mxu0 0
        %5610 = vmatprep.subr.bf16.mxu0 0
        %5611 = vmatpush1.bf16.xpose.msra.mxu0 0
        %5612 = vmatprep.subr.bf16.mxu0 0
        %5613 = vmatpush1.bf16.xpose.msra.mxu0 0
        %5614 = vmatprep.subr.bf16.mxu0 0
        %5615 = vmatpush1.bf16.xpose.msra.mxu0 0
        %5616 = vmatprep.subr.bf16.mxu0 0
        %5617 = vmatpush1.bf16.xpose.msra.mxu0 0
        %5618 = vmatprep.subr.bf16.mxu0 0
        %5619 = vmatpush1.bf16.xpose.msra.mxu0 0
        %5620 = vmatprep.subr.bf16.mxu0 0
        %5621 = vmatpush1.bf16.xpose.msra.mxu0 0
        %5622 = vmatprep.subr.bf16.mxu0 0
        %5623 = vmatpush1.bf16.xpose.msra.mxu0 0
        %5624 = vmatprep.subr.bf16.mxu0 0
        %5625 = vmatpush1.bf16.xpose.msra.mxu0 0
        %5626 = vmatprep.subr.bf16.mxu0 0
        %5627 = vmatpush1.bf16.xpose.msra.mxu0 0
        %5628 = vmatprep.subr.bf16.mxu0 0
        %5629 = vmatpush1.bf16.xpose.msra.mxu0 0
        %5630 = vmatprep.mubr.bf16.mxu0 0
        %5631 = vmatmul.mubr.bf16.gmra.mrb[0].mxu0 %v5593
        %v5632 = vpop.f32.mrb[0].mxu0
        %v5633 = vadd.f32 0.0, %v5632
        %v5634 = vpop.f32.mrb[0].mxu0
        %v5635 = vpop.f32.mrb[0].mxu0
        %v5636 = vpop.f32.mrb[0].mxu0
        %5637 = vdwg.mxu0
        %v5639 = vsel %vm5039, %v2744, 0
        %v5642 = vsel %vm5039, %v3864, 0
        %5644 = vmatprep.subr.bf16.mxu0 0
        %5645 = vmatpush1.bf16.xpose.msra.mxu0 %v5642
        %5646 = vmatprep.subr.bf16.mxu0 0
        %5647 = vmatpush1.bf16.xpose.msra.mxu0 0
        %5648 = vmatprep.subr.bf16.mxu0 0
        %5649 = vmatpush1.bf16.xpose.msra.mxu0 0
        %5650 = vmatprep.subr.bf16.mxu0 0
        %5651 = vmatpush1.bf16.xpose.msra.mxu0 0
        %5652 = vmatprep.subr.bf16.mxu0 0
        %5653 = vmatpush1.bf16.xpose.msra.mxu0 0
        %5654 = vmatprep.subr.bf16.mxu0 0
        %5655 = vmatpush1.bf16.xpose.msra.mxu0 0
        %5656 = vmatprep.subr.bf16.mxu0 0
        %5657 = vmatpush1.bf16.xpose.msra.mxu0 0
        %5658 = vmatprep.subr.bf16.mxu0 0
        %5659 = vmatpush1.bf16.xpose.msra.mxu0 0
        %5660 = vmatprep.subr.bf16.mxu0 0
        %5661 = vmatpush1.bf16.xpose.msra.mxu0 0
        %5662 = vmatprep.subr.bf16.mxu0 0
        %5663 = vmatpush1.bf16.xpose.msra.mxu0 0
        %5664 = vmatprep.subr.bf16.mxu0 0
        %5665 = vmatpush1.bf16.xpose.msra.mxu0 0
        %5666 = vmatprep.subr.bf16.mxu0 0
        %5667 = vmatpush1.bf16.xpose.msra.mxu0 0
        %5668 = vmatprep.subr.bf16.mxu0 0
        %5669 = vmatpush1.bf16.xpose.msra.mxu0 0
        %5670 = vmatprep.subr.bf16.mxu0 0
        %5671 = vmatpush1.bf16.xpose.msra.mxu0 0
        %5672 = vmatprep.subr.bf16.mxu0 0
        %5673 = vmatpush1.bf16.xpose.msra.mxu0 0
        %5674 = vmatprep.subr.bf16.mxu0 0
        %5675 = vmatpush1.bf16.xpose.msra.mxu0 0
        %5676 = vmatprep.mubr.bf16.mxu0 0
        %5677 = vmatmul.mubr.bf16.gmra.mrb[0].mxu0 %v5639
        %v5678 = vpop.f32.mrb[0].mxu0
        %v5679 = vadd.f32 0.0, %v5678
        %v5680 = vpop.f32.mrb[0].mxu0
        %v5681 = vpop.f32.mrb[0].mxu0
        %v5682 = vpop.f32.mrb[0].mxu0
        %5683 = vdwg.mxu0
        %v5685 = vsel %vm5039, %v2747, 0
        %v5688 = vsel %vm5039, %v3867, 0
        %5690 = vmatprep.subr.bf16.mxu0 0
        %5691 = vmatpush1.bf16.xpose.msra.mxu0 %v5688
        %5692 = vmatprep.subr.bf16.mxu0 0
        %5693 = vmatpush1.bf16.xpose.msra.mxu0 0
        %5694 = vmatprep.subr.bf16.mxu0 0
        %5695 = vmatpush1.bf16.xpose.msra.mxu0 0
        %5696 = vmatprep.subr.bf16.mxu0 0
        %5697 = vmatpush1.bf16.xpose.msra.mxu0 0
        %5698 = vmatprep.subr.bf16.mxu0 0
        %5699 = vmatpush1.bf16.xpose.msra.mxu0 0
        %5700 = vmatprep.subr.bf16.mxu0 0
        %5701 = vmatpush1.bf16.xpose.msra.mxu0 0
        %5702 = vmatprep.subr.bf16.mxu0 0
        %5703 = vmatpush1.bf16.xpose.msra.mxu0 0
        %5704 = vmatprep.subr.bf16.mxu0 0
        %5705 = vmatpush1.bf16.xpose.msra.mxu0 0
        %5706 = vmatprep.subr.bf16.mxu0 0
        %5707 = vmatpush1.bf16.xpose.msra.mxu0 0
        %5708 = vmatprep.subr.bf16.mxu0 0
        %5709 = vmatpush1.bf16.xpose.msra.mxu0 0
        %5710 = vmatprep.subr.bf16.mxu0 0
        %5711 = vmatpush1.bf16.xpose.msra.mxu0 0
        %5712 = vmatprep.subr.bf16.mxu0 0
        %5713 = vmatpush1.bf16.xpose.msra.mxu0 0
        %5714 = vmatprep.subr.bf16.mxu0 0
        %5715 = vmatpush1.bf16.xpose.msra.mxu0 0
        %5716 = vmatprep.subr.bf16.mxu0 0
        %5717 = vmatpush1.bf16.xpose.msra.mxu0 0
        %5718 = vmatprep.subr.bf16.mxu0 0
        %5719 = vmatpush1.bf16.xpose.msra.mxu0 0
        %5720 = vmatprep.subr.bf16.mxu0 0
        %5721 = vmatpush1.bf16.xpose.msra.mxu0 0
        %5722 = vmatprep.mubr.bf16.mxu0 0
        %5723 = vmatmul.mubr.bf16.gmra.mrb[0].mxu0 %v5685
        %v5724 = vpop.f32.mrb[0].mxu0
        %v5725 = vadd.f32 0.0, %v5724
        %v5726 = vpop.f32.mrb[0].mxu0
        %v5727 = vpop.f32.mrb[0].mxu0
        %v5728 = vpop.f32.mrb[0].mxu0
        %5729 = vdwg.mxu0
        %v5731 = vsel %vm5039, %v2750, 0
        %v5734 = vsel %vm5039, %v3870, 0
        %5736 = vmatprep.subr.bf16.mxu0 0
        %5737 = vmatpush1.bf16.xpose.msra.mxu0 %v5734
        %5738 = vmatprep.subr.bf16.mxu0 0
        %5739 = vmatpush1.bf16.xpose.msra.mxu0 0
        %5740 = vmatprep.subr.bf16.mxu0 0
        %5741 = vmatpush1.bf16.xpose.msra.mxu0 0
        %5742 = vmatprep.subr.bf16.mxu0 0
        %5743 = vmatpush1.bf16.xpose.msra.mxu0 0
        %5744 = vmatprep.subr.bf16.mxu0 0
        %5745 = vmatpush1.bf16.xpose.msra.mxu0 0
        %5746 = vmatprep.subr.bf16.mxu0 0
        %5747 = vmatpush1.bf16.xpose.msra.mxu0 0
        %5748 = vmatprep.subr.bf16.mxu0 0
        %5749 = vmatpush1.bf16.xpose.msra.mxu0 0
        %5750 = vmatprep.subr.bf16.mxu0 0
        %5751 = vmatpush1.bf16.xpose.msra.mxu0 0
        %5752 = vmatprep.subr.bf16.mxu0 0
        %5753 = vmatpush1.bf16.xpose.msra.mxu0 0
        %5754 = vmatprep.subr.bf16.mxu0 0
        %5755 = vmatpush1.bf16.xpose.msra.mxu0 0
        %5756 = vmatprep.subr.bf16.mxu0 0
        %5757 = vmatpush1.bf16.xpose.msra.mxu0 0
        %5758 = vmatprep.subr.bf16.mxu0 0
        %5759 = vmatpush1.bf16.xpose.msra.mxu0 0
        %5760 = vmatprep.subr.bf16.mxu0 0
        %5761 = vmatpush1.bf16.xpose.msra.mxu0 0
        %5762 = vmatprep.subr.bf16.mxu0 0
        %5763 = vmatpush1.bf16.xpose.msra.mxu0 0
        %5764 = vmatprep.subr.bf16.mxu0 0
        %5765 = vmatpush1.bf16.xpose.msra.mxu0 0
        %5766 = vmatprep.subr.bf16.mxu0 0
        %5767 = vmatpush1.bf16.xpose.msra.mxu0 0
        %5768 = vmatprep.mubr.bf16.mxu0 0
        %5769 = vmatmul.mubr.bf16.gmra.mrb[0].mxu0 %v5731
        %v5770 = vpop.f32.mrb[0].mxu0
        %v5771 = vadd.f32 0.0, %v5770
        %v5772 = vpop.f32.mrb[0].mxu0
        %v5773 = vpop.f32.mrb[0].mxu0
        %v5774 = vpop.f32.mrb[0].mxu0
        %5775 = vdwg.mxu0
        %v5777 = vsel %vm5039, %v2753, 0
        %v5780 = vsel %vm5039, %v3873, 0
        %5782 = vmatprep.subr.bf16.mxu0 0
        %5783 = vmatpush1.bf16.xpose.msra.mxu0 %v5780
        %5784 = vmatprep.subr.bf16.mxu0 0
        %5785 = vmatpush1.bf16.xpose.msra.mxu0 0
        %5786 = vmatprep.subr.bf16.mxu0 0
        %5787 = vmatpush1.bf16.xpose.msra.mxu0 0
        %5788 = vmatprep.subr.bf16.mxu0 0
        %5789 = vmatpush1.bf16.xpose.msra.mxu0 0
        %5790 = vmatprep.subr.bf16.mxu0 0
        %5791 = vmatpush1.bf16.xpose.msra.mxu0 0
        %5792 = vmatprep.subr.bf16.mxu0 0
        %5793 = vmatpush1.bf16.xpose.msra.mxu0 0
        %5794 = vmatprep.subr.bf16.mxu0 0
        %5795 = vmatpush1.bf16.xpose.msra.mxu0 0
        %5796 = vmatprep.subr.bf16.mxu0 0
        %5797 = vmatpush1.bf16.xpose.msra.mxu0 0
        %5798 = vmatprep.subr.bf16.mxu0 0
        %5799 = vmatpush1.bf16.xpose.msra.mxu0 0
        %5800 = vmatprep.subr.bf16.mxu0 0
        %5801 = vmatpush1.bf16.xpose.msra.mxu0 0
        %5802 = vmatprep.subr.bf16.mxu0 0
        %5803 = vmatpush1.bf16.xpose.msra.mxu0 0
        %5804 = vmatprep.subr.bf16.mxu0 0
        %5805 = vmatpush1.bf16.xpose.msra.mxu0 0
        %5806 = vmatprep.subr.bf16.mxu0 0
        %5807 = vmatpush1.bf16.xpose.msra.mxu0 0
        %5808 = vmatprep.subr.bf16.mxu0 0
        %5809 = vmatpush1.bf16.xpose.msra.mxu0 0
        %5810 = vmatprep.subr.bf16.mxu0 0
        %5811 = vmatpush1.bf16.xpose.msra.mxu0 0
        %5812 = vmatprep.subr.bf16.mxu0 0
        %5813 = vmatpush1.bf16.xpose.msra.mxu0 0
        %5814 = vmatprep.mubr.bf16.mxu0 0
        %5815 = vmatmul.mubr.bf16.gmra.mrb[0].mxu0 %v5777
        %v5816 = vpop.f32.mrb[0].mxu0
        %v5817 = vadd.f32 0.0, %v5816
        %v5818 = vpop.f32.mrb[0].mxu0
        %v5819 = vpop.f32.mrb[0].mxu0
        %v5820 = vpop.f32.mrb[0].mxu0
        %5821 = vdwg.mxu0
        %v5823 = vsel %vm5039, %v2756, 0
        %v5826 = vsel %vm5039, %v3876, 0
        %5828 = vmatprep.subr.bf16.mxu0 0
        %5829 = vmatpush1.bf16.xpose.msra.mxu0 %v5826
        %5830 = vmatprep.subr.bf16.mxu0 0
        %5831 = vmatpush1.bf16.xpose.msra.mxu0 0
        %5832 = vmatprep.subr.bf16.mxu0 0
        %5833 = vmatpush1.bf16.xpose.msra.mxu0 0
        %5834 = vmatprep.subr.bf16.mxu0 0
        %5835 = vmatpush1.bf16.xpose.msra.mxu0 0
        %5836 = vmatprep.subr.bf16.mxu0 0
        %5837 = vmatpush1.bf16.xpose.msra.mxu0 0
        %5838 = vmatprep.subr.bf16.mxu0 0
        %5839 = vmatpush1.bf16.xpose.msra.mxu0 0
        %5840 = vmatprep.subr.bf16.mxu0 0
        %5841 = vmatpush1.bf16.xpose.msra.mxu0 0
        %5842 = vmatprep.subr.bf16.mxu0 0
        %5843 = vmatpush1.bf16.xpose.msra.mxu0 0
        %5844 = vmatprep.subr.bf16.mxu0 0
        %5845 = vmatpush1.bf16.xpose.msra.mxu0 0
        %5846 = vmatprep.subr.bf16.mxu0 0
        %5847 = vmatpush1.bf16.xpose.msra.mxu0 0
        %5848 = vmatprep.subr.bf16.mxu0 0
        %5849 = vmatpush1.bf16.xpose.msra.mxu0 0
        %5850 = vmatprep.subr.bf16.mxu0 0
        %5851 = vmatpush1.bf16.xpose.msra.mxu0 0
        %5852 = vmatprep.subr.bf16.mxu0 0
        %5853 = vmatpush1.bf16.xpose.msra.mxu0 0
        %5854 = vmatprep.subr.bf16.mxu0 0
        %5855 = vmatpush1.bf16.xpose.msra.mxu0 0
        %5856 = vmatprep.subr.bf16.mxu0 0
        %5857 = vmatpush1.bf16.xpose.msra.mxu0 0
        %5858 = vmatprep.subr.bf16.mxu0 0
        %5859 = vmatpush1.bf16.xpose.msra.mxu0 0
        %5860 = vmatprep.mubr.bf16.mxu0 0
        %5861 = vmatmul.mubr.bf16.gmra.mrb[0].mxu0 %v5823
        %v5862 = vpop.f32.mrb[0].mxu0
        %v5863 = vadd.f32 0.0, %v5862
        %v5864 = vpop.f32.mrb[0].mxu0
        %v5865 = vpop.f32.mrb[0].mxu0
        %v5866 = vpop.f32.mrb[0].mxu0
        %5867 = vdwg.mxu0
        %v5869 = vsel %vm5039, %v2759, 0
        %v5872 = vsel %vm5039, %v3879, 0
        %5874 = vmatprep.subr.bf16.mxu0 0
        %5875 = vmatpush1.bf16.xpose.msra.mxu0 %v5872
        %5876 = vmatprep.subr.bf16.mxu0 0
        %5877 = vmatpush1.bf16.xpose.msra.mxu0 0
        %5878 = vmatprep.subr.bf16.mxu0 0
        %5879 = vmatpush1.bf16.xpose.msra.mxu0 0
        %5880 = vmatprep.subr.bf16.mxu0 0
        %5881 = vmatpush1.bf16.xpose.msra.mxu0 0
        %5882 = vmatprep.subr.bf16.mxu0 0
        %5883 = vmatpush1.bf16.xpose.msra.mxu0 0
        %5884 = vmatprep.subr.bf16.mxu0 0
        %5885 = vmatpush1.bf16.xpose.msra.mxu0 0
        %5886 = vmatprep.subr.bf16.mxu0 0
        %5887 = vmatpush1.bf16.xpose.msra.mxu0 0
        %5888 = vmatprep.subr.bf16.mxu0 0
        %5889 = vmatpush1.bf16.xpose.msra.mxu0 0
        %5890 = vmatprep.subr.bf16.mxu0 0
        %5891 = vmatpush1.bf16.xpose.msra.mxu0 0
        %5892 = vmatprep.subr.bf16.mxu0 0
        %5893 = vmatpush1.bf16.xpose.msra.mxu0 0
        %5894 = vmatprep.subr.bf16.mxu0 0
        %5895 = vmatpush1.bf16.xpose.msra.mxu0 0
        %5896 = vmatprep.subr.bf16.mxu0 0
        %5897 = vmatpush1.bf16.xpose.msra.mxu0 0
        %5898 = vmatprep.subr.bf16.mxu0 0
        %5899 = vmatpush1.bf16.xpose.msra.mxu0 0
        %5900 = vmatprep.subr.bf16.mxu0 0
        %5901 = vmatpush1.bf16.xpose.msra.mxu0 0
        %5902 = vmatprep.subr.bf16.mxu0 0
        %5903 = vmatpush1.bf16.xpose.msra.mxu0 0
        %5904 = vmatprep.subr.bf16.mxu0 0
        %5905 = vmatpush1.bf16.xpose.msra.mxu0 0
        %5906 = vmatprep.mubr.bf16.mxu0 0
        %5907 = vmatmul.mubr.bf16.gmra.mrb[0].mxu0 %v5869
        %v5908 = vpop.f32.mrb[0].mxu0
        %v5909 = vadd.f32 0.0, %v5908
        %v5910 = vpop.f32.mrb[0].mxu0
        %v5911 = vpop.f32.mrb[0].mxu0
        %v5912 = vpop.f32.mrb[0].mxu0
        %5913 = vdwg.mxu0
        %v5915 = vsel %vm5039, %v2762, 0
        %v5918 = vsel %vm5039, %v3882, 0
        %5920 = vmatprep.subr.bf16.mxu0 0
        %5921 = vmatpush1.bf16.xpose.msra.mxu0 %v5918
        %5922 = vmatprep.subr.bf16.mxu0 0
        %5923 = vmatpush1.bf16.xpose.msra.mxu0 0
        %5924 = vmatprep.subr.bf16.mxu0 0
        %5925 = vmatpush1.bf16.xpose.msra.mxu0 0
        %5926 = vmatprep.subr.bf16.mxu0 0
        %5927 = vmatpush1.bf16.xpose.msra.mxu0 0
        %5928 = vmatprep.subr.bf16.mxu0 0
        %5929 = vmatpush1.bf16.xpose.msra.mxu0 0
        %5930 = vmatprep.subr.bf16.mxu0 0
        %5931 = vmatpush1.bf16.xpose.msra.mxu0 0
        %5932 = vmatprep.subr.bf16.mxu0 0
        %5933 = vmatpush1.bf16.xpose.msra.mxu0 0
        %5934 = vmatprep.subr.bf16.mxu0 0
        %5935 = vmatpush1.bf16.xpose.msra.mxu0 0
        %5936 = vmatprep.subr.bf16.mxu0 0
        %5937 = vmatpush1.bf16.xpose.msra.mxu0 0
        %5938 = vmatprep.subr.bf16.mxu0 0
        %5939 = vmatpush1.bf16.xpose.msra.mxu0 0
        %5940 = vmatprep.subr.bf16.mxu0 0
        %5941 = vmatpush1.bf16.xpose.msra.mxu0 0
        %5942 = vmatprep.subr.bf16.mxu0 0
        %5943 = vmatpush1.bf16.xpose.msra.mxu0 0
        %5944 = vmatprep.subr.bf16.mxu0 0
        %5945 = vmatpush1.bf16.xpose.msra.mxu0 0
        %5946 = vmatprep.subr.bf16.mxu0 0
        %5947 = vmatpush1.bf16.xpose.msra.mxu0 0
        %5948 = vmatprep.subr.bf16.mxu0 0
        %5949 = vmatpush1.bf16.xpose.msra.mxu0 0
        %5950 = vmatprep.subr.bf16.mxu0 0
        %5951 = vmatpush1.bf16.xpose.msra.mxu0 0
        %5952 = vmatprep.mubr.bf16.mxu0 0
        %5953 = vmatmul.mubr.bf16.gmra.mrb[0].mxu0 %v5915
        %v5954 = vpop.f32.mrb[0].mxu0
        %v5955 = vadd.f32 0.0, %v5954
        %v5956 = vpop.f32.mrb[0].mxu0
        %v5957 = vpop.f32.mrb[0].mxu0
        %v5958 = vpop.f32.mrb[0].mxu0
        %5959 = vdwg.mxu0
        %v5961 = vsel %vm5039, %v2765, 0
        %v5964 = vsel %vm5039, %v3885, 0
        %5966 = vmatprep.subr.bf16.mxu0 0
        %5967 = vmatpush1.bf16.xpose.msra.mxu0 %v5964
        %5968 = vmatprep.subr.bf16.mxu0 0
        %5969 = vmatpush1.bf16.xpose.msra.mxu0 0
        %5970 = vmatprep.subr.bf16.mxu0 0
        %5971 = vmatpush1.bf16.xpose.msra.mxu0 0
        %5972 = vmatprep.subr.bf16.mxu0 0
        %5973 = vmatpush1.bf16.xpose.msra.mxu0 0
        %5974 = vmatprep.subr.bf16.mxu0 0
        %5975 = vmatpush1.bf16.xpose.msra.mxu0 0
        %5976 = vmatprep.subr.bf16.mxu0 0
        %5977 = vmatpush1.bf16.xpose.msra.mxu0 0
        %5978 = vmatprep.subr.bf16.mxu0 0
        %5979 = vmatpush1.bf16.xpose.msra.mxu0 0
        %5980 = vmatprep.subr.bf16.mxu0 0
        %5981 = vmatpush1.bf16.xpose.msra.mxu0 0
        %5982 = vmatprep.subr.bf16.mxu0 0
        %5983 = vmatpush1.bf16.xpose.msra.mxu0 0
        %5984 = vmatprep.subr.bf16.mxu0 0
        %5985 = vmatpush1.bf16.xpose.msra.mxu0 0
        %5986 = vmatprep.subr.bf16.mxu0 0
        %5987 = vmatpush1.bf16.xpose.msra.mxu0 0
        %5988 = vmatprep.subr.bf16.mxu0 0
        %5989 = vmatpush1.bf16.xpose.msra.mxu0 0
        %5990 = vmatprep.subr.bf16.mxu0 0
        %5991 = vmatpush1.bf16.xpose.msra.mxu0 0
        %5992 = vmatprep.subr.bf16.mxu0 0
        %5993 = vmatpush1.bf16.xpose.msra.mxu0 0
        %5994 = vmatprep.subr.bf16.mxu0 0
        %5995 = vmatpush1.bf16.xpose.msra.mxu0 0
        %5996 = vmatprep.subr.bf16.mxu0 0
        %5997 = vmatpush1.bf16.xpose.msra.mxu0 0
        %5998 = vmatprep.mubr.bf16.mxu0 0
        %5999 = vmatmul.mubr.bf16.gmra.mrb[0].mxu0 %v5961
        %v6000 = vpop.f32.mrb[0].mxu0
        %v6001 = vadd.f32 0.0, %v6000
        %v6002 = vpop.f32.mrb[0].mxu0
        %v6003 = vpop.f32.mrb[0].mxu0
        %v6004 = vpop.f32.mrb[0].mxu0
        %6005 = vdwg.mxu0
        %v6007 = vsel %vm5039, %v2768, 0
        %v6010 = vsel %vm5039, %v3888, 0
        %6012 = vmatprep.subr.bf16.mxu0 0
        %6013 = vmatpush1.bf16.xpose.msra.mxu0 %v6010
        %6014 = vmatprep.subr.bf16.mxu0 0
        %6015 = vmatpush1.bf16.xpose.msra.mxu0 0
        %6016 = vmatprep.subr.bf16.mxu0 0
        %6017 = vmatpush1.bf16.xpose.msra.mxu0 0
        %6018 = vmatprep.subr.bf16.mxu0 0
        %6019 = vmatpush1.bf16.xpose.msra.mxu0 0
        %6020 = vmatprep.subr.bf16.mxu0 0
        %6021 = vmatpush1.bf16.xpose.msra.mxu0 0
        %6022 = vmatprep.subr.bf16.mxu0 0
        %6023 = vmatpush1.bf16.xpose.msra.mxu0 0
        %6024 = vmatprep.subr.bf16.mxu0 0
        %6025 = vmatpush1.bf16.xpose.msra.mxu0 0
        %6026 = vmatprep.subr.bf16.mxu0 0
        %6027 = vmatpush1.bf16.xpose.msra.mxu0 0
        %6028 = vmatprep.subr.bf16.mxu0 0
        %6029 = vmatpush1.bf16.xpose.msra.mxu0 0
        %6030 = vmatprep.subr.bf16.mxu0 0
        %6031 = vmatpush1.bf16.xpose.msra.mxu0 0
        %6032 = vmatprep.subr.bf16.mxu0 0
        %6033 = vmatpush1.bf16.xpose.msra.mxu0 0
        %6034 = vmatprep.subr.bf16.mxu0 0
        %6035 = vmatpush1.bf16.xpose.msra.mxu0 0
        %6036 = vmatprep.subr.bf16.mxu0 0
        %6037 = vmatpush1.bf16.xpose.msra.mxu0 0
        %6038 = vmatprep.subr.bf16.mxu0 0
        %6039 = vmatpush1.bf16.xpose.msra.mxu0 0
        %6040 = vmatprep.subr.bf16.mxu0 0
        %6041 = vmatpush1.bf16.xpose.msra.mxu0 0
        %6042 = vmatprep.subr.bf16.mxu0 0
        %6043 = vmatpush1.bf16.xpose.msra.mxu0 0
        %6044 = vmatprep.mubr.bf16.mxu0 0
        %6045 = vmatmul.mubr.bf16.gmra.mrb[0].mxu0 %v6007
        %v6046 = vpop.f32.mrb[0].mxu0
        %v6047 = vadd.f32 0.0, %v6046
        %v6048 = vpop.f32.mrb[0].mxu0
        %v6049 = vpop.f32.mrb[0].mxu0
        %v6050 = vpop.f32.mrb[0].mxu0
        %6051 = vdwg.mxu0
        %v6053 = vsel %vm5039, %v2771, 0
        %v6056 = vsel %vm5039, %v3891, 0
        %6058 = vmatprep.subr.bf16.mxu0 0
        %6059 = vmatpush1.bf16.xpose.msra.mxu0 %v6056
        %6060 = vmatprep.subr.bf16.mxu0 0
        %6061 = vmatpush1.bf16.xpose.msra.mxu0 0
        %6062 = vmatprep.subr.bf16.mxu0 0
        %6063 = vmatpush1.bf16.xpose.msra.mxu0 0
        %6064 = vmatprep.subr.bf16.mxu0 0
        %6065 = vmatpush1.bf16.xpose.msra.mxu0 0
        %6066 = vmatprep.subr.bf16.mxu0 0
        %6067 = vmatpush1.bf16.xpose.msra.mxu0 0
        %6068 = vmatprep.subr.bf16.mxu0 0
        %6069 = vmatpush1.bf16.xpose.msra.mxu0 0
        %6070 = vmatprep.subr.bf16.mxu0 0
        %6071 = vmatpush1.bf16.xpose.msra.mxu0 0
        %6072 = vmatprep.subr.bf16.mxu0 0
        %6073 = vmatpush1.bf16.xpose.msra.mxu0 0
        %6074 = vmatprep.subr.bf16.mxu0 0
        %6075 = vmatpush1.bf16.xpose.msra.mxu0 0
        %6076 = vmatprep.subr.bf16.mxu0 0
        %6077 = vmatpush1.bf16.xpose.msra.mxu0 0
        %6078 = vmatprep.subr.bf16.mxu0 0
        %6079 = vmatpush1.bf16.xpose.msra.mxu0 0
        %6080 = vmatprep.subr.bf16.mxu0 0
        %6081 = vmatpush1.bf16.xpose.msra.mxu0 0
        %6082 = vmatprep.subr.bf16.mxu0 0
        %6083 = vmatpush1.bf16.xpose.msra.mxu0 0
        %6084 = vmatprep.subr.bf16.mxu0 0
        %6085 = vmatpush1.bf16.xpose.msra.mxu0 0
        %6086 = vmatprep.subr.bf16.mxu0 0
        %6087 = vmatpush1.bf16.xpose.msra.mxu0 0
        %6088 = vmatprep.subr.bf16.mxu0 0
        %6089 = vmatpush1.bf16.xpose.msra.mxu0 0
        %6090 = vmatprep.mubr.bf16.mxu0 0
        %6091 = vmatmul.mubr.bf16.gmra.mrb[0].mxu0 %v6053
        %v6092 = vpop.f32.mrb[0].mxu0
        %v6093 = vadd.f32 0.0, %v6092
        %v6094 = vpop.f32.mrb[0].mxu0
        %v6095 = vpop.f32.mrb[0].mxu0
        %v6096 = vpop.f32.mrb[0].mxu0
        %6097 = vdwg.mxu0
        %v6099 = vsel %vm5039, %v2774, 0
        %v6102 = vsel %vm5039, %v3894, 0
        %6104 = vmatprep.subr.bf16.mxu0 0
        %6105 = vmatpush1.bf16.xpose.msra.mxu0 %v6102
        %6106 = vmatprep.subr.bf16.mxu0 0
        %6107 = vmatpush1.bf16.xpose.msra.mxu0 0
        %6108 = vmatprep.subr.bf16.mxu0 0
        %6109 = vmatpush1.bf16.xpose.msra.mxu0 0
        %6110 = vmatprep.subr.bf16.mxu0 0
        %6111 = vmatpush1.bf16.xpose.msra.mxu0 0
        %6112 = vmatprep.subr.bf16.mxu0 0
        %6113 = vmatpush1.bf16.xpose.msra.mxu0 0
        %6114 = vmatprep.subr.bf16.mxu0 0
        %6115 = vmatpush1.bf16.xpose.msra.mxu0 0
        %6116 = vmatprep.subr.bf16.mxu0 0
        %6117 = vmatpush1.bf16.xpose.msra.mxu0 0
        %6118 = vmatprep.subr.bf16.mxu0 0
        %6119 = vmatpush1.bf16.xpose.msra.mxu0 0
        %6120 = vmatprep.subr.bf16.mxu0 0
        %6121 = vmatpush1.bf16.xpose.msra.mxu0 0
        %6122 = vmatprep.subr.bf16.mxu0 0
        %6123 = vmatpush1.bf16.xpose.msra.mxu0 0
        %6124 = vmatprep.subr.bf16.mxu0 0
        %6125 = vmatpush1.bf16.xpose.msra.mxu0 0
        %6126 = vmatprep.subr.bf16.mxu0 0
        %6127 = vmatpush1.bf16.xpose.msra.mxu0 0
        %6128 = vmatprep.subr.bf16.mxu0 0
        %6129 = vmatpush1.bf16.xpose.msra.mxu0 0
        %6130 = vmatprep.subr.bf16.mxu0 0
        %6131 = vmatpush1.bf16.xpose.msra.mxu0 0
        %6132 = vmatprep.subr.bf16.mxu0 0
        %6133 = vmatpush1.bf16.xpose.msra.mxu0 0
        %6134 = vmatprep.subr.bf16.mxu0 0
        %6135 = vmatpush1.bf16.xpose.msra.mxu0 0
        %6136 = vmatprep.mubr.bf16.mxu0 0
        %6137 = vmatmul.mubr.bf16.gmra.mrb[0].mxu0 %v6099
        %v6138 = vpop.f32.mrb[0].mxu0
        %v6139 = vadd.f32 0.0, %v6138
        %v6140 = vpop.f32.mrb[0].mxu0
        %v6141 = vpop.f32.mrb[0].mxu0
        %v6142 = vpop.f32.mrb[0].mxu0
        %6143 = vdwg.mxu0
        %v6145 = vsel %vm5039, %v2777, 0
        %v6148 = vsel %vm5039, %v3897, 0
        %6150 = vmatprep.subr.bf16.mxu0 0
        %6151 = vmatpush1.bf16.xpose.msra.mxu0 %v6148
        %6152 = vmatprep.subr.bf16.mxu0 0
        %6153 = vmatpush1.bf16.xpose.msra.mxu0 0
        %6154 = vmatprep.subr.bf16.mxu0 0
        %6155 = vmatpush1.bf16.xpose.msra.mxu0 0
        %6156 = vmatprep.subr.bf16.mxu0 0
        %6157 = vmatpush1.bf16.xpose.msra.mxu0 0
        %6158 = vmatprep.subr.bf16.mxu0 0
        %6159 = vmatpush1.bf16.xpose.msra.mxu0 0
        %6160 = vmatprep.subr.bf16.mxu0 0
        %6161 = vmatpush1.bf16.xpose.msra.mxu0 0
        %6162 = vmatprep.subr.bf16.mxu0 0
        %6163 = vmatpush1.bf16.xpose.msra.mxu0 0
        %6164 = vmatprep.subr.bf16.mxu0 0
        %6165 = vmatpush1.bf16.xpose.msra.mxu0 0
        %6166 = vmatprep.subr.bf16.mxu0 0
        %6167 = vmatpush1.bf16.xpose.msra.mxu0 0
        %6168 = vmatprep.subr.bf16.mxu0 0
        %6169 = vmatpush1.bf16.xpose.msra.mxu0 0
        %6170 = vmatprep.subr.bf16.mxu0 0
        %6171 = vmatpush1.bf16.xpose.msra.mxu0 0
        %6172 = vmatprep.subr.bf16.mxu0 0
        %6173 = vmatpush1.bf16.xpose.msra.mxu0 0
        %6174 = vmatprep.subr.bf16.mxu0 0
        %6175 = vmatpush1.bf16.xpose.msra.mxu0 0
        %6176 = vmatprep.subr.bf16.mxu0 0
        %6177 = vmatpush1.bf16.xpose.msra.mxu0 0
        %6178 = vmatprep.subr.bf16.mxu0 0
        %6179 = vmatpush1.bf16.xpose.msra.mxu0 0
        %6180 = vmatprep.subr.bf16.mxu0 0
        %6181 = vmatpush1.bf16.xpose.msra.mxu0 0
        %6182 = vmatprep.mubr.bf16.mxu0 0
        %6183 = vmatmul.mubr.bf16.gmra.mrb[0].mxu0 %v6145
        %v6184 = vpop.f32.mrb[0].mxu0
        %v6185 = vadd.f32 0.0, %v6184
        %v6186 = vpop.f32.mrb[0].mxu0
        %v6187 = vpop.f32.mrb[0].mxu0
        %v6188 = vpop.f32.mrb[0].mxu0
        %6189 = vdwg.mxu0
        %v6191 = vsel %vm5039, %v2780, 0
        %v6194 = vsel %vm5039, %v3900, 0
        %6196 = vmatprep.subr.bf16.mxu0 0
        %6197 = vmatpush1.bf16.xpose.msra.mxu0 %v6194
        %6198 = vmatprep.subr.bf16.mxu0 0
        %6199 = vmatpush1.bf16.xpose.msra.mxu0 0
        %6200 = vmatprep.subr.bf16.mxu0 0
        %6201 = vmatpush1.bf16.xpose.msra.mxu0 0
        %6202 = vmatprep.subr.bf16.mxu0 0
        %6203 = vmatpush1.bf16.xpose.msra.mxu0 0
        %6204 = vmatprep.subr.bf16.mxu0 0
        %6205 = vmatpush1.bf16.xpose.msra.mxu0 0
        %6206 = vmatprep.subr.bf16.mxu0 0
        %6207 = vmatpush1.bf16.xpose.msra.mxu0 0
        %6208 = vmatprep.subr.bf16.mxu0 0
        %6209 = vmatpush1.bf16.xpose.msra.mxu0 0
        %6210 = vmatprep.subr.bf16.mxu0 0
        %6211 = vmatpush1.bf16.xpose.msra.mxu0 0
        %6212 = vmatprep.subr.bf16.mxu0 0
        %6213 = vmatpush1.bf16.xpose.msra.mxu0 0
        %6214 = vmatprep.subr.bf16.mxu0 0
        %6215 = vmatpush1.bf16.xpose.msra.mxu0 0
        %6216 = vmatprep.subr.bf16.mxu0 0
        %6217 = vmatpush1.bf16.xpose.msra.mxu0 0
        %6218 = vmatprep.subr.bf16.mxu0 0
        %6219 = vmatpush1.bf16.xpose.msra.mxu0 0
        %6220 = vmatprep.subr.bf16.mxu0 0
        %6221 = vmatpush1.bf16.xpose.msra.mxu0 0
        %6222 = vmatprep.subr.bf16.mxu0 0
        %6223 = vmatpush1.bf16.xpose.msra.mxu0 0
        %6224 = vmatprep.subr.bf16.mxu0 0
        %6225 = vmatpush1.bf16.xpose.msra.mxu0 0
        %6226 = vmatprep.subr.bf16.mxu0 0
        %6227 = vmatpush1.bf16.xpose.msra.mxu0 0
        %6228 = vmatprep.mubr.bf16.mxu0 0
        %6229 = vmatmul.mubr.bf16.gmra.mrb[0].mxu0 %v6191
        %v6230 = vpop.f32.mrb[0].mxu0
        %v6231 = vadd.f32 0.0, %v6230
        %v6232 = vpop.f32.mrb[0].mxu0
        %v6233 = vpop.f32.mrb[0].mxu0
        %v6234 = vpop.f32.mrb[0].mxu0
        %6235 = vdwg.mxu0
        %v6237 = vsel %vm5039, %v2783, 0
        %v6240 = vsel %vm5039, %v3903, 0
        %6242 = vmatprep.subr.bf16.mxu0 0
        %6243 = vmatpush1.bf16.xpose.msra.mxu0 %v6240
        %6244 = vmatprep.subr.bf16.mxu0 0
        %6245 = vmatpush1.bf16.xpose.msra.mxu0 0
        %6246 = vmatprep.subr.bf16.mxu0 0
        %6247 = vmatpush1.bf16.xpose.msra.mxu0 0
        %6248 = vmatprep.subr.bf16.mxu0 0
        %6249 = vmatpush1.bf16.xpose.msra.mxu0 0
        %6250 = vmatprep.subr.bf16.mxu0 0
        %6251 = vmatpush1.bf16.xpose.msra.mxu0 0
        %6252 = vmatprep.subr.bf16.mxu0 0
        %6253 = vmatpush1.bf16.xpose.msra.mxu0 0
        %6254 = vmatprep.subr.bf16.mxu0 0
        %6255 = vmatpush1.bf16.xpose.msra.mxu0 0
        %6256 = vmatprep.subr.bf16.mxu0 0
        %6257 = vmatpush1.bf16.xpose.msra.mxu0 0
        %6258 = vmatprep.subr.bf16.mxu0 0
        %6259 = vmatpush1.bf16.xpose.msra.mxu0 0
        %6260 = vmatprep.subr.bf16.mxu0 0
        %6261 = vmatpush1.bf16.xpose.msra.mxu0 0
        %6262 = vmatprep.subr.bf16.mxu0 0
        %6263 = vmatpush1.bf16.xpose.msra.mxu0 0
        %6264 = vmatprep.subr.bf16.mxu0 0
        %6265 = vmatpush1.bf16.xpose.msra.mxu0 0
        %6266 = vmatprep.subr.bf16.mxu0 0
        %6267 = vmatpush1.bf16.xpose.msra.mxu0 0
        %6268 = vmatprep.subr.bf16.mxu0 0
        %6269 = vmatpush1.bf16.xpose.msra.mxu0 0
        %6270 = vmatprep.subr.bf16.mxu0 0
        %6271 = vmatpush1.bf16.xpose.msra.mxu0 0
        %6272 = vmatprep.subr.bf16.mxu0 0
        %6273 = vmatpush1.bf16.xpose.msra.mxu0 0
        %6274 = vmatprep.mubr.bf16.mxu0 0
        %6275 = vmatmul.mubr.bf16.gmra.mrb[0].mxu0 %v6237
        %v6276 = vpop.f32.mrb[0].mxu0
        %v6277 = vadd.f32 0.0, %v6276
        %v6278 = vpop.f32.mrb[0].mxu0
        %v6279 = vpop.f32.mrb[0].mxu0
        %v6280 = vpop.f32.mrb[0].mxu0
        %6281 = vdwg.mxu0
        %v6283 = vsel %vm5039, %v2786, 0
        %v6286 = vsel %vm5039, %v3906, 0
        %6288 = vmatprep.subr.bf16.mxu0 0
        %6289 = vmatpush1.bf16.xpose.msra.mxu0 %v6286
        %6290 = vmatprep.subr.bf16.mxu0 0
        %6291 = vmatpush1.bf16.xpose.msra.mxu0 0
        %6292 = vmatprep.subr.bf16.mxu0 0
        %6293 = vmatpush1.bf16.xpose.msra.mxu0 0
        %6294 = vmatprep.subr.bf16.mxu0 0
        %6295 = vmatpush1.bf16.xpose.msra.mxu0 0
        %6296 = vmatprep.subr.bf16.mxu0 0
        %6297 = vmatpush1.bf16.xpose.msra.mxu0 0
        %6298 = vmatprep.subr.bf16.mxu0 0
        %6299 = vmatpush1.bf16.xpose.msra.mxu0 0
        %6300 = vmatprep.subr.bf16.mxu0 0
        %6301 = vmatpush1.bf16.xpose.msra.mxu0 0
        %6302 = vmatprep.subr.bf16.mxu0 0
        %6303 = vmatpush1.bf16.xpose.msra.mxu0 0
        %6304 = vmatprep.subr.bf16.mxu0 0
        %6305 = vmatpush1.bf16.xpose.msra.mxu0 0
        %6306 = vmatprep.subr.bf16.mxu0 0
        %6307 = vmatpush1.bf16.xpose.msra.mxu0 0
        %6308 = vmatprep.subr.bf16.mxu0 0
        %6309 = vmatpush1.bf16.xpose.msra.mxu0 0
        %6310 = vmatprep.subr.bf16.mxu0 0
        %6311 = vmatpush1.bf16.xpose.msra.mxu0 0
        %6312 = vmatprep.subr.bf16.mxu0 0
        %6313 = vmatpush1.bf16.xpose.msra.mxu0 0
        %6314 = vmatprep.subr.bf16.mxu0 0
        %6315 = vmatpush1.bf16.xpose.msra.mxu0 0
        %6316 = vmatprep.subr.bf16.mxu0 0
        %6317 = vmatpush1.bf16.xpose.msra.mxu0 0
        %6318 = vmatprep.subr.bf16.mxu0 0
        %6319 = vmatpush1.bf16.xpose.msra.mxu0 0
        %6320 = vmatprep.mubr.bf16.mxu0 0
        %6321 = vmatmul.mubr.bf16.gmra.mrb[0].mxu0 %v6283
        %v6322 = vpop.f32.mrb[0].mxu0
        %v6323 = vadd.f32 0.0, %v6322
        %v6324 = vpop.f32.mrb[0].mxu0
        %v6325 = vpop.f32.mrb[0].mxu0
        %v6326 = vpop.f32.mrb[0].mxu0
        %6327 = vdwg.mxu0
        %v6329 = vsel %vm5039, %v2789, 0
        %v6332 = vsel %vm5039, %v3909, 0
        %6334 = vmatprep.subr.bf16.mxu0 0
        %6335 = vmatpush1.bf16.xpose.msra.mxu0 %v6332
        %6336 = vmatprep.subr.bf16.mxu0 0
        %6337 = vmatpush1.bf16.xpose.msra.mxu0 0
        %6338 = vmatprep.subr.bf16.mxu0 0
        %6339 = vmatpush1.bf16.xpose.msra.mxu0 0
        %6340 = vmatprep.subr.bf16.mxu0 0
        %6341 = vmatpush1.bf16.xpose.msra.mxu0 0
        %6342 = vmatprep.subr.bf16.mxu0 0
        %6343 = vmatpush1.bf16.xpose.msra.mxu0 0
        %6344 = vmatprep.subr.bf16.mxu0 0
        %6345 = vmatpush1.bf16.xpose.msra.mxu0 0
        %6346 = vmatprep.subr.bf16.mxu0 0
        %6347 = vmatpush1.bf16.xpose.msra.mxu0 0
        %6348 = vmatprep.subr.bf16.mxu0 0
        %6349 = vmatpush1.bf16.xpose.msra.mxu0 0
        %6350 = vmatprep.subr.bf16.mxu0 0
        %6351 = vmatpush1.bf16.xpose.msra.mxu0 0
        %6352 = vmatprep.subr.bf16.mxu0 0
        %6353 = vmatpush1.bf16.xpose.msra.mxu0 0
        %6354 = vmatprep.subr.bf16.mxu0 0
        %6355 = vmatpush1.bf16.xpose.msra.mxu0 0
        %6356 = vmatprep.subr.bf16.mxu0 0
        %6357 = vmatpush1.bf16.xpose.msra.mxu0 0
        %6358 = vmatprep.subr.bf16.mxu0 0
        %6359 = vmatpush1.bf16.xpose.msra.mxu0 0
        %6360 = vmatprep.subr.bf16.mxu0 0
        %6361 = vmatpush1.bf16.xpose.msra.mxu0 0
        %6362 = vmatprep.subr.bf16.mxu0 0
        %6363 = vmatpush1.bf16.xpose.msra.mxu0 0
        %6364 = vmatprep.subr.bf16.mxu0 0
        %6365 = vmatpush1.bf16.xpose.msra.mxu0 0
        %6366 = vmatprep.mubr.bf16.mxu0 0
        %6367 = vmatmul.mubr.bf16.gmra.mrb[0].mxu0 %v6329
        %v6368 = vpop.f32.mrb[0].mxu0
        %v6369 = vadd.f32 0.0, %v6368
        %v6370 = vpop.f32.mrb[0].mxu0
        %v6371 = vpop.f32.mrb[0].mxu0
        %v6372 = vpop.f32.mrb[0].mxu0
        %6373 = vdwg.mxu0
        %v6375 = vsel %vm5039, %v2792, 0
        %v6378 = vsel %vm5039, %v3912, 0
        %6380 = vmatprep.subr.bf16.mxu0 0
        %6381 = vmatpush1.bf16.xpose.msra.mxu0 %v6378
        %6382 = vmatprep.subr.bf16.mxu0 0
        %6383 = vmatpush1.bf16.xpose.msra.mxu0 0
        %6384 = vmatprep.subr.bf16.mxu0 0
        %6385 = vmatpush1.bf16.xpose.msra.mxu0 0
        %6386 = vmatprep.subr.bf16.mxu0 0
        %6387 = vmatpush1.bf16.xpose.msra.mxu0 0
        %6388 = vmatprep.subr.bf16.mxu0 0
        %6389 = vmatpush1.bf16.xpose.msra.mxu0 0
        %6390 = vmatprep.subr.bf16.mxu0 0
        %6391 = vmatpush1.bf16.xpose.msra.mxu0 0
        %6392 = vmatprep.subr.bf16.mxu0 0
        %6393 = vmatpush1.bf16.xpose.msra.mxu0 0
        %6394 = vmatprep.subr.bf16.mxu0 0
        %6395 = vmatpush1.bf16.xpose.msra.mxu0 0
        %6396 = vmatprep.subr.bf16.mxu0 0
        %6397 = vmatpush1.bf16.xpose.msra.mxu0 0
        %6398 = vmatprep.subr.bf16.mxu0 0
        %6399 = vmatpush1.bf16.xpose.msra.mxu0 0
        %6400 = vmatprep.subr.bf16.mxu0 0
        %6401 = vmatpush1.bf16.xpose.msra.mxu0 0
        %6402 = vmatprep.subr.bf16.mxu0 0
        %6403 = vmatpush1.bf16.xpose.msra.mxu0 0
        %6404 = vmatprep.subr.bf16.mxu0 0
        %6405 = vmatpush1.bf16.xpose.msra.mxu0 0
        %6406 = vmatprep.subr.bf16.mxu0 0
        %6407 = vmatpush1.bf16.xpose.msra.mxu0 0
        %6408 = vmatprep.subr.bf16.mxu0 0
        %6409 = vmatpush1.bf16.xpose.msra.mxu0 0
        %6410 = vmatprep.subr.bf16.mxu0 0
        %6411 = vmatpush1.bf16.xpose.msra.mxu0 0
        %6412 = vmatprep.mubr.bf16.mxu0 0
        %6413 = vmatmul.mubr.bf16.gmra.mrb[0].mxu0 %v6375
        %v6414 = vpop.f32.mrb[0].mxu0
        %v6415 = vadd.f32 0.0, %v6414
        %v6416 = vpop.f32.mrb[0].mxu0
        %v6417 = vpop.f32.mrb[0].mxu0
        %v6418 = vpop.f32.mrb[0].mxu0
        %6419 = vdwg.mxu0
        %v6421 = vsel %vm5039, %v2795, 0
        %v6424 = vsel %vm5039, %v3915, 0
        %6426 = vmatprep.subr.bf16.mxu0 0
        %6427 = vmatpush1.bf16.xpose.msra.mxu0 %v6424
        %6428 = vmatprep.subr.bf16.mxu0 0
        %6429 = vmatpush1.bf16.xpose.msra.mxu0 0
        %6430 = vmatprep.subr.bf16.mxu0 0
        %6431 = vmatpush1.bf16.xpose.msra.mxu0 0
        %6432 = vmatprep.subr.bf16.mxu0 0
        %6433 = vmatpush1.bf16.xpose.msra.mxu0 0
        %6434 = vmatprep.subr.bf16.mxu0 0
        %6435 = vmatpush1.bf16.xpose.msra.mxu0 0
        %6436 = vmatprep.subr.bf16.mxu0 0
        %6437 = vmatpush1.bf16.xpose.msra.mxu0 0
        %6438 = vmatprep.subr.bf16.mxu0 0
        %6439 = vmatpush1.bf16.xpose.msra.mxu0 0
        %6440 = vmatprep.subr.bf16.mxu0 0
        %6441 = vmatpush1.bf16.xpose.msra.mxu0 0
        %6442 = vmatprep.subr.bf16.mxu0 0
        %6443 = vmatpush1.bf16.xpose.msra.mxu0 0
        %6444 = vmatprep.subr.bf16.mxu0 0
        %6445 = vmatpush1.bf16.xpose.msra.mxu0 0
        %6446 = vmatprep.subr.bf16.mxu0 0
        %6447 = vmatpush1.bf16.xpose.msra.mxu0 0
        %6448 = vmatprep.subr.bf16.mxu0 0
        %6449 = vmatpush1.bf16.xpose.msra.mxu0 0
        %6450 = vmatprep.subr.bf16.mxu0 0
        %6451 = vmatpush1.bf16.xpose.msra.mxu0 0
        %6452 = vmatprep.subr.bf16.mxu0 0
        %6453 = vmatpush1.bf16.xpose.msra.mxu0 0
        %6454 = vmatprep.subr.bf16.mxu0 0
        %6455 = vmatpush1.bf16.xpose.msra.mxu0 0
        %6456 = vmatprep.subr.bf16.mxu0 0
        %6457 = vmatpush1.bf16.xpose.msra.mxu0 0
        %6458 = vmatprep.mubr.bf16.mxu0 0
        %6459 = vmatmul.mubr.bf16.gmra.mrb[0].mxu0 %v6421
        %v6460 = vpop.f32.mrb[0].mxu0
        %v6461 = vadd.f32 0.0, %v6460
        %v6462 = vpop.f32.mrb[0].mxu0
        %v6463 = vpop.f32.mrb[0].mxu0
        %v6464 = vpop.f32.mrb[0].mxu0
        %6465 = vdwg.mxu0
        %v6467 = vsel %vm5039, %v2798, 0
        %v6470 = vsel %vm5039, %v3918, 0
        %6472 = vmatprep.subr.bf16.mxu0 0
        %6473 = vmatpush1.bf16.xpose.msra.mxu0 %v6470
        %6474 = vmatprep.subr.bf16.mxu0 0
        %6475 = vmatpush1.bf16.xpose.msra.mxu0 0
        %6476 = vmatprep.subr.bf16.mxu0 0
        %6477 = vmatpush1.bf16.xpose.msra.mxu0 0
        %6478 = vmatprep.subr.bf16.mxu0 0
        %6479 = vmatpush1.bf16.xpose.msra.mxu0 0
        %6480 = vmatprep.subr.bf16.mxu0 0
        %6481 = vmatpush1.bf16.xpose.msra.mxu0 0
        %6482 = vmatprep.subr.bf16.mxu0 0
        %6483 = vmatpush1.bf16.xpose.msra.mxu0 0
        %6484 = vmatprep.subr.bf16.mxu0 0
        %6485 = vmatpush1.bf16.xpose.msra.mxu0 0
        %6486 = vmatprep.subr.bf16.mxu0 0
        %6487 = vmatpush1.bf16.xpose.msra.mxu0 0
        %6488 = vmatprep.subr.bf16.mxu0 0
        %6489 = vmatpush1.bf16.xpose.msra.mxu0 0
        %6490 = vmatprep.subr.bf16.mxu0 0
        %6491 = vmatpush1.bf16.xpose.msra.mxu0 0
        %6492 = vmatprep.subr.bf16.mxu0 0
        %6493 = vmatpush1.bf16.xpose.msra.mxu0 0
        %6494 = vmatprep.subr.bf16.mxu0 0
        %6495 = vmatpush1.bf16.xpose.msra.mxu0 0
        %6496 = vmatprep.subr.bf16.mxu0 0
        %6497 = vmatpush1.bf16.xpose.msra.mxu0 0
        %6498 = vmatprep.subr.bf16.mxu0 0
        %6499 = vmatpush1.bf16.xpose.msra.mxu0 0
        %6500 = vmatprep.subr.bf16.mxu0 0
        %6501 = vmatpush1.bf16.xpose.msra.mxu0 0
        %6502 = vmatprep.subr.bf16.mxu0 0
        %6503 = vmatpush1.bf16.xpose.msra.mxu0 0
        %6504 = vmatprep.mubr.bf16.mxu0 0
        %6505 = vmatmul.mubr.bf16.gmra.mrb[0].mxu0 %v6467
        %v6506 = vpop.f32.mrb[0].mxu0
        %v6507 = vadd.f32 0.0, %v6506
        %v6508 = vpop.f32.mrb[0].mxu0
        %v6509 = vpop.f32.mrb[0].mxu0
        %v6510 = vpop.f32.mrb[0].mxu0
        %6511 = vdwg.mxu0
        %v6512 = vlaneseq
        %v6513 = vand.u32 %v6512, 127
        %vm6514 = vcmp.lt.s32.totalorder %v6513, 5
        %v6515 = vsel %vm6514, 1, 0
        %vm6516 = vcmp.eq.s32.totalorder %v6515, 1
        %v6517 = vsel %vm6516, %v5081, -1e+30
        %v6518 = vsel %vm6516, %v5127, -1e+30
        %v6519 = vsel %vm6516, %v5173, -1e+30
        %v6520 = vsel %vm6516, %v5219, -1e+30
        %v6521 = vsel %vm6516, %v5265, -1e+30
        %v6522 = vsel %vm6516, %v5311, -1e+30
        %v6523 = vsel %vm6516, %v5357, -1e+30
        %v6524 = vsel %vm6516, %v5403, -1e+30
        %v6525 = vsel %vm6516, %v5449, -1e+30
        %v6526 = vsel %vm6516, %v5495, -1e+30
        %v6527 = vsel %vm6516, %v5541, -1e+30
        %v6528 = vsel %vm6516, %v5587, -1e+30
        %v6529 = vsel %vm6516, %v5633, -1e+30
        %v6530 = vsel %vm6516, %v5679, -1e+30
        %v6531 = vsel %vm6516, %v5725, -1e+30
        %v6532 = vsel %vm6516, %v5771, -1e+30
        %v6533 = vsel %vm6516, %v5817, -1e+30
        %v6534 = vsel %vm6516, %v5863, -1e+30
        %v6535 = vsel %vm6516, %v5909, -1e+30
        %v6536 = vsel %vm6516, %v5955, -1e+30
        %v6537 = vsel %vm6516, %v6001, -1e+30
        %v6538 = vsel %vm6516, %v6047, -1e+30
        %v6539 = vsel %vm6516, %v6093, -1e+30
        %v6540 = vsel %vm6516, %v6139, -1e+30
        %v6541 = vsel %vm6516, %v6185, -1e+30
        %v6542 = vsel %vm6516, %v6231, -1e+30
        %v6543 = vsel %vm6516, %v6277, -1e+30
        %v6544 = vsel %vm6516, %v6323, -1e+30
        %v6545 = vsel %vm6516, %v6369, -1e+30
        %v6546 = vsel %vm6516, %v6415, -1e+30
        %v6547 = vsel %vm6516, %v6461, -1e+30
        %v6548 = vsel %vm6516, %v6507, -1e+30
        %vm6549 = vcmask 64512
        %v6550 = vsel %vm6549, %v6517, -inf
        %6551 = vmax.xlane.f32.xlu0 %v6550
        %v6552 = vpop.xlane.xlu0 %6551
        %v6553 = vsel %vm6549, %v6518, -inf
        %6554 = vmax.xlane.f32.xlu0 %v6553
        %v6555 = vpop.xlane.xlu0 %6554
        %v6556 = vsel %vm6549, %v6519, -inf
        %6557 = vmax.xlane.f32.xlu0 %v6556
        %v6558 = vpop.xlane.xlu0 %6557
        %v6559 = vsel %vm6549, %v6520, -inf
        %6560 = vmax.xlane.f32.xlu0 %v6559
        %v6561 = vpop.xlane.xlu0 %6560
        %v6562 = vsel %vm6549, %v6521, -inf
        %6563 = vmax.xlane.f32.xlu0 %v6562
        %v6564 = vpop.xlane.xlu0 %6563
        %v6565 = vsel %vm6549, %v6522, -inf
        %6566 = vmax.xlane.f32.xlu0 %v6565
        %v6567 = vpop.xlane.xlu0 %6566
        %v6568 = vsel %vm6549, %v6523, -inf
        %6569 = vmax.xlane.f32.xlu0 %v6568
        %v6570 = vpop.xlane.xlu0 %6569
        %v6571 = vsel %vm6549, %v6524, -inf
        %6572 = vmax.xlane.f32.xlu0 %v6571
        %v6573 = vpop.xlane.xlu0 %6572
        %v6574 = vsel %vm6549, %v6525, -inf
        %6575 = vmax.xlane.f32.xlu0 %v6574
        %v6576 = vpop.xlane.xlu0 %6575
        %v6577 = vsel %vm6549, %v6526, -inf
        %6578 = vmax.xlane.f32.xlu0 %v6577
        %v6579 = vpop.xlane.xlu0 %6578
        %v6580 = vsel %vm6549, %v6527, -inf
        %6581 = vmax.xlane.f32.xlu0 %v6580
        %v6582 = vpop.xlane.xlu0 %6581
        %v6583 = vsel %vm6549, %v6528, -inf
        %6584 = vmax.xlane.f32.xlu0 %v6583
        %v6585 = vpop.xlane.xlu0 %6584
        %v6586 = vsel %vm6549, %v6529, -inf
        %6587 = vmax.xlane.f32.xlu0 %v6586
        %v6588 = vpop.xlane.xlu0 %6587
        %v6589 = vsel %vm6549, %v6530, -inf
        %6590 = vmax.xlane.f32.xlu0 %v6589
        %v6591 = vpop.xlane.xlu0 %6590
        %v6592 = vsel %vm6549, %v6531, -inf
        %6593 = vmax.xlane.f32.xlu0 %v6592
        %v6594 = vpop.xlane.xlu0 %6593
        %v6595 = vsel %vm6549, %v6532, -inf
        %6596 = vmax.xlane.f32.xlu0 %v6595
        %v6597 = vpop.xlane.xlu0 %6596
        %v6598 = vsel %vm6549, %v6533, -inf
        %6599 = vmax.xlane.f32.xlu0 %v6598
        %v6600 = vpop.xlane.xlu0 %6599
        %v6601 = vsel %vm6549, %v6534, -inf
        %6602 = vmax.xlane.f32.xlu0 %v6601
        %v6603 = vpop.xlane.xlu0 %6602
        %v6604 = vsel %vm6549, %v6535, -inf
        %6605 = vmax.xlane.f32.xlu0 %v6604
        %v6606 = vpop.xlane.xlu0 %6605
        %v6607 = vsel %vm6549, %v6536, -inf
        %6608 = vmax.xlane.f32.xlu0 %v6607
        %v6609 = vpop.xlane.xlu0 %6608
        %v6610 = vsel %vm6549, %v6537, -inf
        %6611 = vmax.xlane.f32.xlu0 %v6610
        %v6612 = vpop.xlane.xlu0 %6611
        %v6613 = vsel %vm6549, %v6538, -inf
        %6614 = vmax.xlane.f32.xlu0 %v6613
        %v6615 = vpop.xlane.xlu0 %6614
        %v6616 = vsel %vm6549, %v6539, -inf
        %6617 = vmax.xlane.f32.xlu0 %v6616
        %v6618 = vpop.xlane.xlu0 %6617
        %v6619 = vsel %vm6549, %v6540, -inf
        %6620 = vmax.xlane.f32.xlu0 %v6619
        %v6621 = vpop.xlane.xlu0 %6620
        %v6622 = vsel %vm6549, %v6541, -inf
        %6623 = vmax.xlane.f32.xlu0 %v6622
        %v6624 = vpop.xlane.xlu0 %6623
        %v6625 = vsel %vm6549, %v6542, -inf
        %6626 = vmax.xlane.f32.xlu0 %v6625
        %v6627 = vpop.xlane.xlu0 %6626
        %v6628 = vsel %vm6549, %v6543, -inf
        %6629 = vmax.xlane.f32.xlu0 %v6628
        %v6630 = vpop.xlane.xlu0 %6629
        %v6631 = vsel %vm6549, %v6544, -inf
        %6632 = vmax.xlane.f32.xlu0 %v6631
        %v6633 = vpop.xlane.xlu0 %6632
        %v6634 = vsel %vm6549, %v6545, -inf
        %6635 = vmax.xlane.f32.xlu0 %v6634
        %v6636 = vpop.xlane.xlu0 %6635
        %v6637 = vsel %vm6549, %v6546, -inf
        %6638 = vmax.xlane.f32.xlu0 %v6637
        %v6639 = vpop.xlane.xlu0 %6638
        %v6640 = vsel %vm6549, %v6547, -inf
        %6641 = vmax.xlane.f32.xlu0 %v6640
        %v6642 = vpop.xlane.xlu0 %6641
        %v6643 = vsel %vm6549, %v6548, -inf
        %6644 = vmax.xlane.f32.xlu0 %v6643
        %v6645 = vpop.xlane.xlu0 %6644
        %v6646 = vsub.f32 %v6517, %v6552
        %v6647 = vsub.f32 %v6518, %v6555
        %v6648 = vsub.f32 %v6519, %v6558
        %v6649 = vsub.f32 %v6520, %v6561
        %v6650 = vsub.f32 %v6521, %v6564
        %v6651 = vsub.f32 %v6522, %v6567
        %v6652 = vsub.f32 %v6523, %v6570
        %v6653 = vsub.f32 %v6524, %v6573
        %v6654 = vsub.f32 %v6525, %v6576
        %v6655 = vsub.f32 %v6526, %v6579
        %v6656 = vsub.f32 %v6527, %v6582
        %v6657 = vsub.f32 %v6528, %v6585
        %v6658 = vsub.f32 %v6529, %v6588
        %v6659 = vsub.f32 %v6530, %v6591
        %v6660 = vsub.f32 %v6531, %v6594
        %v6661 = vsub.f32 %v6532, %v6597
        %v6662 = vsub.f32 %v6533, %v6600
        %v6663 = vsub.f32 %v6534, %v6603
        %v6664 = vsub.f32 %v6535, %v6606
        %v6665 = vsub.f32 %v6536, %v6609
        %v6666 = vsub.f32 %v6537, %v6612
        %v6667 = vsub.f32 %v6538, %v6615
        %v6668 = vsub.f32 %v6539, %v6618
        %v6669 = vsub.f32 %v6540, %v6621
        %v6670 = vsub.f32 %v6541, %v6624
        %v6671 = vsub.f32 %v6542, %v6627
        %v6672 = vsub.f32 %v6543, %v6630
        %v6673 = vsub.f32 %v6544, %v6633
        %v6674 = vsub.f32 %v6545, %v6636
        %v6675 = vsub.f32 %v6546, %v6639
        %v6676 = vsub.f32 %v6547, %v6642
        %v6677 = vsub.f32 %v6548, %v6645
        %v6678 = vmul.f32 %v6646, 1.442695
        %v6679 = vpow.pop %v6678
        %v6680 = vmul.f32 %v6647, 1.442695
        %v6681 = vpow.pop %v6680
        %v6682 = vmul.f32 %v6648, 1.442695
        %v6683 = vpow.pop %v6682
        %v6684 = vmul.f32 %v6649, 1.442695
        %v6685 = vpow.pop %v6684
        %v6686 = vmul.f32 %v6650, 1.442695
        %v6687 = vpow.pop %v6686
        %v6688 = vmul.f32 %v6651, 1.442695
        %v6689 = vpow.pop %v6688
        %v6690 = vmul.f32 %v6652, 1.442695
        %v6691 = vpow.pop %v6690
        %v6692 = vmul.f32 %v6653, 1.442695
        %v6693 = vpow.pop %v6692
        %v6694 = vmul.f32 %v6654, 1.442695
        %v6695 = vpow.pop %v6694
        %v6696 = vmul.f32 %v6655, 1.442695
        %v6697 = vpow.pop %v6696
        %v6698 = vmul.f32 %v6656, 1.442695
        %v6699 = vpow.pop %v6698
        %v6700 = vmul.f32 %v6657, 1.442695
        %v6701 = vpow.pop %v6700
        %v6702 = vmul.f32 %v6658, 1.442695
        %v6703 = vpow.pop %v6702
        %v6704 = vmul.f32 %v6659, 1.442695
        %v6705 = vpow.pop %v6704
        %v6706 = vmul.f32 %v6660, 1.442695
        %v6707 = vpow.pop %v6706
        %v6708 = vmul.f32 %v6661, 1.442695
        %v6709 = vpow.pop %v6708
        %v6710 = vmul.f32 %v6662, 1.442695
        %v6711 = vpow.pop %v6710
        %v6712 = vmul.f32 %v6663, 1.442695
        %v6713 = vpow.pop %v6712
        %v6714 = vmul.f32 %v6664, 1.442695
        %v6715 = vpow.pop %v6714
        %v6716 = vmul.f32 %v6665, 1.442695
        %v6717 = vpow.pop %v6716
        %v6718 = vmul.f32 %v6666, 1.442695
        %v6719 = vpow.pop %v6718
        %v6720 = vmul.f32 %v6667, 1.442695
        %v6721 = vpow.pop %v6720
        %v6722 = vmul.f32 %v6668, 1.442695
        %v6723 = vpow.pop %v6722
        %v6724 = vmul.f32 %v6669, 1.442695
        %v6725 = vpow.pop %v6724
        %v6726 = vmul.f32 %v6670, 1.442695
        %v6727 = vpow.pop %v6726
        %v6728 = vmul.f32 %v6671, 1.442695
        %v6729 = vpow.pop %v6728
        %v6730 = vmul.f32 %v6672, 1.442695
        %v6731 = vpow.pop %v6730
        %v6732 = vmul.f32 %v6673, 1.442695
        %v6733 = vpow.pop %v6732
        %v6734 = vmul.f32 %v6674, 1.442695
        %v6735 = vpow.pop %v6734
        %v6736 = vmul.f32 %v6675, 1.442695
        %v6737 = vpow.pop %v6736
        %v6738 = vmul.f32 %v6676, 1.442695
        %v6739 = vpow.pop %v6738
        %v6740 = vmul.f32 %v6677, 1.442695
        %v6741 = vpow.pop %v6740
        %v6742 = vsel %vm6549, %v6679, 0.0
        %6743 = vadd.xlane.f32.xlu0 %v6742
        %v6744 = vpop.xlane.xlu0 %6743
        %v6745 = vsel %vm6549, %v6681, 0.0
        %6746 = vadd.xlane.f32.xlu0 %v6745
        %v6747 = vpop.xlane.xlu0 %6746
        %v6748 = vsel %vm6549, %v6683, 0.0
        %6749 = vadd.xlane.f32.xlu0 %v6748
        %v6750 = vpop.xlane.xlu0 %6749
        %v6751 = vsel %vm6549, %v6685, 0.0
        %6752 = vadd.xlane.f32.xlu0 %v6751
        %v6753 = vpop.xlane.xlu0 %6752
        %v6754 = vsel %vm6549, %v6687, 0.0
        %6755 = vadd.xlane.f32.xlu0 %v6754
        %v6756 = vpop.xlane.xlu0 %6755
        %v6757 = vsel %vm6549, %v6689, 0.0
        %6758 = vadd.xlane.f32.xlu0 %v6757
        %v6759 = vpop.xlane.xlu0 %6758
        %v6760 = vsel %vm6549, %v6691, 0.0
        %6761 = vadd.xlane.f32.xlu0 %v6760
        %v6762 = vpop.xlane.xlu0 %6761
        %v6763 = vsel %vm6549, %v6693, 0.0
        %6764 = vadd.xlane.f32.xlu0 %v6763
        %v6765 = vpop.xlane.xlu0 %6764
        %v6766 = vsel %vm6549, %v6695, 0.0
        %6767 = vadd.xlane.f32.xlu0 %v6766
        %v6768 = vpop.xlane.xlu0 %6767
        %v6769 = vsel %vm6549, %v6697, 0.0
        %6770 = vadd.xlane.f32.xlu0 %v6769
        %v6771 = vpop.xlane.xlu0 %6770
        %v6772 = vsel %vm6549, %v6699, 0.0
        %6773 = vadd.xlane.f32.xlu0 %v6772
        %v6774 = vpop.xlane.xlu0 %6773
        %v6775 = vsel %vm6549, %v6701, 0.0
        %6776 = vadd.xlane.f32.xlu0 %v6775
        %v6777 = vpop.xlane.xlu0 %6776
        %v6778 = vsel %vm6549, %v6703, 0.0
        %6779 = vadd.xlane.f32.xlu0 %v6778
        %v6780 = vpop.xlane.xlu0 %6779
        %v6781 = vsel %vm6549, %v6705, 0.0
        %6782 = vadd.xlane.f32.xlu0 %v6781
        %v6783 = vpop.xlane.xlu0 %6782
        %v6784 = vsel %vm6549, %v6707, 0.0
        %6785 = vadd.xlane.f32.xlu0 %v6784
        %v6786 = vpop.xlane.xlu0 %6785
        %v6787 = vsel %vm6549, %v6709, 0.0
        %6788 = vadd.xlane.f32.xlu0 %v6787
        %v6789 = vpop.xlane.xlu0 %6788
        %v6790 = vsel %vm6549, %v6711, 0.0
        %6791 = vadd.xlane.f32.xlu0 %v6790
        %v6792 = vpop.xlane.xlu0 %6791
        %v6793 = vsel %vm6549, %v6713, 0.0
        %6794 = vadd.xlane.f32.xlu0 %v6793
        %v6795 = vpop.xlane.xlu0 %6794
        %v6796 = vsel %vm6549, %v6715, 0.0
        %6797 = vadd.xlane.f32.xlu0 %v6796
        %v6798 = vpop.xlane.xlu0 %6797
        %v6799 = vsel %vm6549, %v6717, 0.0
        %6800 = vadd.xlane.f32.xlu0 %v6799
        %v6801 = vpop.xlane.xlu0 %6800
        %v6802 = vsel %vm6549, %v6719, 0.0
        %6803 = vadd.xlane.f32.xlu0 %v6802
        %v6804 = vpop.xlane.xlu0 %6803
        %v6805 = vsel %vm6549, %v6721, 0.0
        %6806 = vadd.xlane.f32.xlu0 %v6805
        %v6807 = vpop.xlane.xlu0 %6806
        %v6808 = vsel %vm6549, %v6723, 0.0
        %6809 = vadd.xlane.f32.xlu0 %v6808
        %v6810 = vpop.xlane.xlu0 %6809
        %v6811 = vsel %vm6549, %v6725, 0.0
        %6812 = vadd.xlane.f32.xlu0 %v6811
        %v6813 = vpop.xlane.xlu0 %6812
        %v6814 = vsel %vm6549, %v6727, 0.0
        %6815 = vadd.xlane.f32.xlu0 %v6814
        %v6816 = vpop.xlane.xlu0 %6815
        %v6817 = vsel %vm6549, %v6729, 0.0
        %6818 = vadd.xlane.f32.xlu0 %v6817
        %v6819 = vpop.xlane.xlu0 %6818
        %v6820 = vsel %vm6549, %v6731, 0.0
        %6821 = vadd.xlane.f32.xlu0 %v6820
        %v6822 = vpop.xlane.xlu0 %6821
        %v6823 = vsel %vm6549, %v6733, 0.0
        %6824 = vadd.xlane.f32.xlu0 %v6823
        %v6825 = vpop.xlane.xlu0 %6824
        %v6826 = vsel %vm6549, %v6735, 0.0
        %6827 = vadd.xlane.f32.xlu0 %v6826
        %v6828 = vpop.xlane.xlu0 %6827
        %v6829 = vsel %vm6549, %v6737, 0.0
        %6830 = vadd.xlane.f32.xlu0 %v6829
        %v6831 = vpop.xlane.xlu0 %6830
        %v6832 = vsel %vm6549, %v6739, 0.0
        %6833 = vadd.xlane.f32.xlu0 %v6832
        %v6834 = vpop.xlane.xlu0 %6833
        %v6835 = vsel %vm6549, %v6741, 0.0
        %6836 = vadd.xlane.f32.xlu0 %v6835
        %v6837 = vpop.xlane.xlu0 %6836
        %v6838 = vrcp.pop %v6744
        %v6839 = vrcp.pop %v6747
        %v6840 = vrcp.pop %v6750
        %v6841 = vrcp.pop %v6753
        %v6842 = vrcp.pop %v6756
        %v6843 = vrcp.pop %v6759
        %v6844 = vrcp.pop %v6762
        %v6845 = vrcp.pop %v6765
        %v6846 = vrcp.pop %v6768
        %v6847 = vrcp.pop %v6771
        %v6848 = vrcp.pop %v6774
        %v6849 = vrcp.pop %v6777
        %v6850 = vrcp.pop %v6780
        %v6851 = vrcp.pop %v6783
        %v6852 = vrcp.pop %v6786
        %v6853 = vrcp.pop %v6789
        %v6854 = vrcp.pop %v6792
        %v6855 = vrcp.pop %v6795
        %v6856 = vrcp.pop %v6798
        %v6857 = vrcp.pop %v6801
        %v6858 = vrcp.pop %v6804
        %v6859 = vrcp.pop %v6807
        %v6860 = vrcp.pop %v6810
        %v6861 = vrcp.pop %v6813
        %v6862 = vrcp.pop %v6816
        %v6863 = vrcp.pop %v6819
        %v6864 = vrcp.pop %v6822
        %v6865 = vrcp.pop %v6825
        %v6866 = vrcp.pop %v6828
        %v6867 = vrcp.pop %v6831
        %v6868 = vrcp.pop %v6834
        %v6869 = vrcp.pop %v6837
        %v6870 = vmul.f32 %v6679, %v6838
        %v6871 = vmul.f32 %v6681, %v6839
        %v6872 = vmul.f32 %v6683, %v6840
        %v6873 = vmul.f32 %v6685, %v6841
        %v6874 = vmul.f32 %v6687, %v6842
        %v6875 = vmul.f32 %v6689, %v6843
        %v6876 = vmul.f32 %v6691, %v6844
        %v6877 = vmul.f32 %v6693, %v6845
        %v6878 = vmul.f32 %v6695, %v6846
        %v6879 = vmul.f32 %v6697, %v6847
        %v6880 = vmul.f32 %v6699, %v6848
        %v6881 = vmul.f32 %v6701, %v6849
        %v6882 = vmul.f32 %v6703, %v6850
        %v6883 = vmul.f32 %v6705, %v6851
        %v6884 = vmul.f32 %v6707, %v6852
        %v6885 = vmul.f32 %v6709, %v6853
        %v6886 = vmul.f32 %v6711, %v6854
        %v6887 = vmul.f32 %v6713, %v6855
        %v6888 = vmul.f32 %v6715, %v6856
        %v6889 = vmul.f32 %v6717, %v6857
        %v6890 = vmul.f32 %v6719, %v6858
        %v6891 = vmul.f32 %v6721, %v6859
        %v6892 = vmul.f32 %v6723, %v6860
        %v6893 = vmul.f32 %v6725, %v6861
        %v6894 = vmul.f32 %v6727, %v6862
        %v6895 = vmul.f32 %v6729, %v6863
        %v6896 = vmul.f32 %v6731, %v6864
        %v6897 = vmul.f32 %v6733, %v6865
        %v6898 = vmul.f32 %v6735, %v6866
        %v6899 = vmul.f32 %v6737, %v6867
        %v6900 = vmul.f32 %v6739, %v6868
        %v6901 = vmul.f32 %v6741, %v6869
        %v6902 = vpack.c.bf16 %v6870, %v6870
        %v6903 = vpack.c.bf16 %v6871, %v6871
        %v6904 = vpack.c.bf16 %v6872, %v6872
        %v6905 = vpack.c.bf16 %v6873, %v6873
        %v6906 = vpack.c.bf16 %v6874, %v6874
        %v6907 = vpack.c.bf16 %v6875, %v6875
        %v6908 = vpack.c.bf16 %v6876, %v6876
        %v6909 = vpack.c.bf16 %v6877, %v6877
        %v6910 = vpack.c.bf16 %v6878, %v6878
        %v6911 = vpack.c.bf16 %v6879, %v6879
        %v6912 = vpack.c.bf16 %v6880, %v6880
        %v6913 = vpack.c.bf16 %v6881, %v6881
        %v6914 = vpack.c.bf16 %v6882, %v6882
        %v6915 = vpack.c.bf16 %v6883, %v6883
        %v6916 = vpack.c.bf16 %v6884, %v6884
        %v6917 = vpack.c.bf16 %v6885, %v6885
        %v6918 = vpack.c.bf16 %v6886, %v6886
        %v6919 = vpack.c.bf16 %v6887, %v6887
        %v6920 = vpack.c.bf16 %v6888, %v6888
        %v6921 = vpack.c.bf16 %v6889, %v6889
        %v6922 = vpack.c.bf16 %v6890, %v6890
        %v6923 = vpack.c.bf16 %v6891, %v6891
        %v6924 = vpack.c.bf16 %v6892, %v6892
        %v6925 = vpack.c.bf16 %v6893, %v6893
        %v6926 = vpack.c.bf16 %v6894, %v6894
        %v6927 = vpack.c.bf16 %v6895, %v6895
        %v6928 = vpack.c.bf16 %v6896, %v6896
        %v6929 = vpack.c.bf16 %v6897, %v6897
        %v6930 = vpack.c.bf16 %v6898, %v6898
        %v6931 = vpack.c.bf16 %v6899, %v6899
        %v6932 = vpack.c.bf16 %v6900, %v6900
        %v6933 = vpack.c.bf16 %v6901, %v6901
        %v6935 = vsel %vm6549, %v6902, 0
        %vm6937 = vcmask 1043456
        %v6939 = vsel %vm6937, %v4945, 0
        %6941 = vmatprep.subr.bf16.mxu0 0
        %6942 = vmatpush1.bf16.msra.mxu0 %v6939
        %6943 = vmatprep.subr.bf16.mxu0 0
        %6944 = vmatpush1.bf16.msra.mxu0 0
        %6945 = vmatprep.subr.bf16.mxu0 0
        %6946 = vmatpush1.bf16.msra.mxu0 0
        %6947 = vmatprep.subr.bf16.mxu0 0
        %6948 = vmatpush1.bf16.msra.mxu0 0
        %6949 = vmatprep.subr.bf16.mxu0 0
        %6950 = vmatpush1.bf16.msra.mxu0 0
        %6951 = vmatprep.subr.bf16.mxu0 0
        %6952 = vmatpush1.bf16.msra.mxu0 0
        %6953 = vmatprep.subr.bf16.mxu0 0
        %6954 = vmatpush1.bf16.msra.mxu0 0
        %6955 = vmatprep.subr.bf16.mxu0 0
        %6956 = vmatpush1.bf16.msra.mxu0 0
        %6957 = vmatprep.subr.bf16.mxu0 0
        %6958 = vmatpush1.bf16.msra.mxu0 0
        %6959 = vmatprep.subr.bf16.mxu0 0
        %6960 = vmatpush1.bf16.msra.mxu0 0
        %6961 = vmatprep.subr.bf16.mxu0 0
        %6962 = vmatpush1.bf16.msra.mxu0 0
        %6963 = vmatprep.subr.bf16.mxu0 0
        %6964 = vmatpush1.bf16.msra.mxu0 0
        %6965 = vmatprep.subr.bf16.mxu0 0
        %6966 = vmatpush1.bf16.msra.mxu0 0
        %6967 = vmatprep.subr.bf16.mxu0 0
        %6968 = vmatpush1.bf16.msra.mxu0 0
        %6969 = vmatprep.subr.bf16.mxu0 0
        %6970 = vmatpush1.bf16.msra.mxu0 0
        %6971 = vmatprep.subr.bf16.mxu0 0
        %6972 = vmatpush1.bf16.msra.mxu0 0
        %6973 = vmatprep.mubr.bf16.mxu0 0
        %6974 = vmatmul.mubr.bf16.gmra.mrb[0].mxu0 %v6935
        %v6975 = vpop.f32.mrb[0].mxu0
        %v6976 = vadd.f32 0.0, %v6975
        %v6977 = vpop.f32.mrb[0].mxu0
        %v6978 = vpop.f32.mrb[0].mxu0
        %v6979 = vpop.f32.mrb[0].mxu0
        %6980 = vdwg.mxu0
        %v6982 = vsel %vm6549, %v6903, 0
        %v6985 = vsel %vm6937, %v4948, 0
        %6987 = vmatprep.subr.bf16.mxu0 0
        %6988 = vmatpush1.bf16.msra.mxu0 %v6985
        %6989 = vmatprep.subr.bf16.mxu0 0
        %6990 = vmatpush1.bf16.msra.mxu0 0
        %6991 = vmatprep.subr.bf16.mxu0 0
        %6992 = vmatpush1.bf16.msra.mxu0 0
        %6993 = vmatprep.subr.bf16.mxu0 0
        %6994 = vmatpush1.bf16.msra.mxu0 0
        %6995 = vmatprep.subr.bf16.mxu0 0
        %6996 = vmatpush1.bf16.msra.mxu0 0
        %6997 = vmatprep.subr.bf16.mxu0 0
        %6998 = vmatpush1.bf16.msra.mxu0 0
        %6999 = vmatprep.subr.bf16.mxu0 0
        %7000 = vmatpush1.bf16.msra.mxu0 0
        %7001 = vmatprep.subr.bf16.mxu0 0
        %7002 = vmatpush1.bf16.msra.mxu0 0
        %7003 = vmatprep.subr.bf16.mxu0 0
        %7004 = vmatpush1.bf16.msra.mxu0 0
        %7005 = vmatprep.subr.bf16.mxu0 0
        %7006 = vmatpush1.bf16.msra.mxu0 0
        %7007 = vmatprep.subr.bf16.mxu0 0
        %7008 = vmatpush1.bf16.msra.mxu0 0
        %7009 = vmatprep.subr.bf16.mxu0 0
        %7010 = vmatpush1.bf16.msra.mxu0 0
        %7011 = vmatprep.subr.bf16.mxu0 0
        %7012 = vmatpush1.bf16.msra.mxu0 0
        %7013 = vmatprep.subr.bf16.mxu0 0
        %7014 = vmatpush1.bf16.msra.mxu0 0
        %7015 = vmatprep.subr.bf16.mxu0 0
        %7016 = vmatpush1.bf16.msra.mxu0 0
        %7017 = vmatprep.subr.bf16.mxu0 0
        %7018 = vmatpush1.bf16.msra.mxu0 0
        %7019 = vmatprep.mubr.bf16.mxu0 0
        %7020 = vmatmul.mubr.bf16.gmra.mrb[0].mxu0 %v6982
        %v7021 = vpop.f32.mrb[0].mxu0
        %v7022 = vadd.f32 0.0, %v7021
        %v7023 = vpop.f32.mrb[0].mxu0
        %v7024 = vpop.f32.mrb[0].mxu0
        %v7025 = vpop.f32.mrb[0].mxu0
        %7026 = vdwg.mxu0
        %v7028 = vsel %vm6549, %v6904, 0
        %v7031 = vsel %vm6937, %v4951, 0
        %7033 = vmatprep.subr.bf16.mxu0 0
        %7034 = vmatpush1.bf16.msra.mxu0 %v7031
        %7035 = vmatprep.subr.bf16.mxu0 0
        %7036 = vmatpush1.bf16.msra.mxu0 0
        %7037 = vmatprep.subr.bf16.mxu0 0
        %7038 = vmatpush1.bf16.msra.mxu0 0
        %7039 = vmatprep.subr.bf16.mxu0 0
        %7040 = vmatpush1.bf16.msra.mxu0 0
        %7041 = vmatprep.subr.bf16.mxu0 0
        %7042 = vmatpush1.bf16.msra.mxu0 0
        %7043 = vmatprep.subr.bf16.mxu0 0
        %7044 = vmatpush1.bf16.msra.mxu0 0
        %7045 = vmatprep.subr.bf16.mxu0 0
        %7046 = vmatpush1.bf16.msra.mxu0 0
        %7047 = vmatprep.subr.bf16.mxu0 0
        %7048 = vmatpush1.bf16.msra.mxu0 0
        %7049 = vmatprep.subr.bf16.mxu0 0
        %7050 = vmatpush1.bf16.msra.mxu0 0
        %7051 = vmatprep.subr.bf16.mxu0 0
        %7052 = vmatpush1.bf16.msra.mxu0 0
        %7053 = vmatprep.subr.bf16.mxu0 0
        %7054 = vmatpush1.bf16.msra.mxu0 0
        %7055 = vmatprep.subr.bf16.mxu0 0
        %7056 = vmatpush1.bf16.msra.mxu0 0
        %7057 = vmatprep.subr.bf16.mxu0 0
        %7058 = vmatpush1.bf16.msra.mxu0 0
        %7059 = vmatprep.subr.bf16.mxu0 0
        %7060 = vmatpush1.bf16.msra.mxu0 0
        %7061 = vmatprep.subr.bf16.mxu0 0
        %7062 = vmatpush1.bf16.msra.mxu0 0
        %7063 = vmatprep.subr.bf16.mxu0 0
        %7064 = vmatpush1.bf16.msra.mxu0 0
        %7065 = vmatprep.mubr.bf16.mxu0 0
        %7066 = vmatmul.mubr.bf16.gmra.mrb[0].mxu0 %v7028
        %v7067 = vpop.f32.mrb[0].mxu0
        %v7068 = vadd.f32 0.0, %v7067
        %v7069 = vpop.f32.mrb[0].mxu0
        %v7070 = vpop.f32.mrb[0].mxu0
        %v7071 = vpop.f32.mrb[0].mxu0
        %7072 = vdwg.mxu0
        %v7074 = vsel %vm6549, %v6905, 0
        %v7077 = vsel %vm6937, %v4954, 0
        %7079 = vmatprep.subr.bf16.mxu0 0
        %7080 = vmatpush1.bf16.msra.mxu0 %v7077
        %7081 = vmatprep.subr.bf16.mxu0 0
        %7082 = vmatpush1.bf16.msra.mxu0 0
        %7083 = vmatprep.subr.bf16.mxu0 0
        %7084 = vmatpush1.bf16.msra.mxu0 0
        %7085 = vmatprep.subr.bf16.mxu0 0
        %7086 = vmatpush1.bf16.msra.mxu0 0
        %7087 = vmatprep.subr.bf16.mxu0 0
        %7088 = vmatpush1.bf16.msra.mxu0 0
        %7089 = vmatprep.subr.bf16.mxu0 0
        %7090 = vmatpush1.bf16.msra.mxu0 0
        %7091 = vmatprep.subr.bf16.mxu0 0
        %7092 = vmatpush1.bf16.msra.mxu0 0
        %7093 = vmatprep.subr.bf16.mxu0 0
        %7094 = vmatpush1.bf16.msra.mxu0 0
        %7095 = vmatprep.subr.bf16.mxu0 0
        %7096 = vmatpush1.bf16.msra.mxu0 0
        %7097 = vmatprep.subr.bf16.mxu0 0
        %7098 = vmatpush1.bf16.msra.mxu0 0
        %7099 = vmatprep.subr.bf16.mxu0 0
        %7100 = vmatpush1.bf16.msra.mxu0 0
        %7101 = vmatprep.subr.bf16.mxu0 0
        %7102 = vmatpush1.bf16.msra.mxu0 0
        %7103 = vmatprep.subr.bf16.mxu0 0
        %7104 = vmatpush1.bf16.msra.mxu0 0
        %7105 = vmatprep.subr.bf16.mxu0 0
        %7106 = vmatpush1.bf16.msra.mxu0 0
        %7107 = vmatprep.subr.bf16.mxu0 0
        %7108 = vmatpush1.bf16.msra.mxu0 0
        %7109 = vmatprep.subr.bf16.mxu0 0
        %7110 = vmatpush1.bf16.msra.mxu0 0
        %7111 = vmatprep.mubr.bf16.mxu0 0
        %7112 = vmatmul.mubr.bf16.gmra.mrb[0].mxu0 %v7074
        %v7113 = vpop.f32.mrb[0].mxu0
        %v7114 = vadd.f32 0.0, %v7113
        %v7115 = vpop.f32.mrb[0].mxu0
        %v7116 = vpop.f32.mrb[0].mxu0
        %v7117 = vpop.f32.mrb[0].mxu0
        %7118 = vdwg.mxu0
        %v7120 = vsel %vm6549, %v6906, 0
        %v7123 = vsel %vm6937, %v4957, 0
        %7125 = vmatprep.subr.bf16.mxu0 0
        %7126 = vmatpush1.bf16.msra.mxu0 %v7123
        %7127 = vmatprep.subr.bf16.mxu0 0
        %7128 = vmatpush1.bf16.msra.mxu0 0
        %7129 = vmatprep.subr.bf16.mxu0 0
        %7130 = vmatpush1.bf16.msra.mxu0 0
        %7131 = vmatprep.subr.bf16.mxu0 0
        %7132 = vmatpush1.bf16.msra.mxu0 0
        %7133 = vmatprep.subr.bf16.mxu0 0
        %7134 = vmatpush1.bf16.msra.mxu0 0
        %7135 = vmatprep.subr.bf16.mxu0 0
        %7136 = vmatpush1.bf16.msra.mxu0 0
        %7137 = vmatprep.subr.bf16.mxu0 0
        %7138 = vmatpush1.bf16.msra.mxu0 0
        %7139 = vmatprep.subr.bf16.mxu0 0
        %7140 = vmatpush1.bf16.msra.mxu0 0
        %7141 = vmatprep.subr.bf16.mxu0 0
        %7142 = vmatpush1.bf16.msra.mxu0 0
        %7143 = vmatprep.subr.bf16.mxu0 0
        %7144 = vmatpush1.bf16.msra.mxu0 0
        %7145 = vmatprep.subr.bf16.mxu0 0
        %7146 = vmatpush1.bf16.msra.mxu0 0
        %7147 = vmatprep.subr.bf16.mxu0 0
        %7148 = vmatpush1.bf16.msra.mxu0 0
        %7149 = vmatprep.subr.bf16.mxu0 0
        %7150 = vmatpush1.bf16.msra.mxu0 0
        %7151 = vmatprep.subr.bf16.mxu0 0
        %7152 = vmatpush1.bf16.msra.mxu0 0
        %7153 = vmatprep.subr.bf16.mxu0 0
        %7154 = vmatpush1.bf16.msra.mxu0 0
        %7155 = vmatprep.subr.bf16.mxu0 0
        %7156 = vmatpush1.bf16.msra.mxu0 0
        %7157 = vmatprep.mubr.bf16.mxu0 0
        %7158 = vmatmul.mubr.bf16.gmra.mrb[0].mxu0 %v7120
        %v7159 = vpop.f32.mrb[0].mxu0
        %v7160 = vadd.f32 0.0, %v7159
        %v7161 = vpop.f32.mrb[0].mxu0
        %v7162 = vpop.f32.mrb[0].mxu0
        %v7163 = vpop.f32.mrb[0].mxu0
        %7164 = vdwg.mxu0
        %v7166 = vsel %vm6549, %v6907, 0
        %v7169 = vsel %vm6937, %v4960, 0
        %7171 = vmatprep.subr.bf16.mxu0 0
        %7172 = vmatpush1.bf16.msra.mxu0 %v7169
        %7173 = vmatprep.subr.bf16.mxu0 0
        %7174 = vmatpush1.bf16.msra.mxu0 0
        %7175 = vmatprep.subr.bf16.mxu0 0
        %7176 = vmatpush1.bf16.msra.mxu0 0
        %7177 = vmatprep.subr.bf16.mxu0 0
        %7178 = vmatpush1.bf16.msra.mxu0 0
        %7179 = vmatprep.subr.bf16.mxu0 0
        %7180 = vmatpush1.bf16.msra.mxu0 0
        %7181 = vmatprep.subr.bf16.mxu0 0
        %7182 = vmatpush1.bf16.msra.mxu0 0
        %7183 = vmatprep.subr.bf16.mxu0 0
        %7184 = vmatpush1.bf16.msra.mxu0 0
        %7185 = vmatprep.subr.bf16.mxu0 0
        %7186 = vmatpush1.bf16.msra.mxu0 0
        %7187 = vmatprep.subr.bf16.mxu0 0
        %7188 = vmatpush1.bf16.msra.mxu0 0
        %7189 = vmatprep.subr.bf16.mxu0 0
        %7190 = vmatpush1.bf16.msra.mxu0 0
        %7191 = vmatprep.subr.bf16.mxu0 0
        %7192 = vmatpush1.bf16.msra.mxu0 0
        %7193 = vmatprep.subr.bf16.mxu0 0
        %7194 = vmatpush1.bf16.msra.mxu0 0
        %7195 = vmatprep.subr.bf16.mxu0 0
        %7196 = vmatpush1.bf16.msra.mxu0 0
        %7197 = vmatprep.subr.bf16.mxu0 0
        %7198 = vmatpush1.bf16.msra.mxu0 0
        %7199 = vmatprep.subr.bf16.mxu0 0
        %7200 = vmatpush1.bf16.msra.mxu0 0
        %7201 = vmatprep.subr.bf16.mxu0 0
        %7202 = vmatpush1.bf16.msra.mxu0 0
        %7203 = vmatprep.mubr.bf16.mxu0 0
        %7204 = vmatmul.mubr.bf16.gmra.mrb[0].mxu0 %v7166
        %v7205 = vpop.f32.mrb[0].mxu0
        %v7206 = vadd.f32 0.0, %v7205
        %v7207 = vpop.f32.mrb[0].mxu0
        %v7208 = vpop.f32.mrb[0].mxu0
        %v7209 = vpop.f32.mrb[0].mxu0
        %7210 = vdwg.mxu0
        %v7212 = vsel %vm6549, %v6908, 0
        %v7215 = vsel %vm6937, %v4963, 0
        %7217 = vmatprep.subr.bf16.mxu0 0
        %7218 = vmatpush1.bf16.msra.mxu0 %v7215
        %7219 = vmatprep.subr.bf16.mxu0 0
        %7220 = vmatpush1.bf16.msra.mxu0 0
        %7221 = vmatprep.subr.bf16.mxu0 0
        %7222 = vmatpush1.bf16.msra.mxu0 0
        %7223 = vmatprep.subr.bf16.mxu0 0
        %7224 = vmatpush1.bf16.msra.mxu0 0
        %7225 = vmatprep.subr.bf16.mxu0 0
        %7226 = vmatpush1.bf16.msra.mxu0 0
        %7227 = vmatprep.subr.bf16.mxu0 0
        %7228 = vmatpush1.bf16.msra.mxu0 0
        %7229 = vmatprep.subr.bf16.mxu0 0
        %7230 = vmatpush1.bf16.msra.mxu0 0
        %7231 = vmatprep.subr.bf16.mxu0 0
        %7232 = vmatpush1.bf16.msra.mxu0 0
        %7233 = vmatprep.subr.bf16.mxu0 0
        %7234 = vmatpush1.bf16.msra.mxu0 0
        %7235 = vmatprep.subr.bf16.mxu0 0
        %7236 = vmatpush1.bf16.msra.mxu0 0
        %7237 = vmatprep.subr.bf16.mxu0 0
        %7238 = vmatpush1.bf16.msra.mxu0 0
        %7239 = vmatprep.subr.bf16.mxu0 0
        %7240 = vmatpush1.bf16.msra.mxu0 0
        %7241 = vmatprep.subr.bf16.mxu0 0
        %7242 = vmatpush1.bf16.msra.mxu0 0
        %7243 = vmatprep.subr.bf16.mxu0 0
        %7244 = vmatpush1.bf16.msra.mxu0 0
        %7245 = vmatprep.subr.bf16.mxu0 0
        %7246 = vmatpush1.bf16.msra.mxu0 0
        %7247 = vmatprep.subr.bf16.mxu0 0
        %7248 = vmatpush1.bf16.msra.mxu0 0
        %7249 = vmatprep.mubr.bf16.mxu0 0
        %7250 = vmatmul.mubr.bf16.gmra.mrb[0].mxu0 %v7212
        %v7251 = vpop.f32.mrb[0].mxu0
        %v7252 = vadd.f32 0.0, %v7251
        %v7253 = vpop.f32.mrb[0].mxu0
        %v7254 = vpop.f32.mrb[0].mxu0
        %v7255 = vpop.f32.mrb[0].mxu0
        %7256 = vdwg.mxu0
        %v7258 = vsel %vm6549, %v6909, 0
        %v7261 = vsel %vm6937, %v4966, 0
        %7263 = vmatprep.subr.bf16.mxu0 0
        %7264 = vmatpush1.bf16.msra.mxu0 %v7261
        %7265 = vmatprep.subr.bf16.mxu0 0
        %7266 = vmatpush1.bf16.msra.mxu0 0
        %7267 = vmatprep.subr.bf16.mxu0 0
        %7268 = vmatpush1.bf16.msra.mxu0 0
        %7269 = vmatprep.subr.bf16.mxu0 0
        %7270 = vmatpush1.bf16.msra.mxu0 0
        %7271 = vmatprep.subr.bf16.mxu0 0
        %7272 = vmatpush1.bf16.msra.mxu0 0
        %7273 = vmatprep.subr.bf16.mxu0 0
        %7274 = vmatpush1.bf16.msra.mxu0 0
        %7275 = vmatprep.subr.bf16.mxu0 0
        %7276 = vmatpush1.bf16.msra.mxu0 0
        %7277 = vmatprep.subr.bf16.mxu0 0
        %7278 = vmatpush1.bf16.msra.mxu0 0
        %7279 = vmatprep.subr.bf16.mxu0 0
        %7280 = vmatpush1.bf16.msra.mxu0 0
        %7281 = vmatprep.subr.bf16.mxu0 0
        %7282 = vmatpush1.bf16.msra.mxu0 0
        %7283 = vmatprep.subr.bf16.mxu0 0
        %7284 = vmatpush1.bf16.msra.mxu0 0
        %7285 = vmatprep.subr.bf16.mxu0 0
        %7286 = vmatpush1.bf16.msra.mxu0 0
        %7287 = vmatprep.subr.bf16.mxu0 0
        %7288 = vmatpush1.bf16.msra.mxu0 0
        %7289 = vmatprep.subr.bf16.mxu0 0
        %7290 = vmatpush1.bf16.msra.mxu0 0
        %7291 = vmatprep.subr.bf16.mxu0 0
        %7292 = vmatpush1.bf16.msra.mxu0 0
        %7293 = vmatprep.subr.bf16.mxu0 0
        %7294 = vmatpush1.bf16.msra.mxu0 0
        %7295 = vmatprep.mubr.bf16.mxu0 0
        %7296 = vmatmul.mubr.bf16.gmra.mrb[0].mxu0 %v7258
        %v7297 = vpop.f32.mrb[0].mxu0
        %v7298 = vadd.f32 0.0, %v7297
        %v7299 = vpop.f32.mrb[0].mxu0
        %v7300 = vpop.f32.mrb[0].mxu0
        %v7301 = vpop.f32.mrb[0].mxu0
        %7302 = vdwg.mxu0
        %v7304 = vsel %vm6549, %v6910, 0
        %v7307 = vsel %vm6937, %v4969, 0
        %7309 = vmatprep.subr.bf16.mxu0 0
        %7310 = vmatpush1.bf16.msra.mxu0 %v7307
        %7311 = vmatprep.subr.bf16.mxu0 0
        %7312 = vmatpush1.bf16.msra.mxu0 0
        %7313 = vmatprep.subr.bf16.mxu0 0
        %7314 = vmatpush1.bf16.msra.mxu0 0
        %7315 = vmatprep.subr.bf16.mxu0 0
        %7316 = vmatpush1.bf16.msra.mxu0 0
        %7317 = vmatprep.subr.bf16.mxu0 0
        %7318 = vmatpush1.bf16.msra.mxu0 0
        %7319 = vmatprep.subr.bf16.mxu0 0
        %7320 = vmatpush1.bf16.msra.mxu0 0
        %7321 = vmatprep.subr.bf16.mxu0 0
        %7322 = vmatpush1.bf16.msra.mxu0 0
        %7323 = vmatprep.subr.bf16.mxu0 0
        %7324 = vmatpush1.bf16.msra.mxu0 0
        %7325 = vmatprep.subr.bf16.mxu0 0
        %7326 = vmatpush1.bf16.msra.mxu0 0
        %7327 = vmatprep.subr.bf16.mxu0 0
        %7328 = vmatpush1.bf16.msra.mxu0 0
        %7329 = vmatprep.subr.bf16.mxu0 0
        %7330 = vmatpush1.bf16.msra.mxu0 0
        %7331 = vmatprep.subr.bf16.mxu0 0
        %7332 = vmatpush1.bf16.msra.mxu0 0
        %7333 = vmatprep.subr.bf16.mxu0 0
        %7334 = vmatpush1.bf16.msra.mxu0 0
        %7335 = vmatprep.subr.bf16.mxu0 0
        %7336 = vmatpush1.bf16.msra.mxu0 0
        %7337 = vmatprep.subr.bf16.mxu0 0
        %7338 = vmatpush1.bf16.msra.mxu0 0
        %7339 = vmatprep.subr.bf16.mxu0 0
        %7340 = vmatpush1.bf16.msra.mxu0 0
        %7341 = vmatprep.mubr.bf16.mxu0 0
        %7342 = vmatmul.mubr.bf16.gmra.mrb[0].mxu0 %v7304
        %v7343 = vpop.f32.mrb[0].mxu0
        %v7344 = vadd.f32 0.0, %v7343
        %v7345 = vpop.f32.mrb[0].mxu0
        %v7346 = vpop.f32.mrb[0].mxu0
        %v7347 = vpop.f32.mrb[0].mxu0
        %7348 = vdwg.mxu0
        %v7350 = vsel %vm6549, %v6911, 0
        %v7353 = vsel %vm6937, %v4972, 0
        %7355 = vmatprep.subr.bf16.mxu0 0
        %7356 = vmatpush1.bf16.msra.mxu0 %v7353
        %7357 = vmatprep.subr.bf16.mxu0 0
        %7358 = vmatpush1.bf16.msra.mxu0 0
        %7359 = vmatprep.subr.bf16.mxu0 0
        %7360 = vmatpush1.bf16.msra.mxu0 0
        %7361 = vmatprep.subr.bf16.mxu0 0
        %7362 = vmatpush1.bf16.msra.mxu0 0
        %7363 = vmatprep.subr.bf16.mxu0 0
        %7364 = vmatpush1.bf16.msra.mxu0 0
        %7365 = vmatprep.subr.bf16.mxu0 0
        %7366 = vmatpush1.bf16.msra.mxu0 0
        %7367 = vmatprep.subr.bf16.mxu0 0
        %7368 = vmatpush1.bf16.msra.mxu0 0
        %7369 = vmatprep.subr.bf16.mxu0 0
        %7370 = vmatpush1.bf16.msra.mxu0 0
        %7371 = vmatprep.subr.bf16.mxu0 0
        %7372 = vmatpush1.bf16.msra.mxu0 0
        %7373 = vmatprep.subr.bf16.mxu0 0
        %7374 = vmatpush1.bf16.msra.mxu0 0
        %7375 = vmatprep.subr.bf16.mxu0 0
        %7376 = vmatpush1.bf16.msra.mxu0 0
        %7377 = vmatprep.subr.bf16.mxu0 0
        %7378 = vmatpush1.bf16.msra.mxu0 0
        %7379 = vmatprep.subr.bf16.mxu0 0
        %7380 = vmatpush1.bf16.msra.mxu0 0
        %7381 = vmatprep.subr.bf16.mxu0 0
        %7382 = vmatpush1.bf16.msra.mxu0 0
        %7383 = vmatprep.subr.bf16.mxu0 0
        %7384 = vmatpush1.bf16.msra.mxu0 0
        %7385 = vmatprep.subr.bf16.mxu0 0
        %7386 = vmatpush1.bf16.msra.mxu0 0
        %7387 = vmatprep.mubr.bf16.mxu0 0
        %7388 = vmatmul.mubr.bf16.gmra.mrb[0].mxu0 %v7350
        %v7389 = vpop.f32.mrb[0].mxu0
        %v7390 = vadd.f32 0.0, %v7389
        %v7391 = vpop.f32.mrb[0].mxu0
        %v7392 = vpop.f32.mrb[0].mxu0
        %v7393 = vpop.f32.mrb[0].mxu0
        %7394 = vdwg.mxu0
        %v7396 = vsel %vm6549, %v6912, 0
        %v7399 = vsel %vm6937, %v4975, 0
        %7401 = vmatprep.subr.bf16.mxu0 0
        %7402 = vmatpush1.bf16.msra.mxu0 %v7399
        %7403 = vmatprep.subr.bf16.mxu0 0
        %7404 = vmatpush1.bf16.msra.mxu0 0
        %7405 = vmatprep.subr.bf16.mxu0 0
        %7406 = vmatpush1.bf16.msra.mxu0 0
        %7407 = vmatprep.subr.bf16.mxu0 0
        %7408 = vmatpush1.bf16.msra.mxu0 0
        %7409 = vmatprep.subr.bf16.mxu0 0
        %7410 = vmatpush1.bf16.msra.mxu0 0
        %7411 = vmatprep.subr.bf16.mxu0 0
        %7412 = vmatpush1.bf16.msra.mxu0 0
        %7413 = vmatprep.subr.bf16.mxu0 0
        %7414 = vmatpush1.bf16.msra.mxu0 0
        %7415 = vmatprep.subr.bf16.mxu0 0
        %7416 = vmatpush1.bf16.msra.mxu0 0
        %7417 = vmatprep.subr.bf16.mxu0 0
        %7418 = vmatpush1.bf16.msra.mxu0 0
        %7419 = vmatprep.subr.bf16.mxu0 0
        %7420 = vmatpush1.bf16.msra.mxu0 0
        %7421 = vmatprep.subr.bf16.mxu0 0
        %7422 = vmatpush1.bf16.msra.mxu0 0
        %7423 = vmatprep.subr.bf16.mxu0 0
        %7424 = vmatpush1.bf16.msra.mxu0 0
        %7425 = vmatprep.subr.bf16.mxu0 0
        %7426 = vmatpush1.bf16.msra.mxu0 0
        %7427 = vmatprep.subr.bf16.mxu0 0
        %7428 = vmatpush1.bf16.msra.mxu0 0
        %7429 = vmatprep.subr.bf16.mxu0 0
        %7430 = vmatpush1.bf16.msra.mxu0 0
        %7431 = vmatprep.subr.bf16.mxu0 0
        %7432 = vmatpush1.bf16.msra.mxu0 0
        %7433 = vmatprep.mubr.bf16.mxu0 0
        %7434 = vmatmul.mubr.bf16.gmra.mrb[0].mxu0 %v7396
        %v7435 = vpop.f32.mrb[0].mxu0
        %v7436 = vadd.f32 0.0, %v7435
        %v7437 = vpop.f32.mrb[0].mxu0
        %v7438 = vpop.f32.mrb[0].mxu0
        %v7439 = vpop.f32.mrb[0].mxu0
        %7440 = vdwg.mxu0
        %v7442 = vsel %vm6549, %v6913, 0
        %v7445 = vsel %vm6937, %v4978, 0
        %7447 = vmatprep.subr.bf16.mxu0 0
        %7448 = vmatpush1.bf16.msra.mxu0 %v7445
        %7449 = vmatprep.subr.bf16.mxu0 0
        %7450 = vmatpush1.bf16.msra.mxu0 0
        %7451 = vmatprep.subr.bf16.mxu0 0
        %7452 = vmatpush1.bf16.msra.mxu0 0
        %7453 = vmatprep.subr.bf16.mxu0 0
        %7454 = vmatpush1.bf16.msra.mxu0 0
        %7455 = vmatprep.subr.bf16.mxu0 0
        %7456 = vmatpush1.bf16.msra.mxu0 0
        %7457 = vmatprep.subr.bf16.mxu0 0
        %7458 = vmatpush1.bf16.msra.mxu0 0
        %7459 = vmatprep.subr.bf16.mxu0 0
        %7460 = vmatpush1.bf16.msra.mxu0 0
        %7461 = vmatprep.subr.bf16.mxu0 0
        %7462 = vmatpush1.bf16.msra.mxu0 0
        %7463 = vmatprep.subr.bf16.mxu0 0
        %7464 = vmatpush1.bf16.msra.mxu0 0
        %7465 = vmatprep.subr.bf16.mxu0 0
        %7466 = vmatpush1.bf16.msra.mxu0 0
        %7467 = vmatprep.subr.bf16.mxu0 0
        %7468 = vmatpush1.bf16.msra.mxu0 0
        %7469 = vmatprep.subr.bf16.mxu0 0
        %7470 = vmatpush1.bf16.msra.mxu0 0
        %7471 = vmatprep.subr.bf16.mxu0 0
        %7472 = vmatpush1.bf16.msra.mxu0 0
        %7473 = vmatprep.subr.bf16.mxu0 0
        %7474 = vmatpush1.bf16.msra.mxu0 0
        %7475 = vmatprep.subr.bf16.mxu0 0
        %7476 = vmatpush1.bf16.msra.mxu0 0
        %7477 = vmatprep.subr.bf16.mxu0 0
        %7478 = vmatpush1.bf16.msra.mxu0 0
        %7479 = vmatprep.mubr.bf16.mxu0 0
        %7480 = vmatmul.mubr.bf16.gmra.mrb[0].mxu0 %v7442
        %v7481 = vpop.f32.mrb[0].mxu0
        %v7482 = vadd.f32 0.0, %v7481
        %v7483 = vpop.f32.mrb[0].mxu0
        %v7484 = vpop.f32.mrb[0].mxu0
        %v7485 = vpop.f32.mrb[0].mxu0
        %7486 = vdwg.mxu0
        %v7488 = vsel %vm6549, %v6914, 0
        %v7491 = vsel %vm6937, %v4981, 0
        %7493 = vmatprep.subr.bf16.mxu0 0
        %7494 = vmatpush1.bf16.msra.mxu0 %v7491
        %7495 = vmatprep.subr.bf16.mxu0 0
        %7496 = vmatpush1.bf16.msra.mxu0 0
        %7497 = vmatprep.subr.bf16.mxu0 0
        %7498 = vmatpush1.bf16.msra.mxu0 0
        %7499 = vmatprep.subr.bf16.mxu0 0
        %7500 = vmatpush1.bf16.msra.mxu0 0
        %7501 = vmatprep.subr.bf16.mxu0 0
        %7502 = vmatpush1.bf16.msra.mxu0 0
        %7503 = vmatprep.subr.bf16.mxu0 0
        %7504 = vmatpush1.bf16.msra.mxu0 0
        %7505 = vmatprep.subr.bf16.mxu0 0
        %7506 = vmatpush1.bf16.msra.mxu0 0
        %7507 = vmatprep.subr.bf16.mxu0 0
        %7508 = vmatpush1.bf16.msra.mxu0 0
        %7509 = vmatprep.subr.bf16.mxu0 0
        %7510 = vmatpush1.bf16.msra.mxu0 0
        %7511 = vmatprep.subr.bf16.mxu0 0
        %7512 = vmatpush1.bf16.msra.mxu0 0
        %7513 = vmatprep.subr.bf16.mxu0 0
        %7514 = vmatpush1.bf16.msra.mxu0 0
        %7515 = vmatprep.subr.bf16.mxu0 0
        %7516 = vmatpush1.bf16.msra.mxu0 0
        %7517 = vmatprep.subr.bf16.mxu0 0
        %7518 = vmatpush1.bf16.msra.mxu0 0
        %7519 = vmatprep.subr.bf16.mxu0 0
        %7520 = vmatpush1.bf16.msra.mxu0 0
        %7521 = vmatprep.subr.bf16.mxu0 0
        %7522 = vmatpush1.bf16.msra.mxu0 0
        %7523 = vmatprep.subr.bf16.mxu0 0
        %7524 = vmatpush1.bf16.msra.mxu0 0
        %7525 = vmatprep.mubr.bf16.mxu0 0
        %7526 = vmatmul.mubr.bf16.gmra.mrb[0].mxu0 %v7488
        %v7527 = vpop.f32.mrb[0].mxu0
        %v7528 = vadd.f32 0.0, %v7527
        %v7529 = vpop.f32.mrb[0].mxu0
        %v7530 = vpop.f32.mrb[0].mxu0
        %v7531 = vpop.f32.mrb[0].mxu0
        %7532 = vdwg.mxu0
        %v7534 = vsel %vm6549, %v6915, 0
        %v7537 = vsel %vm6937, %v4984, 0
        %7539 = vmatprep.subr.bf16.mxu0 0
        %7540 = vmatpush1.bf16.msra.mxu0 %v7537
        %7541 = vmatprep.subr.bf16.mxu0 0
        %7542 = vmatpush1.bf16.msra.mxu0 0
        %7543 = vmatprep.subr.bf16.mxu0 0
        %7544 = vmatpush1.bf16.msra.mxu0 0
        %7545 = vmatprep.subr.bf16.mxu0 0
        %7546 = vmatpush1.bf16.msra.mxu0 0
        %7547 = vmatprep.subr.bf16.mxu0 0
        %7548 = vmatpush1.bf16.msra.mxu0 0
        %7549 = vmatprep.subr.bf16.mxu0 0
        %7550 = vmatpush1.bf16.msra.mxu0 0
        %7551 = vmatprep.subr.bf16.mxu0 0
        %7552 = vmatpush1.bf16.msra.mxu0 0
        %7553 = vmatprep.subr.bf16.mxu0 0
        %7554 = vmatpush1.bf16.msra.mxu0 0
        %7555 = vmatprep.subr.bf16.mxu0 0
        %7556 = vmatpush1.bf16.msra.mxu0 0
        %7557 = vmatprep.subr.bf16.mxu0 0
        %7558 = vmatpush1.bf16.msra.mxu0 0
        %7559 = vmatprep.subr.bf16.mxu0 0
        %7560 = vmatpush1.bf16.msra.mxu0 0
        %7561 = vmatprep.subr.bf16.mxu0 0
        %7562 = vmatpush1.bf16.msra.mxu0 0
        %7563 = vmatprep.subr.bf16.mxu0 0
        %7564 = vmatpush1.bf16.msra.mxu0 0
        %7565 = vmatprep.subr.bf16.mxu0 0
        %7566 = vmatpush1.bf16.msra.mxu0 0
        %7567 = vmatprep.subr.bf16.mxu0 0
        %7568 = vmatpush1.bf16.msra.mxu0 0
        %7569 = vmatprep.subr.bf16.mxu0 0
        %7570 = vmatpush1.bf16.msra.mxu0 0
        %7571 = vmatprep.mubr.bf16.mxu0 0
        %7572 = vmatmul.mubr.bf16.gmra.mrb[0].mxu0 %v7534
        %v7573 = vpop.f32.mrb[0].mxu0
        %v7574 = vadd.f32 0.0, %v7573
        %v7575 = vpop.f32.mrb[0].mxu0
        %v7576 = vpop.f32.mrb[0].mxu0
        %v7577 = vpop.f32.mrb[0].mxu0
        %7578 = vdwg.mxu0
        %v7580 = vsel %vm6549, %v6916, 0
        %v7583 = vsel %vm6937, %v4987, 0
        %7585 = vmatprep.subr.bf16.mxu0 0
        %7586 = vmatpush1.bf16.msra.mxu0 %v7583
        %7587 = vmatprep.subr.bf16.mxu0 0
        %7588 = vmatpush1.bf16.msra.mxu0 0
        %7589 = vmatprep.subr.bf16.mxu0 0
        %7590 = vmatpush1.bf16.msra.mxu0 0
        %7591 = vmatprep.subr.bf16.mxu0 0
        %7592 = vmatpush1.bf16.msra.mxu0 0
        %7593 = vmatprep.subr.bf16.mxu0 0
        %7594 = vmatpush1.bf16.msra.mxu0 0
        %7595 = vmatprep.subr.bf16.mxu0 0
        %7596 = vmatpush1.bf16.msra.mxu0 0
        %7597 = vmatprep.subr.bf16.mxu0 0
        %7598 = vmatpush1.bf16.msra.mxu0 0
        %7599 = vmatprep.subr.bf16.mxu0 0
        %7600 = vmatpush1.bf16.msra.mxu0 0
        %7601 = vmatprep.subr.bf16.mxu0 0
        %7602 = vmatpush1.bf16.msra.mxu0 0
        %7603 = vmatprep.subr.bf16.mxu0 0
        %7604 = vmatpush1.bf16.msra.mxu0 0
        %7605 = vmatprep.subr.bf16.mxu0 0
        %7606 = vmatpush1.bf16.msra.mxu0 0
        %7607 = vmatprep.subr.bf16.mxu0 0
        %7608 = vmatpush1.bf16.msra.mxu0 0
        %7609 = vmatprep.subr.bf16.mxu0 0
        %7610 = vmatpush1.bf16.msra.mxu0 0
        %7611 = vmatprep.subr.bf16.mxu0 0
        %7612 = vmatpush1.bf16.msra.mxu0 0
        %7613 = vmatprep.subr.bf16.mxu0 0
        %7614 = vmatpush1.bf16.msra.mxu0 0
        %7615 = vmatprep.subr.bf16.mxu0 0
        %7616 = vmatpush1.bf16.msra.mxu0 0
        %7617 = vmatprep.mubr.bf16.mxu0 0
        %7618 = vmatmul.mubr.bf16.gmra.mrb[0].mxu0 %v7580
        %v7619 = vpop.f32.mrb[0].mxu0
        %v7620 = vadd.f32 0.0, %v7619
        %v7621 = vpop.f32.mrb[0].mxu0
        %v7622 = vpop.f32.mrb[0].mxu0
        %v7623 = vpop.f32.mrb[0].mxu0
        %7624 = vdwg.mxu0
        %v7626 = vsel %vm6549, %v6917, 0
        %v7629 = vsel %vm6937, %v4990, 0
        %7631 = vmatprep.subr.bf16.mxu0 0
        %7632 = vmatpush1.bf16.msra.mxu0 %v7629
        %7633 = vmatprep.subr.bf16.mxu0 0
        %7634 = vmatpush1.bf16.msra.mxu0 0
        %7635 = vmatprep.subr.bf16.mxu0 0
        %7636 = vmatpush1.bf16.msra.mxu0 0
        %7637 = vmatprep.subr.bf16.mxu0 0
        %7638 = vmatpush1.bf16.msra.mxu0 0
        %7639 = vmatprep.subr.bf16.mxu0 0
        %7640 = vmatpush1.bf16.msra.mxu0 0
        %7641 = vmatprep.subr.bf16.mxu0 0
        %7642 = vmatpush1.bf16.msra.mxu0 0
        %7643 = vmatprep.subr.bf16.mxu0 0
        %7644 = vmatpush1.bf16.msra.mxu0 0
        %7645 = vmatprep.subr.bf16.mxu0 0
        %7646 = vmatpush1.bf16.msra.mxu0 0
        %7647 = vmatprep.subr.bf16.mxu0 0
        %7648 = vmatpush1.bf16.msra.mxu0 0
        %7649 = vmatprep.subr.bf16.mxu0 0
        %7650 = vmatpush1.bf16.msra.mxu0 0
        %7651 = vmatprep.subr.bf16.mxu0 0
        %7652 = vmatpush1.bf16.msra.mxu0 0
        %7653 = vmatprep.subr.bf16.mxu0 0
        %7654 = vmatpush1.bf16.msra.mxu0 0
        %7655 = vmatprep.subr.bf16.mxu0 0
        %7656 = vmatpush1.bf16.msra.mxu0 0
        %7657 = vmatprep.subr.bf16.mxu0 0
        %7658 = vmatpush1.bf16.msra.mxu0 0
        %7659 = vmatprep.subr.bf16.mxu0 0
        %7660 = vmatpush1.bf16.msra.mxu0 0
        %7661 = vmatprep.subr.bf16.mxu0 0
        %7662 = vmatpush1.bf16.msra.mxu0 0
        %7663 = vmatprep.mubr.bf16.mxu0 0
        %7664 = vmatmul.mubr.bf16.gmra.mrb[0].mxu0 %v7626
        %v7665 = vpop.f32.mrb[0].mxu0
        %v7666 = vadd.f32 0.0, %v7665
        %v7667 = vpop.f32.mrb[0].mxu0
        %v7668 = vpop.f32.mrb[0].mxu0
        %v7669 = vpop.f32.mrb[0].mxu0
        %7670 = vdwg.mxu0
        %v7672 = vsel %vm6549, %v6918, 0
        %v7675 = vsel %vm6937, %v4993, 0
        %7677 = vmatprep.subr.bf16.mxu0 0
        %7678 = vmatpush1.bf16.msra.mxu0 %v7675
        %7679 = vmatprep.subr.bf16.mxu0 0
        %7680 = vmatpush1.bf16.msra.mxu0 0
        %7681 = vmatprep.subr.bf16.mxu0 0
        %7682 = vmatpush1.bf16.msra.mxu0 0
        %7683 = vmatprep.subr.bf16.mxu0 0
        %7684 = vmatpush1.bf16.msra.mxu0 0
        %7685 = vmatprep.subr.bf16.mxu0 0
        %7686 = vmatpush1.bf16.msra.mxu0 0
        %7687 = vmatprep.subr.bf16.mxu0 0
        %7688 = vmatpush1.bf16.msra.mxu0 0
        %7689 = vmatprep.subr.bf16.mxu0 0
        %7690 = vmatpush1.bf16.msra.mxu0 0
        %7691 = vmatprep.subr.bf16.mxu0 0
        %7692 = vmatpush1.bf16.msra.mxu0 0
        %7693 = vmatprep.subr.bf16.mxu0 0
        %7694 = vmatpush1.bf16.msra.mxu0 0
        %7695 = vmatprep.subr.bf16.mxu0 0
        %7696 = vmatpush1.bf16.msra.mxu0 0
        %7697 = vmatprep.subr.bf16.mxu0 0
        %7698 = vmatpush1.bf16.msra.mxu0 0
        %7699 = vmatprep.subr.bf16.mxu0 0
        %7700 = vmatpush1.bf16.msra.mxu0 0
        %7701 = vmatprep.subr.bf16.mxu0 0
        %7702 = vmatpush1.bf16.msra.mxu0 0
        %7703 = vmatprep.subr.bf16.mxu0 0
        %7704 = vmatpush1.bf16.msra.mxu0 0
        %7705 = vmatprep.subr.bf16.mxu0 0
        %7706 = vmatpush1.bf16.msra.mxu0 0
        %7707 = vmatprep.subr.bf16.mxu0 0
        %7708 = vmatpush1.bf16.msra.mxu0 0
        %7709 = vmatprep.mubr.bf16.mxu0 0
        %7710 = vmatmul.mubr.bf16.gmra.mrb[0].mxu0 %v7672
        %v7711 = vpop.f32.mrb[0].mxu0
        %v7712 = vadd.f32 0.0, %v7711
        %v7713 = vpop.f32.mrb[0].mxu0
        %v7714 = vpop.f32.mrb[0].mxu0
        %v7715 = vpop.f32.mrb[0].mxu0
        %7716 = vdwg.mxu0
        %v7718 = vsel %vm6549, %v6919, 0
        %v7721 = vsel %vm6937, %v4996, 0
        %7723 = vmatprep.subr.bf16.mxu0 0
        %7724 = vmatpush1.bf16.msra.mxu0 %v7721
        %7725 = vmatprep.subr.bf16.mxu0 0
        %7726 = vmatpush1.bf16.msra.mxu0 0
        %7727 = vmatprep.subr.bf16.mxu0 0
        %7728 = vmatpush1.bf16.msra.mxu0 0
        %7729 = vmatprep.subr.bf16.mxu0 0
        %7730 = vmatpush1.bf16.msra.mxu0 0
        %7731 = vmatprep.subr.bf16.mxu0 0
        %7732 = vmatpush1.bf16.msra.mxu0 0
        %7733 = vmatprep.subr.bf16.mxu0 0
        %7734 = vmatpush1.bf16.msra.mxu0 0
        %7735 = vmatprep.subr.bf16.mxu0 0
        %7736 = vmatpush1.bf16.msra.mxu0 0
        %7737 = vmatprep.subr.bf16.mxu0 0
        %7738 = vmatpush1.bf16.msra.mxu0 0
        %7739 = vmatprep.subr.bf16.mxu0 0
        %7740 = vmatpush1.bf16.msra.mxu0 0
        %7741 = vmatprep.subr.bf16.mxu0 0
        %7742 = vmatpush1.bf16.msra.mxu0 0
        %7743 = vmatprep.subr.bf16.mxu0 0
        %7744 = vmatpush1.bf16.msra.mxu0 0
        %7745 = vmatprep.subr.bf16.mxu0 0
        %7746 = vmatpush1.bf16.msra.mxu0 0
        %7747 = vmatprep.subr.bf16.mxu0 0
        %7748 = vmatpush1.bf16.msra.mxu0 0
        %7749 = vmatprep.subr.bf16.mxu0 0
        %7750 = vmatpush1.bf16.msra.mxu0 0
        %7751 = vmatprep.subr.bf16.mxu0 0
        %7752 = vmatpush1.bf16.msra.mxu0 0
        %7753 = vmatprep.subr.bf16.mxu0 0
        %7754 = vmatpush1.bf16.msra.mxu0 0
        %7755 = vmatprep.mubr.bf16.mxu0 0
        %7756 = vmatmul.mubr.bf16.gmra.mrb[0].mxu0 %v7718
        %v7757 = vpop.f32.mrb[0].mxu0
        %v7758 = vadd.f32 0.0, %v7757
        %v7759 = vpop.f32.mrb[0].mxu0
        %v7760 = vpop.f32.mrb[0].mxu0
        %v7761 = vpop.f32.mrb[0].mxu0
        %7762 = vdwg.mxu0
        %v7764 = vsel %vm6549, %v6920, 0
        %v7767 = vsel %vm6937, %v4999, 0
        %7769 = vmatprep.subr.bf16.mxu0 0
        %7770 = vmatpush1.bf16.msra.mxu0 %v7767
        %7771 = vmatprep.subr.bf16.mxu0 0
        %7772 = vmatpush1.bf16.msra.mxu0 0
        %7773 = vmatprep.subr.bf16.mxu0 0
        %7774 = vmatpush1.bf16.msra.mxu0 0
        %7775 = vmatprep.subr.bf16.mxu0 0
        %7776 = vmatpush1.bf16.msra.mxu0 0
        %7777 = vmatprep.subr.bf16.mxu0 0
        %7778 = vmatpush1.bf16.msra.mxu0 0
        %7779 = vmatprep.subr.bf16.mxu0 0
        %7780 = vmatpush1.bf16.msra.mxu0 0
        %7781 = vmatprep.subr.bf16.mxu0 0
        %7782 = vmatpush1.bf16.msra.mxu0 0
        %7783 = vmatprep.subr.bf16.mxu0 0
        %7784 = vmatpush1.bf16.msra.mxu0 0
        %7785 = vmatprep.subr.bf16.mxu0 0
        %7786 = vmatpush1.bf16.msra.mxu0 0
        %7787 = vmatprep.subr.bf16.mxu0 0
        %7788 = vmatpush1.bf16.msra.mxu0 0
        %7789 = vmatprep.subr.bf16.mxu0 0
        %7790 = vmatpush1.bf16.msra.mxu0 0
        %7791 = vmatprep.subr.bf16.mxu0 0
        %7792 = vmatpush1.bf16.msra.mxu0 0
        %7793 = vmatprep.subr.bf16.mxu0 0
        %7794 = vmatpush1.bf16.msra.mxu0 0
        %7795 = vmatprep.subr.bf16.mxu0 0
        %7796 = vmatpush1.bf16.msra.mxu0 0
        %7797 = vmatprep.subr.bf16.mxu0 0
        %7798 = vmatpush1.bf16.msra.mxu0 0
        %7799 = vmatprep.subr.bf16.mxu0 0
        %7800 = vmatpush1.bf16.msra.mxu0 0
        %7801 = vmatprep.mubr.bf16.mxu0 0
        %7802 = vmatmul.mubr.bf16.gmra.mrb[0].mxu0 %v7764
        %v7803 = vpop.f32.mrb[0].mxu0
        %v7804 = vadd.f32 0.0, %v7803
        %v7805 = vpop.f32.mrb[0].mxu0
        %v7806 = vpop.f32.mrb[0].mxu0
        %v7807 = vpop.f32.mrb[0].mxu0
        %7808 = vdwg.mxu0
        %v7810 = vsel %vm6549, %v6921, 0
        %v7813 = vsel %vm6937, %v5002, 0
        %7815 = vmatprep.subr.bf16.mxu0 0
        %7816 = vmatpush1.bf16.msra.mxu0 %v7813
        %7817 = vmatprep.subr.bf16.mxu0 0
        %7818 = vmatpush1.bf16.msra.mxu0 0
        %7819 = vmatprep.subr.bf16.mxu0 0
        %7820 = vmatpush1.bf16.msra.mxu0 0
        %7821 = vmatprep.subr.bf16.mxu0 0
        %7822 = vmatpush1.bf16.msra.mxu0 0
        %7823 = vmatprep.subr.bf16.mxu0 0
        %7824 = vmatpush1.bf16.msra.mxu0 0
        %7825 = vmatprep.subr.bf16.mxu0 0
        %7826 = vmatpush1.bf16.msra.mxu0 0
        %7827 = vmatprep.subr.bf16.mxu0 0
        %7828 = vmatpush1.bf16.msra.mxu0 0
        %7829 = vmatprep.subr.bf16.mxu0 0
        %7830 = vmatpush1.bf16.msra.mxu0 0
        %7831 = vmatprep.subr.bf16.mxu0 0
        %7832 = vmatpush1.bf16.msra.mxu0 0
        %7833 = vmatprep.subr.bf16.mxu0 0
        %7834 = vmatpush1.bf16.msra.mxu0 0
        %7835 = vmatprep.subr.bf16.mxu0 0
        %7836 = vmatpush1.bf16.msra.mxu0 0
        %7837 = vmatprep.subr.bf16.mxu0 0
        %7838 = vmatpush1.bf16.msra.mxu0 0
        %7839 = vmatprep.subr.bf16.mxu0 0
        %7840 = vmatpush1.bf16.msra.mxu0 0
        %7841 = vmatprep.subr.bf16.mxu0 0
        %7842 = vmatpush1.bf16.msra.mxu0 0
        %7843 = vmatprep.subr.bf16.mxu0 0
        %7844 = vmatpush1.bf16.msra.mxu0 0
        %7845 = vmatprep.subr.bf16.mxu0 0
        %7846 = vmatpush1.bf16.msra.mxu0 0
        %7847 = vmatprep.mubr.bf16.mxu0 0
        %7848 = vmatmul.mubr.bf16.gmra.mrb[0].mxu0 %v7810
        %v7849 = vpop.f32.mrb[0].mxu0
        %v7850 = vadd.f32 0.0, %v7849
        %v7851 = vpop.f32.mrb[0].mxu0
        %v7852 = vpop.f32.mrb[0].mxu0
        %v7853 = vpop.f32.mrb[0].mxu0
        %7854 = vdwg.mxu0
        %v7856 = vsel %vm6549, %v6922, 0
        %v7859 = vsel %vm6937, %v5005, 0
        %7861 = vmatprep.subr.bf16.mxu0 0
        %7862 = vmatpush1.bf16.msra.mxu0 %v7859
        %7863 = vmatprep.subr.bf16.mxu0 0
        %7864 = vmatpush1.bf16.msra.mxu0 0
        %7865 = vmatprep.subr.bf16.mxu0 0
        %7866 = vmatpush1.bf16.msra.mxu0 0
        %7867 = vmatprep.subr.bf16.mxu0 0
        %7868 = vmatpush1.bf16.msra.mxu0 0
        %7869 = vmatprep.subr.bf16.mxu0 0
        %7870 = vmatpush1.bf16.msra.mxu0 0
        %7871 = vmatprep.subr.bf16.mxu0 0
        %7872 = vmatpush1.bf16.msra.mxu0 0
        %7873 = vmatprep.subr.bf16.mxu0 0
        %7874 = vmatpush1.bf16.msra.mxu0 0
        %7875 = vmatprep.subr.bf16.mxu0 0
        %7876 = vmatpush1.bf16.msra.mxu0 0
        %7877 = vmatprep.subr.bf16.mxu0 0
        %7878 = vmatpush1.bf16.msra.mxu0 0
        %7879 = vmatprep.subr.bf16.mxu0 0
        %7880 = vmatpush1.bf16.msra.mxu0 0
        %7881 = vmatprep.subr.bf16.mxu0 0
        %7882 = vmatpush1.bf16.msra.mxu0 0
        %7883 = vmatprep.subr.bf16.mxu0 0
        %7884 = vmatpush1.bf16.msra.mxu0 0
        %7885 = vmatprep.subr.bf16.mxu0 0
        %7886 = vmatpush1.bf16.msra.mxu0 0
        %7887 = vmatprep.subr.bf16.mxu0 0
        %7888 = vmatpush1.bf16.msra.mxu0 0
        %7889 = vmatprep.subr.bf16.mxu0 0
        %7890 = vmatpush1.bf16.msra.mxu0 0
        %7891 = vmatprep.subr.bf16.mxu0 0
        %7892 = vmatpush1.bf16.msra.mxu0 0
        %7893 = vmatprep.mubr.bf16.mxu0 0
        %7894 = vmatmul.mubr.bf16.gmra.mrb[0].mxu0 %v7856
        %v7895 = vpop.f32.mrb[0].mxu0
        %v7896 = vadd.f32 0.0, %v7895
        %v7897 = vpop.f32.mrb[0].mxu0
        %v7898 = vpop.f32.mrb[0].mxu0
        %v7899 = vpop.f32.mrb[0].mxu0
        %7900 = vdwg.mxu0
        %v7902 = vsel %vm6549, %v6923, 0
        %v7905 = vsel %vm6937, %v5008, 0
        %7907 = vmatprep.subr.bf16.mxu0 0
        %7908 = vmatpush1.bf16.msra.mxu0 %v7905
        %7909 = vmatprep.subr.bf16.mxu0 0
        %7910 = vmatpush1.bf16.msra.mxu0 0
        %7911 = vmatprep.subr.bf16.mxu0 0
        %7912 = vmatpush1.bf16.msra.mxu0 0
        %7913 = vmatprep.subr.bf16.mxu0 0
        %7914 = vmatpush1.bf16.msra.mxu0 0
        %7915 = vmatprep.subr.bf16.mxu0 0
        %7916 = vmatpush1.bf16.msra.mxu0 0
        %7917 = vmatprep.subr.bf16.mxu0 0
        %7918 = vmatpush1.bf16.msra.mxu0 0
        %7919 = vmatprep.subr.bf16.mxu0 0
        %7920 = vmatpush1.bf16.msra.mxu0 0
        %7921 = vmatprep.subr.bf16.mxu0 0
        %7922 = vmatpush1.bf16.msra.mxu0 0
        %7923 = vmatprep.subr.bf16.mxu0 0
        %7924 = vmatpush1.bf16.msra.mxu0 0
        %7925 = vmatprep.subr.bf16.mxu0 0
        %7926 = vmatpush1.bf16.msra.mxu0 0
        %7927 = vmatprep.subr.bf16.mxu0 0
        %7928 = vmatpush1.bf16.msra.mxu0 0
        %7929 = vmatprep.subr.bf16.mxu0 0
        %7930 = vmatpush1.bf16.msra.mxu0 0
        %7931 = vmatprep.subr.bf16.mxu0 0
        %7932 = vmatpush1.bf16.msra.mxu0 0
        %7933 = vmatprep.subr.bf16.mxu0 0
        %7934 = vmatpush1.bf16.msra.mxu0 0
        %7935 = vmatprep.subr.bf16.mxu0 0
        %7936 = vmatpush1.bf16.msra.mxu0 0
        %7937 = vmatprep.subr.bf16.mxu0 0
        %7938 = vmatpush1.bf16.msra.mxu0 0
        %7939 = vmatprep.mubr.bf16.mxu0 0
        %7940 = vmatmul.mubr.bf16.gmra.mrb[0].mxu0 %v7902
        %v7941 = vpop.f32.mrb[0].mxu0
        %v7942 = vadd.f32 0.0, %v7941
        %v7943 = vpop.f32.mrb[0].mxu0
        %v7944 = vpop.f32.mrb[0].mxu0
        %v7945 = vpop.f32.mrb[0].mxu0
        %7946 = vdwg.mxu0
        %v7948 = vsel %vm6549, %v6924, 0
        %v7951 = vsel %vm6937, %v5011, 0
        %7953 = vmatprep.subr.bf16.mxu0 0
        %7954 = vmatpush1.bf16.msra.mxu0 %v7951
        %7955 = vmatprep.subr.bf16.mxu0 0
        %7956 = vmatpush1.bf16.msra.mxu0 0
        %7957 = vmatprep.subr.bf16.mxu0 0
        %7958 = vmatpush1.bf16.msra.mxu0 0
        %7959 = vmatprep.subr.bf16.mxu0 0
        %7960 = vmatpush1.bf16.msra.mxu0 0
        %7961 = vmatprep.subr.bf16.mxu0 0
        %7962 = vmatpush1.bf16.msra.mxu0 0
        %7963 = vmatprep.subr.bf16.mxu0 0
        %7964 = vmatpush1.bf16.msra.mxu0 0
        %7965 = vmatprep.subr.bf16.mxu0 0
        %7966 = vmatpush1.bf16.msra.mxu0 0
        %7967 = vmatprep.subr.bf16.mxu0 0
        %7968 = vmatpush1.bf16.msra.mxu0 0
        %7969 = vmatprep.subr.bf16.mxu0 0
        %7970 = vmatpush1.bf16.msra.mxu0 0
        %7971 = vmatprep.subr.bf16.mxu0 0
        %7972 = vmatpush1.bf16.msra.mxu0 0
        %7973 = vmatprep.subr.bf16.mxu0 0
        %7974 = vmatpush1.bf16.msra.mxu0 0
        %7975 = vmatprep.subr.bf16.mxu0 0
        %7976 = vmatpush1.bf16.msra.mxu0 0
        %7977 = vmatprep.subr.bf16.mxu0 0
        %7978 = vmatpush1.bf16.msra.mxu0 0
        %7979 = vmatprep.subr.bf16.mxu0 0
        %7980 = vmatpush1.bf16.msra.mxu0 0
        %7981 = vmatprep.subr.bf16.mxu0 0
        %7982 = vmatpush1.bf16.msra.mxu0 0
        %7983 = vmatprep.subr.bf16.mxu0 0
        %7984 = vmatpush1.bf16.msra.mxu0 0
        %7985 = vmatprep.mubr.bf16.mxu0 0
        %7986 = vmatmul.mubr.bf16.gmra.mrb[0].mxu0 %v7948
        %v7987 = vpop.f32.mrb[0].mxu0
        %v7988 = vadd.f32 0.0, %v7987
        %v7989 = vpop.f32.mrb[0].mxu0
        %v7990 = vpop.f32.mrb[0].mxu0
        %v7991 = vpop.f32.mrb[0].mxu0
        %7992 = vdwg.mxu0
        %v7994 = vsel %vm6549, %v6925, 0
        %v7997 = vsel %vm6937, %v5014, 0
        %7999 = vmatprep.subr.bf16.mxu0 0
        %8000 = vmatpush1.bf16.msra.mxu0 %v7997
        %8001 = vmatprep.subr.bf16.mxu0 0
        %8002 = vmatpush1.bf16.msra.mxu0 0
        %8003 = vmatprep.subr.bf16.mxu0 0
        %8004 = vmatpush1.bf16.msra.mxu0 0
        %8005 = vmatprep.subr.bf16.mxu0 0
        %8006 = vmatpush1.bf16.msra.mxu0 0
        %8007 = vmatprep.subr.bf16.mxu0 0
        %8008 = vmatpush1.bf16.msra.mxu0 0
        %8009 = vmatprep.subr.bf16.mxu0 0
        %8010 = vmatpush1.bf16.msra.mxu0 0
        %8011 = vmatprep.subr.bf16.mxu0 0
        %8012 = vmatpush1.bf16.msra.mxu0 0
        %8013 = vmatprep.subr.bf16.mxu0 0
        %8014 = vmatpush1.bf16.msra.mxu0 0
        %8015 = vmatprep.subr.bf16.mxu0 0
        %8016 = vmatpush1.bf16.msra.mxu0 0
        %8017 = vmatprep.subr.bf16.mxu0 0
        %8018 = vmatpush1.bf16.msra.mxu0 0
        %8019 = vmatprep.subr.bf16.mxu0 0
        %8020 = vmatpush1.bf16.msra.mxu0 0
        %8021 = vmatprep.subr.bf16.mxu0 0
        %8022 = vmatpush1.bf16.msra.mxu0 0
        %8023 = vmatprep.subr.bf16.mxu0 0
        %8024 = vmatpush1.bf16.msra.mxu0 0
        %8025 = vmatprep.subr.bf16.mxu0 0
        %8026 = vmatpush1.bf16.msra.mxu0 0
        %8027 = vmatprep.subr.bf16.mxu0 0
        %8028 = vmatpush1.bf16.msra.mxu0 0
        %8029 = vmatprep.subr.bf16.mxu0 0
        %8030 = vmatpush1.bf16.msra.mxu0 0
        %8031 = vmatprep.mubr.bf16.mxu0 0
        %8032 = vmatmul.mubr.bf16.gmra.mrb[0].mxu0 %v7994
        %v8033 = vpop.f32.mrb[0].mxu0
        %v8034 = vadd.f32 0.0, %v8033
        %v8035 = vpop.f32.mrb[0].mxu0
        %v8036 = vpop.f32.mrb[0].mxu0
        %v8037 = vpop.f32.mrb[0].mxu0
        %8038 = vdwg.mxu0
        %v8040 = vsel %vm6549, %v6926, 0
        %v8043 = vsel %vm6937, %v5017, 0
        %8045 = vmatprep.subr.bf16.mxu0 0
        %8046 = vmatpush1.bf16.msra.mxu0 %v8043
        %8047 = vmatprep.subr.bf16.mxu0 0
        %8048 = vmatpush1.bf16.msra.mxu0 0
        %8049 = vmatprep.subr.bf16.mxu0 0
        %8050 = vmatpush1.bf16.msra.mxu0 0
        %8051 = vmatprep.subr.bf16.mxu0 0
        %8052 = vmatpush1.bf16.msra.mxu0 0
        %8053 = vmatprep.subr.bf16.mxu0 0
        %8054 = vmatpush1.bf16.msra.mxu0 0
        %8055 = vmatprep.subr.bf16.mxu0 0
        %8056 = vmatpush1.bf16.msra.mxu0 0
        %8057 = vmatprep.subr.bf16.mxu0 0
        %8058 = vmatpush1.bf16.msra.mxu0 0
        %8059 = vmatprep.subr.bf16.mxu0 0
        %8060 = vmatpush1.bf16.msra.mxu0 0
        %8061 = vmatprep.subr.bf16.mxu0 0
        %8062 = vmatpush1.bf16.msra.mxu0 0
        %8063 = vmatprep.subr.bf16.mxu0 0
        %8064 = vmatpush1.bf16.msra.mxu0 0
        %8065 = vmatprep.subr.bf16.mxu0 0
        %8066 = vmatpush1.bf16.msra.mxu0 0
        %8067 = vmatprep.subr.bf16.mxu0 0
        %8068 = vmatpush1.bf16.msra.mxu0 0
        %8069 = vmatprep.subr.bf16.mxu0 0
        %8070 = vmatpush1.bf16.msra.mxu0 0
        %8071 = vmatprep.subr.bf16.mxu0 0
        %8072 = vmatpush1.bf16.msra.mxu0 0
        %8073 = vmatprep.subr.bf16.mxu0 0
        %8074 = vmatpush1.bf16.msra.mxu0 0
        %8075 = vmatprep.subr.bf16.mxu0 0
        %8076 = vmatpush1.bf16.msra.mxu0 0
        %8077 = vmatprep.mubr.bf16.mxu0 0
        %8078 = vmatmul.mubr.bf16.gmra.mrb[0].mxu0 %v8040
        %v8079 = vpop.f32.mrb[0].mxu0
        %v8080 = vadd.f32 0.0, %v8079
        %v8081 = vpop.f32.mrb[0].mxu0
        %v8082 = vpop.f32.mrb[0].mxu0
        %v8083 = vpop.f32.mrb[0].mxu0
        %8084 = vdwg.mxu0
        %v8086 = vsel %vm6549, %v6927, 0
        %v8089 = vsel %vm6937, %v5020, 0
        %8091 = vmatprep.subr.bf16.mxu0 0
        %8092 = vmatpush1.bf16.msra.mxu0 %v8089
        %8093 = vmatprep.subr.bf16.mxu0 0
        %8094 = vmatpush1.bf16.msra.mxu0 0
        %8095 = vmatprep.subr.bf16.mxu0 0
        %8096 = vmatpush1.bf16.msra.mxu0 0
        %8097 = vmatprep.subr.bf16.mxu0 0
        %8098 = vmatpush1.bf16.msra.mxu0 0
        %8099 = vmatprep.subr.bf16.mxu0 0
        %8100 = vmatpush1.bf16.msra.mxu0 0
        %8101 = vmatprep.subr.bf16.mxu0 0
        %8102 = vmatpush1.bf16.msra.mxu0 0
        %8103 = vmatprep.subr.bf16.mxu0 0
        %8104 = vmatpush1.bf16.msra.mxu0 0
        %8105 = vmatprep.subr.bf16.mxu0 0
        %8106 = vmatpush1.bf16.msra.mxu0 0
        %8107 = vmatprep.subr.bf16.mxu0 0
        %8108 = vmatpush1.bf16.msra.mxu0 0
        %8109 = vmatprep.subr.bf16.mxu0 0
        %8110 = vmatpush1.bf16.msra.mxu0 0
        %8111 = vmatprep.subr.bf16.mxu0 0
        %8112 = vmatpush1.bf16.msra.mxu0 0
        %8113 = vmatprep.subr.bf16.mxu0 0
        %8114 = vmatpush1.bf16.msra.mxu0 0
        %8115 = vmatprep.subr.bf16.mxu0 0
        %8116 = vmatpush1.bf16.msra.mxu0 0
        %8117 = vmatprep.subr.bf16.mxu0 0
        %8118 = vmatpush1.bf16.msra.mxu0 0
        %8119 = vmatprep.subr.bf16.mxu0 0
        %8120 = vmatpush1.bf16.msra.mxu0 0
        %8121 = vmatprep.subr.bf16.mxu0 0
        %8122 = vmatpush1.bf16.msra.mxu0 0
        %8123 = vmatprep.mubr.bf16.mxu0 0
        %8124 = vmatmul.mubr.bf16.gmra.mrb[0].mxu0 %v8086
        %v8125 = vpop.f32.mrb[0].mxu0
        %v8126 = vadd.f32 0.0, %v8125
        %v8127 = vpop.f32.mrb[0].mxu0
        %v8128 = vpop.f32.mrb[0].mxu0
        %v8129 = vpop.f32.mrb[0].mxu0
        %8130 = vdwg.mxu0
        %v8132 = vsel %vm6549, %v6928, 0
        %v8135 = vsel %vm6937, %v5023, 0
        %8137 = vmatprep.subr.bf16.mxu0 0
        %8138 = vmatpush1.bf16.msra.mxu0 %v8135
        %8139 = vmatprep.subr.bf16.mxu0 0
        %8140 = vmatpush1.bf16.msra.mxu0 0
        %8141 = vmatprep.subr.bf16.mxu0 0
        %8142 = vmatpush1.bf16.msra.mxu0 0
        %8143 = vmatprep.subr.bf16.mxu0 0
        %8144 = vmatpush1.bf16.msra.mxu0 0
        %8145 = vmatprep.subr.bf16.mxu0 0
        %8146 = vmatpush1.bf16.msra.mxu0 0
        %8147 = vmatprep.subr.bf16.mxu0 0
        %8148 = vmatpush1.bf16.msra.mxu0 0
        %8149 = vmatprep.subr.bf16.mxu0 0
        %8150 = vmatpush1.bf16.msra.mxu0 0
        %8151 = vmatprep.subr.bf16.mxu0 0
        %8152 = vmatpush1.bf16.msra.mxu0 0
        %8153 = vmatprep.subr.bf16.mxu0 0
        %8154 = vmatpush1.bf16.msra.mxu0 0
        %8155 = vmatprep.subr.bf16.mxu0 0
        %8156 = vmatpush1.bf16.msra.mxu0 0
        %8157 = vmatprep.subr.bf16.mxu0 0
        %8158 = vmatpush1.bf16.msra.mxu0 0
        %8159 = vmatprep.subr.bf16.mxu0 0
        %8160 = vmatpush1.bf16.msra.mxu0 0
        %8161 = vmatprep.subr.bf16.mxu0 0
        %8162 = vmatpush1.bf16.msra.mxu0 0
        %8163 = vmatprep.subr.bf16.mxu0 0
        %8164 = vmatpush1.bf16.msra.mxu0 0
        %8165 = vmatprep.subr.bf16.mxu0 0
        %8166 = vmatpush1.bf16.msra.mxu0 0
        %8167 = vmatprep.subr.bf16.mxu0 0
        %8168 = vmatpush1.bf16.msra.mxu0 0
        %8169 = vmatprep.mubr.bf16.mxu0 0
        %8170 = vmatmul.mubr.bf16.gmra.mrb[0].mxu0 %v8132
        %v8171 = vpop.f32.mrb[0].mxu0
        %v8172 = vadd.f32 0.0, %v8171
        %v8173 = vpop.f32.mrb[0].mxu0
        %v8174 = vpop.f32.mrb[0].mxu0
        %v8175 = vpop.f32.mrb[0].mxu0
        %8176 = vdwg.mxu0
        %v8178 = vsel %vm6549, %v6929, 0
        %v8181 = vsel %vm6937, %v5026, 0
        %8183 = vmatprep.subr.bf16.mxu0 0
        %8184 = vmatpush1.bf16.msra.mxu0 %v8181
        %8185 = vmatprep.subr.bf16.mxu0 0
        %8186 = vmatpush1.bf16.msra.mxu0 0
        %8187 = vmatprep.subr.bf16.mxu0 0
        %8188 = vmatpush1.bf16.msra.mxu0 0
        %8189 = vmatprep.subr.bf16.mxu0 0
        %8190 = vmatpush1.bf16.msra.mxu0 0
        %8191 = vmatprep.subr.bf16.mxu0 0
        %8192 = vmatpush1.bf16.msra.mxu0 0
        %8193 = vmatprep.subr.bf16.mxu0 0
        %8194 = vmatpush1.bf16.msra.mxu0 0
        %8195 = vmatprep.subr.bf16.mxu0 0
        %8196 = vmatpush1.bf16.msra.mxu0 0
        %8197 = vmatprep.subr.bf16.mxu0 0
        %8198 = vmatpush1.bf16.msra.mxu0 0
        %8199 = vmatprep.subr.bf16.mxu0 0
        %8200 = vmatpush1.bf16.msra.mxu0 0
        %8201 = vmatprep.subr.bf16.mxu0 0
        %8202 = vmatpush1.bf16.msra.mxu0 0
        %8203 = vmatprep.subr.bf16.mxu0 0
        %8204 = vmatpush1.bf16.msra.mxu0 0
        %8205 = vmatprep.subr.bf16.mxu0 0
        %8206 = vmatpush1.bf16.msra.mxu0 0
        %8207 = vmatprep.subr.bf16.mxu0 0
        %8208 = vmatpush1.bf16.msra.mxu0 0
        %8209 = vmatprep.subr.bf16.mxu0 0
        %8210 = vmatpush1.bf16.msra.mxu0 0
        %8211 = vmatprep.subr.bf16.mxu0 0
        %8212 = vmatpush1.bf16.msra.mxu0 0
        %8213 = vmatprep.subr.bf16.mxu0 0
        %8214 = vmatpush1.bf16.msra.mxu0 0
        %8215 = vmatprep.mubr.bf16.mxu0 0
        %8216 = vmatmul.mubr.bf16.gmra.mrb[0].mxu0 %v8178
        %v8217 = vpop.f32.mrb[0].mxu0
        %v8218 = vadd.f32 0.0, %v8217
        %v8219 = vpop.f32.mrb[0].mxu0
        %v8220 = vpop.f32.mrb[0].mxu0
        %v8221 = vpop.f32.mrb[0].mxu0
        %8222 = vdwg.mxu0
        %v8224 = vsel %vm6549, %v6930, 0
        %v8227 = vsel %vm6937, %v5029, 0
        %8229 = vmatprep.subr.bf16.mxu0 0
        %8230 = vmatpush1.bf16.msra.mxu0 %v8227
        %8231 = vmatprep.subr.bf16.mxu0 0
        %8232 = vmatpush1.bf16.msra.mxu0 0
        %8233 = vmatprep.subr.bf16.mxu0 0
        %8234 = vmatpush1.bf16.msra.mxu0 0
        %8235 = vmatprep.subr.bf16.mxu0 0
        %8236 = vmatpush1.bf16.msra.mxu0 0
        %8237 = vmatprep.subr.bf16.mxu0 0
        %8238 = vmatpush1.bf16.msra.mxu0 0
        %8239 = vmatprep.subr.bf16.mxu0 0
        %8240 = vmatpush1.bf16.msra.mxu0 0
        %8241 = vmatprep.subr.bf16.mxu0 0
        %8242 = vmatpush1.bf16.msra.mxu0 0
        %8243 = vmatprep.subr.bf16.mxu0 0
        %8244 = vmatpush1.bf16.msra.mxu0 0
        %8245 = vmatprep.subr.bf16.mxu0 0
        %8246 = vmatpush1.bf16.msra.mxu0 0
        %8247 = vmatprep.subr.bf16.mxu0 0
        %8248 = vmatpush1.bf16.msra.mxu0 0
        %8249 = vmatprep.subr.bf16.mxu0 0
        %8250 = vmatpush1.bf16.msra.mxu0 0
        %8251 = vmatprep.subr.bf16.mxu0 0
        %8252 = vmatpush1.bf16.msra.mxu0 0
        %8253 = vmatprep.subr.bf16.mxu0 0
        %8254 = vmatpush1.bf16.msra.mxu0 0
        %8255 = vmatprep.subr.bf16.mxu0 0
        %8256 = vmatpush1.bf16.msra.mxu0 0
        %8257 = vmatprep.subr.bf16.mxu0 0
        %8258 = vmatpush1.bf16.msra.mxu0 0
        %8259 = vmatprep.subr.bf16.mxu0 0
        %8260 = vmatpush1.bf16.msra.mxu0 0
        %8261 = vmatprep.mubr.bf16.mxu0 0
        %8262 = vmatmul.mubr.bf16.gmra.mrb[0].mxu0 %v8224
        %v8263 = vpop.f32.mrb[0].mxu0
        %v8264 = vadd.f32 0.0, %v8263
        %v8265 = vpop.f32.mrb[0].mxu0
        %v8266 = vpop.f32.mrb[0].mxu0
        %v8267 = vpop.f32.mrb[0].mxu0
        %8268 = vdwg.mxu0
        %v8270 = vsel %vm6549, %v6931, 0
        %v8273 = vsel %vm6937, %v5032, 0
        %8275 = vmatprep.subr.bf16.mxu0 0
        %8276 = vmatpush1.bf16.msra.mxu0 %v8273
        %8277 = vmatprep.subr.bf16.mxu0 0
        %8278 = vmatpush1.bf16.msra.mxu0 0
        %8279 = vmatprep.subr.bf16.mxu0 0
        %8280 = vmatpush1.bf16.msra.mxu0 0
        %8281 = vmatprep.subr.bf16.mxu0 0
        %8282 = vmatpush1.bf16.msra.mxu0 0
        %8283 = vmatprep.subr.bf16.mxu0 0
        %8284 = vmatpush1.bf16.msra.mxu0 0
        %8285 = vmatprep.subr.bf16.mxu0 0
        %8286 = vmatpush1.bf16.msra.mxu0 0
        %8287 = vmatprep.subr.bf16.mxu0 0
        %8288 = vmatpush1.bf16.msra.mxu0 0
        %8289 = vmatprep.subr.bf16.mxu0 0
        %8290 = vmatpush1.bf16.msra.mxu0 0
        %8291 = vmatprep.subr.bf16.mxu0 0
        %8292 = vmatpush1.bf16.msra.mxu0 0
        %8293 = vmatprep.subr.bf16.mxu0 0
        %8294 = vmatpush1.bf16.msra.mxu0 0
        %8295 = vmatprep.subr.bf16.mxu0 0
        %8296 = vmatpush1.bf16.msra.mxu0 0
        %8297 = vmatprep.subr.bf16.mxu0 0
        %8298 = vmatpush1.bf16.msra.mxu0 0
        %8299 = vmatprep.subr.bf16.mxu0 0
        %8300 = vmatpush1.bf16.msra.mxu0 0
        %8301 = vmatprep.subr.bf16.mxu0 0
        %8302 = vmatpush1.bf16.msra.mxu0 0
        %8303 = vmatprep.subr.bf16.mxu0 0
        %8304 = vmatpush1.bf16.msra.mxu0 0
        %8305 = vmatprep.subr.bf16.mxu0 0
        %8306 = vmatpush1.bf16.msra.mxu0 0
        %8307 = vmatprep.mubr.bf16.mxu0 0
        %8308 = vmatmul.mubr.bf16.gmra.mrb[0].mxu0 %v8270
        %v8309 = vpop.f32.mrb[0].mxu0
        %v8310 = vadd.f32 0.0, %v8309
        %v8311 = vpop.f32.mrb[0].mxu0
        %v8312 = vpop.f32.mrb[0].mxu0
        %v8313 = vpop.f32.mrb[0].mxu0
        %8314 = vdwg.mxu0
        %v8316 = vsel %vm6549, %v6932, 0
        %v8319 = vsel %vm6937, %v5035, 0
        %8321 = vmatprep.subr.bf16.mxu0 0
        %8322 = vmatpush1.bf16.msra.mxu0 %v8319
        %8323 = vmatprep.subr.bf16.mxu0 0
        %8324 = vmatpush1.bf16.msra.mxu0 0
        %8325 = vmatprep.subr.bf16.mxu0 0
        %8326 = vmatpush1.bf16.msra.mxu0 0
        %8327 = vmatprep.subr.bf16.mxu0 0
        %8328 = vmatpush1.bf16.msra.mxu0 0
        %8329 = vmatprep.subr.bf16.mxu0 0
        %8330 = vmatpush1.bf16.msra.mxu0 0
        %8331 = vmatprep.subr.bf16.mxu0 0
        %8332 = vmatpush1.bf16.msra.mxu0 0
        %8333 = vmatprep.subr.bf16.mxu0 0
        %8334 = vmatpush1.bf16.msra.mxu0 0
        %8335 = vmatprep.subr.bf16.mxu0 0
        %8336 = vmatpush1.bf16.msra.mxu0 0
        %8337 = vmatprep.subr.bf16.mxu0 0
        %8338 = vmatpush1.bf16.msra.mxu0 0
        %8339 = vmatprep.subr.bf16.mxu0 0
        %8340 = vmatpush1.bf16.msra.mxu0 0
        %8341 = vmatprep.subr.bf16.mxu0 0
        %8342 = vmatpush1.bf16.msra.mxu0 0
        %8343 = vmatprep.subr.bf16.mxu0 0
        %8344 = vmatpush1.bf16.msra.mxu0 0
        %8345 = vmatprep.subr.bf16.mxu0 0
        %8346 = vmatpush1.bf16.msra.mxu0 0
        %8347 = vmatprep.subr.bf16.mxu0 0
        %8348 = vmatpush1.bf16.msra.mxu0 0
        %8349 = vmatprep.subr.bf16.mxu0 0
        %8350 = vmatpush1.bf16.msra.mxu0 0
        %8351 = vmatprep.subr.bf16.mxu0 0
        %8352 = vmatpush1.bf16.msra.mxu0 0
        %8353 = vmatprep.mubr.bf16.mxu0 0
        %8354 = vmatmul.mubr.bf16.gmra.mrb[0].mxu0 %v8316
        %v8355 = vpop.f32.mrb[0].mxu0
        %v8356 = vadd.f32 0.0, %v8355
        %v8357 = vpop.f32.mrb[0].mxu0
        %v8358 = vpop.f32.mrb[0].mxu0
        %v8359 = vpop.f32.mrb[0].mxu0
        %8360 = vdwg.mxu0
        %v8362 = vsel %vm6549, %v6933, 0
        %v8365 = vsel %vm6937, %v5038, 0
        %8367 = vmatprep.subr.bf16.mxu0 0
        %8368 = vmatpush1.bf16.msra.mxu0 %v8365
        %8369 = vmatprep.subr.bf16.mxu0 0
        %8370 = vmatpush1.bf16.msra.mxu0 0
        %8371 = vmatprep.subr.bf16.mxu0 0
        %8372 = vmatpush1.bf16.msra.mxu0 0
        %8373 = vmatprep.subr.bf16.mxu0 0
        %8374 = vmatpush1.bf16.msra.mxu0 0
        %8375 = vmatprep.subr.bf16.mxu0 0
        %8376 = vmatpush1.bf16.msra.mxu0 0
        %8377 = vmatprep.subr.bf16.mxu0 0
        %8378 = vmatpush1.bf16.msra.mxu0 0
        %8379 = vmatprep.subr.bf16.mxu0 0
        %8380 = vmatpush1.bf16.msra.mxu0 0
        %8381 = vmatprep.subr.bf16.mxu0 0
        %8382 = vmatpush1.bf16.msra.mxu0 0
        %8383 = vmatprep.subr.bf16.mxu0 0
        %8384 = vmatpush1.bf16.msra.mxu0 0
        %8385 = vmatprep.subr.bf16.mxu0 0
        %8386 = vmatpush1.bf16.msra.mxu0 0
        %8387 = vmatprep.subr.bf16.mxu0 0
        %8388 = vmatpush1.bf16.msra.mxu0 0
        %8389 = vmatprep.subr.bf16.mxu0 0
        %8390 = vmatpush1.bf16.msra.mxu0 0
        %8391 = vmatprep.subr.bf16.mxu0 0
        %8392 = vmatpush1.bf16.msra.mxu0 0
        %8393 = vmatprep.subr.bf16.mxu0 0
        %8394 = vmatpush1.bf16.msra.mxu0 0
        %8395 = vmatprep.subr.bf16.mxu0 0
        %8396 = vmatpush1.bf16.msra.mxu0 0
        %8397 = vmatprep.subr.bf16.mxu0 0
        %8398 = vmatpush1.bf16.msra.mxu0 0
        %8399 = vmatprep.mubr.bf16.mxu0 0
        %8400 = vmatmul.mubr.bf16.gmra.mrb[0].mxu0 %v8362
        %v8401 = vpop.f32.mrb[0].mxu0
        %v8402 = vadd.f32 0.0, %v8401
        %v8403 = vpop.f32.mrb[0].mxu0
        %v8404 = vpop.f32.mrb[0].mxu0
        %v8405 = vpop.f32.mrb[0].mxu0
        %8406 = vdwg.mxu0
        %v8407 = vpack.c.bf16 %v6976, %v6976
        %v8409 = vunpack.c.l.s4 1983009808
        %v8410 = vunpack.c.0.s8 %v8409
        %v8411 = vlaneseq
        %v8412 = vshrl.u32 %v8411, 7
        %v8413 = vsub.s32 %v8410, %v8412
        %v8414 = vrot.slane %v8407, %v8413
        %v8415 = vpack.c.bf16 %v7068, %v7068
        %v8417 = vunpack.c.l.s4 1983009808
        %v8418 = vunpack.c.0.s8 %v8417
        %v8419 = vlaneseq
        %v8420 = vshrl.u32 %v8419, 7
        %v8421 = vsub.s32 %v8418, %v8420
        %v8422 = vrot.slane %v8415, %v8421
        %v8423 = vcombine.low %v8414, %v8422
        %v8424 = vcombine.high %v8414, %v8422
        %v8426 = vunpack.c.l.s4 1934713408
        %v8427 = vunpack.c.0.s8 %v8426
        %v8428 = vlaneseq
        %v8429 = vshrl.u32 %v8428, 7
        %v8430 = vsub.s32 %v8427, %v8429
        %v8431 = vrot.slane %v8423, %v8430
        %v8433 = vunpack.c.l.s4 1934713408
        %v8434 = vunpack.c.0.s8 %v8433
        %v8435 = vlaneseq
        %v8436 = vshrl.u32 %v8435, 7
        %v8437 = vsub.s32 %v8434, %v8436
        %v8438 = vrot.slane %v8424, %v8437
        %v8439 = vcombine.high %v8431, 0
        %v8440 = vcombine.high %v8438, 0
        %v8441 = vpack.c.bf16 %v7022, %v7022
        %v8443 = vunpack.c.l.s4 1983009808
        %v8444 = vunpack.c.0.s8 %v8443
        %v8445 = vlaneseq
        %v8446 = vshrl.u32 %v8445, 7
        %v8447 = vsub.s32 %v8444, %v8446
        %v8448 = vrot.slane %v8441, %v8447
        %v8449 = vpack.c.bf16 %v7114, %v7114
        %v8451 = vunpack.c.l.s4 1983009808
        %v8452 = vunpack.c.0.s8 %v8451
        %v8453 = vlaneseq
        %v8454 = vshrl.u32 %v8453, 7
        %v8455 = vsub.s32 %v8452, %v8454
        %v8456 = vrot.slane %v8449, %v8455
        %v8457 = vcombine.low %v8448, %v8456
        %v8458 = vcombine.high %v8448, %v8456
        %v8460 = vunpack.c.l.s4 1934713408
        %v8461 = vunpack.c.0.s8 %v8460
        %v8462 = vlaneseq
        %v8463 = vshrl.u32 %v8462, 7
        %v8464 = vsub.s32 %v8461, %v8463
        %v8465 = vrot.slane %v8457, %v8464
        %v8467 = vunpack.c.l.s4 1934713408
        %v8468 = vunpack.c.0.s8 %v8467
        %v8469 = vlaneseq
        %v8470 = vshrl.u32 %v8469, 7
        %v8471 = vsub.s32 %v8468, %v8470
        %v8472 = vrot.slane %v8458, %v8471
        %v8473 = vcombine.high %v8465, 0
        %v8474 = vcombine.high %v8472, 0
        %v8475 = vpack.c.bf16 %v7160, %v7160
        %v8477 = vunpack.c.l.s4 1983009808
        %v8478 = vunpack.c.0.s8 %v8477
        %v8479 = vlaneseq
        %v8480 = vshrl.u32 %v8479, 7
        %v8481 = vsub.s32 %v8478, %v8480
        %v8482 = vrot.slane %v8475, %v8481
        %v8483 = vpack.c.bf16 %v7252, %v7252
        %v8485 = vunpack.c.l.s4 1983009808
        %v8486 = vunpack.c.0.s8 %v8485
        %v8487 = vlaneseq
        %v8488 = vshrl.u32 %v8487, 7
        %v8489 = vsub.s32 %v8486, %v8488
        %v8490 = vrot.slane %v8483, %v8489
        %v8491 = vcombine.low %v8482, %v8490
        %v8492 = vcombine.high %v8482, %v8490
        %v8494 = vunpack.c.l.s4 1934713408
        %v8495 = vunpack.c.0.s8 %v8494
        %v8496 = vlaneseq
        %v8497 = vshrl.u32 %v8496, 7
        %v8498 = vsub.s32 %v8495, %v8497
        %v8499 = vrot.slane %v8491, %v8498
        %v8501 = vunpack.c.l.s4 1934713408
        %v8502 = vunpack.c.0.s8 %v8501
        %v8503 = vlaneseq
        %v8504 = vshrl.u32 %v8503, 7
        %v8505 = vsub.s32 %v8502, %v8504
        %v8506 = vrot.slane %v8492, %v8505
        %v8507 = vcombine.high %v8499, 0
        %v8508 = vcombine.high %v8506, 0
        %v8509 = vpack.c.bf16 %v7206, %v7206
        %v8511 = vunpack.c.l.s4 1983009808
        %v8512 = vunpack.c.0.s8 %v8511
        %v8513 = vlaneseq
        %v8514 = vshrl.u32 %v8513, 7
        %v8515 = vsub.s32 %v8512, %v8514
        %v8516 = vrot.slane %v8509, %v8515
        %v8517 = vpack.c.bf16 %v7298, %v7298
        %v8519 = vunpack.c.l.s4 1983009808
        %v8520 = vunpack.c.0.s8 %v8519
        %v8521 = vlaneseq
        %v8522 = vshrl.u32 %v8521, 7
        %v8523 = vsub.s32 %v8520, %v8522
        %v8524 = vrot.slane %v8517, %v8523
        %v8525 = vcombine.low %v8516, %v8524
        %v8526 = vcombine.high %v8516, %v8524
        %v8528 = vunpack.c.l.s4 1934713408
        %v8529 = vunpack.c.0.s8 %v8528
        %v8530 = vlaneseq
        %v8531 = vshrl.u32 %v8530, 7
        %v8532 = vsub.s32 %v8529, %v8531
        %v8533 = vrot.slane %v8525, %v8532
        %v8535 = vunpack.c.l.s4 1934713408
        %v8536 = vunpack.c.0.s8 %v8535
        %v8537 = vlaneseq
        %v8538 = vshrl.u32 %v8537, 7
        %v8539 = vsub.s32 %v8536, %v8538
        %v8540 = vrot.slane %v8526, %v8539
        %v8541 = vcombine.high %v8533, 0
        %v8542 = vcombine.high %v8540, 0
        %v8543 = vpack.c.bf16 %v7344, %v7344
        %v8545 = vunpack.c.l.s4 1983009808
        %v8546 = vunpack.c.0.s8 %v8545
        %v8547 = vlaneseq
        %v8548 = vshrl.u32 %v8547, 7
        %v8549 = vsub.s32 %v8546, %v8548
        %v8550 = vrot.slane %v8543, %v8549
        %v8551 = vpack.c.bf16 %v7436, %v7436
        %v8553 = vunpack.c.l.s4 1983009808
        %v8554 = vunpack.c.0.s8 %v8553
        %v8555 = vlaneseq
        %v8556 = vshrl.u32 %v8555, 7
        %v8557 = vsub.s32 %v8554, %v8556
        %v8558 = vrot.slane %v8551, %v8557
        %v8559 = vcombine.low %v8550, %v8558
        %v8560 = vcombine.high %v8550, %v8558
        %v8562 = vunpack.c.l.s4 1934713408
        %v8563 = vunpack.c.0.s8 %v8562
        %v8564 = vlaneseq
        %v8565 = vshrl.u32 %v8564, 7
        %v8566 = vsub.s32 %v8563, %v8565
        %v8567 = vrot.slane %v8559, %v8566
        %v8569 = vunpack.c.l.s4 1934713408
        %v8570 = vunpack.c.0.s8 %v8569
        %v8571 = vlaneseq
        %v8572 = vshrl.u32 %v8571, 7
        %v8573 = vsub.s32 %v8570, %v8572
        %v8574 = vrot.slane %v8560, %v8573
        %v8575 = vcombine.high %v8567, 0
        %v8576 = vcombine.high %v8574, 0
        %v8577 = vpack.c.bf16 %v7390, %v7390
        %v8579 = vunpack.c.l.s4 1983009808
        %v8580 = vunpack.c.0.s8 %v8579
        %v8581 = vlaneseq
        %v8582 = vshrl.u32 %v8581, 7
        %v8583 = vsub.s32 %v8580, %v8582
        %v8584 = vrot.slane %v8577, %v8583
        %v8585 = vpack.c.bf16 %v7482, %v7482
        %v8587 = vunpack.c.l.s4 1983009808
        %v8588 = vunpack.c.0.s8 %v8587
        %v8589 = vlaneseq
        %v8590 = vshrl.u32 %v8589, 7
        %v8591 = vsub.s32 %v8588, %v8590
        %v8592 = vrot.slane %v8585, %v8591
        %v8593 = vcombine.low %v8584, %v8592
        %v8594 = vcombine.high %v8584, %v8592
        %v8596 = vunpack.c.l.s4 1934713408
        %v8597 = vunpack.c.0.s8 %v8596
        %v8598 = vlaneseq
        %v8599 = vshrl.u32 %v8598, 7
        %v8600 = vsub.s32 %v8597, %v8599
        %v8601 = vrot.slane %v8593, %v8600
        %v8603 = vunpack.c.l.s4 1934713408
        %v8604 = vunpack.c.0.s8 %v8603
        %v8605 = vlaneseq
        %v8606 = vshrl.u32 %v8605, 7
        %v8607 = vsub.s32 %v8604, %v8606
        %v8608 = vrot.slane %v8594, %v8607
        %v8609 = vcombine.high %v8601, 0
        %v8610 = vcombine.high %v8608, 0
        %v8611 = vpack.c.bf16 %v7528, %v7528
        %v8613 = vunpack.c.l.s4 1983009808
        %v8614 = vunpack.c.0.s8 %v8613
        %v8615 = vlaneseq
        %v8616 = vshrl.u32 %v8615, 7
        %v8617 = vsub.s32 %v8614, %v8616
        %v8618 = vrot.slane %v8611, %v8617
        %v8619 = vpack.c.bf16 %v7620, %v7620
        %v8621 = vunpack.c.l.s4 1983009808
        %v8622 = vunpack.c.0.s8 %v8621
        %v8623 = vlaneseq
        %v8624 = vshrl.u32 %v8623, 7
        %v8625 = vsub.s32 %v8622, %v8624
        %v8626 = vrot.slane %v8619, %v8625
        %v8627 = vcombine.low %v8618, %v8626
        %v8628 = vcombine.high %v8618, %v8626
        %v8630 = vunpack.c.l.s4 1934713408
        %v8631 = vunpack.c.0.s8 %v8630
        %v8632 = vlaneseq
        %v8633 = vshrl.u32 %v8632, 7
        %v8634 = vsub.s32 %v8631, %v8633
        %v8635 = vrot.slane %v8627, %v8634
        %v8637 = vunpack.c.l.s4 1934713408
        %v8638 = vunpack.c.0.s8 %v8637
        %v8639 = vlaneseq
        %v8640 = vshrl.u32 %v8639, 7
        %v8641 = vsub.s32 %v8638, %v8640
        %v8642 = vrot.slane %v8628, %v8641
        %v8643 = vcombine.high %v8635, 0
        %v8644 = vcombine.high %v8642, 0
        %v8645 = vpack.c.bf16 %v7574, %v7574
        %v8647 = vunpack.c.l.s4 1983009808
        %v8648 = vunpack.c.0.s8 %v8647
        %v8649 = vlaneseq
        %v8650 = vshrl.u32 %v8649, 7
        %v8651 = vsub.s32 %v8648, %v8650
        %v8652 = vrot.slane %v8645, %v8651
        %v8653 = vpack.c.bf16 %v7666, %v7666
        %v8655 = vunpack.c.l.s4 1983009808
        %v8656 = vunpack.c.0.s8 %v8655
        %v8657 = vlaneseq
        %v8658 = vshrl.u32 %v8657, 7
        %v8659 = vsub.s32 %v8656, %v8658
        %v8660 = vrot.slane %v8653, %v8659
        %v8661 = vcombine.low %v8652, %v8660
        %v8662 = vcombine.high %v8652, %v8660
        %v8664 = vunpack.c.l.s4 1934713408
        %v8665 = vunpack.c.0.s8 %v8664
        %v8666 = vlaneseq
        %v8667 = vshrl.u32 %v8666, 7
        %v8668 = vsub.s32 %v8665, %v8667
        %v8669 = vrot.slane %v8661, %v8668
        %v8671 = vunpack.c.l.s4 1934713408
        %v8672 = vunpack.c.0.s8 %v8671
        %v8673 = vlaneseq
        %v8674 = vshrl.u32 %v8673, 7
        %v8675 = vsub.s32 %v8672, %v8674
        %v8676 = vrot.slane %v8662, %v8675
        %v8677 = vcombine.high %v8669, 0
        %v8678 = vcombine.high %v8676, 0
        %v8679 = vpack.c.bf16 %v7712, %v7712
        %v8681 = vunpack.c.l.s4 1983009808
        %v8682 = vunpack.c.0.s8 %v8681
        %v8683 = vlaneseq
        %v8684 = vshrl.u32 %v8683, 7
        %v8685 = vsub.s32 %v8682, %v8684
        %v8686 = vrot.slane %v8679, %v8685
        %v8687 = vpack.c.bf16 %v7804, %v7804
        %v8689 = vunpack.c.l.s4 1983009808
        %v8690 = vunpack.c.0.s8 %v8689
        %v8691 = vlaneseq
        %v8692 = vshrl.u32 %v8691, 7
        %v8693 = vsub.s32 %v8690, %v8692
        %v8694 = vrot.slane %v8687, %v8693
        %v8695 = vcombine.low %v8686, %v8694
        %v8696 = vcombine.high %v8686, %v8694
        %v8698 = vunpack.c.l.s4 1934713408
        %v8699 = vunpack.c.0.s8 %v8698
        %v8700 = vlaneseq
        %v8701 = vshrl.u32 %v8700, 7
        %v8702 = vsub.s32 %v8699, %v8701
        %v8703 = vrot.slane %v8695, %v8702
        %v8705 = vunpack.c.l.s4 1934713408
        %v8706 = vunpack.c.0.s8 %v8705
        %v8707 = vlaneseq
        %v8708 = vshrl.u32 %v8707, 7
        %v8709 = vsub.s32 %v8706, %v8708
        %v8710 = vrot.slane %v8696, %v8709
        %v8711 = vcombine.high %v8703, 0
        %v8712 = vcombine.high %v8710, 0
        %v8713 = vpack.c.bf16 %v7758, %v7758
        %v8715 = vunpack.c.l.s4 1983009808
        %v8716 = vunpack.c.0.s8 %v8715
        %v8717 = vlaneseq
        %v8718 = vshrl.u32 %v8717, 7
        %v8719 = vsub.s32 %v8716, %v8718
        %v8720 = vrot.slane %v8713, %v8719
        %v8721 = vpack.c.bf16 %v7850, %v7850
        %v8723 = vunpack.c.l.s4 1983009808
        %v8724 = vunpack.c.0.s8 %v8723
        %v8725 = vlaneseq
        %v8726 = vshrl.u32 %v8725, 7
        %v8727 = vsub.s32 %v8724, %v8726
        %v8728 = vrot.slane %v8721, %v8727
        %v8729 = vcombine.low %v8720, %v8728
        %v8730 = vcombine.high %v8720, %v8728
        %v8732 = vunpack.c.l.s4 1934713408
        %v8733 = vunpack.c.0.s8 %v8732
        %v8734 = vlaneseq
        %v8735 = vshrl.u32 %v8734, 7
        %v8736 = vsub.s32 %v8733, %v8735
        %v8737 = vrot.slane %v8729, %v8736
        %v8739 = vunpack.c.l.s4 1934713408
        %v8740 = vunpack.c.0.s8 %v8739
        %v8741 = vlaneseq
        %v8742 = vshrl.u32 %v8741, 7
        %v8743 = vsub.s32 %v8740, %v8742
        %v8744 = vrot.slane %v8730, %v8743
        %v8745 = vcombine.high %v8737, 0
        %v8746 = vcombine.high %v8744, 0
        %v8747 = vpack.c.bf16 %v7896, %v7896
        %v8749 = vunpack.c.l.s4 1983009808
        %v8750 = vunpack.c.0.s8 %v8749
        %v8751 = vlaneseq
        %v8752 = vshrl.u32 %v8751, 7
        %v8753 = vsub.s32 %v8750, %v8752
        %v8754 = vrot.slane %v8747, %v8753
        %v8755 = vpack.c.bf16 %v7988, %v7988
        %v8757 = vunpack.c.l.s4 1983009808
        %v8758 = vunpack.c.0.s8 %v8757
        %v8759 = vlaneseq
        %v8760 = vshrl.u32 %v8759, 7
        %v8761 = vsub.s32 %v8758, %v8760
        %v8762 = vrot.slane %v8755, %v8761
        %v8763 = vcombine.low %v8754, %v8762
        %v8764 = vcombine.high %v8754, %v8762
        %v8766 = vunpack.c.l.s4 1934713408
        %v8767 = vunpack.c.0.s8 %v8766
        %v8768 = vlaneseq
        %v8769 = vshrl.u32 %v8768, 7
        %v8770 = vsub.s32 %v8767, %v8769
        %v8771 = vrot.slane %v8763, %v8770
        %v8773 = vunpack.c.l.s4 1934713408
        %v8774 = vunpack.c.0.s8 %v8773
        %v8775 = vlaneseq
        %v8776 = vshrl.u32 %v8775, 7
        %v8777 = vsub.s32 %v8774, %v8776
        %v8778 = vrot.slane %v8764, %v8777
        %v8779 = vcombine.high %v8771, 0
        %v8780 = vcombine.high %v8778, 0
        %v8781 = vpack.c.bf16 %v7942, %v7942
        %v8783 = vunpack.c.l.s4 1983009808
        %v8784 = vunpack.c.0.s8 %v8783
        %v8785 = vlaneseq
        %v8786 = vshrl.u32 %v8785, 7
        %v8787 = vsub.s32 %v8784, %v8786
        %v8788 = vrot.slane %v8781, %v8787
        %v8789 = vpack.c.bf16 %v8034, %v8034
        %v8791 = vunpack.c.l.s4 1983009808
        %v8792 = vunpack.c.0.s8 %v8791
        %v8793 = vlaneseq
        %v8794 = vshrl.u32 %v8793, 7
        %v8795 = vsub.s32 %v8792, %v8794
        %v8796 = vrot.slane %v8789, %v8795
        %v8797 = vcombine.low %v8788, %v8796
        %v8798 = vcombine.high %v8788, %v8796
        %v8800 = vunpack.c.l.s4 1934713408
        %v8801 = vunpack.c.0.s8 %v8800
        %v8802 = vlaneseq
        %v8803 = vshrl.u32 %v8802, 7
        %v8804 = vsub.s32 %v8801, %v8803
        %v8805 = vrot.slane %v8797, %v8804
        %v8807 = vunpack.c.l.s4 1934713408
        %v8808 = vunpack.c.0.s8 %v8807
        %v8809 = vlaneseq
        %v8810 = vshrl.u32 %v8809, 7
        %v8811 = vsub.s32 %v8808, %v8810
        %v8812 = vrot.slane %v8798, %v8811
        %v8813 = vcombine.high %v8805, 0
        %v8814 = vcombine.high %v8812, 0
        %v8815 = vpack.c.bf16 %v8080, %v8080
        %v8817 = vunpack.c.l.s4 1983009808
        %v8818 = vunpack.c.0.s8 %v8817
        %v8819 = vlaneseq
        %v8820 = vshrl.u32 %v8819, 7
        %v8821 = vsub.s32 %v8818, %v8820
        %v8822 = vrot.slane %v8815, %v8821
        %v8823 = vpack.c.bf16 %v8172, %v8172
        %v8825 = vunpack.c.l.s4 1983009808
        %v8826 = vunpack.c.0.s8 %v8825
        %v8827 = vlaneseq
        %v8828 = vshrl.u32 %v8827, 7
        %v8829 = vsub.s32 %v8826, %v8828
        %v8830 = vrot.slane %v8823, %v8829
        %v8831 = vcombine.low %v8822, %v8830
        %v8832 = vcombine.high %v8822, %v8830
        %v8834 = vunpack.c.l.s4 1934713408
        %v8835 = vunpack.c.0.s8 %v8834
        %v8836 = vlaneseq
        %v8837 = vshrl.u32 %v8836, 7
        %v8838 = vsub.s32 %v8835, %v8837
        %v8839 = vrot.slane %v8831, %v8838
        %v8841 = vunpack.c.l.s4 1934713408
        %v8842 = vunpack.c.0.s8 %v8841
        %v8843 = vlaneseq
        %v8844 = vshrl.u32 %v8843, 7
        %v8845 = vsub.s32 %v8842, %v8844
        %v8846 = vrot.slane %v8832, %v8845
        %v8847 = vcombine.high %v8839, 0
        %v8848 = vcombine.high %v8846, 0
        %v8849 = vpack.c.bf16 %v8126, %v8126
        %v8851 = vunpack.c.l.s4 1983009808
        %v8852 = vunpack.c.0.s8 %v8851
        %v8853 = vlaneseq
        %v8854 = vshrl.u32 %v8853, 7
        %v8855 = vsub.s32 %v8852, %v8854
        %v8856 = vrot.slane %v8849, %v8855
        %v8857 = vpack.c.bf16 %v8218, %v8218
        %v8859 = vunpack.c.l.s4 1983009808
        %v8860 = vunpack.c.0.s8 %v8859
        %v8861 = vlaneseq
        %v8862 = vshrl.u32 %v8861, 7
        %v8863 = vsub.s32 %v8860, %v8862
        %v8864 = vrot.slane %v8857, %v8863
        %v8865 = vcombine.low %v8856, %v8864
        %v8866 = vcombine.high %v8856, %v8864
        %v8868 = vunpack.c.l.s4 1934713408
        %v8869 = vunpack.c.0.s8 %v8868
        %v8870 = vlaneseq
        %v8871 = vshrl.u32 %v8870, 7
        %v8872 = vsub.s32 %v8869, %v8871
        %v8873 = vrot.slane %v8865, %v8872
        %v8875 = vunpack.c.l.s4 1934713408
        %v8876 = vunpack.c.0.s8 %v8875
        %v8877 = vlaneseq
        %v8878 = vshrl.u32 %v8877, 7
        %v8879 = vsub.s32 %v8876, %v8878
        %v8880 = vrot.slane %v8866, %v8879
        %v8881 = vcombine.high %v8873, 0
        %v8882 = vcombine.high %v8880, 0
        %v8883 = vpack.c.bf16 %v8264, %v8264
        %v8885 = vunpack.c.l.s4 1983009808
        %v8886 = vunpack.c.0.s8 %v8885
        %v8887 = vlaneseq
        %v8888 = vshrl.u32 %v8887, 7
        %v8889 = vsub.s32 %v8886, %v8888
        %v8890 = vrot.slane %v8883, %v8889
        %v8891 = vpack.c.bf16 %v8356, %v8356
        %v8893 = vunpack.c.l.s4 1983009808
        %v8894 = vunpack.c.0.s8 %v8893
        %v8895 = vlaneseq
        %v8896 = vshrl.u32 %v8895, 7
        %v8897 = vsub.s32 %v8894, %v8896
        %v8898 = vrot.slane %v8891, %v8897
        %v8899 = vcombine.low %v8890, %v8898
        %v8900 = vcombine.high %v8890, %v8898
        %v8902 = vunpack.c.l.s4 1934713408
        %v8903 = vunpack.c.0.s8 %v8902
        %v8904 = vlaneseq
        %v8905 = vshrl.u32 %v8904, 7
        %v8906 = vsub.s32 %v8903, %v8905
        %v8907 = vrot.slane %v8899, %v8906
        %v8909 = vunpack.c.l.s4 1934713408
        %v8910 = vunpack.c.0.s8 %v8909
        %v8911 = vlaneseq
        %v8912 = vshrl.u32 %v8911, 7
        %v8913 = vsub.s32 %v8910, %v8912
        %v8914 = vrot.slane %v8900, %v8913
        %v8915 = vcombine.high %v8907, 0
        %v8916 = vcombine.high %v8914, 0
        %v8917 = vpack.c.bf16 %v8310, %v8310
        %v8919 = vunpack.c.l.s4 1983009808
        %v8920 = vunpack.c.0.s8 %v8919
        %v8921 = vlaneseq
        %v8922 = vshrl.u32 %v8921, 7
        %v8923 = vsub.s32 %v8920, %v8922
        %v8924 = vrot.slane %v8917, %v8923
        %v8925 = vpack.c.bf16 %v8402, %v8402
        %v8927 = vunpack.c.l.s4 1983009808
        %v8928 = vunpack.c.0.s8 %v8927
        %v8929 = vlaneseq
        %v8930 = vshrl.u32 %v8929, 7
        %v8931 = vsub.s32 %v8928, %v8930
        %v8932 = vrot.slane %v8925, %v8931
        %v8933 = vcombine.low %v8924, %v8932
        %v8934 = vcombine.high %v8924, %v8932
        %v8936 = vunpack.c.l.s4 1934713408
        %v8937 = vunpack.c.0.s8 %v8936
        %v8938 = vlaneseq
        %v8939 = vshrl.u32 %v8938, 7
        %v8940 = vsub.s32 %v8937, %v8939
        %v8941 = vrot.slane %v8933, %v8940
        %v8943 = vunpack.c.l.s4 1934713408
        %v8944 = vunpack.c.0.s8 %v8943
        %v8945 = vlaneseq
        %v8946 = vshrl.u32 %v8945, 7
        %v8947 = vsub.s32 %v8944, %v8946
        %v8948 = vrot.slane %v8934, %v8947
        %v8949 = vcombine.high %v8941, 0
        %v8950 = vcombine.high %v8948, 0
        %v8953 = vpack.i.b16 %v8465, %v8431
        %v8955 = vshrl.u32 %v8431, 16
        %v8956 = vshrl.u32 %v8465, 16
        %v8957 = vpack.i.b16 %v8956, %v8955
        %v8961 = vpack.i.b16 %v8473, %v8439
        %v8963 = vshrl.u32 %v8439, 16
        %v8964 = vshrl.u32 %v8473, 16
        %v8965 = vpack.i.b16 %v8964, %v8963
        %v8969 = vpack.i.b16 %v8472, %v8438
        %v8971 = vshrl.u32 %v8438, 16
        %v8972 = vshrl.u32 %v8472, 16
        %v8973 = vpack.i.b16 %v8972, %v8971
        %v8977 = vpack.i.b16 %v8474, %v8440
        %v8979 = vshrl.u32 %v8440, 16
        %v8980 = vshrl.u32 %v8474, 16
        %v8981 = vpack.i.b16 %v8980, %v8979
        %v8985 = vpack.i.b16 %v8533, %v8499
        %v8987 = vshrl.u32 %v8499, 16
        %v8988 = vshrl.u32 %v8533, 16
        %v8989 = vpack.i.b16 %v8988, %v8987
        %v8993 = vpack.i.b16 %v8541, %v8507
        %v8995 = vshrl.u32 %v8507, 16
        %v8996 = vshrl.u32 %v8541, 16
        %v8997 = vpack.i.b16 %v8996, %v8995
        %v9001 = vpack.i.b16 %v8540, %v8506
        %v9003 = vshrl.u32 %v8506, 16
        %v9004 = vshrl.u32 %v8540, 16
        %v9005 = vpack.i.b16 %v9004, %v9003
        %v9009 = vpack.i.b16 %v8542, %v8508
        %v9011 = vshrl.u32 %v8508, 16
        %v9012 = vshrl.u32 %v8542, 16
        %v9013 = vpack.i.b16 %v9012, %v9011
        %v9017 = vpack.i.b16 %v8601, %v8567
        %v9019 = vshrl.u32 %v8567, 16
        %v9020 = vshrl.u32 %v8601, 16
        %v9021 = vpack.i.b16 %v9020, %v9019
        %v9025 = vpack.i.b16 %v8609, %v8575
        %v9027 = vshrl.u32 %v8575, 16
        %v9028 = vshrl.u32 %v8609, 16
        %v9029 = vpack.i.b16 %v9028, %v9027
        %v9033 = vpack.i.b16 %v8608, %v8574
        %v9035 = vshrl.u32 %v8574, 16
        %v9036 = vshrl.u32 %v8608, 16
        %v9037 = vpack.i.b16 %v9036, %v9035
        %v9041 = vpack.i.b16 %v8610, %v8576
        %v9043 = vshrl.u32 %v8576, 16
        %v9044 = vshrl.u32 %v8610, 16
        %v9045 = vpack.i.b16 %v9044, %v9043
        %v9049 = vpack.i.b16 %v8669, %v8635
        %v9051 = vshrl.u32 %v8635, 16
        %v9052 = vshrl.u32 %v8669, 16
        %v9053 = vpack.i.b16 %v9052, %v9051
        %v9057 = vpack.i.b16 %v8677, %v8643
        %v9059 = vshrl.u32 %v8643, 16
        %v9060 = vshrl.u32 %v8677, 16
        %v9061 = vpack.i.b16 %v9060, %v9059
        %v9065 = vpack.i.b16 %v8676, %v8642
        %v9067 = vshrl.u32 %v8642, 16
        %v9068 = vshrl.u32 %v8676, 16
        %v9069 = vpack.i.b16 %v9068, %v9067
        %v9073 = vpack.i.b16 %v8678, %v8644
        %v9075 = vshrl.u32 %v8644, 16
        %v9076 = vshrl.u32 %v8678, 16
        %v9077 = vpack.i.b16 %v9076, %v9075
        %v9081 = vpack.i.b16 %v8737, %v8703
        %v9083 = vshrl.u32 %v8703, 16
        %v9084 = vshrl.u32 %v8737, 16
        %v9085 = vpack.i.b16 %v9084, %v9083
        %v9089 = vpack.i.b16 %v8745, %v8711
        %v9091 = vshrl.u32 %v8711, 16
        %v9092 = vshrl.u32 %v8745, 16
        %v9093 = vpack.i.b16 %v9092, %v9091
        %v9097 = vpack.i.b16 %v8744, %v8710
        %v9099 = vshrl.u32 %v8710, 16
        %v9100 = vshrl.u32 %v8744, 16
        %v9101 = vpack.i.b16 %v9100, %v9099
        %v9105 = vpack.i.b16 %v8746, %v8712
        %v9107 = vshrl.u32 %v8712, 16
        %v9108 = vshrl.u32 %v8746, 16
        %v9109 = vpack.i.b16 %v9108, %v9107
        %v9113 = vpack.i.b16 %v8805, %v8771
        %v9115 = vshrl.u32 %v8771, 16
        %v9116 = vshrl.u32 %v8805, 16
        %v9117 = vpack.i.b16 %v9116, %v9115
        %v9121 = vpack.i.b16 %v8813, %v8779
        %v9123 = vshrl.u32 %v8779, 16
        %v9124 = vshrl.u32 %v8813, 16
        %v9125 = vpack.i.b16 %v9124, %v9123
        %v9129 = vpack.i.b16 %v8812, %v8778
        %v9131 = vshrl.u32 %v8778, 16
        %v9132 = vshrl.u32 %v8812, 16
        %v9133 = vpack.i.b16 %v9132, %v9131
        %v9137 = vpack.i.b16 %v8814, %v8780
        %v9139 = vshrl.u32 %v8780, 16
        %v9140 = vshrl.u32 %v8814, 16
        %v9141 = vpack.i.b16 %v9140, %v9139
        %v9145 = vpack.i.b16 %v8873, %v8839
        %v9147 = vshrl.u32 %v8839, 16
        %v9148 = vshrl.u32 %v8873, 16
        %v9149 = vpack.i.b16 %v9148, %v9147
        %v9153 = vpack.i.b16 %v8881, %v8847
        %v9155 = vshrl.u32 %v8847, 16
        %v9156 = vshrl.u32 %v8881, 16
        %v9157 = vpack.i.b16 %v9156, %v9155
        %v9161 = vpack.i.b16 %v8880, %v8846
        %v9163 = vshrl.u32 %v8846, 16
        %v9164 = vshrl.u32 %v8880, 16
        %v9165 = vpack.i.b16 %v9164, %v9163
        %v9169 = vpack.i.b16 %v8882, %v8848
        %v9171 = vshrl.u32 %v8848, 16
        %v9172 = vshrl.u32 %v8882, 16
        %v9173 = vpack.i.b16 %v9172, %v9171
        %v9177 = vpack.i.b16 %v8941, %v8907
        %v9179 = vshrl.u32 %v8907, 16
        %v9180 = vshrl.u32 %v8941, 16
        %v9181 = vpack.i.b16 %v9180, %v9179
        %v9185 = vpack.i.b16 %v8949, %v8915
        %v9187 = vshrl.u32 %v8915, 16
        %v9188 = vshrl.u32 %v8949, 16
        %v9189 = vpack.i.b16 %v9188, %v9187
        %v9193 = vpack.i.b16 %v8948, %v8914
        %v9195 = vshrl.u32 %v8914, 16
        %v9196 = vshrl.u32 %v8948, 16
        %v9197 = vpack.i.b16 %v9196, %v9195
        %v9201 = vpack.i.b16 %v8950, %v8916
        %v9203 = vshrl.u32 %v8916, 16
        %v9204 = vshrl.u32 %v8950, 16
        %v9205 = vpack.i.b16 %v9204, %v9203
        %v9207 = vcombine.low %v8953, %v8969
        %v9209 = vunpack.c.l.s4 1983009808
        %v9210 = vunpack.c.0.s8 %v9209
        %v9211 = vlaneseq
        %v9212 = vshrl.u32 %v9211, 7
        %v9213 = vsub.s32 %v9210, %v9212
        %v9214 = vrot.slane %v9207, %v9213
        %v9215 = vcombine.low %v8961, %v8977
        %v9217 = vunpack.c.l.s4 1983009808
        %v9218 = vunpack.c.0.s8 %v9217
        %v9219 = vlaneseq
        %v9220 = vshrl.u32 %v9219, 7
        %v9221 = vsub.s32 %v9218, %v9220
        %v9222 = vrot.slane %v9215, %v9221
        %v9223 = vcombine.low %v8985, %v9001
        %v9225 = vunpack.c.l.s4 1983009808
        %v9226 = vunpack.c.0.s8 %v9225
        %v9227 = vlaneseq
        %v9228 = vshrl.u32 %v9227, 7
        %v9229 = vsub.s32 %v9226, %v9228
        %v9230 = vrot.slane %v9223, %v9229
        %v9231 = vcombine.low %v8993, %v9009
        %v9233 = vunpack.c.l.s4 1983009808
        %v9234 = vunpack.c.0.s8 %v9233
        %v9235 = vlaneseq
        %v9236 = vshrl.u32 %v9235, 7
        %v9237 = vsub.s32 %v9234, %v9236
        %v9238 = vrot.slane %v9231, %v9237
        %v9239 = vcombine.low %v9214, %v9222
        %v9241 = vunpack.c.l.s4 1934713408
        %v9242 = vunpack.c.0.s8 %v9241
        %v9243 = vlaneseq
        %v9244 = vshrl.u32 %v9243, 7
        %v9245 = vsub.s32 %v9242, %v9244
        %v9246 = vrot.slane %v9239, %v9245
        %v9247 = vcombine.low %v9230, %v9238
        %v9249 = vunpack.c.l.s4 1934713408
        %v9250 = vunpack.c.0.s8 %v9249
        %v9251 = vlaneseq
        %v9252 = vshrl.u32 %v9251, 7
        %v9253 = vsub.s32 %v9250, %v9252
        %v9254 = vrot.slane %v9247, %v9253
        %v9255 = vcombine.low %v9246, %v9254
        %v9256 = vcombine.high %v9246, %v9254
        %v9257 = vcombine.low %v8957, %v8973
        %v9259 = vunpack.c.l.s4 1983009808
        %v9260 = vunpack.c.0.s8 %v9259
        %v9261 = vlaneseq
        %v9262 = vshrl.u32 %v9261, 7
        %v9263 = vsub.s32 %v9260, %v9262
        %v9264 = vrot.slane %v9257, %v9263
        %v9265 = vcombine.low %v8965, %v8981
        %v9267 = vunpack.c.l.s4 1983009808
        %v9268 = vunpack.c.0.s8 %v9267
        %v9269 = vlaneseq
        %v9270 = vshrl.u32 %v9269, 7
        %v9271 = vsub.s32 %v9268, %v9270
        %v9272 = vrot.slane %v9265, %v9271
        %v9273 = vcombine.low %v8989, %v9005
        %v9275 = vunpack.c.l.s4 1983009808
        %v9276 = vunpack.c.0.s8 %v9275
        %v9277 = vlaneseq
        %v9278 = vshrl.u32 %v9277, 7
        %v9279 = vsub.s32 %v9276, %v9278
        %v9280 = vrot.slane %v9273, %v9279
        %v9281 = vcombine.low %v8997, %v9013
        %v9283 = vunpack.c.l.s4 1983009808
        %v9284 = vunpack.c.0.s8 %v9283
        %v9285 = vlaneseq
        %v9286 = vshrl.u32 %v9285, 7
        %v9287 = vsub.s32 %v9284, %v9286
        %v9288 = vrot.slane %v9281, %v9287
        %v9289 = vcombine.low %v9264, %v9272
        %v9291 = vunpack.c.l.s4 1934713408
        %v9292 = vunpack.c.0.s8 %v9291
        %v9293 = vlaneseq
        %v9294 = vshrl.u32 %v9293, 7
        %v9295 = vsub.s32 %v9292, %v9294
        %v9296 = vrot.slane %v9289, %v9295
        %v9297 = vcombine.low %v9280, %v9288
        %v9299 = vunpack.c.l.s4 1934713408
        %v9300 = vunpack.c.0.s8 %v9299
        %v9301 = vlaneseq
        %v9302 = vshrl.u32 %v9301, 7
        %v9303 = vsub.s32 %v9300, %v9302
        %v9304 = vrot.slane %v9297, %v9303
        %v9305 = vcombine.low %v9296, %v9304
        %v9306 = vcombine.high %v9296, %v9304
        %v9307 = vcombine.low %v9017, %v9033
        %v9309 = vunpack.c.l.s4 1983009808
        %v9310 = vunpack.c.0.s8 %v9309
        %v9311 = vlaneseq
        %v9312 = vshrl.u32 %v9311, 7
        %v9313 = vsub.s32 %v9310, %v9312
        %v9314 = vrot.slane %v9307, %v9313
        %v9315 = vcombine.low %v9025, %v9041
        %v9317 = vunpack.c.l.s4 1983009808
        %v9318 = vunpack.c.0.s8 %v9317
        %v9319 = vlaneseq
        %v9320 = vshrl.u32 %v9319, 7
        %v9321 = vsub.s32 %v9318, %v9320
        %v9322 = vrot.slane %v9315, %v9321
        %v9323 = vcombine.low %v9049, %v9065
        %v9325 = vunpack.c.l.s4 1983009808
        %v9326 = vunpack.c.0.s8 %v9325
        %v9327 = vlaneseq
        %v9328 = vshrl.u32 %v9327, 7
        %v9329 = vsub.s32 %v9326, %v9328
        %v9330 = vrot.slane %v9323, %v9329
        %v9331 = vcombine.low %v9057, %v9073
        %v9333 = vunpack.c.l.s4 1983009808
        %v9334 = vunpack.c.0.s8 %v9333
        %v9335 = vlaneseq
        %v9336 = vshrl.u32 %v9335, 7
        %v9337 = vsub.s32 %v9334, %v9336
        %v9338 = vrot.slane %v9331, %v9337
        %v9339 = vcombine.low %v9314, %v9322
        %v9341 = vunpack.c.l.s4 1934713408
        %v9342 = vunpack.c.0.s8 %v9341
        %v9343 = vlaneseq
        %v9344 = vshrl.u32 %v9343, 7
        %v9345 = vsub.s32 %v9342, %v9344
        %v9346 = vrot.slane %v9339, %v9345
        %v9347 = vcombine.low %v9330, %v9338
        %v9349 = vunpack.c.l.s4 1934713408
        %v9350 = vunpack.c.0.s8 %v9349
        %v9351 = vlaneseq
        %v9352 = vshrl.u32 %v9351, 7
        %v9353 = vsub.s32 %v9350, %v9352
        %v9354 = vrot.slane %v9347, %v9353
        %v9355 = vcombine.low %v9346, %v9354
        %v9356 = vcombine.high %v9346, %v9354
        %v9357 = vcombine.low %v9021, %v9037
        %v9359 = vunpack.c.l.s4 1983009808
        %v9360 = vunpack.c.0.s8 %v9359
        %v9361 = vlaneseq
        %v9362 = vshrl.u32 %v9361, 7
        %v9363 = vsub.s32 %v9360, %v9362
        %v9364 = vrot.slane %v9357, %v9363
        %v9365 = vcombine.low %v9029, %v9045
        %v9367 = vunpack.c.l.s4 1983009808
        %v9368 = vunpack.c.0.s8 %v9367
        %v9369 = vlaneseq
        %v9370 = vshrl.u32 %v9369, 7
        %v9371 = vsub.s32 %v9368, %v9370
        %v9372 = vrot.slane %v9365, %v9371
        %v9373 = vcombine.low %v9053, %v9069
        %v9375 = vunpack.c.l.s4 1983009808
        %v9376 = vunpack.c.0.s8 %v9375
        %v9377 = vlaneseq
        %v9378 = vshrl.u32 %v9377, 7
        %v9379 = vsub.s32 %v9376, %v9378
        %v9380 = vrot.slane %v9373, %v9379
        %v9381 = vcombine.low %v9061, %v9077
        %v9383 = vunpack.c.l.s4 1983009808
        %v9384 = vunpack.c.0.s8 %v9383
        %v9385 = vlaneseq
        %v9386 = vshrl.u32 %v9385, 7
        %v9387 = vsub.s32 %v9384, %v9386
        %v9388 = vrot.slane %v9381, %v9387
        %v9389 = vcombine.low %v9364, %v9372
        %v9391 = vunpack.c.l.s4 1934713408
        %v9392 = vunpack.c.0.s8 %v9391
        %v9393 = vlaneseq
        %v9394 = vshrl.u32 %v9393, 7
        %v9395 = vsub.s32 %v9392, %v9394
        %v9396 = vrot.slane %v9389, %v9395
        %v9397 = vcombine.low %v9380, %v9388
        %v9399 = vunpack.c.l.s4 1934713408
        %v9400 = vunpack.c.0.s8 %v9399
        %v9401 = vlaneseq
        %v9402 = vshrl.u32 %v9401, 7
        %v9403 = vsub.s32 %v9400, %v9402
        %v9404 = vrot.slane %v9397, %v9403
        %v9405 = vcombine.low %v9396, %v9404
        %v9406 = vcombine.high %v9396, %v9404
        %v9407 = vcombine.low %v9081, %v9097
        %v9409 = vunpack.c.l.s4 1983009808
        %v9410 = vunpack.c.0.s8 %v9409
        %v9411 = vlaneseq
        %v9412 = vshrl.u32 %v9411, 7
        %v9413 = vsub.s32 %v9410, %v9412
        %v9414 = vrot.slane %v9407, %v9413
        %v9415 = vcombine.low %v9089, %v9105
        %v9417 = vunpack.c.l.s4 1983009808
        %v9418 = vunpack.c.0.s8 %v9417
        %v9419 = vlaneseq
        %v9420 = vshrl.u32 %v9419, 7
        %v9421 = vsub.s32 %v9418, %v9420
        %v9422 = vrot.slane %v9415, %v9421
        %v9423 = vcombine.low %v9113, %v9129
        %v9425 = vunpack.c.l.s4 1983009808
        %v9426 = vunpack.c.0.s8 %v9425
        %v9427 = vlaneseq
        %v9428 = vshrl.u32 %v9427, 7
        %v9429 = vsub.s32 %v9426, %v9428
        %v9430 = vrot.slane %v9423, %v9429
        %v9431 = vcombine.low %v9121, %v9137
        %v9433 = vunpack.c.l.s4 1983009808
        %v9434 = vunpack.c.0.s8 %v9433
        %v9435 = vlaneseq
        %v9436 = vshrl.u32 %v9435, 7
        %v9437 = vsub.s32 %v9434, %v9436
        %v9438 = vrot.slane %v9431, %v9437
        %v9439 = vcombine.low %v9414, %v9422
        %v9441 = vunpack.c.l.s4 1934713408
        %v9442 = vunpack.c.0.s8 %v9441
        %v9443 = vlaneseq
        %v9444 = vshrl.u32 %v9443, 7
        %v9445 = vsub.s32 %v9442, %v9444
        %v9446 = vrot.slane %v9439, %v9445
        %v9447 = vcombine.low %v9430, %v9438
        %v9449 = vunpack.c.l.s4 1934713408
        %v9450 = vunpack.c.0.s8 %v9449
        %v9451 = vlaneseq
        %v9452 = vshrl.u32 %v9451, 7
        %v9453 = vsub.s32 %v9450, %v9452
        %v9454 = vrot.slane %v9447, %v9453
        %v9455 = vcombine.low %v9446, %v9454
        %v9456 = vcombine.high %v9446, %v9454
        %v9457 = vcombine.low %v9085, %v9101
        %v9459 = vunpack.c.l.s4 1983009808
        %v9460 = vunpack.c.0.s8 %v9459
        %v9461 = vlaneseq
        %v9462 = vshrl.u32 %v9461, 7
        %v9463 = vsub.s32 %v9460, %v9462
        %v9464 = vrot.slane %v9457, %v9463
        %v9465 = vcombine.low %v9093, %v9109
        %v9467 = vunpack.c.l.s4 1983009808
        %v9468 = vunpack.c.0.s8 %v9467
        %v9469 = vlaneseq
        %v9470 = vshrl.u32 %v9469, 7
        %v9471 = vsub.s32 %v9468, %v9470
        %v9472 = vrot.slane %v9465, %v9471
        %v9473 = vcombine.low %v9117, %v9133
        %v9475 = vunpack.c.l.s4 1983009808
        %v9476 = vunpack.c.0.s8 %v9475
        %v9477 = vlaneseq
        %v9478 = vshrl.u32 %v9477, 7
        %v9479 = vsub.s32 %v9476, %v9478
        %v9480 = vrot.slane %v9473, %v9479
        %v9481 = vcombine.low %v9125, %v9141
        %v9483 = vunpack.c.l.s4 1983009808
        %v9484 = vunpack.c.0.s8 %v9483
        %v9485 = vlaneseq
        %v9486 = vshrl.u32 %v9485, 7
        %v9487 = vsub.s32 %v9484, %v9486
        %v9488 = vrot.slane %v9481, %v9487
        %v9489 = vcombine.low %v9464, %v9472
        %v9491 = vunpack.c.l.s4 1934713408
        %v9492 = vunpack.c.0.s8 %v9491
        %v9493 = vlaneseq
        %v9494 = vshrl.u32 %v9493, 7
        %v9495 = vsub.s32 %v9492, %v9494
        %v9496 = vrot.slane %v9489, %v9495
        %v9497 = vcombine.low %v9480, %v9488
        %v9499 = vunpack.c.l.s4 1934713408
        %v9500 = vunpack.c.0.s8 %v9499
        %v9501 = vlaneseq
        %v9502 = vshrl.u32 %v9501, 7
        %v9503 = vsub.s32 %v9500, %v9502
        %v9504 = vrot.slane %v9497, %v9503
        %v9505 = vcombine.low %v9496, %v9504
        %v9506 = vcombine.high %v9496, %v9504
        %v9507 = vcombine.low %v9145, %v9161
        %v9509 = vunpack.c.l.s4 1983009808
        %v9510 = vunpack.c.0.s8 %v9509
        %v9511 = vlaneseq
        %v9512 = vshrl.u32 %v9511, 7
        %v9513 = vsub.s32 %v9510, %v9512
        %v9514 = vrot.slane %v9507, %v9513
        %v9515 = vcombine.low %v9153, %v9169
        %v9517 = vunpack.c.l.s4 1983009808
        %v9518 = vunpack.c.0.s8 %v9517
        %v9519 = vlaneseq
        %v9520 = vshrl.u32 %v9519, 7
        %v9521 = vsub.s32 %v9518, %v9520
        %v9522 = vrot.slane %v9515, %v9521
        %v9523 = vcombine.low %v9177, %v9193
        %v9525 = vunpack.c.l.s4 1983009808
        %v9526 = vunpack.c.0.s8 %v9525
        %v9527 = vlaneseq
        %v9528 = vshrl.u32 %v9527, 7
        %v9529 = vsub.s32 %v9526, %v9528
        %v9530 = vrot.slane %v9523, %v9529
        %v9531 = vcombine.low %v9185, %v9201
        %v9533 = vunpack.c.l.s4 1983009808
        %v9534 = vunpack.c.0.s8 %v9533
        %v9535 = vlaneseq
        %v9536 = vshrl.u32 %v9535, 7
        %v9537 = vsub.s32 %v9534, %v9536
        %v9538 = vrot.slane %v9531, %v9537
        %v9539 = vcombine.low %v9514, %v9522
        %v9541 = vunpack.c.l.s4 1934713408
        %v9542 = vunpack.c.0.s8 %v9541
        %v9543 = vlaneseq
        %v9544 = vshrl.u32 %v9543, 7
        %v9545 = vsub.s32 %v9542, %v9544
        %v9546 = vrot.slane %v9539, %v9545
        %v9547 = vcombine.low %v9530, %v9538
        %v9549 = vunpack.c.l.s4 1934713408
        %v9550 = vunpack.c.0.s8 %v9549
        %v9551 = vlaneseq
        %v9552 = vshrl.u32 %v9551, 7
        %v9553 = vsub.s32 %v9550, %v9552
        %v9554 = vrot.slane %v9547, %v9553
        %v9555 = vcombine.low %v9546, %v9554
        %v9556 = vcombine.high %v9546, %v9554
        %v9557 = vcombine.low %v9149, %v9165
        %v9559 = vunpack.c.l.s4 1983009808
        %v9560 = vunpack.c.0.s8 %v9559
        %v9561 = vlaneseq
        %v9562 = vshrl.u32 %v9561, 7
        %v9563 = vsub.s32 %v9560, %v9562
        %v9564 = vrot.slane %v9557, %v9563
        %v9565 = vcombine.low %v9157, %v9173
        %v9567 = vunpack.c.l.s4 1983009808
        %v9568 = vunpack.c.0.s8 %v9567
        %v9569 = vlaneseq
        %v9570 = vshrl.u32 %v9569, 7
        %v9571 = vsub.s32 %v9568, %v9570
        %v9572 = vrot.slane %v9565, %v9571
        %v9573 = vcombine.low %v9181, %v9197
        %v9575 = vunpack.c.l.s4 1983009808
        %v9576 = vunpack.c.0.s8 %v9575
        %v9577 = vlaneseq
        %v9578 = vshrl.u32 %v9577, 7
        %v9579 = vsub.s32 %v9576, %v9578
        %v9580 = vrot.slane %v9573, %v9579
        %v9581 = vcombine.low %v9189, %v9205
        %v9583 = vunpack.c.l.s4 1983009808
        %v9584 = vunpack.c.0.s8 %v9583
        %v9585 = vlaneseq
        %v9586 = vshrl.u32 %v9585, 7
        %v9587 = vsub.s32 %v9584, %v9586
        %v9588 = vrot.slane %v9581, %v9587
        %v9589 = vcombine.low %v9564, %v9572
        %v9591 = vunpack.c.l.s4 1934713408
        %v9592 = vunpack.c.0.s8 %v9591
        %v9593 = vlaneseq
        %v9594 = vshrl.u32 %v9593, 7
        %v9595 = vsub.s32 %v9592, %v9594
        %v9596 = vrot.slane %v9589, %v9595
        %v9597 = vcombine.low %v9580, %v9588
        %v9599 = vunpack.c.l.s4 1934713408
        %v9600 = vunpack.c.0.s8 %v9599
        %v9601 = vlaneseq
        %v9602 = vshrl.u32 %v9601, 7
        %v9603 = vsub.s32 %v9600, %v9602
        %v9604 = vrot.slane %v9597, %v9603
        %v9605 = vcombine.low %v9596, %v9604
        %v9606 = vcombine.high %v9596, %v9604
        %v9609 = vpack.i.b16 %v9305, %v9255
        %v9610 = vshrl.u32 %v9255, 16
        %v9611 = vshrl.u32 %v9305, 16
        %v9612 = vpack.i.b16 %v9611, %v9610
        %v9615 = vpack.i.b16 %v9306, %v9256
        %v9616 = vshrl.u32 %v9256, 16
        %v9617 = vshrl.u32 %v9306, 16
        %v9618 = vpack.i.b16 %v9617, %v9616
        %v9621 = vpack.i.b16 %v9405, %v9355
        %v9622 = vshrl.u32 %v9355, 16
        %v9623 = vshrl.u32 %v9405, 16
        %v9624 = vpack.i.b16 %v9623, %v9622
        %v9627 = vpack.i.b16 %v9406, %v9356
        %v9628 = vshrl.u32 %v9356, 16
        %v9629 = vshrl.u32 %v9406, 16
        %v9630 = vpack.i.b16 %v9629, %v9628
        %v9633 = vpack.i.b16 %v9505, %v9455
        %v9634 = vshrl.u32 %v9455, 16
        %v9635 = vshrl.u32 %v9505, 16
        %v9636 = vpack.i.b16 %v9635, %v9634
        %v9639 = vpack.i.b16 %v9506, %v9456
        %v9640 = vshrl.u32 %v9456, 16
        %v9641 = vshrl.u32 %v9506, 16
        %v9642 = vpack.i.b16 %v9641, %v9640
        %v9645 = vpack.i.b16 %v9605, %v9555
        %v9646 = vshrl.u32 %v9555, 16
        %v9647 = vshrl.u32 %v9605, 16
        %v9648 = vpack.i.b16 %v9647, %v9646
        %v9651 = vpack.i.b16 %v9606, %v9556
        %v9652 = vshrl.u32 %v9556, 16
        %v9653 = vshrl.u32 %v9606, 16
        %v9654 = vpack.i.b16 %v9653, %v9652
        %9655 = vrot.lane.b32.xlu0 %v9612, 32
        %v9656 = vpop.permute.xlu0 %9655
        %9657 = vrot.lane.b32.xlu0 %v9624, 32
        %v9658 = vpop.permute.xlu0 %9657
        %9659 = vrot.lane.b32.xlu0 %v9636, 32
        %v9660 = vpop.permute.xlu0 %9659
        %9661 = vrot.lane.b32.xlu0 %v9648, 32
        %v9662 = vpop.permute.xlu0 %9661
        %9663 = vrot.lane.b32.xlu0 %v9615, 64
        %v9664 = vpop.permute.xlu0 %9663
        %9665 = vrot.lane.b32.xlu0 %v9627, 64
        %v9666 = vpop.permute.xlu0 %9665
        %9667 = vrot.lane.b32.xlu0 %v9639, 64
        %v9668 = vpop.permute.xlu0 %9667
        %9669 = vrot.lane.b32.xlu0 %v9651, 64
        %v9670 = vpop.permute.xlu0 %9669
        %9671 = vrot.lane.b32.xlu0 %v9618, 96
        %v9672 = vpop.permute.xlu0 %9671
        %9673 = vrot.lane.b32.xlu0 %v9630, 96
        %v9674 = vpop.permute.xlu0 %9673
        %9675 = vrot.lane.b32.xlu0 %v9642, 96
        %v9676 = vpop.permute.xlu0 %9675
        %9677 = vrot.lane.b32.xlu0 %v9654, 96
        %v9678 = vpop.permute.xlu0 %9677
        %v9681 = vsel %vm5039, %v9609, %v9656
        %v9684 = vsel %vm5039, %v9621, %v9658
        %v9687 = vsel %vm5039, %v9633, %v9660
        %v9690 = vsel %vm5039, %v9645, %v9662
        %vm9691 = vcmask 523264
        %v9693 = vsel %vm9691, %v9681, %v9664
        %v9695 = vsel %vm9691, %v9684, %v9666
        %v9697 = vsel %vm9691, %v9687, %v9668
        %v9699 = vsel %vm9691, %v9690, %v9670
        %vm9700 = vcmask 785408
        %v9702 = vsel %vm9700, %v9693, %v9672
        %v9705 = vsel %vm9700, %v9695, %v9674
        %v9708 = vsel %vm9700, %v9697, %v9676
        %v9711 = vsel %vm9700, %v9699, %v9678
        %v9713 = vld [vmem:[%s459] sm:$0xf]
        %v9714 = vld [vmem:[%s459 + $0x4] sm:$0xf]
        %v9715 = vld [vmem:[%s459 + $0x8] sm:$0xf]
        %v9716 = vld [vmem:[%s459 + $0xc] sm:$0xf]
        %v9717 = vld [vmem:[%s459 + $0x10] sm:$0xf]
        %v9718 = vld [vmem:[%s459 + $0x14] sm:$0xf]
        %v9719 = vld [vmem:[%s459 + $0x18] sm:$0xf]
        %v9720 = vld [vmem:[%s459 + $0x1c] sm:$0xf]
        %v9721 = vld [vmem:[%s459 + $0x20] sm:$0xf]
        %v9722 = vld [vmem:[%s459 + $0x24] sm:$0xf]
        %v9723 = vld [vmem:[%s459 + $0x28] sm:$0xf]
        %v9724 = vld [vmem:[%s459 + $0x2c] sm:$0xf]
        %v9725 = vld [vmem:[%s459 + $0x30] sm:$0xf]
        %v9726 = vld [vmem:[%s459 + $0x34] sm:$0xf]
        %v9727 = vld [vmem:[%s459 + $0x38] sm:$0xf]
        %v9728 = vld [vmem:[%s459 + $0x3c] sm:$0xf]
        %v9729 = vlaneseq
        %v9730 = vshrl.u32 %v9729, 7
        %v9731 = vsub.s32 3, %v9730
        %v9732 = vrot.slane %v1235, %v9731
        %v9749 = vunpack.c.l.b16 %v9713
        %v9750 = vunpack.c.l.b16 %v9714
        %v9751 = vunpack.c.l.b16 %v9715
        %v9752 = vunpack.c.l.b16 %v9716
        %v9753 = vunpack.c.l.b16 %v9717
        %v9754 = vunpack.c.l.b16 %v9718
        %v9755 = vunpack.c.l.b16 %v9719
        %v9756 = vunpack.c.l.b16 %v9720
        %v9757 = vunpack.c.l.b16 %v9721
        %v9758 = vunpack.c.l.b16 %v9722
        %v9759 = vunpack.c.l.b16 %v9723
        %v9760 = vunpack.c.l.b16 %v9724
        %v9761 = vunpack.c.l.b16 %v9725
        %v9762 = vunpack.c.l.b16 %v9726
        %v9763 = vunpack.c.l.b16 %v9727
        %v9764 = vunpack.c.l.b16 %v9728
        %v9765 = vpack.c.b16 %v9750, %v9749
        %v9766 = vpack.c.b16 %v9752, %v9751
        %v9767 = vpack.c.b16 %v9754, %v9753
        %v9768 = vpack.c.b16 %v9756, %v9755
        %v9769 = vpack.c.b16 %v9758, %v9757
        %v9770 = vpack.c.b16 %v9760, %v9759
        %v9771 = vpack.c.b16 %v9762, %v9761
        %v9772 = vpack.c.b16 %v9764, %v9763
        %9781 = vmatprep.subr.bf16.mxu0 0
        %9782 = vmatpush1.bf16.msra.mxu0 %v9765
        %9783 = vmatprep.subr.bf16.mxu0 0
        %9784 = vmatpush1.bf16.msra.mxu0 %v9766
        %9785 = vmatprep.subr.bf16.mxu0 0
        %9786 = vmatpush1.bf16.msra.mxu0 %v9767
        %9787 = vmatprep.subr.bf16.mxu0 0
        %9788 = vmatpush1.bf16.msra.mxu0 %v9768
        %9789 = vmatprep.subr.bf16.mxu0 0
        %9790 = vmatpush1.bf16.msra.mxu0 %v9769
        %9791 = vmatprep.subr.bf16.mxu0 0
        %9792 = vmatpush1.bf16.msra.mxu0 %v9770
        %9793 = vmatprep.subr.bf16.mxu0 0
        %9794 = vmatpush1.bf16.msra.mxu0 %v9771
        %9795 = vmatprep.subr.bf16.mxu0 0
        %9796 = vmatpush1.bf16.msra.mxu0 %v9772
        %9797 = vmatprep.subr.bf16.mxu0 0
        %9798 = vmatpush1.bf16.msra.mxu0 0
        %9799 = vmatprep.subr.bf16.mxu0 0
        %9800 = vmatpush1.bf16.msra.mxu0 0
        %9801 = vmatprep.subr.bf16.mxu0 0
        %9802 = vmatpush1.bf16.msra.mxu0 0
        %9803 = vmatprep.subr.bf16.mxu0 0
        %9804 = vmatpush1.bf16.msra.mxu0 0
        %9805 = vmatprep.subr.bf16.mxu0 0
        %9806 = vmatpush1.bf16.msra.mxu0 0
        %9807 = vmatprep.subr.bf16.mxu0 0
        %9808 = vmatpush1.bf16.msra.mxu0 0
        %9809 = vmatprep.subr.bf16.mxu0 0
        %9810 = vmatpush1.bf16.msra.mxu0 0
        %9811 = vmatprep.subr.bf16.mxu0 0
        %9812 = vmatpush1.bf16.msra.mxu0 0
        %9813 = vmatprep.mubr.bf16.mxu0 0
        %9814 = vmatmul.mubr.bf16.gmra.mrb[0].mxu0 %v9702
        %v9815 = vpop.f32.mrb[0].mxu0
        %v9816 = vadd.f32 %v9732, %v9815
        %v9817 = vpop.f32.mrb[0].mxu0
        %v9818 = vpop.f32.mrb[0].mxu0
        %v9819 = vadd.f32 %v9732, %v9818
        %v9820 = vpop.f32.mrb[0].mxu0
        %9821 = vmatprep.mubr.bf16.mxu0 0
        %9822 = vmatmul.mubr.bf16.gmra.mrb[0].mxu0 %v9705
        %v9823 = vpop.f32.mrb[0].mxu0
        %v9824 = vadd.f32 %v9732, %v9823
        %v9825 = vpop.f32.mrb[0].mxu0
        %v9826 = vpop.f32.mrb[0].mxu0
        %v9827 = vadd.f32 %v9732, %v9826
        %v9828 = vpop.f32.mrb[0].mxu0
        %9829 = vmatprep.mubr.bf16.mxu0 0
        %9830 = vmatmul.mubr.bf16.gmra.mrb[0].mxu0 %v9708
        %v9831 = vpop.f32.mrb[0].mxu0
        %v9832 = vadd.f32 %v9732, %v9831
        %v9833 = vpop.f32.mrb[0].mxu0
        %v9834 = vpop.f32.mrb[0].mxu0
        %v9835 = vadd.f32 %v9732, %v9834
        %v9836 = vpop.f32.mrb[0].mxu0
        %9837 = vmatprep.mubr.bf16.mxu0 0
        %9838 = vmatmul.mubr.bf16.gmra.mrb[0].mxu0 %v9711
        %v9839 = vpop.f32.mrb[0].mxu0
        %v9840 = vadd.f32 %v9732, %v9839
        %v9841 = vpop.f32.mrb[0].mxu0
        %v9842 = vpop.f32.mrb[0].mxu0
        %v9843 = vadd.f32 %v9732, %v9842
        %v9844 = vpop.f32.mrb[0].mxu0
        %9845 = vdwg.mxu0
        %v9846 = vadd.f32 %v1227, %v9816
        %v9847 = vadd.f32 %v1228, %v9819
        %v9848 = vadd.f32 %v1229, %v9824
        %v9849 = vadd.f32 %v1230, %v9827
        %v9850 = vadd.f32 %v1231, %v9832
        %v9851 = vadd.f32 %v1232, %v9835
        %v9852 = vadd.f32 %v1233, %v9840
        %v9853 = vadd.f32 %v1234, %v9843
        %9854 = vadd.xlane.f32.xlu0 %v9846
        %v9855 = vpop.xlane.xlu0 %9854
        %9856 = vadd.xlane.f32.xlu0 %v9847
        %v9857 = vpop.xlane.xlu0 %9856
        %9858 = vadd.xlane.f32.xlu0 %v9848
        %v9859 = vpop.xlane.xlu0 %9858
        %9860 = vadd.xlane.f32.xlu0 %v9849
        %v9861 = vpop.xlane.xlu0 %9860
        %9862 = vadd.xlane.f32.xlu0 %v9850
        %v9863 = vpop.xlane.xlu0 %9862
        %9864 = vadd.xlane.f32.xlu0 %v9851
        %v9865 = vpop.xlane.xlu0 %9864
        %9866 = vadd.xlane.f32.xlu0 %v9852
        %v9867 = vpop.xlane.xlu0 %9866
        %9868 = vadd.xlane.f32.xlu0 %v9853
        %v9869 = vpop.xlane.xlu0 %9868
        %v9870 = vmul.f32 %v9855, %v1254
        %v9871 = vmul.f32 %v9857, %v1254
        %v9872 = vmul.f32 %v9859, %v1254
        %v9873 = vmul.f32 %v9861, %v1254
        %v9874 = vmul.f32 %v9863, %v1254
        %v9875 = vmul.f32 %v9865, %v1254
        %v9876 = vmul.f32 %v9867, %v1254
        %v9877 = vmul.f32 %v9869, %v1254
        %v9878 = vsub.f32 %v9846, %v9870
        %v9879 = vsub.f32 %v9847, %v9871
        %v9880 = vsub.f32 %v9848, %v9872
        %v9881 = vsub.f32 %v9849, %v9873
        %v9882 = vsub.f32 %v9850, %v9874
        %v9883 = vsub.f32 %v9851, %v9875
        %v9884 = vsub.f32 %v9852, %v9876
        %v9885 = vsub.f32 %v9853, %v9877
        %v9886 = vmul.f32 %v9878, %v9878
        %v9887 = vmul.f32 %v9879, %v9879
        %v9888 = vmul.f32 %v9880, %v9880
        %v9889 = vmul.f32 %v9881, %v9881
        %v9890 = vmul.f32 %v9882, %v9882
        %v9891 = vmul.f32 %v9883, %v9883
        %v9892 = vmul.f32 %v9884, %v9884
        %v9893 = vmul.f32 %v9885, %v9885
        %9894 = vadd.xlane.f32.xlu0 %v9886
        %v9895 = vpop.xlane.xlu0 %9894
        %9896 = vadd.xlane.f32.xlu0 %v9887
        %v9897 = vpop.xlane.xlu0 %9896
        %9898 = vadd.xlane.f32.xlu0 %v9888
        %v9899 = vpop.xlane.xlu0 %9898
        %9900 = vadd.xlane.f32.xlu0 %v9889
        %v9901 = vpop.xlane.xlu0 %9900
        %9902 = vadd.xlane.f32.xlu0 %v9890
        %v9903 = vpop.xlane.xlu0 %9902
        %9904 = vadd.xlane.f32.xlu0 %v9891
        %v9905 = vpop.xlane.xlu0 %9904
        %9906 = vadd.xlane.f32.xlu0 %v9892
        %v9907 = vpop.xlane.xlu0 %9906
        %9908 = vadd.xlane.f32.xlu0 %v9893
        %v9909 = vpop.xlane.xlu0 %9908
        %v9910 = vmul.f32 %v9895, %v1254
        %v9911 = vmul.f32 %v9897, %v1254
        %v9912 = vmul.f32 %v9899, %v1254
        %v9913 = vmul.f32 %v9901, %v1254
        %v9914 = vmul.f32 %v9903, %v1254
        %v9915 = vmul.f32 %v9905, %v1254
        %v9916 = vmul.f32 %v9907, %v1254
        %v9917 = vmul.f32 %v9909, %v1254
        %v9918 = vadd.f32 %v9910, 1e-06
        %v9919 = vadd.f32 %v9911, 1e-06
        %v9920 = vadd.f32 %v9912, 1e-06
        %v9921 = vadd.f32 %v9913, 1e-06
        %v9922 = vadd.f32 %v9914, 1e-06
        %v9923 = vadd.f32 %v9915, 1e-06
        %v9924 = vadd.f32 %v9916, 1e-06
        %v9925 = vadd.f32 %v9917, 1e-06
        %v9926 = vrsqrt.pop %v9918
        %v9927 = vrsqrt.pop %v9919
        %v9928 = vrsqrt.pop %v9920
        %v9929 = vrsqrt.pop %v9921
        %v9930 = vrsqrt.pop %v9922
        %v9931 = vrsqrt.pop %v9923
        %v9932 = vrsqrt.pop %v9924
        %v9933 = vrsqrt.pop %v9925
        %v9934 = vmul.f32 %v9878, %v9926
        %v9935 = vmul.f32 %v9879, %v9927
        %v9936 = vmul.f32 %v9880, %v9928
        %v9937 = vmul.f32 %v9881, %v9929
        %v9938 = vmul.f32 %v9882, %v9930
        %v9939 = vmul.f32 %v9883, %v9931
        %v9940 = vmul.f32 %v9884, %v9932
        %v9941 = vmul.f32 %v9885, %v9933
        %v9942 = vlaneseq
        %v9943 = vshrl.u32 %v9942, 7
        %v9944 = vsub.s32 4, %v9943
        %v9945 = vrot.slane %v1235, %v9944
        %v9946 = vmul.f32 %v9934, %v9945
        %v9947 = vmul.f32 %v9935, %v9945
        %v9948 = vmul.f32 %v9936, %v9945
        %v9949 = vmul.f32 %v9937, %v9945
        %v9950 = vmul.f32 %v9938, %v9945
        %v9951 = vmul.f32 %v9939, %v9945
        %v9952 = vmul.f32 %v9940, %v9945
        %v9953 = vmul.f32 %v9941, %v9945
        %v9954 = vlaneseq
        %v9955 = vshrl.u32 %v9954, 7
        %v9956 = vsub.s32 5, %v9955
        %v9957 = vrot.slane %v1235, %v9956
        %v9958 = vadd.f32 %v9946, %v9957
        %v9959 = vadd.f32 %v9947, %v9957
        %v9960 = vadd.f32 %v9948, %v9957
        %v9961 = vadd.f32 %v9949, %v9957
        %v9962 = vadd.f32 %v9950, %v9957
        %v9963 = vadd.f32 %v9951, %v9957
        %v9964 = vadd.f32 %v9952, %v9957
        %v9965 = vadd.f32 %v9953, %v9957
        %v9966 = vpack.c.bf16 %v9959, %v9958
        %v9967 = vpack.c.bf16 %v9961, %v9960
        %v9968 = vpack.c.bf16 %v9963, %v9962
        %v9969 = vpack.c.bf16 %v9965, %v9964
        %v9970 = vld [vmem:[%s464] sm:$0xff]
        %v9971 = vld [vmem:[%s464 + $0x8] sm:$0xff]
        %v9972 = vld [vmem:[%s464 + $0x10] sm:$0xff]
        %v9973 = vld [vmem:[%s464 + $0x18] sm:$0xff]
        %v9974 = vld [vmem:[%s464 + $0x20] sm:$0xff]
        %v9975 = vld [vmem:[%s464 + $0x28] sm:$0xff]
        %v9976 = vld [vmem:[%s464 + $0x30] sm:$0xff]
        %v9977 = vld [vmem:[%s464 + $0x38] sm:$0xff]
        %v9978 = vld [vmem:[%s464 + $0x40] sm:$0xff]
        %v9979 = vld [vmem:[%s464 + $0x48] sm:$0xff]
        %v9980 = vld [vmem:[%s464 + $0x50] sm:$0xff]
        %v9981 = vld [vmem:[%s464 + $0x58] sm:$0xff]
        %v9982 = vld [vmem:[%s464 + $0x60] sm:$0xff]
        %v9983 = vld [vmem:[%s464 + $0x68] sm:$0xff]
        %v9984 = vld [vmem:[%s464 + $0x70] sm:$0xff]
        %v9985 = vld [vmem:[%s464 + $0x78] sm:$0xff]
        %v9986 = vlaneseq
        %v9987 = vshrl.u32 %v9986, 7
        %v9988 = vsub.s32 6, %v9987
        %v9989 = vrot.slane %v1235, %v9988
        %v9990 = vlaneseq
        %v9991 = vshrl.u32 %v9990, 7
        %v9992 = vsub.s32 6, %v9991
        %v9993 = vrot.slane %v1236, %v9992
        %v10010 = vunpack.c.l.b16 %v9970
        %v10011 = vunpack.c.h.b16 %v9970
        %v10012 = vunpack.c.l.b16 %v9971
        %v10013 = vunpack.c.h.b16 %v9971
        %v10014 = vunpack.c.l.b16 %v9972
        %v10015 = vunpack.c.h.b16 %v9972
        %v10016 = vunpack.c.l.b16 %v9973
        %v10017 = vunpack.c.h.b16 %v9973
        %v10018 = vunpack.c.l.b16 %v9974
        %v10019 = vunpack.c.h.b16 %v9974
        %v10020 = vunpack.c.l.b16 %v9975
        %v10021 = vunpack.c.h.b16 %v9975
        %v10022 = vunpack.c.l.b16 %v9976
        %v10023 = vunpack.c.h.b16 %v9976
        %v10024 = vunpack.c.l.b16 %v9977
        %v10025 = vunpack.c.h.b16 %v9977
        %v10026 = vunpack.c.l.b16 %v9978
        %v10027 = vunpack.c.h.b16 %v9978
        %v10028 = vunpack.c.l.b16 %v9979
        %v10029 = vunpack.c.h.b16 %v9979
        %v10030 = vunpack.c.l.b16 %v9980
        %v10031 = vunpack.c.h.b16 %v9980
        %v10032 = vunpack.c.l.b16 %v9981
        %v10033 = vunpack.c.h.b16 %v9981
        %v10034 = vunpack.c.l.b16 %v9982
        %v10035 = vunpack.c.h.b16 %v9982
        %v10036 = vunpack.c.l.b16 %v9983
        %v10037 = vunpack.c.h.b16 %v9983
        %v10038 = vunpack.c.l.b16 %v9984
        %v10039 = vunpack.c.h.b16 %v9984
        %v10040 = vunpack.c.l.b16 %v9985
        %v10041 = vunpack.c.h.b16 %v9985
        %v10042 = vpack.c.b16 %v10012, %v10010
        %v10043 = vpack.c.b16 %v10013, %v10011
        %v10044 = vpack.c.b16 %v10016, %v10014
        %v10045 = vpack.c.b16 %v10017, %v10015
        %v10046 = vpack.c.b16 %v10020, %v10018
        %v10047 = vpack.c.b16 %v10021, %v10019
        %v10048 = vpack.c.b16 %v10024, %v10022
        %v10049 = vpack.c.b16 %v10025, %v10023
        %v10050 = vpack.c.b16 %v10028, %v10026
        %v10051 = vpack.c.b16 %v10029, %v10027
        %v10052 = vpack.c.b16 %v10032, %v10030
        %v10053 = vpack.c.b16 %v10033, %v10031
        %v10054 = vpack.c.b16 %v10036, %v10034
        %v10055 = vpack.c.b16 %v10037, %v10035
        %v10056 = vpack.c.b16 %v10040, %v10038
        %v10057 = vpack.c.b16 %v10041, %v10039
        %10074 = vmatprep.subr.bf16.mxu0 %v10043
        %10075 = vmatpush1.bf16.msra.mxu0 %v10042
        %10076 = vmatprep.subr.bf16.mxu0 %v10045
        %10077 = vmatpush1.bf16.msra.mxu0 %v10044
        %10078 = vmatprep.subr.bf16.mxu0 %v10047
        %10079 = vmatpush1.bf16.msra.mxu0 %v10046
        %10080 = vmatprep.subr.bf16.mxu0 %v10049
        %10081 = vmatpush1.bf16.msra.mxu0 %v10048
        %10082 = vmatprep.subr.bf16.mxu0 %v10051
        %10083 = vmatpush1.bf16.msra.mxu0 %v10050
        %10084 = vmatprep.subr.bf16.mxu0 %v10053
        %10085 = vmatpush1.bf16.msra.mxu0 %v10052
        %10086 = vmatprep.subr.bf16.mxu0 %v10055
        %10087 = vmatpush1.bf16.msra.mxu0 %v10054
        %10088 = vmatprep.subr.bf16.mxu0 %v10057
        %10089 = vmatpush1.bf16.msra.mxu0 %v10056
        %10090 = vmatprep.subr.bf16.mxu0 0
        %10091 = vmatpush1.bf16.msra.mxu0 0
        %10092 = vmatprep.subr.bf16.mxu0 0
        %10093 = vmatpush1.bf16.msra.mxu0 0
        %10094 = vmatprep.subr.bf16.mxu0 0
        %10095 = vmatpush1.bf16.msra.mxu0 0
        %10096 = vmatprep.subr.bf16.mxu0 0
        %10097 = vmatpush1.bf16.msra.mxu0 0
        %10098 = vmatprep.subr.bf16.mxu0 0
        %10099 = vmatpush1.bf16.msra.mxu0 0
        %10100 = vmatprep.subr.bf16.mxu0 0
        %10101 = vmatpush1.bf16.msra.mxu0 0
        %10102 = vmatprep.subr.bf16.mxu0 0
        %10103 = vmatpush1.bf16.msra.mxu0 0
        %10104 = vmatprep.subr.bf16.mxu0 0
        %10105 = vmatpush1.bf16.msra.mxu0 0
        %10106 = vmatprep.mubr.bf16.mxu0 0
        %10107 = vmatmul.mubr.bf16.gmra.mrb[0].mxu0 %v9966
        %v10108 = vpop.f32.mrb[0].mxu0
        %v10109 = vadd.f32 %v9989, %v10108
        %v10110 = vpop.f32.mrb[0].mxu0
        %v10111 = vadd.f32 %v9993, %v10110
        %v10112 = vpop.f32.mrb[0].mxu0
        %v10113 = vadd.f32 %v9989, %v10112
        %v10114 = vpop.f32.mrb[0].mxu0
        %v10115 = vadd.f32 %v9993, %v10114
        %10116 = vmatprep.mubr.bf16.mxu0 0
        %10117 = vmatmul.mubr.bf16.gmra.mrb[0].mxu0 %v9967
        %v10118 = vpop.f32.mrb[0].mxu0
        %v10119 = vadd.f32 %v9989, %v10118
        %v10120 = vpop.f32.mrb[0].mxu0
        %v10121 = vadd.f32 %v9993, %v10120
        %v10122 = vpop.f32.mrb[0].mxu0
        %v10123 = vadd.f32 %v9989, %v10122
        %v10124 = vpop.f32.mrb[0].mxu0
        %v10125 = vadd.f32 %v9993, %v10124
        %10126 = vmatprep.mubr.bf16.mxu0 0
        %10127 = vmatmul.mubr.bf16.gmra.mrb[0].mxu0 %v9968
        %v10128 = vpop.f32.mrb[0].mxu0
        %v10129 = vadd.f32 %v9989, %v10128
        %v10130 = vpop.f32.mrb[0].mxu0
        %v10131 = vadd.f32 %v9993, %v10130
        %v10132 = vpop.f32.mrb[0].mxu0
        %v10133 = vadd.f32 %v9989, %v10132
        %v10134 = vpop.f32.mrb[0].mxu0
        %v10135 = vadd.f32 %v9993, %v10134
        %10136 = vmatprep.mubr.bf16.mxu0 0
        %10137 = vmatmul.mubr.bf16.gmra.mrb[0].mxu0 %v9969
        %v10138 = vpop.f32.mrb[0].mxu0
        %v10139 = vadd.f32 %v9989, %v10138
        %v10140 = vpop.f32.mrb[0].mxu0
        %v10141 = vadd.f32 %v9993, %v10140
        %v10142 = vpop.f32.mrb[0].mxu0
        %v10143 = vadd.f32 %v9989, %v10142
        %v10144 = vpop.f32.mrb[0].mxu0
        %v10145 = vadd.f32 %v9993, %v10144
        %10146 = vdwg.mxu0
        %v10147 = vmul.f32 %v10109, %v10109
        %v10148 = vmul.f32 %v10111, %v10111
        %v10149 = vmul.f32 %v10113, %v10113
        %v10150 = vmul.f32 %v10115, %v10115
        %v10151 = vmul.f32 %v10119, %v10119
        %v10152 = vmul.f32 %v10121, %v10121
        %v10153 = vmul.f32 %v10123, %v10123
        %v10154 = vmul.f32 %v10125, %v10125
        %v10155 = vmul.f32 %v10129, %v10129
        %v10156 = vmul.f32 %v10131, %v10131
        %v10157 = vmul.f32 %v10133, %v10133
        %v10158 = vmul.f32 %v10135, %v10135
        %v10159 = vmul.f32 %v10139, %v10139
        %v10160 = vmul.f32 %v10141, %v10141
        %v10161 = vmul.f32 %v10143, %v10143
        %v10162 = vmul.f32 %v10145, %v10145
        %v10163 = vmul.f32 %v10109, %v10147
        %v10164 = vmul.f32 %v10111, %v10148
        %v10165 = vmul.f32 %v10113, %v10149
        %v10166 = vmul.f32 %v10115, %v10150
        %v10167 = vmul.f32 %v10119, %v10151
        %v10168 = vmul.f32 %v10121, %v10152
        %v10169 = vmul.f32 %v10123, %v10153
        %v10170 = vmul.f32 %v10125, %v10154
        %v10171 = vmul.f32 %v10129, %v10155
        %v10172 = vmul.f32 %v10131, %v10156
        %v10173 = vmul.f32 %v10133, %v10157
        %v10174 = vmul.f32 %v10135, %v10158
        %v10175 = vmul.f32 %v10139, %v10159
        %v10176 = vmul.f32 %v10141, %v10160
        %v10177 = vmul.f32 %v10143, %v10161
        %v10178 = vmul.f32 %v10145, %v10162
        %v10179 = vmul.f32 %v10163, 0.044715
        %v10180 = vmul.f32 %v10164, 0.044715
        %v10181 = vmul.f32 %v10165, 0.044715
        %v10182 = vmul.f32 %v10166, 0.044715
        %v10183 = vmul.f32 %v10167, 0.044715
        %v10184 = vmul.f32 %v10168, 0.044715
        %v10185 = vmul.f32 %v10169, 0.044715
        %v10186 = vmul.f32 %v10170, 0.044715
        %v10187 = vmul.f32 %v10171, 0.044715
        %v10188 = vmul.f32 %v10172, 0.044715
        %v10189 = vmul.f32 %v10173, 0.044715
        %v10190 = vmul.f32 %v10174, 0.044715
        %v10191 = vmul.f32 %v10175, 0.044715
        %v10192 = vmul.f32 %v10176, 0.044715
        %v10193 = vmul.f32 %v10177, 0.044715
        %v10194 = vmul.f32 %v10178, 0.044715
        %v10195 = vadd.f32 %v10109, %v10179
        %v10196 = vadd.f32 %v10111, %v10180
        %v10197 = vadd.f32 %v10113, %v10181
        %v10198 = vadd.f32 %v10115, %v10182
        %v10199 = vadd.f32 %v10119, %v10183
        %v10200 = vadd.f32 %v10121, %v10184
        %v10201 = vadd.f32 %v10123, %v10185
        %v10202 = vadd.f32 %v10125, %v10186
        %v10203 = vadd.f32 %v10129, %v10187
        %v10204 = vadd.f32 %v10131, %v10188
        %v10205 = vadd.f32 %v10133, %v10189
        %v10206 = vadd.f32 %v10135, %v10190
        %v10207 = vadd.f32 %v10139, %v10191
        %v10208 = vadd.f32 %v10141, %v10192
        %v10209 = vadd.f32 %v10143, %v10193
        %v10210 = vadd.f32 %v10145, %v10194
        %v10211 = vmul.f32 %v10195, 0.7978846
        %v10212 = vmul.f32 %v10196, 0.7978846
        %v10213 = vmul.f32 %v10197, 0.7978846
        %v10214 = vmul.f32 %v10198, 0.7978846
        %v10215 = vmul.f32 %v10199, 0.7978846
        %v10216 = vmul.f32 %v10200, 0.7978846
        %v10217 = vmul.f32 %v10201, 0.7978846
        %v10218 = vmul.f32 %v10202, 0.7978846
        %v10219 = vmul.f32 %v10203, 0.7978846
        %v10220 = vmul.f32 %v10204, 0.7978846
        %v10221 = vmul.f32 %v10205, 0.7978846
        %v10222 = vmul.f32 %v10206, 0.7978846
        %v10223 = vmul.f32 %v10207, 0.7978846
        %v10224 = vmul.f32 %v10208, 0.7978846
        %v10225 = vmul.f32 %v10209, 0.7978846
        %v10226 = vmul.f32 %v10210, 0.7978846
        %v10227 = vtanh.pop %v10211
        %v10228 = vtanh.pop %v10212
        %v10229 = vtanh.pop %v10213
        %v10230 = vtanh.pop %v10214
        %v10231 = vtanh.pop %v10215
        %v10232 = vtanh.pop %v10216
        %v10233 = vtanh.pop %v10217
        %v10234 = vtanh.pop %v10218
        %v10235 = vtanh.pop %v10219
        %v10236 = vtanh.pop %v10220
        %v10237 = vtanh.pop %v10221
        %v10238 = vtanh.pop %v10222
        %v10239 = vtanh.pop %v10223
        %v10240 = vtanh.pop %v10224
        %v10241 = vtanh.pop %v10225
        %v10242 = vtanh.pop %v10226
        %v10243 = vadd.f32 %v10227, 1.0
        %v10244 = vadd.f32 %v10228, 1.0
        %v10245 = vadd.f32 %v10229, 1.0
        %v10246 = vadd.f32 %v10230, 1.0
        %v10247 = vadd.f32 %v10231, 1.0
        %v10248 = vadd.f32 %v10232, 1.0
        %v10249 = vadd.f32 %v10233, 1.0
        %v10250 = vadd.f32 %v10234, 1.0
        %v10251 = vadd.f32 %v10235, 1.0
        %v10252 = vadd.f32 %v10236, 1.0
        %v10253 = vadd.f32 %v10237, 1.0
        %v10254 = vadd.f32 %v10238, 1.0
        %v10255 = vadd.f32 %v10239, 1.0
        %v10256 = vadd.f32 %v10240, 1.0
        %v10257 = vadd.f32 %v10241, 1.0
        %v10258 = vadd.f32 %v10242, 1.0
        %v10259 = vmul.f32 %v10243, 0.5
        %v10260 = vmul.f32 %v10244, 0.5
        %v10261 = vmul.f32 %v10245, 0.5
        %v10262 = vmul.f32 %v10246, 0.5
        %v10263 = vmul.f32 %v10247, 0.5
        %v10264 = vmul.f32 %v10248, 0.5
        %v10265 = vmul.f32 %v10249, 0.5
        %v10266 = vmul.f32 %v10250, 0.5
        %v10267 = vmul.f32 %v10251, 0.5
        %v10268 = vmul.f32 %v10252, 0.5
        %v10269 = vmul.f32 %v10253, 0.5
        %v10270 = vmul.f32 %v10254, 0.5
        %v10271 = vmul.f32 %v10255, 0.5
        %v10272 = vmul.f32 %v10256, 0.5
        %v10273 = vmul.f32 %v10257, 0.5
        %v10274 = vmul.f32 %v10258, 0.5
        %v10275 = vmul.f32 %v10109, %v10259
        %v10276 = vmul.f32 %v10111, %v10260
        %v10277 = vmul.f32 %v10113, %v10261
        %v10278 = vmul.f32 %v10115, %v10262
        %v10279 = vmul.f32 %v10119, %v10263
        %v10280 = vmul.f32 %v10121, %v10264
        %v10281 = vmul.f32 %v10123, %v10265
        %v10282 = vmul.f32 %v10125, %v10266
        %v10283 = vmul.f32 %v10129, %v10267
        %v10284 = vmul.f32 %v10131, %v10268
        %v10285 = vmul.f32 %v10133, %v10269
        %v10286 = vmul.f32 %v10135, %v10270
        %v10287 = vmul.f32 %v10139, %v10271
        %v10288 = vmul.f32 %v10141, %v10272
        %v10289 = vmul.f32 %v10143, %v10273
        %v10290 = vmul.f32 %v10145, %v10274
        %v10291 = vpack.c.bf16 %v10277, %v10275
        %v10292 = vpack.c.bf16 %v10278, %v10276
        %v10293 = vpack.c.bf16 %v10281, %v10279
        %v10294 = vpack.c.bf16 %v10282, %v10280
        %v10295 = vpack.c.bf16 %v10285, %v10283
        %v10296 = vpack.c.bf16 %v10286, %v10284
        %v10297 = vpack.c.bf16 %v10289, %v10287
        %v10298 = vpack.c.bf16 %v10290, %v10288
        %v10299 = vld [vmem:[%s469] sm:$0xf]
        %v10300 = vld [vmem:[%s469 + $0x4] sm:$0xf]
        %v10301 = vld [vmem:[%s469 + $0x8] sm:$0xf]
        %v10302 = vld [vmem:[%s469 + $0xc] sm:$0xf]
        %v10303 = vld [vmem:[%s469 + $0x10] sm:$0xf]
        %v10304 = vld [vmem:[%s469 + $0x14] sm:$0xf]
        %v10305 = vld [vmem:[%s469 + $0x18] sm:$0xf]
        %v10306 = vld [vmem:[%s469 + $0x1c] sm:$0xf]
        %v10307 = vld [vmem:[%s469 + $0x20] sm:$0xf]
        %v10308 = vld [vmem:[%s469 + $0x24] sm:$0xf]
        %v10309 = vld [vmem:[%s469 + $0x28] sm:$0xf]
        %v10310 = vld [vmem:[%s469 + $0x2c] sm:$0xf]
        %v10311 = vld [vmem:[%s469 + $0x30] sm:$0xf]
        %v10312 = vld [vmem:[%s469 + $0x34] sm:$0xf]
        %v10313 = vld [vmem:[%s469 + $0x38] sm:$0xf]
        %v10314 = vld [vmem:[%s469 + $0x3c] sm:$0xf]
        %v10315 = vld [vmem:[%s469 + $0x40] sm:$0xf]
        %v10316 = vld [vmem:[%s469 + $0x44] sm:$0xf]
        %v10317 = vld [vmem:[%s469 + $0x48] sm:$0xf]
        %v10318 = vld [vmem:[%s469 + $0x4c] sm:$0xf]
        %v10319 = vld [vmem:[%s469 + $0x50] sm:$0xf]
        %v10320 = vld [vmem:[%s469 + $0x54] sm:$0xf]
        %v10321 = vld [vmem:[%s469 + $0x58] sm:$0xf]
        %v10322 = vld [vmem:[%s469 + $0x5c] sm:$0xf]
        %v10323 = vld [vmem:[%s469 + $0x60] sm:$0xf]
        %v10324 = vld [vmem:[%s469 + $0x64] sm:$0xf]
        %v10325 = vld [vmem:[%s469 + $0x68] sm:$0xf]
        %v10326 = vld [vmem:[%s469 + $0x6c] sm:$0xf]
        %v10327 = vld [vmem:[%s469 + $0x70] sm:$0xf]
        %v10328 = vld [vmem:[%s469 + $0x74] sm:$0xf]
        %v10329 = vld [vmem:[%s469 + $0x78] sm:$0xf]
        %v10330 = vld [vmem:[%s469 + $0x7c] sm:$0xf]
        %v10331 = vlaneseq
        %v10332 = vshrl.u32 %v10331, 7
        %v10333 = vsub.s32 7, %v10332
        %v10334 = vrot.slane %v1235, %v10333
        %v10367 = vunpack.c.l.b16 %v10299
        %v10368 = vunpack.c.l.b16 %v10300
        %v10369 = vunpack.c.l.b16 %v10301
        %v10370 = vunpack.c.l.b16 %v10302
        %v10371 = vunpack.c.l.b16 %v10303
        %v10372 = vunpack.c.l.b16 %v10304
        %v10373 = vunpack.c.l.b16 %v10305
        %v10374 = vunpack.c.l.b16 %v10306
        %v10375 = vunpack.c.l.b16 %v10307
        %v10376 = vunpack.c.l.b16 %v10308
        %v10377 = vunpack.c.l.b16 %v10309
        %v10378 = vunpack.c.l.b16 %v10310
        %v10379 = vunpack.c.l.b16 %v10311
        %v10380 = vunpack.c.l.b16 %v10312
        %v10381 = vunpack.c.l.b16 %v10313
        %v10382 = vunpack.c.l.b16 %v10314
        %v10383 = vunpack.c.l.b16 %v10315
        %v10384 = vunpack.c.l.b16 %v10316
        %v10385 = vunpack.c.l.b16 %v10317
        %v10386 = vunpack.c.l.b16 %v10318
        %v10387 = vunpack.c.l.b16 %v10319
        %v10388 = vunpack.c.l.b16 %v10320
        %v10389 = vunpack.c.l.b16 %v10321
        %v10390 = vunpack.c.l.b16 %v10322
        %v10391 = vunpack.c.l.b16 %v10323
        %v10392 = vunpack.c.l.b16 %v10324
        %v10393 = vunpack.c.l.b16 %v10325
        %v10394 = vunpack.c.l.b16 %v10326
        %v10395 = vunpack.c.l.b16 %v10327
        %v10396 = vunpack.c.l.b16 %v10328
        %v10397 = vunpack.c.l.b16 %v10329
        %v10398 = vunpack.c.l.b16 %v10330
        %v10399 = vpack.c.b16 %v10368, %v10367
        %v10400 = vpack.c.b16 %v10370, %v10369
        %v10401 = vpack.c.b16 %v10372, %v10371
        %v10402 = vpack.c.b16 %v10374, %v10373
        %v10403 = vpack.c.b16 %v10376, %v10375
        %v10404 = vpack.c.b16 %v10378, %v10377
        %v10405 = vpack.c.b16 %v10380, %v10379
        %v10406 = vpack.c.b16 %v10382, %v10381
        %v10407 = vpack.c.b16 %v10384, %v10383
        %v10408 = vpack.c.b16 %v10386, %v10385
        %v10409 = vpack.c.b16 %v10388, %v10387
        %v10410 = vpack.c.b16 %v10390, %v10389
        %v10411 = vpack.c.b16 %v10392, %v10391
        %v10412 = vpack.c.b16 %v10394, %v10393
        %v10413 = vpack.c.b16 %v10396, %v10395
        %v10414 = vpack.c.b16 %v10398, %v10397
        %10431 = vmatprep.subr.bf16.mxu0 0
        %10432 = vmatpush1.bf16.msra.mxu0 %v10399
        %10433 = vmatprep.subr.bf16.mxu0 0
        %10434 = vmatpush1.bf16.msra.mxu0 %v10400
        %10435 = vmatprep.subr.bf16.mxu0 0
        %10436 = vmatpush1.bf16.msra.mxu0 %v10401
        %10437 = vmatprep.subr.bf16.mxu0 0
        %10438 = vmatpush1.bf16.msra.mxu0 %v10402
        %10439 = vmatprep.subr.bf16.mxu0 0
        %10440 = vmatpush1.bf16.msra.mxu0 %v10403
        %10441 = vmatprep.subr.bf16.mxu0 0
        %10442 = vmatpush1.bf16.msra.mxu0 %v10404
        %10443 = vmatprep.subr.bf16.mxu0 0
        %10444 = vmatpush1.bf16.msra.mxu0 %v10405
        %10445 = vmatprep.subr.bf16.mxu0 0
        %10446 = vmatpush1.bf16.msra.mxu0 %v10406
        %10447 = vmatprep.subr.bf16.mxu0 0
        %10448 = vmatpush1.bf16.msra.mxu0 %v10407
        %10449 = vmatprep.subr.bf16.mxu0 0
        %10450 = vmatpush1.bf16.msra.mxu0 %v10408
        %10451 = vmatprep.subr.bf16.mxu0 0
        %10452 = vmatpush1.bf16.msra.mxu0 %v10409
        %10453 = vmatprep.subr.bf16.mxu0 0
        %10454 = vmatpush1.bf16.msra.mxu0 %v10410
        %10455 = vmatprep.subr.bf16.mxu0 0
        %10456 = vmatpush1.bf16.msra.mxu0 %v10411
        %10457 = vmatprep.subr.bf16.mxu0 0
        %10458 = vmatpush1.bf16.msra.mxu0 %v10412
        %10459 = vmatprep.subr.bf16.mxu0 0
        %10460 = vmatpush1.bf16.msra.mxu0 %v10413
        %10461 = vmatprep.subr.bf16.mxu0 0
        %10462 = vmatpush1.bf16.msra.mxu0 %v10414
        %10463 = vmatprep.mubr.bf16.mxu0 %v10292
        %10464 = vmatmul.mubr.bf16.gmra.mrb[0].mxu0 %v10291
        %v10465 = vpop.f32.mrb[0].mxu0
        %v10466 = vadd.f32 %v10334, %v10465
        %v10467 = vpop.f32.mrb[0].mxu0
        %v10468 = vpop.f32.mrb[0].mxu0
        %v10469 = vadd.f32 %v10334, %v10468
        %v10470 = vpop.f32.mrb[0].mxu0
        %10471 = vmatprep.mubr.bf16.mxu0 %v10294
        %10472 = vmatmul.mubr.bf16.gmra.mrb[0].mxu0 %v10293
        %v10473 = vpop.f32.mrb[0].mxu0
        %v10474 = vadd.f32 %v10334, %v10473
        %v10475 = vpop.f32.mrb[0].mxu0
        %v10476 = vpop.f32.mrb[0].mxu0
        %v10477 = vadd.f32 %v10334, %v10476
        %v10478 = vpop.f32.mrb[0].mxu0
        %10479 = vmatprep.mubr.bf16.mxu0 %v10296
        %10480 = vmatmul.mubr.bf16.gmra.mrb[0].mxu0 %v10295
        %v10481 = vpop.f32.mrb[0].mxu0
        %v10482 = vadd.f32 %v10334, %v10481
        %v10483 = vpop.f32.mrb[0].mxu0
        %v10484 = vpop.f32.mrb[0].mxu0
        %v10485 = vadd.f32 %v10334, %v10484
        %v10486 = vpop.f32.mrb[0].mxu0
        %10487 = vmatprep.mubr.bf16.mxu0 %v10298
        %10488 = vmatmul.mubr.bf16.gmra.mrb[0].mxu0 %v10297
        %v10489 = vpop.f32.mrb[0].mxu0
        %v10490 = vadd.f32 %v10334, %v10489
        %v10491 = vpop.f32.mrb[0].mxu0
        %v10492 = vpop.f32.mrb[0].mxu0
        %v10493 = vadd.f32 %v10334, %v10492
        %v10494 = vpop.f32.mrb[0].mxu0
        %10495 = vdwg.mxu0
        %v10496 = vadd.f32 %v9846, %v10466
        %v10497 = vadd.f32 %v9847, %v10469
        %v10498 = vadd.f32 %v9848, %v10474
        %v10499 = vadd.f32 %v9849, %v10477
        %v10500 = vadd.f32 %v9850, %v10482
        %v10501 = vadd.f32 %v9851, %v10485
        %v10502 = vadd.f32 %v9852, %v10490
        %v10503 = vadd.f32 %v9853, %v10493
        %10504 = vst [vmem:[#allocation2] sm:$0xff] %v10496
        %10505 = vst [vmem:[#allocation2 + $0x8] sm:$0xff] %v10497
        %10506 = vst [vmem:[#allocation2 + $0x10] sm:$0xff] %v10498
        %10507 = vst [vmem:[#allocation2 + $0x18] sm:$0xff] %v10499
        %10508 = vst [vmem:[#allocation2 + $0x20] sm:$0xff] %v10500
        %10509 = vst [vmem:[#allocation2 + $0x28] sm:$0xff] %v10501
        %10510 = vst [vmem:[#allocation2 + $0x30] sm:$0xff] %v10502
        %10511 = vst [vmem:[#allocation2 + $0x38] sm:$0xff] %v10503
        %p10512 = scmp.eq.s32.totalorder %s29, 1
        // Predicated region
        $region65: #{vit_forward.1} parent=59 // pred_check
          %p10513 = pneg %p10512
        $region66: #{vit_forward.1} parent=59 // pred_check_branch
          %10515 = sbr.rel (%p10513) target = $region68
        $region67: #{vit_forward.1} parent=59 // pred_region
          %v10516 = vld [vmem:[%s9] sm:$0xff]
          %v10525 = vrot.slane %v10497, 7
          %vm10526 = vcmask 1041409
          %v10527 = vsel %vm10526, %v10525, %v10496
          %v10528 = vrot.slane %v10498, 6
          %vm10529 = vcmask 1042434
          %v10530 = vsel %vm10529, %v10528, %v10527
          %v10531 = vrot.slane %v10499, 5
          %vm10532 = vcmask 1043459
          %v10533 = vsel %vm10532, %v10531, %v10530
          %v10534 = vrot.slane %v10500, 4
          %vm10535 = vcmask 1044484
          %v10536 = vsel %vm10535, %v10534, %v10533
          %v10537 = vrot.slane %v10501, 3
          %vm10538 = vcmask 1045509
          %v10539 = vsel %vm10538, %v10537, %v10536
          %v10540 = vrot.slane %v10502, 2
          %vm10541 = vcmask 1046534
          %v10542 = vsel %vm10541, %v10540, %v10539
          %v10543 = vrot.slane %v10503, 1
          %vm10544 = vcmask 1047559
          %v10545 = vsel %vm10544, %v10543, %v10542
          %10547 = vadd.xlane.f32.xlu0 %v10545
          %v10548 = vpop.xlane.xlu0 %10547
          %v10549 = vmul.f32 %v10548, %v1254
          %v10551 = vrot.slane %v10549, 1
          %v10552 = vrot.slane %v10549, 2
          %v10553 = vrot.slane %v10549, 3
          %v10554 = vrot.slane %v10549, 4
          %v10555 = vrot.slane %v10549, 5
          %v10556 = vrot.slane %v10549, 6
          %v10557 = vrot.slane %v10549, 7
          %v10566 = vsub.f32 %v10496, %v10549
          %v10567 = vsub.f32 %v10497, %v10551
          %v10568 = vsub.f32 %v10498, %v10552
          %v10569 = vsub.f32 %v10499, %v10553
          %v10570 = vsub.f32 %v10500, %v10554
          %v10571 = vsub.f32 %v10501, %v10555
          %v10572 = vsub.f32 %v10502, %v10556
          %v10573 = vsub.f32 %v10503, %v10557
          %v10574 = vmul.f32 %v10566, %v10566
          %v10575 = vmul.f32 %v10567, %v10567
          %v10576 = vmul.f32 %v10568, %v10568
          %v10577 = vmul.f32 %v10569, %v10569
          %v10578 = vmul.f32 %v10570, %v10570
          %v10579 = vmul.f32 %v10571, %v10571
          %v10580 = vmul.f32 %v10572, %v10572
          %v10581 = vmul.f32 %v10573, %v10573
          %v10590 = vrot.slane %v10575, 7
          %v10591 = vsel %vm10526, %v10590, %v10574
          %v10592 = vrot.slane %v10576, 6
          %v10593 = vsel %vm10529, %v10592, %v10591
          %v10594 = vrot.slane %v10577, 5
          %v10595 = vsel %vm10532, %v10594, %v10593
          %v10596 = vrot.slane %v10578, 4
          %v10597 = vsel %vm10535, %v10596, %v10595
          %v10598 = vrot.slane %v10579, 3
          %v10599 = vsel %vm10538, %v10598, %v10597
          %v10600 = vrot.slane %v10580, 2
          %v10601 = vsel %vm10541, %v10600, %v10599
          %v10602 = vrot.slane %v10581, 1
          %v10603 = vsel %vm10544, %v10602, %v10601
          %10605 = vadd.xlane.f32.xlu0 %v10603
          %v10606 = vpop.xlane.xlu0 %10605
          %v10607 = vmul.f32 %v10606, %v1254
          %v10608 = vadd.f32 %v10607, 1e-06
          %v10609 = vrsqrt.pop %v10608
          %v10611 = vrot.slane %v10609, 1
          %v10612 = vrot.slane %v10609, 2
          %v10613 = vrot.slane %v10609, 3
          %v10614 = vrot.slane %v10609, 4
          %v10615 = vrot.slane %v10609, 5
          %v10616 = vrot.slane %v10609, 6
          %v10617 = vrot.slane %v10609, 7
          %v10626 = vmul.f32 %v10566, %v10609
          %v10627 = vmul.f32 %v10567, %v10611
          %v10628 = vmul.f32 %v10568, %v10612
          %v10629 = vmul.f32 %v10569, %v10613
          %v10630 = vmul.f32 %v10570, %v10614
          %v10631 = vmul.f32 %v10571, %v10615
          %v10632 = vmul.f32 %v10572, %v10616
          %v10633 = vmul.f32 %v10573, %v10617
          %v10634 = vlaneseq
          %v10635 = vshrl.u32 %v10634, 7
          %v10636 = vsub.s32 0, %v10635
          %v10637 = vrot.slane %v10516, %v10636
          %v10638 = vmul.f32 %v10626, %v10637
          %v10639 = vmul.f32 %v10627, %v10637
          %v10640 = vmul.f32 %v10628, %v10637
          %v10641 = vmul.f32 %v10629, %v10637
          %v10642 = vmul.f32 %v10630, %v10637
          %v10643 = vmul.f32 %v10631, %v10637
          %v10644 = vmul.f32 %v10632, %v10637
          %v10645 = vmul.f32 %v10633, %v10637
          %v10646 = vlaneseq
          %v10647 = vshrl.u32 %v10646, 7
          %v10648 = vsub.s32 1, %v10647
          %v10649 = vrot.slane %v10516, %v10648
          %v10650 = vadd.f32 %v10638, %v10649
          %v10651 = vadd.f32 %v10639, %v10649
          %v10652 = vadd.f32 %v10640, %v10649
          %v10653 = vadd.f32 %v10641, %v10649
          %v10654 = vadd.f32 %v10642, %v10649
          %v10655 = vadd.f32 %v10643, %v10649
          %v10656 = vadd.f32 %v10644, %v10649
          %v10657 = vadd.f32 %v10645, %v10649
          %v10658 = vpack.c.bf16 %v10650, %v10650
          %v10659 = vpack.c.bf16 %v10651, %v10651
          %v10660 = vpack.c.bf16 %v10652, %v10652
          %v10661 = vpack.c.bf16 %v10653, %v10653
          %v10662 = vpack.c.bf16 %v10654, %v10654
          %v10663 = vpack.c.bf16 %v10655, %v10655
          %v10664 = vpack.c.bf16 %v10656, %v10656
          %v10665 = vpack.c.bf16 %v10657, %v10657
          %v10666 = vld [vmem:[%s8] sm:$0xf]
          %v10667 = vld [vmem:[%s8 + $0x4] sm:$0xf]
          %v10668 = vld [vmem:[%s8 + $0x8] sm:$0xf]
          %v10669 = vld [vmem:[%s8 + $0xc] sm:$0xf]
          %v10670 = vld [vmem:[%s8 + $0x10] sm:$0xf]
          %v10671 = vld [vmem:[%s8 + $0x14] sm:$0xf]
          %v10672 = vld [vmem:[%s8 + $0x18] sm:$0xf]
          %v10673 = vld [vmem:[%s8 + $0x1c] sm:$0xf]
          %v10674 = vld [vmem:[%s8 + $0x20] sm:$0xf]
          %v10675 = vld [vmem:[%s8 + $0x24] sm:$0xf]
          %v10676 = vld [vmem:[%s8 + $0x28] sm:$0xf]
          %v10677 = vld [vmem:[%s8 + $0x2c] sm:$0xf]
          %v10678 = vld [vmem:[%s8 + $0x30] sm:$0xf]
          %v10679 = vld [vmem:[%s8 + $0x34] sm:$0xf]
          %v10680 = vld [vmem:[%s8 + $0x38] sm:$0xf]
          %v10681 = vld [vmem:[%s8 + $0x3c] sm:$0xf]
          %v10682 = vlaneseq
          %v10683 = vshrl.u32 %v10682, 7
          %v10684 = vsub.s32 2, %v10683
          %v10685 = vrot.slane %v10516, %v10684
          %v10694 = vunpack.c.l.b16 %v10658
          %v10695 = vunpack.c.l.b16 %v10659
          %v10696 = vunpack.c.l.b16 %v10660
          %v10697 = vunpack.c.l.b16 %v10661
          %v10698 = vunpack.c.l.b16 %v10662
          %v10699 = vunpack.c.l.b16 %v10663
          %v10700 = vunpack.c.l.b16 %v10664
          %v10701 = vunpack.c.l.b16 %v10665
          %v10702 = vrot.slane %v10695, 7
          %v10703 = vsel %vm10526, %v10702, %v10694
          %v10704 = vrot.slane %v10696, 6
          %v10705 = vsel %vm10529, %v10704, %v10703
          %v10706 = vrot.slane %v10697, 5
          %v10707 = vsel %vm10532, %v10706, %v10705
          %v10708 = vrot.slane %v10698, 4
          %v10709 = vsel %vm10535, %v10708, %v10707
          %v10710 = vrot.slane %v10699, 3
          %v10711 = vsel %vm10538, %v10710, %v10709
          %v10712 = vrot.slane %v10700, 2
          %v10713 = vsel %vm10541, %v10712, %v10711
          %v10714 = vrot.slane %v10701, 1
          %v10715 = vsel %vm10544, %v10714, %v10713
          %v10716 = vpack.c.b16 %v10715, %v10715
          %v10734 = vunpack.c.l.b16 %v10666
          %v10735 = vunpack.c.l.b16 %v10667
          %v10736 = vunpack.c.l.b16 %v10668
          %v10737 = vunpack.c.l.b16 %v10669
          %v10738 = vunpack.c.l.b16 %v10670
          %v10739 = vunpack.c.l.b16 %v10671
          %v10740 = vunpack.c.l.b16 %v10672
          %v10741 = vunpack.c.l.b16 %v10673
          %v10742 = vunpack.c.l.b16 %v10674
          %v10743 = vunpack.c.l.b16 %v10675
          %v10744 = vunpack.c.l.b16 %v10676
          %v10745 = vunpack.c.l.b16 %v10677
          %v10746 = vunpack.c.l.b16 %v10678
          %v10747 = vunpack.c.l.b16 %v10679
          %v10748 = vunpack.c.l.b16 %v10680
          %v10749 = vunpack.c.l.b16 %v10681
          %v10750 = vpack.c.b16 %v10735, %v10734
          %v10751 = vpack.c.b16 %v10737, %v10736
          %v10752 = vpack.c.b16 %v10739, %v10738
          %v10753 = vpack.c.b16 %v10741, %v10740
          %v10754 = vpack.c.b16 %v10743, %v10742
          %v10755 = vpack.c.b16 %v10745, %v10744
          %v10756 = vpack.c.b16 %v10747, %v10746
          %v10757 = vpack.c.b16 %v10749, %v10748
          %10766 = vmatprep.subr.bf16.mxu0 0
          %10767 = vmatpush1.bf16.msra.mxu0 %v10750
          %10768 = vmatprep.subr.bf16.mxu0 0
          %10769 = vmatpush1.bf16.msra.mxu0 %v10751
          %10770 = vmatprep.subr.bf16.mxu0 0
          %10771 = vmatpush1.bf16.msra.mxu0 %v10752
          %10772 = vmatprep.subr.bf16.mxu0 0
          %10773 = vmatpush1.bf16.msra.mxu0 %v10753
          %10774 = vmatprep.subr.bf16.mxu0 0
          %10775 = vmatpush1.bf16.msra.mxu0 %v10754
          %10776 = vmatprep.subr.bf16.mxu0 0
          %10777 = vmatpush1.bf16.msra.mxu0 %v10755
          %10778 = vmatprep.subr.bf16.mxu0 0
          %10779 = vmatpush1.bf16.msra.mxu0 %v10756
          %10780 = vmatprep.subr.bf16.mxu0 0
          %10781 = vmatpush1.bf16.msra.mxu0 %v10757
          %10782 = vmatprep.subr.bf16.mxu0 0
          %10783 = vmatpush1.bf16.msra.mxu0 0
          %10784 = vmatprep.subr.bf16.mxu0 0
          %10785 = vmatpush1.bf16.msra.mxu0 0
          %10786 = vmatprep.subr.bf16.mxu0 0
          %10787 = vmatpush1.bf16.msra.mxu0 0
          %10788 = vmatprep.subr.bf16.mxu0 0
          %10789 = vmatpush1.bf16.msra.mxu0 0
          %10790 = vmatprep.subr.bf16.mxu0 0
          %10791 = vmatpush1.bf16.msra.mxu0 0
          %10792 = vmatprep.subr.bf16.mxu0 0
          %10793 = vmatpush1.bf16.msra.mxu0 0
          %10794 = vmatprep.subr.bf16.mxu0 0
          %10795 = vmatpush1.bf16.msra.mxu0 0
          %10796 = vmatprep.subr.bf16.mxu0 0
          %10797 = vmatpush1.bf16.msra.mxu0 0
          %10798 = vmatprep.mubr.bf16.mxu0 0
          %10799 = vmatmul.mubr.bf16.gmra.mrb[0].mxu0 %v10716
          %v10800 = vpop.f32.mrb[0].mxu0
          %v10801 = vadd.f32 %v10685, %v10800
          %v10802 = vpop.f32.mrb[0].mxu0
          %v10803 = vpop.f32.mrb[0].mxu0
          %v10804 = vpop.f32.mrb[0].mxu0
          %10805 = vdwg.mxu0
          %10806 = vst [vmem:[%s442] sm:$0xff] %v10801
        $region68: #{vit_forward.1} parent=59 // pred_fallthru
          _
        %s10807 = sand.u32 %s284, 1
        %s10808 = scalar_lea.sflag [#allocation4], %s10807
        %s10809 = sand.u32 %s284, 1
        %s10810 = smul.addr %s10809, 8
        %s10811 = scalar_lea.vmem [#allocation3], %s10810
        // Predicated region
        $region69: #{vit_forward.1} parent=59 // pred_check
          %p10812 = pneg %p294
        $region70: #{vit_forward.1} parent=59 // pred_check_branch
          %10814 = sbr.rel (%p10812) target = $region72
        $region71: #{vit_forward.1} parent=59 // pred_region
          %s10816 = ssub.s32 128, 128
          %10817 = vsyncadd %s10808, %s10816
          %s10818 = smul.addr %s28, 128
          %s10819 = scalar_lea.hbm %s10, %s10818
          %s10821 = sshll.u32 %s10811, 4
          %s10822 = int_to_ptr.vmem [resolvable:$true] %s10821
          %10824 = dma.vmem_to_hbm [thread:$0]  %s10822, 128, %s10819, %s10808
        $region72: #{vit_forward.1} parent=59 // pred_fallthru
          _
      $region60: #{vit_forward.1} parent=5 // pred_fallthru
        _
      %p10825 = scmp.le.s32.totalorder 2, %s19
      // Predicated region
      $region73: #{vit_forward.1} parent=5 // pred_check
        %p10826 = pneg %p10825
      $region74: #{vit_forward.1} parent=5 // pred_check_branch
        %10828 = sbr.rel (%p10826) target = $region76
      $region75: #{vit_forward.1} parent=5 // pred_region
        %s10829 = ssub.s32 %s19, 2
        // Predicated region
        $region77: #{vit_forward.1} parent=75 // pred_check
          %p10830 = pneg %p300
        $region78: #{vit_forward.1} parent=75 // pred_check_branch
          %10832 = sbr.rel (%p10830) target = $region80
        $region79: #{vit_forward.1} parent=75 // pred_region
          %s10833 = sand.u32 %s285, 1
          %s10834 = scalar_lea.sflag [#allocation4], %s10833
          %s10835 = sand.u32 %s285, 1
          %s10836 = smul.addr %s10835, 8
          %s10837 = scalar_lea.vmem [#allocation3], %s10836
          %10838 = dma.done %s10834, 128
        $region80: #{vit_forward.1} parent=75 // pred_fallthru
          _
      $region76: #{vit_forward.1} parent=5 // pred_fallthru
        _
    $region6: #{vit_forward.1} parent=1 // loop_footer
      %s23 = sadd.s32 1, %s19
    $region7: #{vit_forward.1} parent=1 // loop_footer_branch
      %18 = sbr.rel target = $region3
    $region8: #{vit_forward.1} parent=1 // loop_exit
      _
    %10839 = vsyncpa [#allocation4], 1
    %s10840 = scalar_lea.sflag [#allocation4], 1
    %10841 = vsyncpa %s10840, 1

</llo_original>
